<compile_context>
chip_gen: v5e
topology: v5e:2x2
jax: 0.10.0
libtpu: 0.0.40
codegen_flags: <defaults>
</compile_context>

<pallas_src>
import jax
import jax.numpy as jnp
import numpy as np
from jax.experimental import pallas as pl
from jax.experimental.pallas import tpu as pltpu


# ------------------------------- kernel --------------------------------------

def _sigmoid(x):
    return 1.0 / (1.0 + jnp.exp(-x))


def _conv3x3_planes(planes, w_ref, b_ref, pad_ref, cin, cout, size):
    """Zero-padded 3x3 conv over `cin` (size, size) planes -> `cout` planes.

    Channel counts in this module are 1-2, so an im2col matmul would only have
    K = 9*cin <= 18; a direct shifted-plane accumulation on the VPU (scalar
    weights read from SMEM) is cheaper and keeps the MXU free.  This runs once
    per image (inside the epilogue), so its cost is negligible.
    """
    for ci in range(cin):
        pad_ref[ci, 1:size + 1, 1:size + 1] = planes[ci]
    outs = []
    for co in range(cout):
        acc = jnp.zeros((size, size), jnp.float32)
        for ci in range(cin):
            for kh in range(3):
                for kw in range(3):
                    w = w_ref[((co * cin + ci) * 3 + kh) * 3 + kw]
                    acc = acc + w * pad_ref[ci, kh:kh + size, kw:kw + size]
        outs.append(acc + b_ref[co])
    return outs


def _fused_kernel(x_ref, pwt_ref, w2_ref, b1_ref,
                  pm_ref, pmt_ref, um_ref, umt_ref,
                  wc1_ref, bc1_ref, wc2_ref, bc2_ref,
                  wc3_ref, bc3_ref, wc4_ref, bc4_ref,
                  o_ref, acc_ref, pad8_ref, pad32_ref):
    cb = pl.program_id(1)

    @pl.when(cb == 0)
    def _():
        acc_ref[...] = jnp.zeros_like(acc_ref)

    # ---- stage 1 partial: pool along W, then pool along H fused with the 1x1 conv.
    x = x_ref[0]                                    # (c_blk, H, W), native NCHW block
    c_blk, hh, ww = x.shape
    t = jnp.dot(x.reshape(c_blk * hh, ww), pwt_ref[...],
                preferred_element_type=jnp.float32)                 # (c_blk*H, 32)
    part = jnp.dot(w2_ref[...], t, preferred_element_type=jnp.float32)  # (64, 32)
    acc_ref[...] = acc_ref[...] + part.reshape(2, 32, 32)

    # ---- stage 2 epilogue: runs once per image with outx resident in VMEM.
    @pl.when(cb == pl.num_programs(1) - 1)
    def _():
        # Borders of the padded-conv scratch must be zero; interiors are always
        # overwritten.  (Zeroed here, per image, to stay megacore-safe.)
        pad8_ref[...] = jnp.zeros_like(pad8_ref)
        pad32_ref[...] = jnp.zeros_like(pad32_ref)

        outx = [acc_ref[0] + b1_ref[0], acc_ref[1] + b1_ref[1]]     # add `one` bias

        # gap_conv2(2, 2, 8): AdaptiveAvgPool2d(8) as P @ X @ P^T -> CBS -> CBS
        pooled = []
        for c in range(2):
            tt = jnp.dot(pm_ref[...], outx[c], preferred_element_type=jnp.float32)
            pooled.append(jnp.dot(tt, pmt_ref[...],
                                  preferred_element_type=jnp.float32))
        h = _conv3x3_planes(pooled, wc1_ref, bc1_ref, pad8_ref, 2, 2, 8)
        h = [_sigmoid(p) for p in h]
        h = _conv3x3_planes(h, wc2_ref, bc2_ref, pad8_ref, 2, 2, 8)
        h = [_sigmoid(p) for p in h]

        # up_conv2_bil(32): bilinear 8->32 (align_corners=True) as U @ X @ U^T,
        # followed by the residual add with outx.
        s = []
        for c in range(2):
            tt = jnp.dot(um_ref[...], h[c], preferred_element_type=jnp.float32)
            s.append(jnp.dot(tt, umt_ref[...], preferred_element_type=jnp.float32)
                     + outx[c])

        # gap_conv2(2, 1, 32): AdaptiveAvgPool2d(32) on a 32x32 map is the identity.
        h3 = _conv3x3_planes(s, wc3_ref, bc3_ref, pad32_ref, 2, 2, 32)
        h3 = [_sigmoid(p) for p in h3]
        h4 = _conv3x3_planes(h3, wc4_ref, bc4_ref, pad32_ref, 2, 1, 32)
        o_ref[...] = _sigmoid(h4[0]).reshape(1, 1, 32, 32)


# -------------------------- host-side constant builders ---------------------

def _pool_matrix(out_size, in_size):
    """Uniform adaptive-average-pool matrix (in_size % out_size == 0)."""
    assert in_size % out_size == 0
    k = in_size // out_size
    p = np.zeros((out_size, in_size), np.float32)
    for i in range(out_size):
        p[i, i * k:(i + 1) * k] = 1.0 / k
    return p


def _bilinear_matrix(out_size, in_size):
    """Row-interpolation matrix of nn.UpsamplingBilinear2d (align_corners=True)."""
    u = np.zeros((out_size, in_size), np.float32)
    for i in range(out_size):
        src = i * (in_size - 1) / (out_size - 1) if out_size > 1 else 0.0
        i0 = min(int(np.floor(src)), in_size - 1)
        i1 = min(i0 + 1, in_size - 1)
        f = src - i0
        u[i, i0] += 1.0 - f
        u[i, i1] += f
    return u


def _fold_cbs(p, eps=1e-5):
    """Fold conv bias + eval-mode BatchNorm into the conv weights / bias."""
    scale = p["g"] / jnp.sqrt(p["v"] + eps)                       # (Cout,)
    w = (p["w"].astype(jnp.float32) * scale[:, None, None, None]).reshape(-1)
    b = ((p["b"] - p["m"]) * scale + p["bt"]).astype(jnp.float32)
    return w, b


def _pick_channel_block(H, W, cap_bytes):
    """Largest channel block (divisor of 64) whose x-block + W2-block fit cap_bytes.

    The W2 block's minor dim is c_blk*H, which must be a multiple of 128 unless the
    block spans all 64 channels (then it equals the full array dim).  The x block
    pads W up to 128 lanes in VMEM for f32.
    """
    w_pad = ((W + 127) // 128) * 128
    valid = [cb for cb in (64, 32, 16, 8, 4, 2, 1)
             if cb == 64 or (cb * H) % 128 == 0]
    for cb in valid:                       # descending -> largest block under cap
        if cb * H * (w_pad + 64) * 4 <= cap_bytes:
            return cb
    return valid[-1]                       # smallest legal block as a fallback


# ------------------------------- wrapper -------------------------------------

def subject_attention1_forward(x, params, *, block_cap_bytes=6 * (1 << 20)):
    """subject_attention1 forward (eval-mode BatchNorm). x: (N, 64, H, W) NCHW."""
    N, C, H, W = x.shape
    assert C == 64, "subject_attention1 hard-codes 64 input channels"
    assert H % 32 == 0 and W % 32 == 0, "spatial dims must be multiples of 32"
    x = x.astype(jnp.float32)

    # Stage-1 constants: W-pool matrix and the (one_w x PH) combined H-pool matrix.
    ph = jnp.asarray(_pool_matrix(32, H))            # (32, H)
    pw_t = jnp.asarray(_pool_matrix(32, W).T)        # (W, 32)
    w_one = params["one_w"].reshape(2, 64).astype(jnp.float32)
    # W2[(o,p), (c,h)] = one_w[o,c] * PH[p,h]
    w2 = jnp.einsum("oc,ph->opch", w_one, ph).reshape(64, 64 * H)
    b1 = params["one_b"].reshape(2).astype(jnp.float32)

    # Stage-2 constants.
    pm = jnp.asarray(_pool_matrix(8, 32))            # (8, 32)
    pmt = jnp.asarray(_pool_matrix(8, 32).T)         # (32, 8)
    um = jnp.asarray(_bilinear_matrix(32, 8))        # (32, 8)
    umt = jnp.asarray(_bilinear_matrix(32, 8).T)     # (8, 32)
    wc1, bc1 = _fold_cbs(params["c2a"])
    wc2, bc2 = _fold_cbs(params["c2b"])
    wc3, bc3 = _fold_cbs(params["c4a"])
    wc4, bc4 = _fold_cbs(params["c4b"])

    c_blk = _pick_channel_block(H, W, block_cap_bytes)
    n_cblk = 64 // c_blk

    smem = pl.BlockSpec(memory_space=pltpu.MemorySpace.SMEM)
    out = pl.pallas_call(
        _fused_kernel,
        out_shape=jax.ShapeDtypeStruct((N, 1, 32, 32), jnp.float32),
        grid_spec=pltpu.PrefetchScalarGridSpec(
            num_scalar_prefetch=0,
            # NOTE: the channel-block axis must stay the innermost ("arbitrary")
            # grid axis -- the VMEM accumulator and the output block are resident
            # across it.  The batch axis stays leading + "parallel" for megacore.
            grid=(N, n_cblk),
            in_specs=[
                pl.BlockSpec((1, c_blk, H, W), lambda n, cb: (n, cb, 0, 0)),
                pl.BlockSpec((W, 32), lambda n, cb: (0, 0)),
                pl.BlockSpec((64, c_blk * H), lambda n, cb: (0, cb)),
                smem,                                             # one_b
                pl.BlockSpec((8, 32), lambda n, cb: (0, 0)),
                pl.BlockSpec((32, 8), lambda n, cb: (0, 0)),
                pl.BlockSpec((32, 8), lambda n, cb: (0, 0)),
                pl.BlockSpec((8, 32), lambda n, cb: (0, 0)),
            ] + [smem] * 8,
            out_specs=pl.BlockSpec((1, 1, 32, 32), lambda n, cb: (n, 0, 0, 0)),
            scratch_shapes=[
                pltpu.VMEM((2, 32, 32), jnp.float32),   # outx accumulator
                pltpu.VMEM((2, 10, 10), jnp.float32),   # padded 8x8 conv buffer
                pltpu.VMEM((2, 34, 34), jnp.float32),   # padded 32x32 conv buffer
            ],
        ),
        compiler_params=pltpu.CompilerParams(
            dimension_semantics=("parallel", "arbitrary"),
            vmem_limit_bytes=40 * (1 << 20),   # safe on v5e/v6e (128 MiB) and v7x (64 MiB)
        ),
    )(x, pw_t, w2, b1, pm, pmt, um, umt,
      wc1, bc1, wc2, bc2, wc3, bc3, wc4, bc4)
    return out


# ---------------- pure-JAX reference (NCHW, mirrors PyTorch) -----------------

def _ref_forward(x, params):
    hp = jax.lax.Precision.HIGHEST

    def conv2d(y, w, b, pad):
        z = jax.lax.conv_general_dilated(
            y, w, window_strides=(1, 1), padding=((pad, pad), (pad, pad)),
            dimension_numbers=("NCHW", "OIHW", "NCHW"), precision=hp)
        return z + b[None, :, None, None]

    def bn_eval(y, p, eps=1e-5):
        return ((y - p["m"][None, :, None, None])
                / jnp.sqrt(p["v"][None, :, None, None] + eps)
                * p["g"][None, :, None, None] + p["bt"][None, :, None, None])

    def cbs(y, p):
        return jax.nn.sigmoid(bn_eval(conv2d(y, p["w"], p["b"], 1), p))

    def adaptive_pool(y, out):
        n, c, h, w = y.shape
        return y.reshape(n, c, out, h // out, out, w // out).mean(axis=(3, 5))

    def up_bilinear_align_corners(y, out):
        n, c, h, w = y.shape
        ys = np.arange(out) * (h - 1) / (out - 1)
        xs = np.arange(out) * (w - 1) / (out - 1)
        y0 = np.clip(np.floor(ys).astype(np.int32), 0, h - 1)
        y1 = np.clip(y0 + 1, 0, h - 1)
        x0 = np.clip(np.floor(xs).astype(np.int32), 0, w - 1)
        x1 = np.clip(x0 + 1, 0, w - 1)
        fy = jnp.asarray((ys - y0).astype(np.float32))[None, None, :, None]
        fx = jnp.asarray((xs - x0).astype(np.float32))[None, None, None, :]
        rows = y[:, :, y0, :] * (1.0 - fy) + y[:, :, y1, :] * fy
        return rows[:, :, :, x0] * (1.0 - fx) + rows[:, :, :, x1] * fx

    out1 = conv2d(x, params["one_w"], params["one_b"], 0)    # self.one
    outx = adaptive_pool(out1, 32)                           # self.conv1
    t = adaptive_pool(outx, 8)                               # conv2.gap
    t = cbs(t, params["c2a"])                                # conv2.conv1
    t = cbs(t, params["c2b"])                                # conv2.conv2
    t = up_bilinear_align_corners(t, 32)                     # self.conv3
    t = t + outx                                             # torch.add
    t = adaptive_pool(t, 32)                                 # conv4.gap (identity)
    t = cbs(t, params["c4a"])                                # conv4.conv1
    t = cbs(t, params["c4b"])                                # conv4.conv2
    return t


# ----------------------------------- main ------------------------------------

def _cbs_init(key, cin, cout):
    kk = jax.random.split(key, 6)
    return {
        "w": jax.random.normal(kk[0], (cout, cin, 3, 3), jnp.float32) * 0.3,
        "b": 0.1 * jax.random.normal(kk[1], (cout,), jnp.float32),
        "g": 1.0 + 0.1 * jax.random.normal(kk[2], (cout,), jnp.float32),
        "bt": 0.1 * jax.random.normal(kk[3], (cout,), jnp.float32),
        "m": 0.1 * jax.random.normal(kk[4], (cout,), jnp.float32),
        "v": jnp.abs(jax.random.normal(kk[5], (cout,), jnp.float32)) + 0.5,
    }


if __name__ == "__main__":
    N, C, H, W = 2, 64, 64, 64
    key = jax.random.PRNGKey(0)
    kx, kw1, kb1, k2a, k2b, k4a, k4b = jax.random.split(key, 7)

    x = jax.random.normal(kx, (N, C, H, W), jnp.float32)
    params = {
        "one_w": jax.random.normal(kw1, (2, 64, 1, 1), jnp.float32) * 0.1,
        "one_b": 0.1 * jax.random.normal(kb1, (2,), jnp.float32),
        "c2a": _cbs_init(k2a, 2, 2),
        "c2b": _cbs_init(k2b, 2, 2),
        "c4a": _cbs_init(k4a, 2, 2),
        "c4b": _cbs_init(k4b, 2, 1),
    }

    ref = jax.block_until_ready(_ref_forward(x, params))

    # Default block cap: the whole 64-channel slab per image fits -> grid (N, 1).
    out = jax.block_until_ready(subject_attention1_forward(x, params))
    assert out.shape == (N, 1, 32, 32), out.shape
    np.testing.assert_allclose(np.asarray(out), np.asarray(ref), rtol=2e-4, atol=2e-4)

    # Tiny block cap: forces channel tiling (c_blk=16 -> grid (N, 4)) so the
    # cross-block accumulation + epilogue path is also exercised.
    out_tiled = jax.block_until_ready(
        subject_attention1_forward(x, params, block_cap_bytes=1 << 20))
    np.testing.assert_allclose(np.asarray(out_tiled), np.asarray(ref),
                               rtol=2e-4, atol=2e-4)

    print("KERNEL_OK")
</pallas_src>

<mosaic_0001>
module attributes {stable_mosaic.version = 11 : i64} {
  func.func @_fused_kernel(%arg0: i32, %arg1: i32, %arg2: memref<1x64x64x64xf32, #tpu.memory_space<vmem>>, %arg3: memref<64x32xf32, #tpu.memory_space<vmem>>, %arg4: memref<64x4096xf32, #tpu.memory_space<vmem>>, %arg5: memref<2xf32, #tpu.memory_space<smem>>, %arg6: memref<8x32xf32, #tpu.memory_space<vmem>>, %arg7: memref<32x8xf32, #tpu.memory_space<vmem>>, %arg8: memref<32x8xf32, #tpu.memory_space<vmem>>, %arg9: memref<8x32xf32, #tpu.memory_space<vmem>>, %arg10: memref<36xf32, #tpu.memory_space<smem>>, %arg11: memref<2xf32, #tpu.memory_space<smem>>, %arg12: memref<36xf32, #tpu.memory_space<smem>>, %arg13: memref<2xf32, #tpu.memory_space<smem>>, %arg14: memref<36xf32, #tpu.memory_space<smem>>, %arg15: memref<2xf32, #tpu.memory_space<smem>>, %arg16: memref<18xf32, #tpu.memory_space<smem>>, %arg17: memref<1xf32, #tpu.memory_space<smem>>, %arg18: memref<1x1x32x32xf32, #tpu.memory_space<vmem>>, %arg19: memref<2x32x32xf32, #tpu.memory_space<vmem>>, %arg20: memref<2x10x10xf32, #tpu.memory_space<vmem>>, %arg21: memref<2x34x34xf32, #tpu.memory_space<vmem>>) attributes {dimension_semantics = [#tpu.dimension_semantics<parallel>, #tpu.dimension_semantics<arbitrary>], iteration_bounds = array<i64: 2, 1>, scalar_prefetch = 0 : i64, scratch_operands = 3 : i64, tpu.core_type = #tpu.core_type<tc>, window_params = [{transform_indices = @transform_0, window_bounds = array<i64: 1, 64, 64, 64>}, {pipeline_mode = #tpu.pipeline_mode<synchronous>, transform_indices = @transform_1, window_bounds = array<i64: 64, 32>}, {transform_indices = @transform_2, window_bounds = array<i64: 64, 4096>}, {transform_indices = @transform_3, window_bounds = array<i64: 2>}, {pipeline_mode = #tpu.pipeline_mode<synchronous>, transform_indices = @transform_4, window_bounds = array<i64: 8, 32>}, {pipeline_mode = #tpu.pipeline_mode<synchronous>, transform_indices = @transform_5, window_bounds = array<i64: 32, 8>}, {pipeline_mode = #tpu.pipeline_mode<synchronous>, transform_indices = @transform_6, window_bounds = array<i64: 32, 8>}, {pipeline_mode = #tpu.pipeline_mode<synchronous>, transform_indices = @transform_7, window_bounds = array<i64: 8, 32>}, {transform_indices = @transform_8, window_bounds = array<i64: 36>}, {transform_indices = @transform_9, window_bounds = array<i64: 2>}, {transform_indices = @transform_10, window_bounds = array<i64: 36>}, {transform_indices = @transform_11, window_bounds = array<i64: 2>}, {transform_indices = @transform_12, window_bounds = array<i64: 36>}, {transform_indices = @transform_13, window_bounds = array<i64: 2>}, {transform_indices = @transform_14, window_bounds = array<i64: 18>}, {transform_indices = @transform_15, window_bounds = array<i64: 1>}, {transform_indices = @transform_16, window_bounds = array<i64: 1, 1, 32, 32>}]} {
    %c0_i32 = arith.constant 0 : i32
    %0 = arith.cmpi eq, %arg1, %c0_i32 : i32
    %1 = arith.extui %0 : i1 to i32
    %c0_i32_0 = arith.constant 0 : i32
    %2 = arith.cmpi ne, %1, %c0_i32_0 : i32
    scf.if %2 {
      %cst_17 = arith.constant 0.000000e+00 : f32
      %17 = vector.broadcast %cst_17 : f32 to vector<2x32x32xf32>
      %c0_18 = arith.constant 0 : index
      %c0_19 = arith.constant 0 : index
      %c0_20 = arith.constant 0 : index
      %18 = vector.load %arg19[%c0_18, %c0_19, %c0_20] : memref<2x32x32xf32, #tpu.memory_space<vmem>>, vector<2x32x32xf32>
      tpu.vector_store %arg19[%c0_18, %c0_19, %c0_20], %17 {strides = array<i32>} : memref<2x32x32xf32, #tpu.memory_space<vmem>>, vector<2x32x32xf32>,
    } else {
    }
    %c0 = arith.constant 0 : index
    %c0_1 = arith.constant 0 : index
    %c0_2 = arith.constant 0 : index
    %c0_3 = arith.constant 0 : index
    %3 = vector.load %arg2[%c0, %c0_1, %c0_2, %c0_3] : memref<1x64x64x64xf32, #tpu.memory_space<vmem>>, vector<1x64x64x64xf32>
    %4 = vector.shape_cast %3 : vector<1x64x64x64xf32> to vector<64x64x64xf32>
    %5 = vector.shape_cast %4 : vector<64x64x64xf32> to vector<4096x64xf32>
    %c0_4 = arith.constant 0 : index
    %c0_5 = arith.constant 0 : index
    %6 = vector.load %arg3[%c0_4, %c0_5] : memref<64x32xf32, #tpu.memory_space<vmem>>, vector<64x32xf32>
    %cst = arith.constant dense<0.000000e+00> : vector<4096x32xf32>
    %7 = tpu.matmul %5, %6, %cst {dimension_numbers = #tpu.dot_dimension_numbers<[1], [0], [0], [1], [0, 0, 1, 1], [], []>} : vector<4096x64xf32>, vector<64x32xf32>, vector<4096x32xf32> -> vector<4096x32xf32>
    %c0_6 = arith.constant 0 : index
    %c0_7 = arith.constant 0 : index
    %8 = vector.load %arg4[%c0_6, %c0_7] : memref<64x4096xf32, #tpu.memory_space<vmem>>, vector<64x4096xf32>
    %cst_8 = arith.constant dense<0.000000e+00> : vector<64x32xf32>
    %9 = tpu.matmul %8, %7, %cst_8 {dimension_numbers = #tpu.dot_dimension_numbers<[1], [0], [0], [1], [0, 0, 1, 1], [], []>} : vector<64x4096xf32>, vector<4096x32xf32>, vector<64x32xf32> -> vector<64x32xf32>
    %c0_9 = arith.constant 0 : index
    %c0_10 = arith.constant 0 : index
    %c0_11 = arith.constant 0 : index
    %10 = vector.load %arg19[%c0_9, %c0_10, %c0_11] : memref<2x32x32xf32, #tpu.memory_space<vmem>>, vector<2x32x32xf32>
    %11 = vector.shape_cast %9 : vector<64x32xf32> to vector<2x32x32xf32>
    %12 = arith.addf %10, %11 : vector<2x32x32xf32>
    %c0_12 = arith.constant 0 : index
    %c0_13 = arith.constant 0 : index
    %c0_14 = arith.constant 0 : index
    %13 = vector.load %arg19[%c0_12, %c0_13, %c0_14] : memref<2x32x32xf32, #tpu.memory_space<vmem>>, vector<2x32x32xf32>
    tpu.vector_store %arg19[%c0_12, %c0_13, %c0_14], %12 {strides = array<i32>} : memref<2x32x32xf32, #tpu.memory_space<vmem>>, vector<2x32x32xf32>,
    %c0_i32_15 = arith.constant 0 : i32
    %14 = arith.cmpi eq, %arg1, %c0_i32_15 : i32
    %15 = arith.extui %14 : i1 to i32
    %c0_i32_16 = arith.constant 0 : i32
    %16 = arith.cmpi ne, %15, %c0_i32_16 : i32
    scf.if %16 {
      %cst_17 = arith.constant 0.000000e+00 : f32
      %17 = vector.broadcast %cst_17 : f32 to vector<2x10x10xf32>
      %c0_18 = arith.constant 0 : index
      %c0_19 = arith.constant 0 : index
      %c0_20 = arith.constant 0 : index
      %18 = vector.load %arg20[%c0_18, %c0_19, %c0_20] : memref<2x10x10xf32, #tpu.memory_space<vmem>>, vector<2x10x10xf32>
      tpu.vector_store %arg20[%c0_18, %c0_19, %c0_20], %17 {strides = array<i32>} : memref<2x10x10xf32, #tpu.memory_space<vmem>>, vector<2x10x10xf32>,
      %cst_21 = arith.constant 0.000000e+00 : f32
      %19 = vector.broadcast %cst_21 : f32 to vector<2x34x34xf32>
      %c0_22 = arith.constant 0 : index
      %c0_23 = arith.constant 0 : index
      %c0_24 = arith.constant 0 : index
      %20 = vector.load %arg21[%c0_22, %c0_23, %c0_24] : memref<2x34x34xf32, #tpu.memory_space<vmem>>, vector<2x34x34xf32>
      tpu.vector_store %arg21[%c0_22, %c0_23, %c0_24], %19 {strides = array<i32>} : memref<2x34x34xf32, #tpu.memory_space<vmem>>, vector<2x34x34xf32>,
      %c0_25 = arith.constant 0 : index
      %c0_26 = arith.constant 0 : index
      %c0_27 = arith.constant 0 : index
      %21 = vector.load %arg19[%c0_25, %c0_26, %c0_27] : memref<2x32x32xf32, #tpu.memory_space<vmem>>, vector<1x32x32xf32>
      %22 = vector.shape_cast %21 : vector<1x32x32xf32> to vector<32x32xf32>
      %c0_28 = arith.constant 0 : index
      %23 = memref.load %arg5[%c0_28] : memref<2xf32, #tpu.memory_space<smem>>
      %24 = vector.broadcast %23 : f32 to vector<32x32xf32>
      %25 = arith.addf %22, %24 : vector<32x32xf32>
      %c1 = arith.constant 1 : index
      %c0_29 = arith.constant 0 : index
      %c0_30 = arith.constant 0 : index
      %26 = vector.load %arg19[%c1, %c0_29, %c0_30] : memref<2x32x32xf32, #tpu.memory_space<vmem>>, vector<1x32x32xf32>
      %27 = vector.shape_cast %26 : vector<1x32x32xf32> to vector<32x32xf32>
      %c1_31 = arith.constant 1 : index
      %28 = memref.load %arg5[%c1_31] : memref<2xf32, #tpu.memory_space<smem>>
      %29 = vector.broadcast %28 : f32 to vector<32x32xf32>
      %30 = arith.addf %27, %29 : vector<32x32xf32>
      %c0_32 = arith.constant 0 : index
      %c0_33 = arith.constant 0 : index
      %31 = vector.load %arg6[%c0_32, %c0_33] : memref<8x32xf32, #tpu.memory_space<vmem>>, vector<8x32xf32>
      %cst_34 = arith.constant dense<0.000000e+00> : vector<8x32xf32>
      %32 = tpu.matmul %31, %25, %cst_34 {dimension_numbers = #tpu.dot_dimension_numbers<[1], [0], [0], [1], [0, 0, 1, 1], [], []>} : vector<8x32xf32>, vector<32x32xf32>, vector<8x32xf32> -> vector<8x32xf32>
      %c0_35 = arith.constant 0 : index
      %c0_36 = arith.constant 0 : index
      %33 = vector.load %arg7[%c0_35, %c0_36] : memref<32x8xf32, #tpu.memory_space<vmem>>, vector<32x8xf32>
      %cst_37 = arith.constant dense<0.000000e+00> : vector<8x8xf32>
      %34 = tpu.matmul %32, %33, %cst_37 {dimension_numbers = #tpu.dot_dimension_numbers<[1], [0], [0], [1], [0, 0, 1, 1], [], []>} : vector<8x32xf32>, vector<32x8xf32>, vector<8x8xf32> -> vector<8x8xf32>
      %c0_38 = arith.constant 0 : index
      %c0_39 = arith.constant 0 : index
      %35 = vector.load %arg6[%c0_38, %c0_39] : memref<8x32xf32, #tpu.memory_space<vmem>>, vector<8x32xf32>
      %cst_40 = arith.constant dense<0.000000e+00> : vector<8x32xf32>
      %36 = tpu.matmul %35, %30, %cst_40 {dimension_numbers = #tpu.dot_dimension_numbers<[1], [0], [0], [1], [0, 0, 1, 1], [], []>} : vector<8x32xf32>, vector<32x32xf32>, vector<8x32xf32> -> vector<8x32xf32>
      %c0_41 = arith.constant 0 : index
      %c0_42 = arith.constant 0 : index
      %37 = vector.load %arg7[%c0_41, %c0_42] : memref<32x8xf32, #tpu.memory_space<vmem>>, vector<32x8xf32>
      %cst_43 = arith.constant dense<0.000000e+00> : vector<8x8xf32>
      %38 = tpu.matmul %36, %37, %cst_43 {dimension_numbers = #tpu.dot_dimension_numbers<[1], [0], [0], [1], [0, 0, 1, 1], [], []>} : vector<8x32xf32>, vector<32x8xf32>, vector<8x8xf32> -> vector<8x8xf32>
      %c0_44 = arith.constant 0 : index
      %c1_45 = arith.constant 1 : index
      %c1_46 = arith.constant 1 : index
      %39 = vector.load %arg20[%c0_44, %c1_45, %c1_46] : memref<2x10x10xf32, #tpu.memory_space<vmem>>, vector<1x8x8xf32>
      %40 = vector.shape_cast %39 : vector<1x8x8xf32> to vector<8x8xf32>
      %41 = vector.shape_cast %34 : vector<8x8xf32> to vector<1x8x8xf32>
      tpu.vector_store %arg20[%c0_44, %c1_45, %c1_46], %41 {strides = array<i32>} : memref<2x10x10xf32, #tpu.memory_space<vmem>>, vector<1x8x8xf32>,
      %c1_47 = arith.constant 1 : index
      %c1_48 = arith.constant 1 : index
      %c1_49 = arith.constant 1 : index
      %42 = vector.load %arg20[%c1_47, %c1_48, %c1_49] : memref<2x10x10xf32, #tpu.memory_space<vmem>>, vector<1x8x8xf32>
      %43 = vector.shape_cast %42 : vector<1x8x8xf32> to vector<8x8xf32>
      %44 = vector.shape_cast %38 : vector<8x8xf32> to vector<1x8x8xf32>
      tpu.vector_store %arg20[%c1_47, %c1_48, %c1_49], %44 {strides = array<i32>} : memref<2x10x10xf32, #tpu.memory_space<vmem>>, vector<1x8x8xf32>,
      %cst_50 = arith.constant 0.000000e+00 : f32
      %45 = vector.broadcast %cst_50 : f32 to vector<8x8xf32>
      %c0_51 = arith.constant 0 : index
      %46 = memref.load %arg10[%c0_51] : memref<36xf32, #tpu.memory_space<smem>>
      %c0_52 = arith.constant 0 : index
      %c0_53 = arith.constant 0 : index
      %c0_54 = arith.constant 0 : index
      %47 = vector.load %arg20[%c0_52, %c0_53, %c0_54] : memref<2x10x10xf32, #tpu.memory_space<vmem>>, vector<1x8x8xf32>
      %48 = vector.shape_cast %47 : vector<1x8x8xf32> to vector<8x8xf32>
      %49 = vector.broadcast %46 : f32 to vector<8x8xf32>
      %50 = arith.mulf %49, %48 : vector<8x8xf32>
      %51 = arith.addf %45, %50 : vector<8x8xf32>
      %c1_55 = arith.constant 1 : index
      %52 = memref.load %arg10[%c1_55] : memref<36xf32, #tpu.memory_space<smem>>
      %c0_56 = arith.constant 0 : index
      %c0_57 = arith.constant 0 : index
      %c1_58 = arith.constant 1 : index
      %53 = vector.load %arg20[%c0_56, %c0_57, %c1_58] : memref<2x10x10xf32, #tpu.memory_space<vmem>>, vector<1x8x8xf32>
      %54 = vector.shape_cast %53 : vector<1x8x8xf32> to vector<8x8xf32>
      %55 = vector.broadcast %52 : f32 to vector<8x8xf32>
      %56 = arith.mulf %55, %54 : vector<8x8xf32>
      %57 = arith.addf %51, %56 : vector<8x8xf32>
      %c2 = arith.constant 2 : index
      %58 = memref.load %arg10[%c2] : memref<36xf32, #tpu.memory_space<smem>>
      %c0_59 = arith.constant 0 : index
      %c0_60 = arith.constant 0 : index
      %c2_61 = arith.constant 2 : index
      %59 = vector.load %arg20[%c0_59, %c0_60, %c2_61] : memref<2x10x10xf32, #tpu.memory_space<vmem>>, vector<1x8x8xf32>
      %60 = vector.shape_cast %59 : vector<1x8x8xf32> to vector<8x8xf32>
      %61 = vector.broadcast %58 : f32 to vector<8x8xf32>
      %62 = arith.mulf %61, %60 : vector<8x8xf32>
      %63 = arith.addf %57, %62 : vector<8x8xf32>
      %c3 = arith.constant 3 : index
      %64 = memref.load %arg10[%c3] : memref<36xf32, #tpu.memory_space<smem>>
      %c0_62 = arith.constant 0 : index
      %c1_63 = arith.constant 1 : index
      %c0_64 = arith.constant 0 : index
      %65 = vector.load %arg20[%c0_62, %c1_63, %c0_64] : memref<2x10x10xf32, #tpu.memory_space<vmem>>, vector<1x8x8xf32>
      %66 = vector.shape_cast %65 : vector<1x8x8xf32> to vector<8x8xf32>
      %67 = vector.broadcast %64 : f32 to vector<8x8xf32>
      %68 = arith.mulf %67, %66 : vector<8x8xf32>
      %69 = arith.addf %63, %68 : vector<8x8xf32>
      %c4 = arith.constant 4 : index
      %70 = memref.load %arg10[%c4] : memref<36xf32, #tpu.memory_space<smem>>
      %c0_65 = arith.constant 0 : index
      %c1_66 = arith.constant 1 : index
      %c1_67 = arith.constant 1 : index
      %71 = vector.load %arg20[%c0_65, %c1_66, %c1_67] : memref<2x10x10xf32, #tpu.memory_space<vmem>>, vector<1x8x8xf32>
      %72 = vector.shape_cast %71 : vector<1x8x8xf32> to vector<8x8xf32>
      %73 = vector.broadcast %70 : f32 to vector<8x8xf32>
      %74 = arith.mulf %73, %72 : vector<8x8xf32>
      %75 = arith.addf %69, %74 : vector<8x8xf32>
      %c5 = arith.constant 5 : index
      %76 = memref.load %arg10[%c5] : memref<36xf32, #tpu.memory_space<smem>>
      %c0_68 = arith.constant 0 : index
      %c1_69 = arith.constant 1 : index
      %c2_70 = arith.constant 2 : index
      %77 = vector.load %arg20[%c0_68, %c1_69, %c2_70] : memref<2x10x10xf32, #tpu.memory_space<vmem>>, vector<1x8x8xf32>
      %78 = vector.shape_cast %77 : vector<1x8x8xf32> to vector<8x8xf32>
      %79 = vector.broadcast %76 : f32 to vector<8x8xf32>
      %80 = arith.mulf %79, %78 : vector<8x8xf32>
      %81 = arith.addf %75, %80 : vector<8x8xf32>
      %c6 = arith.constant 6 : index
      %82 = memref.load %arg10[%c6] : memref<36xf32, #tpu.memory_space<smem>>
      %c0_71 = arith.constant 0 : index
      %c2_72 = arith.constant 2 : index
      %c0_73 = arith.constant 0 : index
      %83 = vector.load %arg20[%c0_71, %c2_72, %c0_73] : memref<2x10x10xf32, #tpu.memory_space<vmem>>, vector<1x8x8xf32>
      %84 = vector.shape_cast %83 : vector<1x8x8xf32> to vector<8x8xf32>
      %85 = vector.broadcast %82 : f32 to vector<8x8xf32>
      %86 = arith.mulf %85, %84 : vector<8x8xf32>
      %87 = arith.addf %81, %86 : vector<8x8xf32>
      %c7 = arith.constant 7 : index
      %88 = memref.load %arg10[%c7] : memref<36xf32, #tpu.memory_space<smem>>
      %c0_74 = arith.constant 0 : index
      %c2_75 = arith.constant 2 : index
      %c1_76 = arith.constant 1 : index
      %89 = vector.load %arg20[%c0_74, %c2_75, %c1_76] : memref<2x10x10xf32, #tpu.memory_space<vmem>>, vector<1x8x8xf32>
      %90 = vector.shape_cast %89 : vector<1x8x8xf32> to vector<8x8xf32>
      %91 = vector.broadcast %88 : f32 to vector<8x8xf32>
      %92 = arith.mulf %91, %90 : vector<8x8xf32>
      %93 = arith.addf %87, %92 : vector<8x8xf32>
      %c8 = arith.constant 8 : index
      %94 = memref.load %arg10[%c8] : memref<36xf32, #tpu.memory_space<smem>>
      %c0_77 = arith.constant 0 : index
      %c2_78 = arith.constant 2 : index
      %c2_79 = arith.constant 2 : index
      %95 = vector.load %arg20[%c0_77, %c2_78, %c2_79] : memref<2x10x10xf32, #tpu.memory_space<vmem>>, vector<1x8x8xf32>
      %96 = vector.shape_cast %95 : vector<1x8x8xf32> to vector<8x8xf32>
      %97 = vector.broadcast %94 : f32 to vector<8x8xf32>
      %98 = arith.mulf %97, %96 : vector<8x8xf32>
      %99 = arith.addf %93, %98 : vector<8x8xf32>
      %c9 = arith.constant 9 : index
      %100 = memref.load %arg10[%c9] : memref<36xf32, #tpu.memory_space<smem>>
      %c1_80 = arith.constant 1 : index
      %c0_81 = arith.constant 0 : index
      %c0_82 = arith.constant 0 : index
      %101 = vector.load %arg20[%c1_80, %c0_81, %c0_82] : memref<2x10x10xf32, #tpu.memory_space<vmem>>, vector<1x8x8xf32>
      %102 = vector.shape_cast %101 : vector<1x8x8xf32> to vector<8x8xf32>
      %103 = vector.broadcast %100 : f32 to vector<8x8xf32>
      %104 = arith.mulf %103, %102 : vector<8x8xf32>
      %105 = arith.addf %99, %104 : vector<8x8xf32>
      %c10 = arith.constant 10 : index
      %106 = memref.load %arg10[%c10] : memref<36xf32, #tpu.memory_space<smem>>
      %c1_83 = arith.constant 1 : index
      %c0_84 = arith.constant 0 : index
      %c1_85 = arith.constant 1 : index
      %107 = vector.load %arg20[%c1_83, %c0_84, %c1_85] : memref<2x10x10xf32, #tpu.memory_space<vmem>>, vector<1x8x8xf32>
      %108 = vector.shape_cast %107 : vector<1x8x8xf32> to vector<8x8xf32>
      %109 = vector.broadcast %106 : f32 to vector<8x8xf32>
      %110 = arith.mulf %109, %108 : vector<8x8xf32>
      %111 = arith.addf %105, %110 : vector<8x8xf32>
      %c11 = arith.constant 11 : index
      %112 = memref.load %arg10[%c11] : memref<36xf32, #tpu.memory_space<smem>>
      %c1_86 = arith.constant 1 : index
      %c0_87 = arith.constant 0 : index
      %c2_88 = arith.constant 2 : index
      %113 = vector.load %arg20[%c1_86, %c0_87, %c2_88] : memref<2x10x10xf32, #tpu.memory_space<vmem>>, vector<1x8x8xf32>
      %114 = vector.shape_cast %113 : vector<1x8x8xf32> to vector<8x8xf32>
      %115 = vector.broadcast %112 : f32 to vector<8x8xf32>
      %116 = arith.mulf %115, %114 : vector<8x8xf32>
      %117 = arith.addf %111, %116 : vector<8x8xf32>
      %c12 = arith.constant 12 : index
      %118 = memref.load %arg10[%c12] : memref<36xf32, #tpu.memory_space<smem>>
      %c1_89 = arith.constant 1 : index
      %c1_90 = arith.constant 1 : index
      %c0_91 = arith.constant 0 : index
      %119 = vector.load %arg20[%c1_89, %c1_90, %c0_91] : memref<2x10x10xf32, #tpu.memory_space<vmem>>, vector<1x8x8xf32>
      %120 = vector.shape_cast %119 : vector<1x8x8xf32> to vector<8x8xf32>
      %121 = vector.broadcast %118 : f32 to vector<8x8xf32>
      %122 = arith.mulf %121, %120 : vector<8x8xf32>
      %123 = arith.addf %117, %122 : vector<8x8xf32>
      %c13 = arith.constant 13 : index
      %124 = memref.load %arg10[%c13] : memref<36xf32, #tpu.memory_space<smem>>
      %c1_92 = arith.constant 1 : index
      %c1_93 = arith.constant 1 : index
      %c1_94 = arith.constant 1 : index
      %125 = vector.load %arg20[%c1_92, %c1_93, %c1_94] : memref<2x10x10xf32, #tpu.memory_space<vmem>>, vector<1x8x8xf32>
      %126 = vector.shape_cast %125 : vector<1x8x8xf32> to vector<8x8xf32>
      %127 = vector.broadcast %124 : f32 to vector<8x8xf32>
      %128 = arith.mulf %127, %126 : vector<8x8xf32>
      %129 = arith.addf %123, %128 : vector<8x8xf32>
      %c14 = arith.constant 14 : index
      %130 = memref.load %arg10[%c14] : memref<36xf32, #tpu.memory_space<smem>>
      %c1_95 = arith.constant 1 : index
      %c1_96 = arith.constant 1 : index
      %c2_97 = arith.constant 2 : index
      %131 = vector.load %arg20[%c1_95, %c1_96, %c2_97] : memref<2x10x10xf32, #tpu.memory_space<vmem>>, vector<1x8x8xf32>
      %132 = vector.shape_cast %131 : vector<1x8x8xf32> to vector<8x8xf32>
      %133 = vector.broadcast %130 : f32 to vector<8x8xf32>
      %134 = arith.mulf %133, %132 : vector<8x8xf32>
      %135 = arith.addf %129, %134 : vector<8x8xf32>
      %c15 = arith.constant 15 : index
      %136 = memref.load %arg10[%c15] : memref<36xf32, #tpu.memory_space<smem>>
      %c1_98 = arith.constant 1 : index
      %c2_99 = arith.constant 2 : index
      %c0_100 = arith.constant 0 : index
      %137 = vector.load %arg20[%c1_98, %c2_99, %c0_100] : memref<2x10x10xf32, #tpu.memory_space<vmem>>, vector<1x8x8xf32>
      %138 = vector.shape_cast %137 : vector<1x8x8xf32> to vector<8x8xf32>
      %139 = vector.broadcast %136 : f32 to vector<8x8xf32>
      %140 = arith.mulf %139, %138 : vector<8x8xf32>
      %141 = arith.addf %135, %140 : vector<8x8xf32>
      %c16 = arith.constant 16 : index
      %142 = memref.load %arg10[%c16] : memref<36xf32, #tpu.memory_space<smem>>
      %c1_101 = arith.constant 1 : index
      %c2_102 = arith.constant 2 : index
      %c1_103 = arith.constant 1 : index
      %143 = vector.load %arg20[%c1_101, %c2_102, %c1_103] : memref<2x10x10xf32, #tpu.memory_space<vmem>>, vector<1x8x8xf32>
      %144 = vector.shape_cast %143 : vector<1x8x8xf32> to vector<8x8xf32>
      %145 = vector.broadcast %142 : f32 to vector<8x8xf32>
      %146 = arith.mulf %145, %144 : vector<8x8xf32>
      %147 = arith.addf %141, %146 : vector<8x8xf32>
      %c17 = arith.constant 17 : index
      %148 = memref.load %arg10[%c17] : memref<36xf32, #tpu.memory_space<smem>>
      %c1_104 = arith.constant 1 : index
      %c2_105 = arith.constant 2 : index
      %c2_106 = arith.constant 2 : index
      %149 = vector.load %arg20[%c1_104, %c2_105, %c2_106] : memref<2x10x10xf32, #tpu.memory_space<vmem>>, vector<1x8x8xf32>
      %150 = vector.shape_cast %149 : vector<1x8x8xf32> to vector<8x8xf32>
      %151 = vector.broadcast %148 : f32 to vector<8x8xf32>
      %152 = arith.mulf %151, %150 : vector<8x8xf32>
      %153 = arith.addf %147, %152 : vector<8x8xf32>
      %c0_107 = arith.constant 0 : index
      %154 = memref.load %arg11[%c0_107] : memref<2xf32, #tpu.memory_space<smem>>
      %155 = vector.broadcast %154 : f32 to vector<8x8xf32>
      %156 = arith.addf %153, %155 : vector<8x8xf32>
      %cst_108 = arith.constant 0.000000e+00 : f32
      %157 = vector.broadcast %cst_108 : f32 to vector<8x8xf32>
      %c18 = arith.constant 18 : index
      %158 = memref.load %arg10[%c18] : memref<36xf32, #tpu.memory_space<smem>>
      %c0_109 = arith.constant 0 : index
      %c0_110 = arith.constant 0 : index
      %c0_111 = arith.constant 0 : index
      %159 = vector.load %arg20[%c0_109, %c0_110, %c0_111] : memref<2x10x10xf32, #tpu.memory_space<vmem>>, vector<1x8x8xf32>
      %160 = vector.shape_cast %159 : vector<1x8x8xf32> to vector<8x8xf32>
      %161 = vector.broadcast %158 : f32 to vector<8x8xf32>
      %162 = arith.mulf %161, %160 : vector<8x8xf32>
      %163 = arith.addf %157, %162 : vector<8x8xf32>
      %c19 = arith.constant 19 : index
      %164 = memref.load %arg10[%c19] : memref<36xf32, #tpu.memory_space<smem>>
      %c0_112 = arith.constant 0 : index
      %c0_113 = arith.constant 0 : index
      %c1_114 = arith.constant 1 : index
      %165 = vector.load %arg20[%c0_112, %c0_113, %c1_114] : memref<2x10x10xf32, #tpu.memory_space<vmem>>, vector<1x8x8xf32>
      %166 = vector.shape_cast %165 : vector<1x8x8xf32> to vector<8x8xf32>
      %167 = vector.broadcast %164 : f32 to vector<8x8xf32>
      %168 = arith.mulf %167, %166 : vector<8x8xf32>
      %169 = arith.addf %163, %168 : vector<8x8xf32>
      %c20 = arith.constant 20 : index
      %170 = memref.load %arg10[%c20] : memref<36xf32, #tpu.memory_space<smem>>
      %c0_115 = arith.constant 0 : index
      %c0_116 = arith.constant 0 : index
      %c2_117 = arith.constant 2 : index
      %171 = vector.load %arg20[%c0_115, %c0_116, %c2_117] : memref<2x10x10xf32, #tpu.memory_space<vmem>>, vector<1x8x8xf32>
      %172 = vector.shape_cast %171 : vector<1x8x8xf32> to vector<8x8xf32>
      %173 = vector.broadcast %170 : f32 to vector<8x8xf32>
      %174 = arith.mulf %173, %172 : vector<8x8xf32>
      %175 = arith.addf %169, %174 : vector<8x8xf32>
      %c21 = arith.constant 21 : index
      %176 = memref.load %arg10[%c21] : memref<36xf32, #tpu.memory_space<smem>>
      %c0_118 = arith.constant 0 : index
      %c1_119 = arith.constant 1 : index
      %c0_120 = arith.constant 0 : index
      %177 = vector.load %arg20[%c0_118, %c1_119, %c0_120] : memref<2x10x10xf32, #tpu.memory_space<vmem>>, vector<1x8x8xf32>
      %178 = vector.shape_cast %177 : vector<1x8x8xf32> to vector<8x8xf32>
      %179 = vector.broadcast %176 : f32 to vector<8x8xf32>
      %180 = arith.mulf %179, %178 : vector<8x8xf32>
      %181 = arith.addf %175, %180 : vector<8x8xf32>
      %c22 = arith.constant 22 : index
      %182 = memref.load %arg10[%c22] : memref<36xf32, #tpu.memory_space<smem>>
      %c0_121 = arith.constant 0 : index
      %c1_122 = arith.constant 1 : index
      %c1_123 = arith.constant 1 : index
      %183 = vector.load %arg20[%c0_121, %c1_122, %c1_123] : memref<2x10x10xf32, #tpu.memory_space<vmem>>, vector<1x8x8xf32>
      %184 = vector.shape_cast %183 : vector<1x8x8xf32> to vector<8x8xf32>
      %185 = vector.broadcast %182 : f32 to vector<8x8xf32>
      %186 = arith.mulf %185, %184 : vector<8x8xf32>
      %187 = arith.addf %181, %186 : vector<8x8xf32>
      %c23 = arith.constant 23 : index
      %188 = memref.load %arg10[%c23] : memref<36xf32, #tpu.memory_space<smem>>
      %c0_124 = arith.constant 0 : index
      %c1_125 = arith.constant 1 : index
      %c2_126 = arith.constant 2 : index
      %189 = vector.load %arg20[%c0_124, %c1_125, %c2_126] : memref<2x10x10xf32, #tpu.memory_space<vmem>>, vector<1x8x8xf32>
      %190 = vector.shape_cast %189 : vector<1x8x8xf32> to vector<8x8xf32>
      %191 = vector.broadcast %188 : f32 to vector<8x8xf32>
      %192 = arith.mulf %191, %190 : vector<8x8xf32>
      %193 = arith.addf %187, %192 : vector<8x8xf32>
      %c24 = arith.constant 24 : index
      %194 = memref.load %arg10[%c24] : memref<36xf32, #tpu.memory_space<smem>>
      %c0_127 = arith.constant 0 : index
      %c2_128 = arith.constant 2 : index
      %c0_129 = arith.constant 0 : index
      %195 = vector.load %arg20[%c0_127, %c2_128, %c0_129] : memref<2x10x10xf32, #tpu.memory_space<vmem>>, vector<1x8x8xf32>
      %196 = vector.shape_cast %195 : vector<1x8x8xf32> to vector<8x8xf32>
      %197 = vector.broadcast %194 : f32 to vector<8x8xf32>
      %198 = arith.mulf %197, %196 : vector<8x8xf32>
      %199 = arith.addf %193, %198 : vector<8x8xf32>
      %c25 = arith.constant 25 : index
      %200 = memref.load %arg10[%c25] : memref<36xf32, #tpu.memory_space<smem>>
      %c0_130 = arith.constant 0 : index
      %c2_131 = arith.constant 2 : index
      %c1_132 = arith.constant 1 : index
      %201 = vector.load %arg20[%c0_130, %c2_131, %c1_132] : memref<2x10x10xf32, #tpu.memory_space<vmem>>, vector<1x8x8xf32>
      %202 = vector.shape_cast %201 : vector<1x8x8xf32> to vector<8x8xf32>
      %203 = vector.broadcast %200 : f32 to vector<8x8xf32>
      %204 = arith.mulf %203, %202 : vector<8x8xf32>
      %205 = arith.addf %199, %204 : vector<8x8xf32>
      %c26 = arith.constant 26 : index
      %206 = memref.load %arg10[%c26] : memref<36xf32, #tpu.memory_space<smem>>
      %c0_133 = arith.constant 0 : index
      %c2_134 = arith.constant 2 : index
      %c2_135 = arith.constant 2 : index
      %207 = vector.load %arg20[%c0_133, %c2_134, %c2_135] : memref<2x10x10xf32, #tpu.memory_space<vmem>>, vector<1x8x8xf32>
      %208 = vector.shape_cast %207 : vector<1x8x8xf32> to vector<8x8xf32>
      %209 = vector.broadcast %206 : f32 to vector<8x8xf32>
      %210 = arith.mulf %209, %208 : vector<8x8xf32>
      %211 = arith.addf %205, %210 : vector<8x8xf32>
      %c27 = arith.constant 27 : index
      %212 = memref.load %arg10[%c27] : memref<36xf32, #tpu.memory_space<smem>>
      %c1_136 = arith.constant 1 : index
      %c0_137 = arith.constant 0 : index
      %c0_138 = arith.constant 0 : index
      %213 = vector.load %arg20[%c1_136, %c0_137, %c0_138] : memref<2x10x10xf32, #tpu.memory_space<vmem>>, vector<1x8x8xf32>
      %214 = vector.shape_cast %213 : vector<1x8x8xf32> to vector<8x8xf32>
      %215 = vector.broadcast %212 : f32 to vector<8x8xf32>
      %216 = arith.mulf %215, %214 : vector<8x8xf32>
      %217 = arith.addf %211, %216 : vector<8x8xf32>
      %c28 = arith.constant 28 : index
      %218 = memref.load %arg10[%c28] : memref<36xf32, #tpu.memory_space<smem>>
      %c1_139 = arith.constant 1 : index
      %c0_140 = arith.constant 0 : index
      %c1_141 = arith.constant 1 : index
      %219 = vector.load %arg20[%c1_139, %c0_140, %c1_141] : memref<2x10x10xf32, #tpu.memory_space<vmem>>, vector<1x8x8xf32>
      %220 = vector.shape_cast %219 : vector<1x8x8xf32> to vector<8x8xf32>
      %221 = vector.broadcast %218 : f32 to vector<8x8xf32>
      %222 = arith.mulf %221, %220 : vector<8x8xf32>
      %223 = arith.addf %217, %222 : vector<8x8xf32>
      %c29 = arith.constant 29 : index
      %224 = memref.load %arg10[%c29] : memref<36xf32, #tpu.memory_space<smem>>
      %c1_142 = arith.constant 1 : index
      %c0_143 = arith.constant 0 : index
      %c2_144 = arith.constant 2 : index
      %225 = vector.load %arg20[%c1_142, %c0_143, %c2_144] : memref<2x10x10xf32, #tpu.memory_space<vmem>>, vector<1x8x8xf32>
      %226 = vector.shape_cast %225 : vector<1x8x8xf32> to vector<8x8xf32>
      %227 = vector.broadcast %224 : f32 to vector<8x8xf32>
      %228 = arith.mulf %227, %226 : vector<8x8xf32>
      %229 = arith.addf %223, %228 : vector<8x8xf32>
      %c30 = arith.constant 30 : index
      %230 = memref.load %arg10[%c30] : memref<36xf32, #tpu.memory_space<smem>>
      %c1_145 = arith.constant 1 : index
      %c1_146 = arith.constant 1 : index
      %c0_147 = arith.constant 0 : index
      %231 = vector.load %arg20[%c1_145, %c1_146, %c0_147] : memref<2x10x10xf32, #tpu.memory_space<vmem>>, vector<1x8x8xf32>
      %232 = vector.shape_cast %231 : vector<1x8x8xf32> to vector<8x8xf32>
      %233 = vector.broadcast %230 : f32 to vector<8x8xf32>
      %234 = arith.mulf %233, %232 : vector<8x8xf32>
      %235 = arith.addf %229, %234 : vector<8x8xf32>
      %c31 = arith.constant 31 : index
      %236 = memref.load %arg10[%c31] : memref<36xf32, #tpu.memory_space<smem>>
      %c1_148 = arith.constant 1 : index
      %c1_149 = arith.constant 1 : index
      %c1_150 = arith.constant 1 : index
      %237 = vector.load %arg20[%c1_148, %c1_149, %c1_150] : memref<2x10x10xf32, #tpu.memory_space<vmem>>, vector<1x8x8xf32>
      %238 = vector.shape_cast %237 : vector<1x8x8xf32> to vector<8x8xf32>
      %239 = vector.broadcast %236 : f32 to vector<8x8xf32>
      %240 = arith.mulf %239, %238 : vector<8x8xf32>
      %241 = arith.addf %235, %240 : vector<8x8xf32>
      %c32 = arith.constant 32 : index
      %242 = memref.load %arg10[%c32] : memref<36xf32, #tpu.memory_space<smem>>
      %c1_151 = arith.constant 1 : index
      %c1_152 = arith.constant 1 : index
      %c2_153 = arith.constant 2 : index
      %243 = vector.load %arg20[%c1_151, %c1_152, %c2_153] : memref<2x10x10xf32, #tpu.memory_space<vmem>>, vector<1x8x8xf32>
      %244 = vector.shape_cast %243 : vector<1x8x8xf32> to vector<8x8xf32>
      %245 = vector.broadcast %242 : f32 to vector<8x8xf32>
      %246 = arith.mulf %245, %244 : vector<8x8xf32>
      %247 = arith.addf %241, %246 : vector<8x8xf32>
      %c33 = arith.constant 33 : index
      %248 = memref.load %arg10[%c33] : memref<36xf32, #tpu.memory_space<smem>>
      %c1_154 = arith.constant 1 : index
      %c2_155 = arith.constant 2 : index
      %c0_156 = arith.constant 0 : index
      %249 = vector.load %arg20[%c1_154, %c2_155, %c0_156] : memref<2x10x10xf32, #tpu.memory_space<vmem>>, vector<1x8x8xf32>
      %250 = vector.shape_cast %249 : vector<1x8x8xf32> to vector<8x8xf32>
      %251 = vector.broadcast %248 : f32 to vector<8x8xf32>
      %252 = arith.mulf %251, %250 : vector<8x8xf32>
      %253 = arith.addf %247, %252 : vector<8x8xf32>
      %c34 = arith.constant 34 : index
      %254 = memref.load %arg10[%c34] : memref<36xf32, #tpu.memory_space<smem>>
      %c1_157 = arith.constant 1 : index
      %c2_158 = arith.constant 2 : index
      %c1_159 = arith.constant 1 : index
      %255 = vector.load %arg20[%c1_157, %c2_158, %c1_159] : memref<2x10x10xf32, #tpu.memory_space<vmem>>, vector<1x8x8xf32>
      %256 = vector.shape_cast %255 : vector<1x8x8xf32> to vector<8x8xf32>
      %257 = vector.broadcast %254 : f32 to vector<8x8xf32>
      %258 = arith.mulf %257, %256 : vector<8x8xf32>
      %259 = arith.addf %253, %258 : vector<8x8xf32>
      %c35 = arith.constant 35 : index
      %260 = memref.load %arg10[%c35] : memref<36xf32, #tpu.memory_space<smem>>
      %c1_160 = arith.constant 1 : index
      %c2_161 = arith.constant 2 : index
      %c2_162 = arith.constant 2 : index
      %261 = vector.load %arg20[%c1_160, %c2_161, %c2_162] : memref<2x10x10xf32, #tpu.memory_space<vmem>>, vector<1x8x8xf32>
      %262 = vector.shape_cast %261 : vector<1x8x8xf32> to vector<8x8xf32>
      %263 = vector.broadcast %260 : f32 to vector<8x8xf32>
      %264 = arith.mulf %263, %262 : vector<8x8xf32>
      %265 = arith.addf %259, %264 : vector<8x8xf32>
      %c1_163 = arith.constant 1 : index
      %266 = memref.load %arg11[%c1_163] : memref<2xf32, #tpu.memory_space<smem>>
      %267 = vector.broadcast %266 : f32 to vector<8x8xf32>
      %268 = arith.addf %265, %267 : vector<8x8xf32>
      %cst_164 = arith.constant 0.000000e+00 : f32
      %269 = vector.broadcast %cst_164 : f32 to vector<8x8xf32>
      %270 = arith.subf %269, %156 : vector<8x8xf32>
      %271 = math.exp %270 : vector<8x8xf32>
      %cst_165 = arith.constant 1.000000e+00 : f32
      %272 = vector.broadcast %cst_165 : f32 to vector<8x8xf32>
      %273 = arith.addf %272, %271 : vector<8x8xf32>
      %cst_166 = arith.constant 1.000000e+00 : f32
      %274 = vector.broadcast %cst_166 : f32 to vector<8x8xf32>
      %275 = arith.divf %274, %273 : vector<8x8xf32>
      %cst_167 = arith.constant 0.000000e+00 : f32
      %276 = vector.broadcast %cst_167 : f32 to vector<8x8xf32>
      %277 = arith.subf %276, %268 : vector<8x8xf32>
      %278 = math.exp %277 : vector<8x8xf32>
      %cst_168 = arith.constant 1.000000e+00 : f32
      %279 = vector.broadcast %cst_168 : f32 to vector<8x8xf32>
      %280 = arith.addf %279, %278 : vector<8x8xf32>
      %cst_169 = arith.constant 1.000000e+00 : f32
      %281 = vector.broadcast %cst_169 : f32 to vector<8x8xf32>
      %282 = arith.divf %281, %280 : vector<8x8xf32>
      %c0_170 = arith.constant 0 : index
      %c1_171 = arith.constant 1 : index
      %c1_172 = arith.constant 1 : index
      %283 = vector.load %arg20[%c0_170, %c1_171, %c1_172] : memref<2x10x10xf32, #tpu.memory_space<vmem>>, vector<1x8x8xf32>
      %284 = vector.shape_cast %283 : vector<1x8x8xf32> to vector<8x8xf32>
      %285 = vector.shape_cast %275 : vector<8x8xf32> to vector<1x8x8xf32>
      tpu.vector_store %arg20[%c0_170, %c1_171, %c1_172], %285 {strides = array<i32>} : memref<2x10x10xf32, #tpu.memory_space<vmem>>, vector<1x8x8xf32>,
      %c1_173 = arith.constant 1 : index
      %c1_174 = arith.constant 1 : index
      %c1_175 = arith.constant 1 : index
      %286 = vector.load %arg20[%c1_173, %c1_174, %c1_175] : memref<2x10x10xf32, #tpu.memory_space<vmem>>, vector<1x8x8xf32>
      %287 = vector.shape_cast %286 : vector<1x8x8xf32> to vector<8x8xf32>
      %288 = vector.shape_cast %282 : vector<8x8xf32> to vector<1x8x8xf32>
      tpu.vector_store %arg20[%c1_173, %c1_174, %c1_175], %288 {strides = array<i32>} : memref<2x10x10xf32, #tpu.memory_space<vmem>>, vector<1x8x8xf32>,
      %cst_176 = arith.constant 0.000000e+00 : f32
      %289 = vector.broadcast %cst_176 : f32 to vector<8x8xf32>
      %c0_177 = arith.constant 0 : index
      %290 = memref.load %arg12[%c0_177] : memref<36xf32, #tpu.memory_space<smem>>
      %c0_178 = arith.constant 0 : index
      %c0_179 = arith.constant 0 : index
      %c0_180 = arith.constant 0 : index
      %291 = vector.load %arg20[%c0_178, %c0_179, %c0_180] : memref<2x10x10xf32, #tpu.memory_space<vmem>>, vector<1x8x8xf32>
      %292 = vector.shape_cast %291 : vector<1x8x8xf32> to vector<8x8xf32>
      %293 = vector.broadcast %290 : f32 to vector<8x8xf32>
      %294 = arith.mulf %293, %292 : vector<8x8xf32>
      %295 = arith.addf %289, %294 : vector<8x8xf32>
      %c1_181 = arith.constant 1 : index
      %296 = memref.load %arg12[%c1_181] : memref<36xf32, #tpu.memory_space<smem>>
      %c0_182 = arith.constant 0 : index
      %c0_183 = arith.constant 0 : index
      %c1_184 = arith.constant 1 : index
      %297 = vector.load %arg20[%c0_182, %c0_183, %c1_184] : memref<2x10x10xf32, #tpu.memory_space<vmem>>, vector<1x8x8xf32>
      %298 = vector.shape_cast %297 : vector<1x8x8xf32> to vector<8x8xf32>
      %299 = vector.broadcast %296 : f32 to vector<8x8xf32>
      %300 = arith.mulf %299, %298 : vector<8x8xf32>
      %301 = arith.addf %295, %300 : vector<8x8xf32>
      %c2_185 = arith.constant 2 : index
      %302 = memref.load %arg12[%c2_185] : memref<36xf32, #tpu.memory_space<smem>>
      %c0_186 = arith.constant 0 : index
      %c0_187 = arith.constant 0 : index
      %c2_188 = arith.constant 2 : index
      %303 = vector.load %arg20[%c0_186, %c0_187, %c2_188] : memref<2x10x10xf32, #tpu.memory_space<vmem>>, vector<1x8x8xf32>
      %304 = vector.shape_cast %303 : vector<1x8x8xf32> to vector<8x8xf32>
      %305 = vector.broadcast %302 : f32 to vector<8x8xf32>
      %306 = arith.mulf %305, %304 : vector<8x8xf32>
      %307 = arith.addf %301, %306 : vector<8x8xf32>
      %c3_189 = arith.constant 3 : index
      %308 = memref.load %arg12[%c3_189] : memref<36xf32, #tpu.memory_space<smem>>
      %c0_190 = arith.constant 0 : index
      %c1_191 = arith.constant 1 : index
      %c0_192 = arith.constant 0 : index
      %309 = vector.load %arg20[%c0_190, %c1_191, %c0_192] : memref<2x10x10xf32, #tpu.memory_space<vmem>>, vector<1x8x8xf32>
      %310 = vector.shape_cast %309 : vector<1x8x8xf32> to vector<8x8xf32>
      %311 = vector.broadcast %308 : f32 to vector<8x8xf32>
      %312 = arith.mulf %311, %310 : vector<8x8xf32>
      %313 = arith.addf %307, %312 : vector<8x8xf32>
      %c4_193 = arith.constant 4 : index
      %314 = memref.load %arg12[%c4_193] : memref<36xf32, #tpu.memory_space<smem>>
      %c0_194 = arith.constant 0 : index
      %c1_195 = arith.constant 1 : index
      %c1_196 = arith.constant 1 : index
      %315 = vector.load %arg20[%c0_194, %c1_195, %c1_196] : memref<2x10x10xf32, #tpu.memory_space<vmem>>, vector<1x8x8xf32>
      %316 = vector.shape_cast %315 : vector<1x8x8xf32> to vector<8x8xf32>
      %317 = vector.broadcast %314 : f32 to vector<8x8xf32>
      %318 = arith.mulf %317, %316 : vector<8x8xf32>
      %319 = arith.addf %313, %318 : vector<8x8xf32>
      %c5_197 = arith.constant 5 : index
      %320 = memref.load %arg12[%c5_197] : memref<36xf32, #tpu.memory_space<smem>>
      %c0_198 = arith.constant 0 : index
      %c1_199 = arith.constant 1 : index
      %c2_200 = arith.constant 2 : index
      %321 = vector.load %arg20[%c0_198, %c1_199, %c2_200] : memref<2x10x10xf32, #tpu.memory_space<vmem>>, vector<1x8x8xf32>
      %322 = vector.shape_cast %321 : vector<1x8x8xf32> to vector<8x8xf32>
      %323 = vector.broadcast %320 : f32 to vector<8x8xf32>
      %324 = arith.mulf %323, %322 : vector<8x8xf32>
      %325 = arith.addf %319, %324 : vector<8x8xf32>
      %c6_201 = arith.constant 6 : index
      %326 = memref.load %arg12[%c6_201] : memref<36xf32, #tpu.memory_space<smem>>
      %c0_202 = arith.constant 0 : index
      %c2_203 = arith.constant 2 : index
      %c0_204 = arith.constant 0 : index
      %327 = vector.load %arg20[%c0_202, %c2_203, %c0_204] : memref<2x10x10xf32, #tpu.memory_space<vmem>>, vector<1x8x8xf32>
      %328 = vector.shape_cast %327 : vector<1x8x8xf32> to vector<8x8xf32>
      %329 = vector.broadcast %326 : f32 to vector<8x8xf32>
      %330 = arith.mulf %329, %328 : vector<8x8xf32>
      %331 = arith.addf %325, %330 : vector<8x8xf32>
      %c7_205 = arith.constant 7 : index
      %332 = memref.load %arg12[%c7_205] : memref<36xf32, #tpu.memory_space<smem>>
      %c0_206 = arith.constant 0 : index
      %c2_207 = arith.constant 2 : index
      %c1_208 = arith.constant 1 : index
      %333 = vector.load %arg20[%c0_206, %c2_207, %c1_208] : memref<2x10x10xf32, #tpu.memory_space<vmem>>, vector<1x8x8xf32>
      %334 = vector.shape_cast %333 : vector<1x8x8xf32> to vector<8x8xf32>
      %335 = vector.broadcast %332 : f32 to vector<8x8xf32>
      %336 = arith.mulf %335, %334 : vector<8x8xf32>
      %337 = arith.addf %331, %336 : vector<8x8xf32>
      %c8_209 = arith.constant 8 : index
      %338 = memref.load %arg12[%c8_209] : memref<36xf32, #tpu.memory_space<smem>>
      %c0_210 = arith.constant 0 : index
      %c2_211 = arith.constant 2 : index
      %c2_212 = arith.constant 2 : index
      %339 = vector.load %arg20[%c0_210, %c2_211, %c2_212] : memref<2x10x10xf32, #tpu.memory_space<vmem>>, vector<1x8x8xf32>
      %340 = vector.shape_cast %339 : vector<1x8x8xf32> to vector<8x8xf32>
      %341 = vector.broadcast %338 : f32 to vector<8x8xf32>
      %342 = arith.mulf %341, %340 : vector<8x8xf32>
      %343 = arith.addf %337, %342 : vector<8x8xf32>
      %c9_213 = arith.constant 9 : index
      %344 = memref.load %arg12[%c9_213] : memref<36xf32, #tpu.memory_space<smem>>
      %c1_214 = arith.constant 1 : index
      %c0_215 = arith.constant 0 : index
      %c0_216 = arith.constant 0 : index
      %345 = vector.load %arg20[%c1_214, %c0_215, %c0_216] : memref<2x10x10xf32, #tpu.memory_space<vmem>>, vector<1x8x8xf32>
      %346 = vector.shape_cast %345 : vector<1x8x8xf32> to vector<8x8xf32>
      %347 = vector.broadcast %344 : f32 to vector<8x8xf32>
      %348 = arith.mulf %347, %346 : vector<8x8xf32>
      %349 = arith.addf %343, %348 : vector<8x8xf32>
      %c10_217 = arith.constant 10 : index
      %350 = memref.load %arg12[%c10_217] : memref<36xf32, #tpu.memory_space<smem>>
      %c1_218 = arith.constant 1 : index
      %c0_219 = arith.constant 0 : index
      %c1_220 = arith.constant 1 : index
      %351 = vector.load %arg20[%c1_218, %c0_219, %c1_220] : memref<2x10x10xf32, #tpu.memory_space<vmem>>, vector<1x8x8xf32>
      %352 = vector.shape_cast %351 : vector<1x8x8xf32> to vector<8x8xf32>
      %353 = vector.broadcast %350 : f32 to vector<8x8xf32>
      %354 = arith.mulf %353, %352 : vector<8x8xf32>
      %355 = arith.addf %349, %354 : vector<8x8xf32>
      %c11_221 = arith.constant 11 : index
      %356 = memref.load %arg12[%c11_221] : memref<36xf32, #tpu.memory_space<smem>>
      %c1_222 = arith.constant 1 : index
      %c0_223 = arith.constant 0 : index
      %c2_224 = arith.constant 2 : index
      %357 = vector.load %arg20[%c1_222, %c0_223, %c2_224] : memref<2x10x10xf32, #tpu.memory_space<vmem>>, vector<1x8x8xf32>
      %358 = vector.shape_cast %357 : vector<1x8x8xf32> to vector<8x8xf32>
      %359 = vector.broadcast %356 : f32 to vector<8x8xf32>
      %360 = arith.mulf %359, %358 : vector<8x8xf32>
      %361 = arith.addf %355, %360 : vector<8x8xf32>
      %c12_225 = arith.constant 12 : index
      %362 = memref.load %arg12[%c12_225] : memref<36xf32, #tpu.memory_space<smem>>
      %c1_226 = arith.constant 1 : index
      %c1_227 = arith.constant 1 : index
      %c0_228 = arith.constant 0 : index
      %363 = vector.load %arg20[%c1_226, %c1_227, %c0_228] : memref<2x10x10xf32, #tpu.memory_space<vmem>>, vector<1x8x8xf32>
      %364 = vector.shape_cast %363 : vector<1x8x8xf32> to vector<8x8xf32>
      %365 = vector.broadcast %362 : f32 to vector<8x8xf32>
      %366 = arith.mulf %365, %364 : vector<8x8xf32>
      %367 = arith.addf %361, %366 : vector<8x8xf32>
      %c13_229 = arith.constant 13 : index
      %368 = memref.load %arg12[%c13_229] : memref<36xf32, #tpu.memory_space<smem>>
      %c1_230 = arith.constant 1 : index
      %c1_231 = arith.constant 1 : index
      %c1_232 = arith.constant 1 : index
      %369 = vector.load %arg20[%c1_230, %c1_231, %c1_232] : memref<2x10x10xf32, #tpu.memory_space<vmem>>, vector<1x8x8xf32>
      %370 = vector.shape_cast %369 : vector<1x8x8xf32> to vector<8x8xf32>
      %371 = vector.broadcast %368 : f32 to vector<8x8xf32>
      %372 = arith.mulf %371, %370 : vector<8x8xf32>
      %373 = arith.addf %367, %372 : vector<8x8xf32>
      %c14_233 = arith.constant 14 : index
      %374 = memref.load %arg12[%c14_233] : memref<36xf32, #tpu.memory_space<smem>>
      %c1_234 = arith.constant 1 : index
      %c1_235 = arith.constant 1 : index
      %c2_236 = arith.constant 2 : index
      %375 = vector.load %arg20[%c1_234, %c1_235, %c2_236] : memref<2x10x10xf32, #tpu.memory_space<vmem>>, vector<1x8x8xf32>
      %376 = vector.shape_cast %375 : vector<1x8x8xf32> to vector<8x8xf32>
      %377 = vector.broadcast %374 : f32 to vector<8x8xf32>
      %378 = arith.mulf %377, %376 : vector<8x8xf32>
      %379 = arith.addf %373, %378 : vector<8x8xf32>
      %c15_237 = arith.constant 15 : index
      %380 = memref.load %arg12[%c15_237] : memref<36xf32, #tpu.memory_space<smem>>
      %c1_238 = arith.constant 1 : index
      %c2_239 = arith.constant 2 : index
      %c0_240 = arith.constant 0 : index
      %381 = vector.load %arg20[%c1_238, %c2_239, %c0_240] : memref<2x10x10xf32, #tpu.memory_space<vmem>>, vector<1x8x8xf32>
      %382 = vector.shape_cast %381 : vector<1x8x8xf32> to vector<8x8xf32>
      %383 = vector.broadcast %380 : f32 to vector<8x8xf32>
      %384 = arith.mulf %383, %382 : vector<8x8xf32>
      %385 = arith.addf %379, %384 : vector<8x8xf32>
      %c16_241 = arith.constant 16 : index
      %386 = memref.load %arg12[%c16_241] : memref<36xf32, #tpu.memory_space<smem>>
      %c1_242 = arith.constant 1 : index
      %c2_243 = arith.constant 2 : index
      %c1_244 = arith.constant 1 : index
      %387 = vector.load %arg20[%c1_242, %c2_243, %c1_244] : memref<2x10x10xf32, #tpu.memory_space<vmem>>, vector<1x8x8xf32>
      %388 = vector.shape_cast %387 : vector<1x8x8xf32> to vector<8x8xf32>
      %389 = vector.broadcast %386 : f32 to vector<8x8xf32>
      %390 = arith.mulf %389, %388 : vector<8x8xf32>
      %391 = arith.addf %385, %390 : vector<8x8xf32>
      %c17_245 = arith.constant 17 : index
      %392 = memref.load %arg12[%c17_245] : memref<36xf32, #tpu.memory_space<smem>>
      %c1_246 = arith.constant 1 : index
      %c2_247 = arith.constant 2 : index
      %c2_248 = arith.constant 2 : index
      %393 = vector.load %arg20[%c1_246, %c2_247, %c2_248] : memref<2x10x10xf32, #tpu.memory_space<vmem>>, vector<1x8x8xf32>
      %394 = vector.shape_cast %393 : vector<1x8x8xf32> to vector<8x8xf32>
      %395 = vector.broadcast %392 : f32 to vector<8x8xf32>
      %396 = arith.mulf %395, %394 : vector<8x8xf32>
      %397 = arith.addf %391, %396 : vector<8x8xf32>
      %c0_249 = arith.constant 0 : index
      %398 = memref.load %arg13[%c0_249] : memref<2xf32, #tpu.memory_space<smem>>
      %399 = vector.broadcast %398 : f32 to vector<8x8xf32>
      %400 = arith.addf %397, %399 : vector<8x8xf32>
      %cst_250 = arith.constant 0.000000e+00 : f32
      %401 = vector.broadcast %cst_250 : f32 to vector<8x8xf32>
      %c18_251 = arith.constant 18 : index
      %402 = memref.load %arg12[%c18_251] : memref<36xf32, #tpu.memory_space<smem>>
      %c0_252 = arith.constant 0 : index
      %c0_253 = arith.constant 0 : index
      %c0_254 = arith.constant 0 : index
      %403 = vector.load %arg20[%c0_252, %c0_253, %c0_254] : memref<2x10x10xf32, #tpu.memory_space<vmem>>, vector<1x8x8xf32>
      %404 = vector.shape_cast %403 : vector<1x8x8xf32> to vector<8x8xf32>
      %405 = vector.broadcast %402 : f32 to vector<8x8xf32>
      %406 = arith.mulf %405, %404 : vector<8x8xf32>
      %407 = arith.addf %401, %406 : vector<8x8xf32>
      %c19_255 = arith.constant 19 : index
      %408 = memref.load %arg12[%c19_255] : memref<36xf32, #tpu.memory_space<smem>>
      %c0_256 = arith.constant 0 : index
      %c0_257 = arith.constant 0 : index
      %c1_258 = arith.constant 1 : index
      %409 = vector.load %arg20[%c0_256, %c0_257, %c1_258] : memref<2x10x10xf32, #tpu.memory_space<vmem>>, vector<1x8x8xf32>
      %410 = vector.shape_cast %409 : vector<1x8x8xf32> to vector<8x8xf32>
      %411 = vector.broadcast %408 : f32 to vector<8x8xf32>
      %412 = arith.mulf %411, %410 : vector<8x8xf32>
      %413 = arith.addf %407, %412 : vector<8x8xf32>
      %c20_259 = arith.constant 20 : index
      %414 = memref.load %arg12[%c20_259] : memref<36xf32, #tpu.memory_space<smem>>
      %c0_260 = arith.constant 0 : index
      %c0_261 = arith.constant 0 : index
      %c2_262 = arith.constant 2 : index
      %415 = vector.load %arg20[%c0_260, %c0_261, %c2_262] : memref<2x10x10xf32, #tpu.memory_space<vmem>>, vector<1x8x8xf32>
      %416 = vector.shape_cast %415 : vector<1x8x8xf32> to vector<8x8xf32>
      %417 = vector.broadcast %414 : f32 to vector<8x8xf32>
      %418 = arith.mulf %417, %416 : vector<8x8xf32>
      %419 = arith.addf %413, %418 : vector<8x8xf32>
      %c21_263 = arith.constant 21 : index
      %420 = memref.load %arg12[%c21_263] : memref<36xf32, #tpu.memory_space<smem>>
      %c0_264 = arith.constant 0 : index
      %c1_265 = arith.constant 1 : index
      %c0_266 = arith.constant 0 : index
      %421 = vector.load %arg20[%c0_264, %c1_265, %c0_266] : memref<2x10x10xf32, #tpu.memory_space<vmem>>, vector<1x8x8xf32>
      %422 = vector.shape_cast %421 : vector<1x8x8xf32> to vector<8x8xf32>
      %423 = vector.broadcast %420 : f32 to vector<8x8xf32>
      %424 = arith.mulf %423, %422 : vector<8x8xf32>
      %425 = arith.addf %419, %424 : vector<8x8xf32>
      %c22_267 = arith.constant 22 : index
      %426 = memref.load %arg12[%c22_267] : memref<36xf32, #tpu.memory_space<smem>>
      %c0_268 = arith.constant 0 : index
      %c1_269 = arith.constant 1 : index
      %c1_270 = arith.constant 1 : index
      %427 = vector.load %arg20[%c0_268, %c1_269, %c1_270] : memref<2x10x10xf32, #tpu.memory_space<vmem>>, vector<1x8x8xf32>
      %428 = vector.shape_cast %427 : vector<1x8x8xf32> to vector<8x8xf32>
      %429 = vector.broadcast %426 : f32 to vector<8x8xf32>
      %430 = arith.mulf %429, %428 : vector<8x8xf32>
      %431 = arith.addf %425, %430 : vector<8x8xf32>
      %c23_271 = arith.constant 23 : index
      %432 = memref.load %arg12[%c23_271] : memref<36xf32, #tpu.memory_space<smem>>
      %c0_272 = arith.constant 0 : index
      %c1_273 = arith.constant 1 : index
      %c2_274 = arith.constant 2 : index
      %433 = vector.load %arg20[%c0_272, %c1_273, %c2_274] : memref<2x10x10xf32, #tpu.memory_space<vmem>>, vector<1x8x8xf32>
      %434 = vector.shape_cast %433 : vector<1x8x8xf32> to vector<8x8xf32>
      %435 = vector.broadcast %432 : f32 to vector<8x8xf32>
      %436 = arith.mulf %435, %434 : vector<8x8xf32>
      %437 = arith.addf %431, %436 : vector<8x8xf32>
      %c24_275 = arith.constant 24 : index
      %438 = memref.load %arg12[%c24_275] : memref<36xf32, #tpu.memory_space<smem>>
      %c0_276 = arith.constant 0 : index
      %c2_277 = arith.constant 2 : index
      %c0_278 = arith.constant 0 : index
      %439 = vector.load %arg20[%c0_276, %c2_277, %c0_278] : memref<2x10x10xf32, #tpu.memory_space<vmem>>, vector<1x8x8xf32>
      %440 = vector.shape_cast %439 : vector<1x8x8xf32> to vector<8x8xf32>
      %441 = vector.broadcast %438 : f32 to vector<8x8xf32>
      %442 = arith.mulf %441, %440 : vector<8x8xf32>
      %443 = arith.addf %437, %442 : vector<8x8xf32>
      %c25_279 = arith.constant 25 : index
      %444 = memref.load %arg12[%c25_279] : memref<36xf32, #tpu.memory_space<smem>>
      %c0_280 = arith.constant 0 : index
      %c2_281 = arith.constant 2 : index
      %c1_282 = arith.constant 1 : index
      %445 = vector.load %arg20[%c0_280, %c2_281, %c1_282] : memref<2x10x10xf32, #tpu.memory_space<vmem>>, vector<1x8x8xf32>
      %446 = vector.shape_cast %445 : vector<1x8x8xf32> to vector<8x8xf32>
      %447 = vector.broadcast %444 : f32 to vector<8x8xf32>
      %448 = arith.mulf %447, %446 : vector<8x8xf32>
      %449 = arith.addf %443, %448 : vector<8x8xf32>
      %c26_283 = arith.constant 26 : index
      %450 = memref.load %arg12[%c26_283] : memref<36xf32, #tpu.memory_space<smem>>
      %c0_284 = arith.constant 0 : index
      %c2_285 = arith.constant 2 : index
      %c2_286 = arith.constant 2 : index
      %451 = vector.load %arg20[%c0_284, %c2_285, %c2_286] : memref<2x10x10xf32, #tpu.memory_space<vmem>>, vector<1x8x8xf32>
      %452 = vector.shape_cast %451 : vector<1x8x8xf32> to vector<8x8xf32>
      %453 = vector.broadcast %450 : f32 to vector<8x8xf32>
      %454 = arith.mulf %453, %452 : vector<8x8xf32>
      %455 = arith.addf %449, %454 : vector<8x8xf32>
      %c27_287 = arith.constant 27 : index
      %456 = memref.load %arg12[%c27_287] : memref<36xf32, #tpu.memory_space<smem>>
      %c1_288 = arith.constant 1 : index
      %c0_289 = arith.constant 0 : index
      %c0_290 = arith.constant 0 : index
      %457 = vector.load %arg20[%c1_288, %c0_289, %c0_290] : memref<2x10x10xf32, #tpu.memory_space<vmem>>, vector<1x8x8xf32>
      %458 = vector.shape_cast %457 : vector<1x8x8xf32> to vector<8x8xf32>
      %459 = vector.broadcast %456 : f32 to vector<8x8xf32>
      %460 = arith.mulf %459, %458 : vector<8x8xf32>
      %461 = arith.addf %455, %460 : vector<8x8xf32>
      %c28_291 = arith.constant 28 : index
      %462 = memref.load %arg12[%c28_291] : memref<36xf32, #tpu.memory_space<smem>>
      %c1_292 = arith.constant 1 : index
      %c0_293 = arith.constant 0 : index
      %c1_294 = arith.constant 1 : index
      %463 = vector.load %arg20[%c1_292, %c0_293, %c1_294] : memref<2x10x10xf32, #tpu.memory_space<vmem>>, vector<1x8x8xf32>
      %464 = vector.shape_cast %463 : vector<1x8x8xf32> to vector<8x8xf32>
      %465 = vector.broadcast %462 : f32 to vector<8x8xf32>
      %466 = arith.mulf %465, %464 : vector<8x8xf32>
      %467 = arith.addf %461, %466 : vector<8x8xf32>
      %c29_295 = arith.constant 29 : index
      %468 = memref.load %arg12[%c29_295] : memref<36xf32, #tpu.memory_space<smem>>
      %c1_296 = arith.constant 1 : index
      %c0_297 = arith.constant 0 : index
      %c2_298 = arith.constant 2 : index
      %469 = vector.load %arg20[%c1_296, %c0_297, %c2_298] : memref<2x10x10xf32, #tpu.memory_space<vmem>>, vector<1x8x8xf32>
      %470 = vector.shape_cast %469 : vector<1x8x8xf32> to vector<8x8xf32>
      %471 = vector.broadcast %468 : f32 to vector<8x8xf32>
      %472 = arith.mulf %471, %470 : vector<8x8xf32>
      %473 = arith.addf %467, %472 : vector<8x8xf32>
      %c30_299 = arith.constant 30 : index
      %474 = memref.load %arg12[%c30_299] : memref<36xf32, #tpu.memory_space<smem>>
      %c1_300 = arith.constant 1 : index
      %c1_301 = arith.constant 1 : index
      %c0_302 = arith.constant 0 : index
      %475 = vector.load %arg20[%c1_300, %c1_301, %c0_302] : memref<2x10x10xf32, #tpu.memory_space<vmem>>, vector<1x8x8xf32>
      %476 = vector.shape_cast %475 : vector<1x8x8xf32> to vector<8x8xf32>
      %477 = vector.broadcast %474 : f32 to vector<8x8xf32>
      %478 = arith.mulf %477, %476 : vector<8x8xf32>
      %479 = arith.addf %473, %478 : vector<8x8xf32>
      %c31_303 = arith.constant 31 : index
      %480 = memref.load %arg12[%c31_303] : memref<36xf32, #tpu.memory_space<smem>>
      %c1_304 = arith.constant 1 : index
      %c1_305 = arith.constant 1 : index
      %c1_306 = arith.constant 1 : index
      %481 = vector.load %arg20[%c1_304, %c1_305, %c1_306] : memref<2x10x10xf32, #tpu.memory_space<vmem>>, vector<1x8x8xf32>
      %482 = vector.shape_cast %481 : vector<1x8x8xf32> to vector<8x8xf32>
      %483 = vector.broadcast %480 : f32 to vector<8x8xf32>
      %484 = arith.mulf %483, %482 : vector<8x8xf32>
      %485 = arith.addf %479, %484 : vector<8x8xf32>
      %c32_307 = arith.constant 32 : index
      %486 = memref.load %arg12[%c32_307] : memref<36xf32, #tpu.memory_space<smem>>
      %c1_308 = arith.constant 1 : index
      %c1_309 = arith.constant 1 : index
      %c2_310 = arith.constant 2 : index
      %487 = vector.load %arg20[%c1_308, %c1_309, %c2_310] : memref<2x10x10xf32, #tpu.memory_space<vmem>>, vector<1x8x8xf32>
      %488 = vector.shape_cast %487 : vector<1x8x8xf32> to vector<8x8xf32>
      %489 = vector.broadcast %486 : f32 to vector<8x8xf32>
      %490 = arith.mulf %489, %488 : vector<8x8xf32>
      %491 = arith.addf %485, %490 : vector<8x8xf32>
      %c33_311 = arith.constant 33 : index
      %492 = memref.load %arg12[%c33_311] : memref<36xf32, #tpu.memory_space<smem>>
      %c1_312 = arith.constant 1 : index
      %c2_313 = arith.constant 2 : index
      %c0_314 = arith.constant 0 : index
      %493 = vector.load %arg20[%c1_312, %c2_313, %c0_314] : memref<2x10x10xf32, #tpu.memory_space<vmem>>, vector<1x8x8xf32>
      %494 = vector.shape_cast %493 : vector<1x8x8xf32> to vector<8x8xf32>
      %495 = vector.broadcast %492 : f32 to vector<8x8xf32>
      %496 = arith.mulf %495, %494 : vector<8x8xf32>
      %497 = arith.addf %491, %496 : vector<8x8xf32>
      %c34_315 = arith.constant 34 : index
      %498 = memref.load %arg12[%c34_315] : memref<36xf32, #tpu.memory_space<smem>>
      %c1_316 = arith.constant 1 : index
      %c2_317 = arith.constant 2 : index
      %c1_318 = arith.constant 1 : index
      %499 = vector.load %arg20[%c1_316, %c2_317, %c1_318] : memref<2x10x10xf32, #tpu.memory_space<vmem>>, vector<1x8x8xf32>
      %500 = vector.shape_cast %499 : vector<1x8x8xf32> to vector<8x8xf32>
      %501 = vector.broadcast %498 : f32 to vector<8x8xf32>
      %502 = arith.mulf %501, %500 : vector<8x8xf32>
      %503 = arith.addf %497, %502 : vector<8x8xf32>
      %c35_319 = arith.constant 35 : index
      %504 = memref.load %arg12[%c35_319] : memref<36xf32, #tpu.memory_space<smem>>
      %c1_320 = arith.constant 1 : index
      %c2_321 = arith.constant 2 : index
      %c2_322 = arith.constant 2 : index
      %505 = vector.load %arg20[%c1_320, %c2_321, %c2_322] : memref<2x10x10xf32, #tpu.memory_space<vmem>>, vector<1x8x8xf32>
      %506 = vector.shape_cast %505 : vector<1x8x8xf32> to vector<8x8xf32>
      %507 = vector.broadcast %504 : f32 to vector<8x8xf32>
      %508 = arith.mulf %507, %506 : vector<8x8xf32>
      %509 = arith.addf %503, %508 : vector<8x8xf32>
      %c1_323 = arith.constant 1 : index
      %510 = memref.load %arg13[%c1_323] : memref<2xf32, #tpu.memory_space<smem>>
      %511 = vector.broadcast %510 : f32 to vector<8x8xf32>
      %512 = arith.addf %509, %511 : vector<8x8xf32>
      %cst_324 = arith.constant 0.000000e+00 : f32
      %513 = vector.broadcast %cst_324 : f32 to vector<8x8xf32>
      %514 = arith.subf %513, %400 : vector<8x8xf32>
      %515 = math.exp %514 : vector<8x8xf32>
      %cst_325 = arith.constant 1.000000e+00 : f32
      %516 = vector.broadcast %cst_325 : f32 to vector<8x8xf32>
      %517 = arith.addf %516, %515 : vector<8x8xf32>
      %cst_326 = arith.constant 1.000000e+00 : f32
      %518 = vector.broadcast %cst_326 : f32 to vector<8x8xf32>
      %519 = arith.divf %518, %517 : vector<8x8xf32>
      %cst_327 = arith.constant 0.000000e+00 : f32
      %520 = vector.broadcast %cst_327 : f32 to vector<8x8xf32>
      %521 = arith.subf %520, %512 : vector<8x8xf32>
      %522 = math.exp %521 : vector<8x8xf32>
      %cst_328 = arith.constant 1.000000e+00 : f32
      %523 = vector.broadcast %cst_328 : f32 to vector<8x8xf32>
      %524 = arith.addf %523, %522 : vector<8x8xf32>
      %cst_329 = arith.constant 1.000000e+00 : f32
      %525 = vector.broadcast %cst_329 : f32 to vector<8x8xf32>
      %526 = arith.divf %525, %524 : vector<8x8xf32>
      %c0_330 = arith.constant 0 : index
      %c0_331 = arith.constant 0 : index
      %527 = vector.load %arg8[%c0_330, %c0_331] : memref<32x8xf32, #tpu.memory_space<vmem>>, vector<32x8xf32>
      %cst_332 = arith.constant dense<0.000000e+00> : vector<32x8xf32>
      %528 = tpu.matmul %527, %519, %cst_332 {dimension_numbers = #tpu.dot_dimension_numbers<[1], [0], [0], [1], [0, 0, 1, 1], [], []>} : vector<32x8xf32>, vector<8x8xf32>, vector<32x8xf32> -> vector<32x8xf32>
      %c0_333 = arith.constant 0 : index
      %c0_334 = arith.constant 0 : index
      %529 = vector.load %arg9[%c0_333, %c0_334] : memref<8x32xf32, #tpu.memory_space<vmem>>, vector<8x32xf32>
      %cst_335 = arith.constant dense<0.000000e+00> : vector<32x32xf32>
      %530 = tpu.matmul %528, %529, %cst_335 {dimension_numbers = #tpu.dot_dimension_numbers<[1], [0], [0], [1], [0, 0, 1, 1], [], []>} : vector<32x8xf32>, vector<8x32xf32>, vector<32x32xf32> -> vector<32x32xf32>
      %531 = arith.addf %530, %25 : vector<32x32xf32>
      %c0_336 = arith.constant 0 : index
      %c0_337 = arith.constant 0 : index
      %532 = vector.load %arg8[%c0_336, %c0_337] : memref<32x8xf32, #tpu.memory_space<vmem>>, vector<32x8xf32>
      %cst_338 = arith.constant dense<0.000000e+00> : vector<32x8xf32>
      %533 = tpu.matmul %532, %526, %cst_338 {dimension_numbers = #tpu.dot_dimension_numbers<[1], [0], [0], [1], [0, 0, 1, 1], [], []>} : vector<32x8xf32>, vector<8x8xf32>, vector<32x8xf32> -> vector<32x8xf32>
      %c0_339 = arith.constant 0 : index
      %c0_340 = arith.constant 0 : index
      %534 = vector.load %arg9[%c0_339, %c0_340] : memref<8x32xf32, #tpu.memory_space<vmem>>, vector<8x32xf32>
      %cst_341 = arith.constant dense<0.000000e+00> : vector<32x32xf32>
      %535 = tpu.matmul %533, %534, %cst_341 {dimension_numbers = #tpu.dot_dimension_numbers<[1], [0], [0], [1], [0, 0, 1, 1], [], []>} : vector<32x8xf32>, vector<8x32xf32>, vector<32x32xf32> -> vector<32x32xf32>
      %536 = arith.addf %535, %30 : vector<32x32xf32>
      %c0_342 = arith.constant 0 : index
      %c1_343 = arith.constant 1 : index
      %c1_344 = arith.constant 1 : index
      %537 = vector.load %arg21[%c0_342, %c1_343, %c1_344] : memref<2x34x34xf32, #tpu.memory_space<vmem>>, vector<1x32x32xf32>
      %538 = vector.shape_cast %537 : vector<1x32x32xf32> to vector<32x32xf32>
      %539 = vector.shape_cast %531 : vector<32x32xf32> to vector<1x32x32xf32>
      tpu.vector_store %arg21[%c0_342, %c1_343, %c1_344], %539 {strides = array<i32>} : memref<2x34x34xf32, #tpu.memory_space<vmem>>, vector<1x32x32xf32>,
      %c1_345 = arith.constant 1 : index
      %c1_346 = arith.constant 1 : index
      %c1_347 = arith.constant 1 : index
      %540 = vector.load %arg21[%c1_345, %c1_346, %c1_347] : memref<2x34x34xf32, #tpu.memory_space<vmem>>, vector<1x32x32xf32>
      %541 = vector.shape_cast %540 : vector<1x32x32xf32> to vector<32x32xf32>
      %542 = vector.shape_cast %536 : vector<32x32xf32> to vector<1x32x32xf32>
      tpu.vector_store %arg21[%c1_345, %c1_346, %c1_347], %542 {strides = array<i32>} : memref<2x34x34xf32, #tpu.memory_space<vmem>>, vector<1x32x32xf32>,
      %cst_348 = arith.constant 0.000000e+00 : f32
      %543 = vector.broadcast %cst_348 : f32 to vector<32x32xf32>
      %c0_349 = arith.constant 0 : index
      %544 = memref.load %arg14[%c0_349] : memref<36xf32, #tpu.memory_space<smem>>
      %c0_350 = arith.constant 0 : index
      %c0_351 = arith.constant 0 : index
      %c0_352 = arith.constant 0 : index
      %545 = vector.load %arg21[%c0_350, %c0_351, %c0_352] : memref<2x34x34xf32, #tpu.memory_space<vmem>>, vector<1x32x32xf32>
      %546 = vector.shape_cast %545 : vector<1x32x32xf32> to vector<32x32xf32>
      %547 = vector.broadcast %544 : f32 to vector<32x32xf32>
      %548 = arith.mulf %547, %546 : vector<32x32xf32>
      %549 = arith.addf %543, %548 : vector<32x32xf32>
      %c1_353 = arith.constant 1 : index
      %550 = memref.load %arg14[%c1_353] : memref<36xf32, #tpu.memory_space<smem>>
      %c0_354 = arith.constant 0 : index
      %c0_355 = arith.constant 0 : index
      %c1_356 = arith.constant 1 : index
      %551 = vector.load %arg21[%c0_354, %c0_355, %c1_356] : memref<2x34x34xf32, #tpu.memory_space<vmem>>, vector<1x32x32xf32>
      %552 = vector.shape_cast %551 : vector<1x32x32xf32> to vector<32x32xf32>
      %553 = vector.broadcast %550 : f32 to vector<32x32xf32>
      %554 = arith.mulf %553, %552 : vector<32x32xf32>
      %555 = arith.addf %549, %554 : vector<32x32xf32>
      %c2_357 = arith.constant 2 : index
      %556 = memref.load %arg14[%c2_357] : memref<36xf32, #tpu.memory_space<smem>>
      %c0_358 = arith.constant 0 : index
      %c0_359 = arith.constant 0 : index
      %c2_360 = arith.constant 2 : index
      %557 = vector.load %arg21[%c0_358, %c0_359, %c2_360] : memref<2x34x34xf32, #tpu.memory_space<vmem>>, vector<1x32x32xf32>
      %558 = vector.shape_cast %557 : vector<1x32x32xf32> to vector<32x32xf32>
      %559 = vector.broadcast %556 : f32 to vector<32x32xf32>
      %560 = arith.mulf %559, %558 : vector<32x32xf32>
      %561 = arith.addf %555, %560 : vector<32x32xf32>
      %c3_361 = arith.constant 3 : index
      %562 = memref.load %arg14[%c3_361] : memref<36xf32, #tpu.memory_space<smem>>
      %c0_362 = arith.constant 0 : index
      %c1_363 = arith.constant 1 : index
      %c0_364 = arith.constant 0 : index
      %563 = vector.load %arg21[%c0_362, %c1_363, %c0_364] : memref<2x34x34xf32, #tpu.memory_space<vmem>>, vector<1x32x32xf32>
      %564 = vector.shape_cast %563 : vector<1x32x32xf32> to vector<32x32xf32>
      %565 = vector.broadcast %562 : f32 to vector<32x32xf32>
      %566 = arith.mulf %565, %564 : vector<32x32xf32>
      %567 = arith.addf %561, %566 : vector<32x32xf32>
      %c4_365 = arith.constant 4 : index
      %568 = memref.load %arg14[%c4_365] : memref<36xf32, #tpu.memory_space<smem>>
      %c0_366 = arith.constant 0 : index
      %c1_367 = arith.constant 1 : index
      %c1_368 = arith.constant 1 : index
      %569 = vector.load %arg21[%c0_366, %c1_367, %c1_368] : memref<2x34x34xf32, #tpu.memory_space<vmem>>, vector<1x32x32xf32>
      %570 = vector.shape_cast %569 : vector<1x32x32xf32> to vector<32x32xf32>
      %571 = vector.broadcast %568 : f32 to vector<32x32xf32>
      %572 = arith.mulf %571, %570 : vector<32x32xf32>
      %573 = arith.addf %567, %572 : vector<32x32xf32>
      %c5_369 = arith.constant 5 : index
      %574 = memref.load %arg14[%c5_369] : memref<36xf32, #tpu.memory_space<smem>>
      %c0_370 = arith.constant 0 : index
      %c1_371 = arith.constant 1 : index
      %c2_372 = arith.constant 2 : index
      %575 = vector.load %arg21[%c0_370, %c1_371, %c2_372] : memref<2x34x34xf32, #tpu.memory_space<vmem>>, vector<1x32x32xf32>
      %576 = vector.shape_cast %575 : vector<1x32x32xf32> to vector<32x32xf32>
      %577 = vector.broadcast %574 : f32 to vector<32x32xf32>
      %578 = arith.mulf %577, %576 : vector<32x32xf32>
      %579 = arith.addf %573, %578 : vector<32x32xf32>
      %c6_373 = arith.constant 6 : index
      %580 = memref.load %arg14[%c6_373] : memref<36xf32, #tpu.memory_space<smem>>
      %c0_374 = arith.constant 0 : index
      %c2_375 = arith.constant 2 : index
      %c0_376 = arith.constant 0 : index
      %581 = vector.load %arg21[%c0_374, %c2_375, %c0_376] : memref<2x34x34xf32, #tpu.memory_space<vmem>>, vector<1x32x32xf32>
      %582 = vector.shape_cast %581 : vector<1x32x32xf32> to vector<32x32xf32>
      %583 = vector.broadcast %580 : f32 to vector<32x32xf32>
      %584 = arith.mulf %583, %582 : vector<32x32xf32>
      %585 = arith.addf %579, %584 : vector<32x32xf32>
      %c7_377 = arith.constant 7 : index
      %586 = memref.load %arg14[%c7_377] : memref<36xf32, #tpu.memory_space<smem>>
      %c0_378 = arith.constant 0 : index
      %c2_379 = arith.constant 2 : index
      %c1_380 = arith.constant 1 : index
      %587 = vector.load %arg21[%c0_378, %c2_379, %c1_380] : memref<2x34x34xf32, #tpu.memory_space<vmem>>, vector<1x32x32xf32>
      %588 = vector.shape_cast %587 : vector<1x32x32xf32> to vector<32x32xf32>
      %589 = vector.broadcast %586 : f32 to vector<32x32xf32>
      %590 = arith.mulf %589, %588 : vector<32x32xf32>
      %591 = arith.addf %585, %590 : vector<32x32xf32>
      %c8_381 = arith.constant 8 : index
      %592 = memref.load %arg14[%c8_381] : memref<36xf32, #tpu.memory_space<smem>>
      %c0_382 = arith.constant 0 : index
      %c2_383 = arith.constant 2 : index
      %c2_384 = arith.constant 2 : index
      %593 = vector.load %arg21[%c0_382, %c2_383, %c2_384] : memref<2x34x34xf32, #tpu.memory_space<vmem>>, vector<1x32x32xf32>
      %594 = vector.shape_cast %593 : vector<1x32x32xf32> to vector<32x32xf32>
      %595 = vector.broadcast %592 : f32 to vector<32x32xf32>
      %596 = arith.mulf %595, %594 : vector<32x32xf32>
      %597 = arith.addf %591, %596 : vector<32x32xf32>
      %c9_385 = arith.constant 9 : index
      %598 = memref.load %arg14[%c9_385] : memref<36xf32, #tpu.memory_space<smem>>
      %c1_386 = arith.constant 1 : index
      %c0_387 = arith.constant 0 : index
      %c0_388 = arith.constant 0 : index
      %599 = vector.load %arg21[%c1_386, %c0_387, %c0_388] : memref<2x34x34xf32, #tpu.memory_space<vmem>>, vector<1x32x32xf32>
      %600 = vector.shape_cast %599 : vector<1x32x32xf32> to vector<32x32xf32>
      %601 = vector.broadcast %598 : f32 to vector<32x32xf32>
      %602 = arith.mulf %601, %600 : vector<32x32xf32>
      %603 = arith.addf %597, %602 : vector<32x32xf32>
      %c10_389 = arith.constant 10 : index
      %604 = memref.load %arg14[%c10_389] : memref<36xf32, #tpu.memory_space<smem>>
      %c1_390 = arith.constant 1 : index
      %c0_391 = arith.constant 0 : index
      %c1_392 = arith.constant 1 : index
      %605 = vector.load %arg21[%c1_390, %c0_391, %c1_392] : memref<2x34x34xf32, #tpu.memory_space<vmem>>, vector<1x32x32xf32>
      %606 = vector.shape_cast %605 : vector<1x32x32xf32> to vector<32x32xf32>
      %607 = vector.broadcast %604 : f32 to vector<32x32xf32>
      %608 = arith.mulf %607, %606 : vector<32x32xf32>
      %609 = arith.addf %603, %608 : vector<32x32xf32>
      %c11_393 = arith.constant 11 : index
      %610 = memref.load %arg14[%c11_393] : memref<36xf32, #tpu.memory_space<smem>>
      %c1_394 = arith.constant 1 : index
      %c0_395 = arith.constant 0 : index
      %c2_396 = arith.constant 2 : index
      %611 = vector.load %arg21[%c1_394, %c0_395, %c2_396] : memref<2x34x34xf32, #tpu.memory_space<vmem>>, vector<1x32x32xf32>
      %612 = vector.shape_cast %611 : vector<1x32x32xf32> to vector<32x32xf32>
      %613 = vector.broadcast %610 : f32 to vector<32x32xf32>
      %614 = arith.mulf %613, %612 : vector<32x32xf32>
      %615 = arith.addf %609, %614 : vector<32x32xf32>
      %c12_397 = arith.constant 12 : index
      %616 = memref.load %arg14[%c12_397] : memref<36xf32, #tpu.memory_space<smem>>
      %c1_398 = arith.constant 1 : index
      %c1_399 = arith.constant 1 : index
      %c0_400 = arith.constant 0 : index
      %617 = vector.load %arg21[%c1_398, %c1_399, %c0_400] : memref<2x34x34xf32, #tpu.memory_space<vmem>>, vector<1x32x32xf32>
      %618 = vector.shape_cast %617 : vector<1x32x32xf32> to vector<32x32xf32>
      %619 = vector.broadcast %616 : f32 to vector<32x32xf32>
      %620 = arith.mulf %619, %618 : vector<32x32xf32>
      %621 = arith.addf %615, %620 : vector<32x32xf32>
      %c13_401 = arith.constant 13 : index
      %622 = memref.load %arg14[%c13_401] : memref<36xf32, #tpu.memory_space<smem>>
      %c1_402 = arith.constant 1 : index
      %c1_403 = arith.constant 1 : index
      %c1_404 = arith.constant 1 : index
      %623 = vector.load %arg21[%c1_402, %c1_403, %c1_404] : memref<2x34x34xf32, #tpu.memory_space<vmem>>, vector<1x32x32xf32>
      %624 = vector.shape_cast %623 : vector<1x32x32xf32> to vector<32x32xf32>
      %625 = vector.broadcast %622 : f32 to vector<32x32xf32>
      %626 = arith.mulf %625, %624 : vector<32x32xf32>
      %627 = arith.addf %621, %626 : vector<32x32xf32>
      %c14_405 = arith.constant 14 : index
      %628 = memref.load %arg14[%c14_405] : memref<36xf32, #tpu.memory_space<smem>>
      %c1_406 = arith.constant 1 : index
      %c1_407 = arith.constant 1 : index
      %c2_408 = arith.constant 2 : index
      %629 = vector.load %arg21[%c1_406, %c1_407, %c2_408] : memref<2x34x34xf32, #tpu.memory_space<vmem>>, vector<1x32x32xf32>
      %630 = vector.shape_cast %629 : vector<1x32x32xf32> to vector<32x32xf32>
      %631 = vector.broadcast %628 : f32 to vector<32x32xf32>
      %632 = arith.mulf %631, %630 : vector<32x32xf32>
      %633 = arith.addf %627, %632 : vector<32x32xf32>
      %c15_409 = arith.constant 15 : index
      %634 = memref.load %arg14[%c15_409] : memref<36xf32, #tpu.memory_space<smem>>
      %c1_410 = arith.constant 1 : index
      %c2_411 = arith.constant 2 : index
      %c0_412 = arith.constant 0 : index
      %635 = vector.load %arg21[%c1_410, %c2_411, %c0_412] : memref<2x34x34xf32, #tpu.memory_space<vmem>>, vector<1x32x32xf32>
      %636 = vector.shape_cast %635 : vector<1x32x32xf32> to vector<32x32xf32>
      %637 = vector.broadcast %634 : f32 to vector<32x32xf32>
      %638 = arith.mulf %637, %636 : vector<32x32xf32>
      %639 = arith.addf %633, %638 : vector<32x32xf32>
      %c16_413 = arith.constant 16 : index
      %640 = memref.load %arg14[%c16_413] : memref<36xf32, #tpu.memory_space<smem>>
      %c1_414 = arith.constant 1 : index
      %c2_415 = arith.constant 2 : index
      %c1_416 = arith.constant 1 : index
      %641 = vector.load %arg21[%c1_414, %c2_415, %c1_416] : memref<2x34x34xf32, #tpu.memory_space<vmem>>, vector<1x32x32xf32>
      %642 = vector.shape_cast %641 : vector<1x32x32xf32> to vector<32x32xf32>
      %643 = vector.broadcast %640 : f32 to vector<32x32xf32>
      %644 = arith.mulf %643, %642 : vector<32x32xf32>
      %645 = arith.addf %639, %644 : vector<32x32xf32>
      %c17_417 = arith.constant 17 : index
      %646 = memref.load %arg14[%c17_417] : memref<36xf32, #tpu.memory_space<smem>>
      %c1_418 = arith.constant 1 : index
      %c2_419 = arith.constant 2 : index
      %c2_420 = arith.constant 2 : index
      %647 = vector.load %arg21[%c1_418, %c2_419, %c2_420] : memref<2x34x34xf32, #tpu.memory_space<vmem>>, vector<1x32x32xf32>
      %648 = vector.shape_cast %647 : vector<1x32x32xf32> to vector<32x32xf32>
      %649 = vector.broadcast %646 : f32 to vector<32x32xf32>
      %650 = arith.mulf %649, %648 : vector<32x32xf32>
      %651 = arith.addf %645, %650 : vector<32x32xf32>
      %c0_421 = arith.constant 0 : index
      %652 = memref.load %arg15[%c0_421] : memref<2xf32, #tpu.memory_space<smem>>
      %653 = vector.broadcast %652 : f32 to vector<32x32xf32>
      %654 = arith.addf %651, %653 : vector<32x32xf32>
      %cst_422 = arith.constant 0.000000e+00 : f32
      %655 = vector.broadcast %cst_422 : f32 to vector<32x32xf32>
      %c18_423 = arith.constant 18 : index
      %656 = memref.load %arg14[%c18_423] : memref<36xf32, #tpu.memory_space<smem>>
      %c0_424 = arith.constant 0 : index
      %c0_425 = arith.constant 0 : index
      %c0_426 = arith.constant 0 : index
      %657 = vector.load %arg21[%c0_424, %c0_425, %c0_426] : memref<2x34x34xf32, #tpu.memory_space<vmem>>, vector<1x32x32xf32>
      %658 = vector.shape_cast %657 : vector<1x32x32xf32> to vector<32x32xf32>
      %659 = vector.broadcast %656 : f32 to vector<32x32xf32>
      %660 = arith.mulf %659, %658 : vector<32x32xf32>
      %661 = arith.addf %655, %660 : vector<32x32xf32>
      %c19_427 = arith.constant 19 : index
      %662 = memref.load %arg14[%c19_427] : memref<36xf32, #tpu.memory_space<smem>>
      %c0_428 = arith.constant 0 : index
      %c0_429 = arith.constant 0 : index
      %c1_430 = arith.constant 1 : index
      %663 = vector.load %arg21[%c0_428, %c0_429, %c1_430] : memref<2x34x34xf32, #tpu.memory_space<vmem>>, vector<1x32x32xf32>
      %664 = vector.shape_cast %663 : vector<1x32x32xf32> to vector<32x32xf32>
      %665 = vector.broadcast %662 : f32 to vector<32x32xf32>
      %666 = arith.mulf %665, %664 : vector<32x32xf32>
      %667 = arith.addf %661, %666 : vector<32x32xf32>
      %c20_431 = arith.constant 20 : index
      %668 = memref.load %arg14[%c20_431] : memref<36xf32, #tpu.memory_space<smem>>
      %c0_432 = arith.constant 0 : index
      %c0_433 = arith.constant 0 : index
      %c2_434 = arith.constant 2 : index
      %669 = vector.load %arg21[%c0_432, %c0_433, %c2_434] : memref<2x34x34xf32, #tpu.memory_space<vmem>>, vector<1x32x32xf32>
      %670 = vector.shape_cast %669 : vector<1x32x32xf32> to vector<32x32xf32>
      %671 = vector.broadcast %668 : f32 to vector<32x32xf32>
      %672 = arith.mulf %671, %670 : vector<32x32xf32>
      %673 = arith.addf %667, %672 : vector<32x32xf32>
      %c21_435 = arith.constant 21 : index
      %674 = memref.load %arg14[%c21_435] : memref<36xf32, #tpu.memory_space<smem>>
      %c0_436 = arith.constant 0 : index
      %c1_437 = arith.constant 1 : index
      %c0_438 = arith.constant 0 : index
      %675 = vector.load %arg21[%c0_436, %c1_437, %c0_438] : memref<2x34x34xf32, #tpu.memory_space<vmem>>, vector<1x32x32xf32>
      %676 = vector.shape_cast %675 : vector<1x32x32xf32> to vector<32x32xf32>
      %677 = vector.broadcast %674 : f32 to vector<32x32xf32>
      %678 = arith.mulf %677, %676 : vector<32x32xf32>
      %679 = arith.addf %673, %678 : vector<32x32xf32>
      %c22_439 = arith.constant 22 : index
      %680 = memref.load %arg14[%c22_439] : memref<36xf32, #tpu.memory_space<smem>>
      %c0_440 = arith.constant 0 : index
      %c1_441 = arith.constant 1 : index
      %c1_442 = arith.constant 1 : index
      %681 = vector.load %arg21[%c0_440, %c1_441, %c1_442] : memref<2x34x34xf32, #tpu.memory_space<vmem>>, vector<1x32x32xf32>
      %682 = vector.shape_cast %681 : vector<1x32x32xf32> to vector<32x32xf32>
      %683 = vector.broadcast %680 : f32 to vector<32x32xf32>
      %684 = arith.mulf %683, %682 : vector<32x32xf32>
      %685 = arith.addf %679, %684 : vector<32x32xf32>
      %c23_443 = arith.constant 23 : index
      %686 = memref.load %arg14[%c23_443] : memref<36xf32, #tpu.memory_space<smem>>
      %c0_444 = arith.constant 0 : index
      %c1_445 = arith.constant 1 : index
      %c2_446 = arith.constant 2 : index
      %687 = vector.load %arg21[%c0_444, %c1_445, %c2_446] : memref<2x34x34xf32, #tpu.memory_space<vmem>>, vector<1x32x32xf32>
      %688 = vector.shape_cast %687 : vector<1x32x32xf32> to vector<32x32xf32>
      %689 = vector.broadcast %686 : f32 to vector<32x32xf32>
      %690 = arith.mulf %689, %688 : vector<32x32xf32>
      %691 = arith.addf %685, %690 : vector<32x32xf32>
      %c24_447 = arith.constant 24 : index
      %692 = memref.load %arg14[%c24_447] : memref<36xf32, #tpu.memory_space<smem>>
      %c0_448 = arith.constant 0 : index
      %c2_449 = arith.constant 2 : index
      %c0_450 = arith.constant 0 : index
      %693 = vector.load %arg21[%c0_448, %c2_449, %c0_450] : memref<2x34x34xf32, #tpu.memory_space<vmem>>, vector<1x32x32xf32>
      %694 = vector.shape_cast %693 : vector<1x32x32xf32> to vector<32x32xf32>
      %695 = vector.broadcast %692 : f32 to vector<32x32xf32>
      %696 = arith.mulf %695, %694 : vector<32x32xf32>
      %697 = arith.addf %691, %696 : vector<32x32xf32>
      %c25_451 = arith.constant 25 : index
      %698 = memref.load %arg14[%c25_451] : memref<36xf32, #tpu.memory_space<smem>>
      %c0_452 = arith.constant 0 : index
      %c2_453 = arith.constant 2 : index
      %c1_454 = arith.constant 1 : index
      %699 = vector.load %arg21[%c0_452, %c2_453, %c1_454] : memref<2x34x34xf32, #tpu.memory_space<vmem>>, vector<1x32x32xf32>
      %700 = vector.shape_cast %699 : vector<1x32x32xf32> to vector<32x32xf32>
      %701 = vector.broadcast %698 : f32 to vector<32x32xf32>
      %702 = arith.mulf %701, %700 : vector<32x32xf32>
      %703 = arith.addf %697, %702 : vector<32x32xf32>
      %c26_455 = arith.constant 26 : index
      %704 = memref.load %arg14[%c26_455] : memref<36xf32, #tpu.memory_space<smem>>
      %c0_456 = arith.constant 0 : index
      %c2_457 = arith.constant 2 : index
      %c2_458 = arith.constant 2 : index
      %705 = vector.load %arg21[%c0_456, %c2_457, %c2_458] : memref<2x34x34xf32, #tpu.memory_space<vmem>>, vector<1x32x32xf32>
      %706 = vector.shape_cast %705 : vector<1x32x32xf32> to vector<32x32xf32>
      %707 = vector.broadcast %704 : f32 to vector<32x32xf32>
      %708 = arith.mulf %707, %706 : vector<32x32xf32>
      %709 = arith.addf %703, %708 : vector<32x32xf32>
      %c27_459 = arith.constant 27 : index
      %710 = memref.load %arg14[%c27_459] : memref<36xf32, #tpu.memory_space<smem>>
      %c1_460 = arith.constant 1 : index
      %c0_461 = arith.constant 0 : index
      %c0_462 = arith.constant 0 : index
      %711 = vector.load %arg21[%c1_460, %c0_461, %c0_462] : memref<2x34x34xf32, #tpu.memory_space<vmem>>, vector<1x32x32xf32>
      %712 = vector.shape_cast %711 : vector<1x32x32xf32> to vector<32x32xf32>
      %713 = vector.broadcast %710 : f32 to vector<32x32xf32>
      %714 = arith.mulf %713, %712 : vector<32x32xf32>
      %715 = arith.addf %709, %714 : vector<32x32xf32>
      %c28_463 = arith.constant 28 : index
      %716 = memref.load %arg14[%c28_463] : memref<36xf32, #tpu.memory_space<smem>>
      %c1_464 = arith.constant 1 : index
      %c0_465 = arith.constant 0 : index
      %c1_466 = arith.constant 1 : index
      %717 = vector.load %arg21[%c1_464, %c0_465, %c1_466] : memref<2x34x34xf32, #tpu.memory_space<vmem>>, vector<1x32x32xf32>
      %718 = vector.shape_cast %717 : vector<1x32x32xf32> to vector<32x32xf32>
      %719 = vector.broadcast %716 : f32 to vector<32x32xf32>
      %720 = arith.mulf %719, %718 : vector<32x32xf32>
      %721 = arith.addf %715, %720 : vector<32x32xf32>
      %c29_467 = arith.constant 29 : index
      %722 = memref.load %arg14[%c29_467] : memref<36xf32, #tpu.memory_space<smem>>
      %c1_468 = arith.constant 1 : index
      %c0_469 = arith.constant 0 : index
      %c2_470 = arith.constant 2 : index
      %723 = vector.load %arg21[%c1_468, %c0_469, %c2_470] : memref<2x34x34xf32, #tpu.memory_space<vmem>>, vector<1x32x32xf32>
      %724 = vector.shape_cast %723 : vector<1x32x32xf32> to vector<32x32xf32>
      %725 = vector.broadcast %722 : f32 to vector<32x32xf32>
      %726 = arith.mulf %725, %724 : vector<32x32xf32>
      %727 = arith.addf %721, %726 : vector<32x32xf32>
      %c30_471 = arith.constant 30 : index
      %728 = memref.load %arg14[%c30_471] : memref<36xf32, #tpu.memory_space<smem>>
      %c1_472 = arith.constant 1 : index
      %c1_473 = arith.constant 1 : index
      %c0_474 = arith.constant 0 : index
      %729 = vector.load %arg21[%c1_472, %c1_473, %c0_474] : memref<2x34x34xf32, #tpu.memory_space<vmem>>, vector<1x32x32xf32>
      %730 = vector.shape_cast %729 : vector<1x32x32xf32> to vector<32x32xf32>
      %731 = vector.broadcast %728 : f32 to vector<32x32xf32>
      %732 = arith.mulf %731, %730 : vector<32x32xf32>
      %733 = arith.addf %727, %732 : vector<32x32xf32>
      %c31_475 = arith.constant 31 : index
      %734 = memref.load %arg14[%c31_475] : memref<36xf32, #tpu.memory_space<smem>>
      %c1_476 = arith.constant 1 : index
      %c1_477 = arith.constant 1 : index
      %c1_478 = arith.constant 1 : index
      %735 = vector.load %arg21[%c1_476, %c1_477, %c1_478] : memref<2x34x34xf32, #tpu.memory_space<vmem>>, vector<1x32x32xf32>
      %736 = vector.shape_cast %735 : vector<1x32x32xf32> to vector<32x32xf32>
      %737 = vector.broadcast %734 : f32 to vector<32x32xf32>
      %738 = arith.mulf %737, %736 : vector<32x32xf32>
      %739 = arith.addf %733, %738 : vector<32x32xf32>
      %c32_479 = arith.constant 32 : index
      %740 = memref.load %arg14[%c32_479] : memref<36xf32, #tpu.memory_space<smem>>
      %c1_480 = arith.constant 1 : index
      %c1_481 = arith.constant 1 : index
      %c2_482 = arith.constant 2 : index
      %741 = vector.load %arg21[%c1_480, %c1_481, %c2_482] : memref<2x34x34xf32, #tpu.memory_space<vmem>>, vector<1x32x32xf32>
      %742 = vector.shape_cast %741 : vector<1x32x32xf32> to vector<32x32xf32>
      %743 = vector.broadcast %740 : f32 to vector<32x32xf32>
      %744 = arith.mulf %743, %742 : vector<32x32xf32>
      %745 = arith.addf %739, %744 : vector<32x32xf32>
      %c33_483 = arith.constant 33 : index
      %746 = memref.load %arg14[%c33_483] : memref<36xf32, #tpu.memory_space<smem>>
      %c1_484 = arith.constant 1 : index
      %c2_485 = arith.constant 2 : index
      %c0_486 = arith.constant 0 : index
      %747 = vector.load %arg21[%c1_484, %c2_485, %c0_486] : memref<2x34x34xf32, #tpu.memory_space<vmem>>, vector<1x32x32xf32>
      %748 = vector.shape_cast %747 : vector<1x32x32xf32> to vector<32x32xf32>
      %749 = vector.broadcast %746 : f32 to vector<32x32xf32>
      %750 = arith.mulf %749, %748 : vector<32x32xf32>
      %751 = arith.addf %745, %750 : vector<32x32xf32>
      %c34_487 = arith.constant 34 : index
      %752 = memref.load %arg14[%c34_487] : memref<36xf32, #tpu.memory_space<smem>>
      %c1_488 = arith.constant 1 : index
      %c2_489 = arith.constant 2 : index
      %c1_490 = arith.constant 1 : index
      %753 = vector.load %arg21[%c1_488, %c2_489, %c1_490] : memref<2x34x34xf32, #tpu.memory_space<vmem>>, vector<1x32x32xf32>
      %754 = vector.shape_cast %753 : vector<1x32x32xf32> to vector<32x32xf32>
      %755 = vector.broadcast %752 : f32 to vector<32x32xf32>
      %756 = arith.mulf %755, %754 : vector<32x32xf32>
      %757 = arith.addf %751, %756 : vector<32x32xf32>
      %c35_491 = arith.constant 35 : index
      %758 = memref.load %arg14[%c35_491] : memref<36xf32, #tpu.memory_space<smem>>
      %c1_492 = arith.constant 1 : index
      %c2_493 = arith.constant 2 : index
      %c2_494 = arith.constant 2 : index
      %759 = vector.load %arg21[%c1_492, %c2_493, %c2_494] : memref<2x34x34xf32, #tpu.memory_space<vmem>>, vector<1x32x32xf32>
      %760 = vector.shape_cast %759 : vector<1x32x32xf32> to vector<32x32xf32>
      %761 = vector.broadcast %758 : f32 to vector<32x32xf32>
      %762 = arith.mulf %761, %760 : vector<32x32xf32>
      %763 = arith.addf %757, %762 : vector<32x32xf32>
      %c1_495 = arith.constant 1 : index
      %764 = memref.load %arg15[%c1_495] : memref<2xf32, #tpu.memory_space<smem>>
      %765 = vector.broadcast %764 : f32 to vector<32x32xf32>
      %766 = arith.addf %763, %765 : vector<32x32xf32>
      %cst_496 = arith.constant 0.000000e+00 : f32
      %767 = vector.broadcast %cst_496 : f32 to vector<32x32xf32>
      %768 = arith.subf %767, %654 : vector<32x32xf32>
      %769 = math.exp %768 : vector<32x32xf32>
      %cst_497 = arith.constant 1.000000e+00 : f32
      %770 = vector.broadcast %cst_497 : f32 to vector<32x32xf32>
      %771 = arith.addf %770, %769 : vector<32x32xf32>
      %cst_498 = arith.constant 1.000000e+00 : f32
      %772 = vector.broadcast %cst_498 : f32 to vector<32x32xf32>
      %773 = arith.divf %772, %771 : vector<32x32xf32>
      %cst_499 = arith.constant 0.000000e+00 : f32
      %774 = vector.broadcast %cst_499 : f32 to vector<32x32xf32>
      %775 = arith.subf %774, %766 : vector<32x32xf32>
      %776 = math.exp %775 : vector<32x32xf32>
      %cst_500 = arith.constant 1.000000e+00 : f32
      %777 = vector.broadcast %cst_500 : f32 to vector<32x32xf32>
      %778 = arith.addf %777, %776 : vector<32x32xf32>
      %cst_501 = arith.constant 1.000000e+00 : f32
      %779 = vector.broadcast %cst_501 : f32 to vector<32x32xf32>
      %780 = arith.divf %779, %778 : vector<32x32xf32>
      %c0_502 = arith.constant 0 : index
      %c1_503 = arith.constant 1 : index
      %c1_504 = arith.constant 1 : index
      %781 = vector.load %arg21[%c0_502, %c1_503, %c1_504] : memref<2x34x34xf32, #tpu.memory_space<vmem>>, vector<1x32x32xf32>
      %782 = vector.shape_cast %781 : vector<1x32x32xf32> to vector<32x32xf32>
      %783 = vector.shape_cast %773 : vector<32x32xf32> to vector<1x32x32xf32>
      tpu.vector_store %arg21[%c0_502, %c1_503, %c1_504], %783 {strides = array<i32>} : memref<2x34x34xf32, #tpu.memory_space<vmem>>, vector<1x32x32xf32>,
      %c1_505 = arith.constant 1 : index
      %c1_506 = arith.constant 1 : index
      %c1_507 = arith.constant 1 : index
      %784 = vector.load %arg21[%c1_505, %c1_506, %c1_507] : memref<2x34x34xf32, #tpu.memory_space<vmem>>, vector<1x32x32xf32>
      %785 = vector.shape_cast %784 : vector<1x32x32xf32> to vector<32x32xf32>
      %786 = vector.shape_cast %780 : vector<32x32xf32> to vector<1x32x32xf32>
      tpu.vector_store %arg21[%c1_505, %c1_506, %c1_507], %786 {strides = array<i32>} : memref<2x34x34xf32, #tpu.memory_space<vmem>>, vector<1x32x32xf32>,
      %cst_508 = arith.constant 0.000000e+00 : f32
      %787 = vector.broadcast %cst_508 : f32 to vector<32x32xf32>
      %c0_509 = arith.constant 0 : index
      %788 = memref.load %arg16[%c0_509] : memref<18xf32, #tpu.memory_space<smem>>
      %c0_510 = arith.constant 0 : index
      %c0_511 = arith.constant 0 : index
      %c0_512 = arith.constant 0 : index
      %789 = vector.load %arg21[%c0_510, %c0_511, %c0_512] : memref<2x34x34xf32, #tpu.memory_space<vmem>>, vector<1x32x32xf32>
      %790 = vector.shape_cast %789 : vector<1x32x32xf32> to vector<32x32xf32>
      %791 = vector.broadcast %788 : f32 to vector<32x32xf32>
      %792 = arith.mulf %791, %790 : vector<32x32xf32>
      %793 = arith.addf %787, %792 : vector<32x32xf32>
      %c1_513 = arith.constant 1 : index
      %794 = memref.load %arg16[%c1_513] : memref<18xf32, #tpu.memory_space<smem>>
      %c0_514 = arith.constant 0 : index
      %c0_515 = arith.constant 0 : index
      %c1_516 = arith.constant 1 : index
      %795 = vector.load %arg21[%c0_514, %c0_515, %c1_516] : memref<2x34x34xf32, #tpu.memory_space<vmem>>, vector<1x32x32xf32>
      %796 = vector.shape_cast %795 : vector<1x32x32xf32> to vector<32x32xf32>
      %797 = vector.broadcast %794 : f32 to vector<32x32xf32>
      %798 = arith.mulf %797, %796 : vector<32x32xf32>
      %799 = arith.addf %793, %798 : vector<32x32xf32>
      %c2_517 = arith.constant 2 : index
      %800 = memref.load %arg16[%c2_517] : memref<18xf32, #tpu.memory_space<smem>>
      %c0_518 = arith.constant 0 : index
      %c0_519 = arith.constant 0 : index
      %c2_520 = arith.constant 2 : index
      %801 = vector.load %arg21[%c0_518, %c0_519, %c2_520] : memref<2x34x34xf32, #tpu.memory_space<vmem>>, vector<1x32x32xf32>
      %802 = vector.shape_cast %801 : vector<1x32x32xf32> to vector<32x32xf32>
      %803 = vector.broadcast %800 : f32 to vector<32x32xf32>
      %804 = arith.mulf %803, %802 : vector<32x32xf32>
      %805 = arith.addf %799, %804 : vector<32x32xf32>
      %c3_521 = arith.constant 3 : index
      %806 = memref.load %arg16[%c3_521] : memref<18xf32, #tpu.memory_space<smem>>
      %c0_522 = arith.constant 0 : index
      %c1_523 = arith.constant 1 : index
      %c0_524 = arith.constant 0 : index
      %807 = vector.load %arg21[%c0_522, %c1_523, %c0_524] : memref<2x34x34xf32, #tpu.memory_space<vmem>>, vector<1x32x32xf32>
      %808 = vector.shape_cast %807 : vector<1x32x32xf32> to vector<32x32xf32>
      %809 = vector.broadcast %806 : f32 to vector<32x32xf32>
      %810 = arith.mulf %809, %808 : vector<32x32xf32>
      %811 = arith.addf %805, %810 : vector<32x32xf32>
      %c4_525 = arith.constant 4 : index
      %812 = memref.load %arg16[%c4_525] : memref<18xf32, #tpu.memory_space<smem>>
      %c0_526 = arith.constant 0 : index
      %c1_527 = arith.constant 1 : index
      %c1_528 = arith.constant 1 : index
      %813 = vector.load %arg21[%c0_526, %c1_527, %c1_528] : memref<2x34x34xf32, #tpu.memory_space<vmem>>, vector<1x32x32xf32>
      %814 = vector.shape_cast %813 : vector<1x32x32xf32> to vector<32x32xf32>
      %815 = vector.broadcast %812 : f32 to vector<32x32xf32>
      %816 = arith.mulf %815, %814 : vector<32x32xf32>
      %817 = arith.addf %811, %816 : vector<32x32xf32>
      %c5_529 = arith.constant 5 : index
      %818 = memref.load %arg16[%c5_529] : memref<18xf32, #tpu.memory_space<smem>>
      %c0_530 = arith.constant 0 : index
      %c1_531 = arith.constant 1 : index
      %c2_532 = arith.constant 2 : index
      %819 = vector.load %arg21[%c0_530, %c1_531, %c2_532] : memref<2x34x34xf32, #tpu.memory_space<vmem>>, vector<1x32x32xf32>
      %820 = vector.shape_cast %819 : vector<1x32x32xf32> to vector<32x32xf32>
      %821 = vector.broadcast %818 : f32 to vector<32x32xf32>
      %822 = arith.mulf %821, %820 : vector<32x32xf32>
      %823 = arith.addf %817, %822 : vector<32x32xf32>
      %c6_533 = arith.constant 6 : index
      %824 = memref.load %arg16[%c6_533] : memref<18xf32, #tpu.memory_space<smem>>
      %c0_534 = arith.constant 0 : index
      %c2_535 = arith.constant 2 : index
      %c0_536 = arith.constant 0 : index
      %825 = vector.load %arg21[%c0_534, %c2_535, %c0_536] : memref<2x34x34xf32, #tpu.memory_space<vmem>>, vector<1x32x32xf32>
      %826 = vector.shape_cast %825 : vector<1x32x32xf32> to vector<32x32xf32>
      %827 = vector.broadcast %824 : f32 to vector<32x32xf32>
      %828 = arith.mulf %827, %826 : vector<32x32xf32>
      %829 = arith.addf %823, %828 : vector<32x32xf32>
      %c7_537 = arith.constant 7 : index
      %830 = memref.load %arg16[%c7_537] : memref<18xf32, #tpu.memory_space<smem>>
      %c0_538 = arith.constant 0 : index
      %c2_539 = arith.constant 2 : index
      %c1_540 = arith.constant 1 : index
      %831 = vector.load %arg21[%c0_538, %c2_539, %c1_540] : memref<2x34x34xf32, #tpu.memory_space<vmem>>, vector<1x32x32xf32>
      %832 = vector.shape_cast %831 : vector<1x32x32xf32> to vector<32x32xf32>
      %833 = vector.broadcast %830 : f32 to vector<32x32xf32>
      %834 = arith.mulf %833, %832 : vector<32x32xf32>
      %835 = arith.addf %829, %834 : vector<32x32xf32>
      %c8_541 = arith.constant 8 : index
      %836 = memref.load %arg16[%c8_541] : memref<18xf32, #tpu.memory_space<smem>>
      %c0_542 = arith.constant 0 : index
      %c2_543 = arith.constant 2 : index
      %c2_544 = arith.constant 2 : index
      %837 = vector.load %arg21[%c0_542, %c2_543, %c2_544] : memref<2x34x34xf32, #tpu.memory_space<vmem>>, vector<1x32x32xf32>
      %838 = vector.shape_cast %837 : vector<1x32x32xf32> to vector<32x32xf32>
      %839 = vector.broadcast %836 : f32 to vector<32x32xf32>
      %840 = arith.mulf %839, %838 : vector<32x32xf32>
      %841 = arith.addf %835, %840 : vector<32x32xf32>
      %c9_545 = arith.constant 9 : index
      %842 = memref.load %arg16[%c9_545] : memref<18xf32, #tpu.memory_space<smem>>
      %c1_546 = arith.constant 1 : index
      %c0_547 = arith.constant 0 : index
      %c0_548 = arith.constant 0 : index
      %843 = vector.load %arg21[%c1_546, %c0_547, %c0_548] : memref<2x34x34xf32, #tpu.memory_space<vmem>>, vector<1x32x32xf32>
      %844 = vector.shape_cast %843 : vector<1x32x32xf32> to vector<32x32xf32>
      %845 = vector.broadcast %842 : f32 to vector<32x32xf32>
      %846 = arith.mulf %845, %844 : vector<32x32xf32>
      %847 = arith.addf %841, %846 : vector<32x32xf32>
      %c10_549 = arith.constant 10 : index
      %848 = memref.load %arg16[%c10_549] : memref<18xf32, #tpu.memory_space<smem>>
      %c1_550 = arith.constant 1 : index
      %c0_551 = arith.constant 0 : index
      %c1_552 = arith.constant 1 : index
      %849 = vector.load %arg21[%c1_550, %c0_551, %c1_552] : memref<2x34x34xf32, #tpu.memory_space<vmem>>, vector<1x32x32xf32>
      %850 = vector.shape_cast %849 : vector<1x32x32xf32> to vector<32x32xf32>
      %851 = vector.broadcast %848 : f32 to vector<32x32xf32>
      %852 = arith.mulf %851, %850 : vector<32x32xf32>
      %853 = arith.addf %847, %852 : vector<32x32xf32>
      %c11_553 = arith.constant 11 : index
      %854 = memref.load %arg16[%c11_553] : memref<18xf32, #tpu.memory_space<smem>>
      %c1_554 = arith.constant 1 : index
      %c0_555 = arith.constant 0 : index
      %c2_556 = arith.constant 2 : index
      %855 = vector.load %arg21[%c1_554, %c0_555, %c2_556] : memref<2x34x34xf32, #tpu.memory_space<vmem>>, vector<1x32x32xf32>
      %856 = vector.shape_cast %855 : vector<1x32x32xf32> to vector<32x32xf32>
      %857 = vector.broadcast %854 : f32 to vector<32x32xf32>
      %858 = arith.mulf %857, %856 : vector<32x32xf32>
      %859 = arith.addf %853, %858 : vector<32x32xf32>
      %c12_557 = arith.constant 12 : index
      %860 = memref.load %arg16[%c12_557] : memref<18xf32, #tpu.memory_space<smem>>
      %c1_558 = arith.constant 1 : index
      %c1_559 = arith.constant 1 : index
      %c0_560 = arith.constant 0 : index
      %861 = vector.load %arg21[%c1_558, %c1_559, %c0_560] : memref<2x34x34xf32, #tpu.memory_space<vmem>>, vector<1x32x32xf32>
      %862 = vector.shape_cast %861 : vector<1x32x32xf32> to vector<32x32xf32>
      %863 = vector.broadcast %860 : f32 to vector<32x32xf32>
      %864 = arith.mulf %863, %862 : vector<32x32xf32>
      %865 = arith.addf %859, %864 : vector<32x32xf32>
      %c13_561 = arith.constant 13 : index
      %866 = memref.load %arg16[%c13_561] : memref<18xf32, #tpu.memory_space<smem>>
      %c1_562 = arith.constant 1 : index
      %c1_563 = arith.constant 1 : index
      %c1_564 = arith.constant 1 : index
      %867 = vector.load %arg21[%c1_562, %c1_563, %c1_564] : memref<2x34x34xf32, #tpu.memory_space<vmem>>, vector<1x32x32xf32>
      %868 = vector.shape_cast %867 : vector<1x32x32xf32> to vector<32x32xf32>
      %869 = vector.broadcast %866 : f32 to vector<32x32xf32>
      %870 = arith.mulf %869, %868 : vector<32x32xf32>
      %871 = arith.addf %865, %870 : vector<32x32xf32>
      %c14_565 = arith.constant 14 : index
      %872 = memref.load %arg16[%c14_565] : memref<18xf32, #tpu.memory_space<smem>>
      %c1_566 = arith.constant 1 : index
      %c1_567 = arith.constant 1 : index
      %c2_568 = arith.constant 2 : index
      %873 = vector.load %arg21[%c1_566, %c1_567, %c2_568] : memref<2x34x34xf32, #tpu.memory_space<vmem>>, vector<1x32x32xf32>
      %874 = vector.shape_cast %873 : vector<1x32x32xf32> to vector<32x32xf32>
      %875 = vector.broadcast %872 : f32 to vector<32x32xf32>
      %876 = arith.mulf %875, %874 : vector<32x32xf32>
      %877 = arith.addf %871, %876 : vector<32x32xf32>
      %c15_569 = arith.constant 15 : index
      %878 = memref.load %arg16[%c15_569] : memref<18xf32, #tpu.memory_space<smem>>
      %c1_570 = arith.constant 1 : index
      %c2_571 = arith.constant 2 : index
      %c0_572 = arith.constant 0 : index
      %879 = vector.load %arg21[%c1_570, %c2_571, %c0_572] : memref<2x34x34xf32, #tpu.memory_space<vmem>>, vector<1x32x32xf32>
      %880 = vector.shape_cast %879 : vector<1x32x32xf32> to vector<32x32xf32>
      %881 = vector.broadcast %878 : f32 to vector<32x32xf32>
      %882 = arith.mulf %881, %880 : vector<32x32xf32>
      %883 = arith.addf %877, %882 : vector<32x32xf32>
      %c16_573 = arith.constant 16 : index
      %884 = memref.load %arg16[%c16_573] : memref<18xf32, #tpu.memory_space<smem>>
      %c1_574 = arith.constant 1 : index
      %c2_575 = arith.constant 2 : index
      %c1_576 = arith.constant 1 : index
      %885 = vector.load %arg21[%c1_574, %c2_575, %c1_576] : memref<2x34x34xf32, #tpu.memory_space<vmem>>, vector<1x32x32xf32>
      %886 = vector.shape_cast %885 : vector<1x32x32xf32> to vector<32x32xf32>
      %887 = vector.broadcast %884 : f32 to vector<32x32xf32>
      %888 = arith.mulf %887, %886 : vector<32x32xf32>
      %889 = arith.addf %883, %888 : vector<32x32xf32>
      %c17_577 = arith.constant 17 : index
      %890 = memref.load %arg16[%c17_577] : memref<18xf32, #tpu.memory_space<smem>>
      %c1_578 = arith.constant 1 : index
      %c2_579 = arith.constant 2 : index
      %c2_580 = arith.constant 2 : index
      %891 = vector.load %arg21[%c1_578, %c2_579, %c2_580] : memref<2x34x34xf32, #tpu.memory_space<vmem>>, vector<1x32x32xf32>
      %892 = vector.shape_cast %891 : vector<1x32x32xf32> to vector<32x32xf32>
      %893 = vector.broadcast %890 : f32 to vector<32x32xf32>
      %894 = arith.mulf %893, %892 : vector<32x32xf32>
      %895 = arith.addf %889, %894 : vector<32x32xf32>
      %c0_581 = arith.constant 0 : index
      %896 = memref.load %arg17[%c0_581] : memref<1xf32, #tpu.memory_space<smem>>
      %897 = vector.broadcast %896 : f32 to vector<32x32xf32>
      %898 = arith.addf %895, %897 : vector<32x32xf32>
      %cst_582 = arith.constant 0.000000e+00 : f32
      %899 = vector.broadcast %cst_582 : f32 to vector<32x32xf32>
      %900 = arith.subf %899, %898 : vector<32x32xf32>
      %901 = math.exp %900 : vector<32x32xf32>
      %cst_583 = arith.constant 1.000000e+00 : f32
      %902 = vector.broadcast %cst_583 : f32 to vector<32x32xf32>
      %903 = arith.addf %902, %901 : vector<32x32xf32>
      %cst_584 = arith.constant 1.000000e+00 : f32
      %904 = vector.broadcast %cst_584 : f32 to vector<32x32xf32>
      %905 = arith.divf %904, %903 : vector<32x32xf32>
      %906 = vector.shape_cast %905 : vector<32x32xf32> to vector<1x1x32x32xf32>
      %c0_585 = arith.constant 0 : index
      %c0_586 = arith.constant 0 : index
      %c0_587 = arith.constant 0 : index
      %c0_588 = arith.constant 0 : index
      %907 = vector.load %arg18[%c0_585, %c0_586, %c0_587, %c0_588] : memref<1x1x32x32xf32, #tpu.memory_space<vmem>>, vector<1x1x32x32xf32>
      tpu.vector_store %arg18[%c0_585, %c0_586, %c0_587, %c0_588], %906 {strides = array<i32>} : memref<1x1x32x32xf32, #tpu.memory_space<vmem>>, vector<1x1x32x32xf32>,
    } else {
    }
    return
  }
  func.func @transform_0(%arg0: i32, %arg1: i32) -> (i32, i32, i32, i32) {
    %c0_i32 = arith.constant 0 : i32
    %c0_i32_0 = arith.constant 0 : i32
    %c0_i32_1 = arith.constant 0 : i32
    return %arg0, %arg1, %c0_i32, %c0_i32_0 : i32, i32, i32, i32
  }
  func.func @transform_1(%arg0: i32, %arg1: i32) -> (i32, i32) {
    %c0_i32 = arith.constant 0 : i32
    %c0_i32_0 = arith.constant 0 : i32
    %c0_i32_1 = arith.constant 0 : i32
    return %c0_i32, %c0_i32_0 : i32, i32
  }
  func.func @transform_2(%arg0: i32, %arg1: i32) -> (i32, i32) {
    %c0_i32 = arith.constant 0 : i32
    %c0_i32_0 = arith.constant 0 : i32
    return %c0_i32, %arg1 : i32, i32
  }
  func.func @transform_3(%arg0: i32, %arg1: i32) -> i32 {
    %c0_i32 = arith.constant 0 : i32
    %c0_i32_0 = arith.constant 0 : i32
    return %c0_i32 : i32
  }
  func.func @transform_4(%arg0: i32, %arg1: i32) -> (i32, i32) {
    %c0_i32 = arith.constant 0 : i32
    %c0_i32_0 = arith.constant 0 : i32
    %c0_i32_1 = arith.constant 0 : i32
    return %c0_i32, %c0_i32_0 : i32, i32
  }
  func.func @transform_5(%arg0: i32, %arg1: i32) -> (i32, i32) {
    %c0_i32 = arith.constant 0 : i32
    %c0_i32_0 = arith.constant 0 : i32
    %c0_i32_1 = arith.constant 0 : i32
    return %c0_i32, %c0_i32_0 : i32, i32
  }
  func.func @transform_6(%arg0: i32, %arg1: i32) -> (i32, i32) {
    %c0_i32 = arith.constant 0 : i32
    %c0_i32_0 = arith.constant 0 : i32
    %c0_i32_1 = arith.constant 0 : i32
    return %c0_i32, %c0_i32_0 : i32, i32
  }
  func.func @transform_7(%arg0: i32, %arg1: i32) -> (i32, i32) {
    %c0_i32 = arith.constant 0 : i32
    %c0_i32_0 = arith.constant 0 : i32
    %c0_i32_1 = arith.constant 0 : i32
    return %c0_i32, %c0_i32_0 : i32, i32
  }
  func.func @transform_8(%arg0: i32, %arg1: i32) -> i32 {
    %c0_i32 = arith.constant 0 : i32
    %c0_i32_0 = arith.constant 0 : i32
    return %c0_i32 : i32
  }
  func.func @transform_9(%arg0: i32, %arg1: i32) -> i32 {
    %c0_i32 = arith.constant 0 : i32
    %c0_i32_0 = arith.constant 0 : i32
    return %c0_i32 : i32
  }
  func.func @transform_10(%arg0: i32, %arg1: i32) -> i32 {
    %c0_i32 = arith.constant 0 : i32
    %c0_i32_0 = arith.constant 0 : i32
    return %c0_i32 : i32
  }
  func.func @transform_11(%arg0: i32, %arg1: i32) -> i32 {
    %c0_i32 = arith.constant 0 : i32
    %c0_i32_0 = arith.constant 0 : i32
    return %c0_i32 : i32
  }
  func.func @transform_12(%arg0: i32, %arg1: i32) -> i32 {
    %c0_i32 = arith.constant 0 : i32
    %c0_i32_0 = arith.constant 0 : i32
    return %c0_i32 : i32
  }
  func.func @transform_13(%arg0: i32, %arg1: i32) -> i32 {
    %c0_i32 = arith.constant 0 : i32
    %c0_i32_0 = arith.constant 0 : i32
    return %c0_i32 : i32
  }
  func.func @transform_14(%arg0: i32, %arg1: i32) -> i32 {
    %c0_i32 = arith.constant 0 : i32
    %c0_i32_0 = arith.constant 0 : i32
    return %c0_i32 : i32
  }
  func.func @transform_15(%arg0: i32, %arg1: i32) -> i32 {
    %c0_i32 = arith.constant 0 : i32
    %c0_i32_0 = arith.constant 0 : i32
    return %c0_i32 : i32
  }
  func.func @transform_16(%arg0: i32, %arg1: i32) -> (i32, i32, i32, i32) {
    %c0_i32 = arith.constant 0 : i32
    %c0_i32_0 = arith.constant 0 : i32
    %c0_i32_1 = arith.constant 0 : i32
    %c0_i32_2 = arith.constant 0 : i32
    return %arg0, %c0_i32, %c0_i32_0, %c0_i32_1 : i32, i32, i32, i32
  }
}

</mosaic_0001>

<llo_original>
// kernel: tpu_custom_call.1
$region0: #{tpu_custom_call.1}
  #allocation0 [shape = 'u32[]', space=smem, size = 0x4, offset = 0x4, fixed_abs, tag = 'smem constant byte address 0x4 - core index']
  #allocation1 [shape = 'u32[72,128]{1,0:T(1,128)}', space=vmem, size = 0x9000, scoped, tag = 'internal scratch']
  #allocation2 [shape = 'f32[2,32,32]{2,1,0:T(8,128)}', space=vmem, size = 0x8000, scoped, tag = 'scratch operand']
  #allocation3 [shape = 'f32[2,10,10]{2,1,0:T(8,128)}', space=vmem, size = 0x4000, scoped, tag = 'scratch operand']
  #allocation4 [shape = 'f32[2,34,34]{2,1,0:T(8,128)}', space=vmem, size = 0xa000, scoped, tag = 'scratch operand']
  #allocation5 [shape = 'f32[1]{0:T(128)S(6)}', space=smem, size = 0x200, scoped, tag = 'scoped memory for tpu_custom_call.1']
  %s0 = inlined_call_operand.hbm [shape: f32[2,64,64,64], index: 0, kind: input, shape index: {}]
  %s1 = inlined_call_operand.vmem [shape: f32[64,32], index: 1, kind: input, shape index: {}]
  %s2 = inlined_call_operand.hbm [shape: f32[64,4096], index: 2, kind: input, shape index: {}]
  %s3 = inlined_call_operand.hbm [shape: f32[2], index: 3, kind: input, shape index: {}]
  %s4 = inlined_call_operand.hbm [shape: f32[8,32], index: 4, kind: input, shape index: {}]
  %s5 = inlined_call_operand.vmem [shape: f32[32,8], index: 5, kind: input, shape index: {}]
  %s6 = inlined_call_operand.vmem [shape: f32[32,8], index: 6, kind: input, shape index: {}]
  %s7 = inlined_call_operand.hbm [shape: f32[8,32], index: 7, kind: input, shape index: {}]
  %s8 = inlined_call_operand.hbm [shape: f32[36], index: 8, kind: input, shape index: {}]
  %s9 = inlined_call_operand.hbm [shape: f32[2], index: 9, kind: input, shape index: {}]
  %s10 = inlined_call_operand.hbm [shape: f32[36], index: 10, kind: input, shape index: {}]
  %s11 = inlined_call_operand.hbm [shape: f32[2], index: 11, kind: input, shape index: {}]
  %s12 = inlined_call_operand.hbm [shape: f32[36], index: 12, kind: input, shape index: {}]
  %s13 = inlined_call_operand.hbm [shape: f32[2], index: 13, kind: input, shape index: {}]
  %s14 = inlined_call_operand.hbm [shape: f32[18], index: 14, kind: input, shape index: {}]
  %s15 = inlined_call_operand.<no memory space> [shape: f32[1], index: 15, kind: input, shape index: {}]
  %s16 = inlined_call_operand.hbm [shape: f32[2,1,32,32], index: 16, kind: output, shape index: {}]
  %s17 = sld [smem:[#allocation0]]
  $region153: #{tpu_custom_call.1} parent=0
    _
  %s19 = ssub.s32 1, %s17
  %s20 = scalar_select 0, %s19, %s17
  %21 = sst [smem:[#allocation5]] %s15
  $region1: #{tpu_custom_call.1} parent=0
    #allocation6 [shape = 'u8[4194304]{0}', space=vmem, size = 0x400000, scoped, tag = 'input window, operand 0']
    #allocation7 [shape = 's32[2]{0}', space=sflag, size = 0x8, scoped, tag = 'scoped memory for tpu_custom_call.1']
    #allocation8 [shape = 's32[2]{0}', space=sflag, size = 0x8, scoped, tag = 'scoped memory for tpu_custom_call.1']
    #allocation9 [shape = 's32[2]{0}', space=sflag, size = 0x8, scoped, tag = 'scoped memory for tpu_custom_call.1']
    #allocation10 [shape = 'u8[1048576]{0}', space=vmem, size = 0x100000, scoped, tag = 'input window, operand 2, single buffered']
    #allocation11 [shape = 's32[1]{0}', space=sflag, size = 0x4, scoped, tag = 'scoped memory for tpu_custom_call.1']
    #allocation12 [shape = 'u8[512]{0}', space=smem, size = 0x200, scoped, tag = 'input window, operand 3, single buffered']
    #allocation13 [shape = 'u8[4096]{0}', space=vmem, size = 0x1000, scoped, tag = 'input window, operand 4, single buffered']
    #allocation14 [shape = 'u8[4096]{0}', space=vmem, size = 0x1000, scoped, tag = 'input window, operand 7, single buffered']
    #allocation15 [shape = 's32[1]{0}', space=sflag, size = 0x4, scoped, tag = 'scoped memory for tpu_custom_call.1']
    #allocation16 [shape = 'u8[512]{0}', space=smem, size = 0x200, scoped, tag = 'input window, operand 8, single buffered']
    #allocation17 [shape = 's32[1]{0}', space=sflag, size = 0x4, scoped, tag = 'scoped memory for tpu_custom_call.1']
    #allocation18 [shape = 'u8[512]{0}', space=smem, size = 0x200, scoped, tag = 'input window, operand 9, single buffered']
    #allocation19 [shape = 'u8[512]{0}', space=smem, size = 0x200, scoped, tag = 'input window, operand 10, single buffered']
    #allocation20 [shape = 's32[1]{0}', space=sflag, size = 0x4, scoped, tag = 'scoped memory for tpu_custom_call.1']
    #allocation21 [shape = 'u8[512]{0}', space=smem, size = 0x200, scoped, tag = 'input window, operand 11, single buffered']
    #allocation22 [shape = 'u8[512]{0}', space=smem, size = 0x200, scoped, tag = 'input window, operand 12, single buffered']
    #allocation23 [shape = 's32[1]{0}', space=sflag, size = 0x4, scoped, tag = 'scoped memory for tpu_custom_call.1']
    #allocation24 [shape = 'u8[512]{0}', space=smem, size = 0x200, scoped, tag = 'input window, operand 13, single buffered']
    #allocation25 [shape = 'u8[512]{0}', space=smem, size = 0x200, scoped, tag = 'input window, operand 14, single buffered']
    #allocation26 [shape = 's32[1]{0}', space=sflag, size = 0x4, scoped, tag = 'scoped memory for tpu_custom_call.1']
    #allocation27 [shape = 'u8[32768]{0}', space=vmem, size = 0x8000, scoped, tag = 'output window, operand 0']
    %22 = vsyncpa [#allocation7], 0
    %s23 = scalar_lea.sflag [#allocation7], 1
    %24 = vsyncpa %s23, 0
    %25 = vsyncpa [#allocation11], 0
    %26 = vsyncpa [#allocation9], 0
    %27 = vsyncpa [#allocation15], 0
    %28 = vsyncpa [#allocation17], 0
    %29 = vsyncpa [#allocation20], 0
    %30 = vsyncpa [#allocation23], 0
    %31 = vsyncpa [#allocation26], 0
    %32 = vsyncpa [#allocation8], 0
    %s33 = scalar_lea.sflag [#allocation8], 1
    %34 = vsyncpa %s33, 0
    loop: start=0, step=1, limit=4
    $region2: #{tpu_custom_call.1} parent=1 // loop_pre_header
      _
    $region3: #{tpu_custom_call.1} parent=1 // loop_header
      %s36 = sphi 0, %s40
      %p37 = scmp.ge.s32.totalorder %s36, 4
      %s43 = sphi 0, %s55
      %s44 = sphi 0, %s51
      %s45 = sphi 0, %s43
      %s46 = sphi 0, %s44
      %s47 = sphi 0, %s45
      %s48 = sphi 0, %s46
      %s60 = sphi 0, %s62
      %s63 = sphi 0, %s60
      %s64 = sphi 0, %s63
      %s80 = sphi 0, %s64
      %s84 = sphi 0, %s84
      %s86 = sphi 0, %s84
      %s87 = sphi 0, %s86
      %s101 = sphi 0, %s87
      %s107 = sphi 0, %s109
      %s110 = sphi 0, %s107
      %s111 = sphi 0, %s110
      %s127 = sphi 0, %s111
      %s131 = sphi 0, %s131
      %s133 = sphi 0, %s131
      %s134 = sphi 0, %s133
      %s148 = sphi 0, %s134
      %s152 = sphi 0, %s152
      %s154 = sphi 0, %s152
      %s155 = sphi 0, %s154
      %s169 = sphi 0, %s155
      %s173 = sphi 0, %s173
      %s175 = sphi 0, %s173
      %s176 = sphi 0, %s175
      %s190 = sphi 0, %s176
      %s194 = sphi 0, %s194
      %s196 = sphi 0, %s194
      %s197 = sphi 0, %s196
      %s211 = sphi 0, %s197
      %s215 = sphi 0, %s215
      %s217 = sphi 0, %s215
      %s218 = sphi 0, %s217
      %s232 = sphi 0, %s218
      %s236 = sphi 0, %s236
      %s238 = sphi 0, %s236
      %s239 = sphi 0, %s238
      %s253 = sphi 0, %s239
      %s257 = sphi 0, %s257
      %s259 = sphi 0, %s257
      %s260 = sphi 0, %s259
      %s274 = sphi 0, %s260
      %s278 = sphi 0, %s278
      %s280 = sphi 0, %s278
      %s281 = sphi 0, %s280
      %s295 = sphi 0, %s281
      %s299 = sphi 0, %s299
      %s301 = sphi 0, %s299
      %s302 = sphi 0, %s301
      %s316 = sphi 0, %s302
      %s320 = sphi 0, %s320
      %s322 = sphi 0, %s320
      %s323 = sphi 0, %s322
      %s337 = sphi 0, %s323
      %s341 = sphi 0, %s341
      %s343 = sphi 0, %s341
      %s344 = sphi 0, %s343
      %s358 = sphi 0, %s344
      %s362 = sphi 0, %s362
      %s364 = sphi 0, %s362
      %s365 = sphi 0, %s364
      %s379 = sphi 0, %s365
      %s383 = sphi 0, %s383
      %s385 = sphi 0, %s383
      %s386 = sphi 0, %s385
      %s400 = sphi 0, %s386
      %s406 = sphi 0, %s408
      %s409 = sphi 0, %s406
      %s410 = sphi 0, %s409
      %s426 = sphi 0, %s410
    $region4: #{tpu_custom_call.1} parent=1 // loop_header_branch
      %39 = sbr.rel (%p37) target = $region8
    $region5: #{tpu_custom_call.1} parent=1 // loop_body
      %s41 = ssub.s32 %s36, 1
      %s42 = ssub.s32 %s36, 2
      %s49 = sadd.s32 1, %s44
      %p50 = scmp.ge.s32.totalorder %s49, 1
      %s51 = scalar_select %p50, 0, %s49
      %s52 = sadd.s32 1, %s43
      %s53 = scalar_select %p50, %s52, %s43
      %p54 = scmp.ge.s32.totalorder %s53, 2
      %s55 = scalar_select %p54, 0, %s53
      %s56 = ssub.s32 %s43, %s55
      %s57 = ssub.s32 %s44, %s51
      %s58 = sor.u32 %s56, %s57
      %p59 = scmp.eq.s32.totalorder %s58, 0
      %s61 = sadd.s32 %s60, 1
      %s62 = scalar_select %p59, %s60, %s61
      %p65 = pneg %p59
      %p66 = scmp.eq.s32.totalorder %s36, 1
      %p67 = por %p65, %p66
      %p68 = scmp.ne.s32.totalorder %s60, %s63
      %p69 = scmp.eq.s32.totalorder %s36, 0
      %p70 = por %p68, %p69
      %p71 = scmp.ne.s32.totalorder %s60, %s63
      %p72 = scmp.eq.s32.totalorder %s41, 1
      %p73 = por %p71, %p72
      %p74 = scmp.ne.s32.totalorder %s63, %s64
      %p75 = scmp.eq.s32.totalorder %s41, 0
      %p76 = por %p74, %p75
      %p77 = scmp.ne.s32.totalorder %s63, %s64
      %p78 = scmp.eq.s32.totalorder %s42, 1
      %p79 = por %p77, %p78
      %p81 = scmp.ne.s32.totalorder %s64, %s80
      %p82 = scmp.eq.s32.totalorder %s42, 0
      %p83 = por %p81, %p82
      %s85 = sadd.s32 %s84, 1
      %p88 = scmp.eq.s32.totalorder %s36, 1
      %p89 = scmp.ne.s32.totalorder %s84, %s86
      %p90 = scmp.eq.s32.totalorder %s36, 0
      %p91 = por %p89, %p90
      %p92 = scmp.ne.s32.totalorder %s84, %s86
      %p93 = scmp.eq.s32.totalorder %s41, 1
      %p94 = por %p92, %p93
      %p95 = scmp.ne.s32.totalorder %s86, %s87
      %p96 = scmp.eq.s32.totalorder %s41, 0
      %p97 = por %p95, %p96
      %p98 = scmp.ne.s32.totalorder %s86, %s87
      %p99 = scmp.eq.s32.totalorder %s42, 1
      %p100 = por %p98, %p99
      %p102 = scmp.ne.s32.totalorder %s87, %s101
      %p103 = scmp.eq.s32.totalorder %s42, 0
      %p104 = por %p102, %p103
      %s105 = ssub.s32 %s44, %s51
      %p106 = scmp.eq.s32.totalorder %s105, 0
      %s108 = sadd.s32 %s107, 1
      %s109 = scalar_select %p106, %s107, %s108
      %p112 = pneg %p106
      %p113 = scmp.eq.s32.totalorder %s36, 1
      %p114 = por %p112, %p113
      %p115 = scmp.ne.s32.totalorder %s107, %s110
      %p116 = scmp.eq.s32.totalorder %s36, 0
      %p117 = por %p115, %p116
      %p118 = scmp.ne.s32.totalorder %s107, %s110
      %p119 = scmp.eq.s32.totalorder %s41, 1
      %p120 = por %p118, %p119
      %p121 = scmp.ne.s32.totalorder %s110, %s111
      %p122 = scmp.eq.s32.totalorder %s41, 0
      %p123 = por %p121, %p122
      %p124 = scmp.ne.s32.totalorder %s110, %s111
      %p125 = scmp.eq.s32.totalorder %s42, 1
      %p126 = por %p124, %p125
      %p128 = scmp.ne.s32.totalorder %s111, %s127
      %p129 = scmp.eq.s32.totalorder %s42, 0
      %p130 = por %p128, %p129
      %s132 = sadd.s32 %s131, 1
      %p135 = scmp.eq.s32.totalorder %s36, 1
      %p136 = scmp.ne.s32.totalorder %s131, %s133
      %p137 = scmp.eq.s32.totalorder %s36, 0
      %p138 = por %p136, %p137
      %p139 = scmp.ne.s32.totalorder %s131, %s133
      %p140 = scmp.eq.s32.totalorder %s41, 1
      %p141 = por %p139, %p140
      %p142 = scmp.ne.s32.totalorder %s133, %s134
      %p143 = scmp.eq.s32.totalorder %s41, 0
      %p144 = por %p142, %p143
      %p145 = scmp.ne.s32.totalorder %s133, %s134
      %p146 = scmp.eq.s32.totalorder %s42, 1
      %p147 = por %p145, %p146
      %p149 = scmp.ne.s32.totalorder %s134, %s148
      %p150 = scmp.eq.s32.totalorder %s42, 0
      %p151 = por %p149, %p150
      %s153 = sadd.s32 %s152, 1
      %p156 = scmp.eq.s32.totalorder %s36, 1
      %p157 = scmp.ne.s32.totalorder %s152, %s154
      %p158 = scmp.eq.s32.totalorder %s36, 0
      %p159 = por %p157, %p158
      %p160 = scmp.ne.s32.totalorder %s152, %s154
      %p161 = scmp.eq.s32.totalorder %s41, 1
      %p162 = por %p160, %p161
      %p163 = scmp.ne.s32.totalorder %s154, %s155
      %p164 = scmp.eq.s32.totalorder %s41, 0
      %p165 = por %p163, %p164
      %p166 = scmp.ne.s32.totalorder %s154, %s155
      %p167 = scmp.eq.s32.totalorder %s42, 1
      %p168 = por %p166, %p167
      %p170 = scmp.ne.s32.totalorder %s155, %s169
      %p171 = scmp.eq.s32.totalorder %s42, 0
      %p172 = por %p170, %p171
      %s174 = sadd.s32 %s173, 1
      %p177 = scmp.eq.s32.totalorder %s36, 1
      %p178 = scmp.ne.s32.totalorder %s173, %s175
      %p179 = scmp.eq.s32.totalorder %s36, 0
      %p180 = por %p178, %p179
      %p181 = scmp.ne.s32.totalorder %s173, %s175
      %p182 = scmp.eq.s32.totalorder %s41, 1
      %p183 = por %p181, %p182
      %p184 = scmp.ne.s32.totalorder %s175, %s176
      %p185 = scmp.eq.s32.totalorder %s41, 0
      %p186 = por %p184, %p185
      %p187 = scmp.ne.s32.totalorder %s175, %s176
      %p188 = scmp.eq.s32.totalorder %s42, 1
      %p189 = por %p187, %p188
      %p191 = scmp.ne.s32.totalorder %s176, %s190
      %p192 = scmp.eq.s32.totalorder %s42, 0
      %p193 = por %p191, %p192
      %s195 = sadd.s32 %s194, 1
      %p198 = scmp.eq.s32.totalorder %s36, 1
      %p199 = scmp.ne.s32.totalorder %s194, %s196
      %p200 = scmp.eq.s32.totalorder %s36, 0
      %p201 = por %p199, %p200
      %p202 = scmp.ne.s32.totalorder %s194, %s196
      %p203 = scmp.eq.s32.totalorder %s41, 1
      %p204 = por %p202, %p203
      %p205 = scmp.ne.s32.totalorder %s196, %s197
      %p206 = scmp.eq.s32.totalorder %s41, 0
      %p207 = por %p205, %p206
      %p208 = scmp.ne.s32.totalorder %s196, %s197
      %p209 = scmp.eq.s32.totalorder %s42, 1
      %p210 = por %p208, %p209
      %p212 = scmp.ne.s32.totalorder %s197, %s211
      %p213 = scmp.eq.s32.totalorder %s42, 0
      %p214 = por %p212, %p213
      %s216 = sadd.s32 %s215, 1
      %p219 = scmp.eq.s32.totalorder %s36, 1
      %p220 = scmp.ne.s32.totalorder %s215, %s217
      %p221 = scmp.eq.s32.totalorder %s36, 0
      %p222 = por %p220, %p221
      %p223 = scmp.ne.s32.totalorder %s215, %s217
      %p224 = scmp.eq.s32.totalorder %s41, 1
      %p225 = por %p223, %p224
      %p226 = scmp.ne.s32.totalorder %s217, %s218
      %p227 = scmp.eq.s32.totalorder %s41, 0
      %p228 = por %p226, %p227
      %p229 = scmp.ne.s32.totalorder %s217, %s218
      %p230 = scmp.eq.s32.totalorder %s42, 1
      %p231 = por %p229, %p230
      %p233 = scmp.ne.s32.totalorder %s218, %s232
      %p234 = scmp.eq.s32.totalorder %s42, 0
      %p235 = por %p233, %p234
      %s237 = sadd.s32 %s236, 1
      %p240 = scmp.eq.s32.totalorder %s36, 1
      %p241 = scmp.ne.s32.totalorder %s236, %s238
      %p242 = scmp.eq.s32.totalorder %s36, 0
      %p243 = por %p241, %p242
      %p244 = scmp.ne.s32.totalorder %s236, %s238
      %p245 = scmp.eq.s32.totalorder %s41, 1
      %p246 = por %p244, %p245
      %p247 = scmp.ne.s32.totalorder %s238, %s239
      %p248 = scmp.eq.s32.totalorder %s41, 0
      %p249 = por %p247, %p248
      %p250 = scmp.ne.s32.totalorder %s238, %s239
      %p251 = scmp.eq.s32.totalorder %s42, 1
      %p252 = por %p250, %p251
      %p254 = scmp.ne.s32.totalorder %s239, %s253
      %p255 = scmp.eq.s32.totalorder %s42, 0
      %p256 = por %p254, %p255
      %s258 = sadd.s32 %s257, 1
      %p261 = scmp.eq.s32.totalorder %s36, 1
      %p262 = scmp.ne.s32.totalorder %s257, %s259
      %p263 = scmp.eq.s32.totalorder %s36, 0
      %p264 = por %p262, %p263
      %p265 = scmp.ne.s32.totalorder %s257, %s259
      %p266 = scmp.eq.s32.totalorder %s41, 1
      %p267 = por %p265, %p266
      %p268 = scmp.ne.s32.totalorder %s259, %s260
      %p269 = scmp.eq.s32.totalorder %s41, 0
      %p270 = por %p268, %p269
      %p271 = scmp.ne.s32.totalorder %s259, %s260
      %p272 = scmp.eq.s32.totalorder %s42, 1
      %p273 = por %p271, %p272
      %p275 = scmp.ne.s32.totalorder %s260, %s274
      %p276 = scmp.eq.s32.totalorder %s42, 0
      %p277 = por %p275, %p276
      %s279 = sadd.s32 %s278, 1
      %p282 = scmp.eq.s32.totalorder %s36, 1
      %p283 = scmp.ne.s32.totalorder %s278, %s280
      %p284 = scmp.eq.s32.totalorder %s36, 0
      %p285 = por %p283, %p284
      %p286 = scmp.ne.s32.totalorder %s278, %s280
      %p287 = scmp.eq.s32.totalorder %s41, 1
      %p288 = por %p286, %p287
      %p289 = scmp.ne.s32.totalorder %s280, %s281
      %p290 = scmp.eq.s32.totalorder %s41, 0
      %p291 = por %p289, %p290
      %p292 = scmp.ne.s32.totalorder %s280, %s281
      %p293 = scmp.eq.s32.totalorder %s42, 1
      %p294 = por %p292, %p293
      %p296 = scmp.ne.s32.totalorder %s281, %s295
      %p297 = scmp.eq.s32.totalorder %s42, 0
      %p298 = por %p296, %p297
      %s300 = sadd.s32 %s299, 1
      %p303 = scmp.eq.s32.totalorder %s36, 1
      %p304 = scmp.ne.s32.totalorder %s299, %s301
      %p305 = scmp.eq.s32.totalorder %s36, 0
      %p306 = por %p304, %p305
      %p307 = scmp.ne.s32.totalorder %s299, %s301
      %p308 = scmp.eq.s32.totalorder %s41, 1
      %p309 = por %p307, %p308
      %p310 = scmp.ne.s32.totalorder %s301, %s302
      %p311 = scmp.eq.s32.totalorder %s41, 0
      %p312 = por %p310, %p311
      %p313 = scmp.ne.s32.totalorder %s301, %s302
      %p314 = scmp.eq.s32.totalorder %s42, 1
      %p315 = por %p313, %p314
      %p317 = scmp.ne.s32.totalorder %s302, %s316
      %p318 = scmp.eq.s32.totalorder %s42, 0
      %p319 = por %p317, %p318
      %s321 = sadd.s32 %s320, 1
      %p324 = scmp.eq.s32.totalorder %s36, 1
      %p325 = scmp.ne.s32.totalorder %s320, %s322
      %p326 = scmp.eq.s32.totalorder %s36, 0
      %p327 = por %p325, %p326
      %p328 = scmp.ne.s32.totalorder %s320, %s322
      %p329 = scmp.eq.s32.totalorder %s41, 1
      %p330 = por %p328, %p329
      %p331 = scmp.ne.s32.totalorder %s322, %s323
      %p332 = scmp.eq.s32.totalorder %s41, 0
      %p333 = por %p331, %p332
      %p334 = scmp.ne.s32.totalorder %s322, %s323
      %p335 = scmp.eq.s32.totalorder %s42, 1
      %p336 = por %p334, %p335
      %p338 = scmp.ne.s32.totalorder %s323, %s337
      %p339 = scmp.eq.s32.totalorder %s42, 0
      %p340 = por %p338, %p339
      %s342 = sadd.s32 %s341, 1
      %p345 = scmp.eq.s32.totalorder %s36, 1
      %p346 = scmp.ne.s32.totalorder %s341, %s343
      %p347 = scmp.eq.s32.totalorder %s36, 0
      %p348 = por %p346, %p347
      %p349 = scmp.ne.s32.totalorder %s341, %s343
      %p350 = scmp.eq.s32.totalorder %s41, 1
      %p351 = por %p349, %p350
      %p352 = scmp.ne.s32.totalorder %s343, %s344
      %p353 = scmp.eq.s32.totalorder %s41, 0
      %p354 = por %p352, %p353
      %p355 = scmp.ne.s32.totalorder %s343, %s344
      %p356 = scmp.eq.s32.totalorder %s42, 1
      %p357 = por %p355, %p356
      %p359 = scmp.ne.s32.totalorder %s344, %s358
      %p360 = scmp.eq.s32.totalorder %s42, 0
      %p361 = por %p359, %p360
      %s363 = sadd.s32 %s362, 1
      %p366 = scmp.eq.s32.totalorder %s36, 1
      %p367 = scmp.ne.s32.totalorder %s362, %s364
      %p368 = scmp.eq.s32.totalorder %s36, 0
      %p369 = por %p367, %p368
      %p370 = scmp.ne.s32.totalorder %s362, %s364
      %p371 = scmp.eq.s32.totalorder %s41, 1
      %p372 = por %p370, %p371
      %p373 = scmp.ne.s32.totalorder %s364, %s365
      %p374 = scmp.eq.s32.totalorder %s41, 0
      %p375 = por %p373, %p374
      %p376 = scmp.ne.s32.totalorder %s364, %s365
      %p377 = scmp.eq.s32.totalorder %s42, 1
      %p378 = por %p376, %p377
      %p380 = scmp.ne.s32.totalorder %s365, %s379
      %p381 = scmp.eq.s32.totalorder %s42, 0
      %p382 = por %p380, %p381
      %s384 = sadd.s32 %s383, 1
      %p387 = scmp.eq.s32.totalorder %s36, 1
      %p388 = scmp.ne.s32.totalorder %s383, %s385
      %p389 = scmp.eq.s32.totalorder %s36, 0
      %p390 = por %p388, %p389
      %p391 = scmp.ne.s32.totalorder %s383, %s385
      %p392 = scmp.eq.s32.totalorder %s41, 1
      %p393 = por %p391, %p392
      %p394 = scmp.ne.s32.totalorder %s385, %s386
      %p395 = scmp.eq.s32.totalorder %s41, 0
      %p396 = por %p394, %p395
      %p397 = scmp.ne.s32.totalorder %s385, %s386
      %p398 = scmp.eq.s32.totalorder %s42, 1
      %p399 = por %p397, %p398
      %p401 = scmp.ne.s32.totalorder %s386, %s400
      %p402 = scmp.eq.s32.totalorder %s42, 0
      %p403 = por %p401, %p402
      %s404 = ssub.s32 %s43, %s55
      %p405 = scmp.eq.s32.totalorder %s404, 0
      %s407 = sadd.s32 %s406, 1
      %s408 = scalar_select %p405, %s406, %s407
      %p411 = pneg %p405
      %p412 = scmp.eq.s32.totalorder %s36, 1
      %p413 = por %p411, %p412
      %p414 = scmp.ne.s32.totalorder %s406, %s409
      %p415 = scmp.eq.s32.totalorder %s36, 0
      %p416 = por %p414, %p415
      %p417 = scmp.ne.s32.totalorder %s406, %s409
      %p418 = scmp.eq.s32.totalorder %s41, 1
      %p419 = por %p417, %p418
      %p420 = scmp.ne.s32.totalorder %s409, %s410
      %p421 = scmp.eq.s32.totalorder %s41, 0
      %p422 = por %p420, %p421
      %p423 = scmp.ne.s32.totalorder %s409, %s410
      %p424 = scmp.eq.s32.totalorder %s42, 1
      %p425 = por %p423, %p424
      %p427 = scmp.ne.s32.totalorder %s410, %s426
      %p428 = scmp.eq.s32.totalorder %s42, 0
      %p429 = por %p427, %p428
      %p430 = scmp.le.s32.totalorder 1, %s36
      %p431 = scmp.lt.s32.totalorder %s36, 3
      %p432 = pnand %p430, %p431
      %p433 = pneg %p432
      // Predicated region
      $region9: #{tpu_custom_call.1} parent=5 // pred_check
        _
      $region10: #{tpu_custom_call.1} parent=5 // pred_check_branch
        %435 = sbr.rel (%p432) target = $region12
      $region11: #{tpu_custom_call.1} parent=5 // pred_region
        %s436 = ssub.s32 %s36, 1
        // Predicated region
        $region13: #{tpu_custom_call.1} parent=11 // pred_check
          %p437 = pneg %p97
        $region14: #{tpu_custom_call.1} parent=11 // pred_check_branch
          %439 = sbr.rel (%p437) target = $region16
        $region15: #{tpu_custom_call.1} parent=11 // pred_region
          _
        $region16: #{tpu_custom_call.1} parent=11 // pred_fallthru
          _
        // Predicated region
        $region17: #{tpu_custom_call.1} parent=11 // pred_check
          %p440 = pneg %p123
        $region18: #{tpu_custom_call.1} parent=11 // pred_check_branch
          %442 = sbr.rel (%p440) target = $region20
        $region19: #{tpu_custom_call.1} parent=11 // pred_region
          %s443 = smul.u32 32, %s46
          %445 = vsyncadd [#allocation11], 0
          %s446 = smul.addr %s443, 8
          %s447 = scalar_lea.hbm %s2, %s446
          %s448 = sshll.u32 %s447, 4
          %s449 = int_to_ptr.hbm [resolvable:$true] %s448
          %s450 = sshll.u32 [#allocation10], 4
          %s451 = int_to_ptr.vmem [resolvable:$true] %s450
          %456 = dma.hbm_to_vmem [thread:$0]  %s449, 32768, %s451, [#allocation11], 4096, 4096, 256
        $region20: #{tpu_custom_call.1} parent=11 // pred_fallthru
          _
        // Predicated region
        $region21: #{tpu_custom_call.1} parent=11 // pred_check
          %p457 = pneg %p144
        $region22: #{tpu_custom_call.1} parent=11 // pred_check_branch
          %459 = sbr.rel (%p457) target = $region24
        $region23: #{tpu_custom_call.1} parent=11 // pred_region
          %461 = vsyncadd [#allocation9], 0
          %s463 = sshll.u32 %s3, 4
          %s464 = int_to_ptr.hbm [resolvable:$true] %s463
          %466 = dma.hbm_to_smem %s464, 16, [#allocation12], [#allocation9]
        $region24: #{tpu_custom_call.1} parent=11 // pred_fallthru
          _
        // Predicated region
        $region25: #{tpu_custom_call.1} parent=11 // pred_check
          %p467 = pneg %p165
        $region26: #{tpu_custom_call.1} parent=11 // pred_check_branch
          %469 = sbr.rel (%p467) target = $region28
        $region27: #{tpu_custom_call.1} parent=11 // pred_region
          %471 = vsyncadd [#allocation11], 0
          %s473 = sshll.u32 %s4, 4
          %s474 = int_to_ptr.hbm [resolvable:$true] %s473
          %s475 = sshll.u32 [#allocation13], 4
          %s476 = int_to_ptr.vmem [resolvable:$true] %s475
          %478 = dma.hbm_to_vmem [thread:$0]  %s474, 128, %s476, [#allocation11]
        $region28: #{tpu_custom_call.1} parent=11 // pred_fallthru
          _
        // Predicated region
        $region29: #{tpu_custom_call.1} parent=11 // pred_check
          %p479 = pneg %p186
        $region30: #{tpu_custom_call.1} parent=11 // pred_check_branch
          %481 = sbr.rel (%p479) target = $region32
        $region31: #{tpu_custom_call.1} parent=11 // pred_region
          _
        $region32: #{tpu_custom_call.1} parent=11 // pred_fallthru
          _
        // Predicated region
        $region33: #{tpu_custom_call.1} parent=11 // pred_check
          %p482 = pneg %p207
        $region34: #{tpu_custom_call.1} parent=11 // pred_check_branch
          %484 = sbr.rel (%p482) target = $region36
        $region35: #{tpu_custom_call.1} parent=11 // pred_region
          _
        $region36: #{tpu_custom_call.1} parent=11 // pred_fallthru
          _
        // Predicated region
        $region37: #{tpu_custom_call.1} parent=11 // pred_check
          %p485 = pneg %p228
        $region38: #{tpu_custom_call.1} parent=11 // pred_check_branch
          %487 = sbr.rel (%p485) target = $region40
        $region39: #{tpu_custom_call.1} parent=11 // pred_region
          %489 = vsyncadd [#allocation15], 0
          %s491 = sshll.u32 %s7, 4
          %s492 = int_to_ptr.hbm [resolvable:$true] %s491
          %s493 = sshll.u32 [#allocation14], 4
          %s494 = int_to_ptr.vmem [resolvable:$true] %s493
          %496 = dma.hbm_to_vmem [thread:$0]  %s492, 128, %s494, [#allocation15]
        $region40: #{tpu_custom_call.1} parent=11 // pred_fallthru
          _
        // Predicated region
        $region41: #{tpu_custom_call.1} parent=11 // pred_check
          %p497 = pneg %p249
        $region42: #{tpu_custom_call.1} parent=11 // pred_check_branch
          %499 = sbr.rel (%p497) target = $region44
        $region43: #{tpu_custom_call.1} parent=11 // pred_region
          %501 = vsyncadd [#allocation17], 0
          %s503 = sshll.u32 %s8, 4
          %s504 = int_to_ptr.hbm [resolvable:$true] %s503
          %506 = dma.hbm_to_smem %s504, 16, [#allocation16], [#allocation17]
        $region44: #{tpu_custom_call.1} parent=11 // pred_fallthru
          _
        // Predicated region
        $region45: #{tpu_custom_call.1} parent=11 // pred_check
          %p507 = pneg %p270
        $region46: #{tpu_custom_call.1} parent=11 // pred_check_branch
          %509 = sbr.rel (%p507) target = $region48
        $region47: #{tpu_custom_call.1} parent=11 // pred_region
          %511 = vsyncadd [#allocation17], 0
          %s513 = sshll.u32 %s9, 4
          %s514 = int_to_ptr.hbm [resolvable:$true] %s513
          %516 = dma.hbm_to_smem %s514, 16, [#allocation18], [#allocation17]
        $region48: #{tpu_custom_call.1} parent=11 // pred_fallthru
          _
        // Predicated region
        $region49: #{tpu_custom_call.1} parent=11 // pred_check
          %p517 = pneg %p291
        $region50: #{tpu_custom_call.1} parent=11 // pred_check_branch
          %519 = sbr.rel (%p517) target = $region52
        $region51: #{tpu_custom_call.1} parent=11 // pred_region
          %521 = vsyncadd [#allocation20], 0
          %s523 = sshll.u32 %s10, 4
          %s524 = int_to_ptr.hbm [resolvable:$true] %s523
          %526 = dma.hbm_to_smem %s524, 16, [#allocation19], [#allocation20]
        $region52: #{tpu_custom_call.1} parent=11 // pred_fallthru
          _
        // Predicated region
        $region53: #{tpu_custom_call.1} parent=11 // pred_check
          %p527 = pneg %p312
        $region54: #{tpu_custom_call.1} parent=11 // pred_check_branch
          %529 = sbr.rel (%p527) target = $region56
        $region55: #{tpu_custom_call.1} parent=11 // pred_region
          %531 = vsyncadd [#allocation20], 0
          %s533 = sshll.u32 %s11, 4
          %s534 = int_to_ptr.hbm [resolvable:$true] %s533
          %536 = dma.hbm_to_smem %s534, 16, [#allocation21], [#allocation20]
        $region56: #{tpu_custom_call.1} parent=11 // pred_fallthru
          _
        // Predicated region
        $region57: #{tpu_custom_call.1} parent=11 // pred_check
          %p537 = pneg %p333
        $region58: #{tpu_custom_call.1} parent=11 // pred_check_branch
          %539 = sbr.rel (%p537) target = $region60
        $region59: #{tpu_custom_call.1} parent=11 // pred_region
          %541 = vsyncadd [#allocation23], 0
          %s543 = sshll.u32 %s12, 4
          %s544 = int_to_ptr.hbm [resolvable:$true] %s543
          %546 = dma.hbm_to_smem %s544, 16, [#allocation22], [#allocation23]
        $region60: #{tpu_custom_call.1} parent=11 // pred_fallthru
          _
        // Predicated region
        $region61: #{tpu_custom_call.1} parent=11 // pred_check
          %p547 = pneg %p354
        $region62: #{tpu_custom_call.1} parent=11 // pred_check_branch
          %549 = sbr.rel (%p547) target = $region64
        $region63: #{tpu_custom_call.1} parent=11 // pred_region
          %551 = vsyncadd [#allocation23], 0
          %s553 = sshll.u32 %s13, 4
          %s554 = int_to_ptr.hbm [resolvable:$true] %s553
          %556 = dma.hbm_to_smem %s554, 16, [#allocation24], [#allocation23]
        $region64: #{tpu_custom_call.1} parent=11 // pred_fallthru
          _
        // Predicated region
        $region65: #{tpu_custom_call.1} parent=11 // pred_check
          %p557 = pneg %p375
        $region66: #{tpu_custom_call.1} parent=11 // pred_check_branch
          %559 = sbr.rel (%p557) target = $region68
        $region67: #{tpu_custom_call.1} parent=11 // pred_region
          %561 = vsyncadd [#allocation26], 0
          %s563 = sshll.u32 %s14, 4
          %s564 = int_to_ptr.hbm [resolvable:$true] %s563
          %566 = dma.hbm_to_smem %s564, 16, [#allocation25], [#allocation26]
        $region68: #{tpu_custom_call.1} parent=11 // pred_fallthru
          _
        // Predicated region
        $region69: #{tpu_custom_call.1} parent=11 // pred_check
          %p567 = pneg %p396
        $region70: #{tpu_custom_call.1} parent=11 // pred_check_branch
          %569 = sbr.rel (%p567) target = $region72
        $region71: #{tpu_custom_call.1} parent=11 // pred_region
          _
        $region72: #{tpu_custom_call.1} parent=11 // pred_fallthru
          _
      $region12: #{tpu_custom_call.1} parent=5 // pred_fallthru
        _
      %p570 = scmp.lt.s32.totalorder %s36, 2
      // Predicated region
      $region73: #{tpu_custom_call.1} parent=5 // pred_check
        %p571 = pneg %p570
      $region74: #{tpu_custom_call.1} parent=5 // pred_check_branch
        %573 = sbr.rel (%p571) target = $region76
      $region75: #{tpu_custom_call.1} parent=5 // pred_region
        // Predicated region
        $region77: #{tpu_custom_call.1} parent=75 // pred_check
          %p574 = pneg %p70
        $region78: #{tpu_custom_call.1} parent=75 // pred_check_branch
          %576 = sbr.rel (%p574) target = $region80
        $region79: #{tpu_custom_call.1} parent=75 // pred_region
          %s577 = sand.u32 %s60, 1
          %s578 = scalar_lea.sflag [#allocation7], %s577
          %s579 = sand.u32 %s60, 1
          %s580 = smul.addr %s579, 4096
          %s581 = scalar_lea.vmem [#allocation6], %s580
          %s582 = smul.u32 64, %s44
          %584 = vsyncadd %s578, 0
          %s585 = smul.addr %s582, 8
          %s586 = smul.addr %s43, 512
          %s587 = sadd.s32 %s585, %s586
          %s588 = smul.addr %s587, 8
          %s589 = scalar_lea.hbm %s0, %s588
          %s590 = sshll.u32 %s589, 4
          %s591 = int_to_ptr.hbm [resolvable:$true] %s590
          %s592 = sshll.u32 %s581, 4
          %s593 = int_to_ptr.vmem [resolvable:$true] %s592
          %598 = dma.hbm_to_vmem [thread:$0]  %s591, 65536, %s593, %s578, 128, 128, 8
        $region80: #{tpu_custom_call.1} parent=75 // pred_fallthru
          _
      $region76: #{tpu_custom_call.1} parent=5 // pred_fallthru
        _
      %p599 = scmp.le.s32.totalorder 1, %s36
      %p600 = scmp.lt.s32.totalorder %s36, 3
      %p601 = pnand %p599, %p600
      %p602 = pneg %p601
      // Predicated region
      $region81: #{tpu_custom_call.1} parent=5 // pred_check
        _
      $region82: #{tpu_custom_call.1} parent=5 // pred_check_branch
        %604 = sbr.rel (%p601) target = $region84
      $region83: #{tpu_custom_call.1} parent=5 // pred_region
        %s605 = ssub.s32 %s36, 1
        %s606 = sand.u32 %s63, 1
        %s607 = scalar_lea.sflag [#allocation7], %s606
        %s608 = sand.u32 %s63, 1
        %s609 = smul.addr %s608, 4096
        %s610 = scalar_lea.vmem [#allocation6], %s609
        // Predicated region
        $region85: #{tpu_custom_call.1} parent=83 // pred_check
          %p611 = pneg %p76
        $region86: #{tpu_custom_call.1} parent=83 // pred_check_branch
          %613 = sbr.rel (%p611) target = $region88
        $region87: #{tpu_custom_call.1} parent=83 // pred_region
          %615 = dma.done %s607, 65536
        $region88: #{tpu_custom_call.1} parent=83 // pred_fallthru
          _
        // Predicated region
        $region89: #{tpu_custom_call.1} parent=83 // pred_check
          %p616 = pneg %p123
        $region90: #{tpu_custom_call.1} parent=83 // pred_check_branch
          %618 = sbr.rel (%p616) target = $region92
        $region91: #{tpu_custom_call.1} parent=83 // pred_region
          %620 = dma.done [#allocation11], 32768
        $region92: #{tpu_custom_call.1} parent=83 // pred_fallthru
          _
        // Predicated region
        $region93: #{tpu_custom_call.1} parent=83 // pred_check
          %p621 = pneg %p144
        $region94: #{tpu_custom_call.1} parent=83 // pred_check_branch
          %623 = sbr.rel (%p621) target = $region96
        $region95: #{tpu_custom_call.1} parent=83 // pred_region
          %625 = dma.done [#allocation9], 16
        $region96: #{tpu_custom_call.1} parent=83 // pred_fallthru
          _
        // Predicated region
        $region97: #{tpu_custom_call.1} parent=83 // pred_check
          %p626 = pneg %p165
        $region98: #{tpu_custom_call.1} parent=83 // pred_check_branch
          %628 = sbr.rel (%p626) target = $region100
        $region99: #{tpu_custom_call.1} parent=83 // pred_region
          %630 = dma.done [#allocation11], 128
        $region100: #{tpu_custom_call.1} parent=83 // pred_fallthru
          _
        // Predicated region
        $region101: #{tpu_custom_call.1} parent=83 // pred_check
          %p631 = pneg %p228
        $region102: #{tpu_custom_call.1} parent=83 // pred_check_branch
          %633 = sbr.rel (%p631) target = $region104
        $region103: #{tpu_custom_call.1} parent=83 // pred_region
          %635 = dma.done [#allocation15], 128
        $region104: #{tpu_custom_call.1} parent=83 // pred_fallthru
          _
        // Predicated region
        $region105: #{tpu_custom_call.1} parent=83 // pred_check
          %p636 = pneg %p249
        $region106: #{tpu_custom_call.1} parent=83 // pred_check_branch
          %638 = sbr.rel (%p636) target = $region108
        $region107: #{tpu_custom_call.1} parent=83 // pred_region
          %640 = dma.done [#allocation17], 16
        $region108: #{tpu_custom_call.1} parent=83 // pred_fallthru
          _
        // Predicated region
        $region109: #{tpu_custom_call.1} parent=83 // pred_check
          %p641 = pneg %p270
        $region110: #{tpu_custom_call.1} parent=83 // pred_check_branch
          %643 = sbr.rel (%p641) target = $region112
        $region111: #{tpu_custom_call.1} parent=83 // pred_region
          %645 = dma.done [#allocation17], 16
        $region112: #{tpu_custom_call.1} parent=83 // pred_fallthru
          _
        // Predicated region
        $region113: #{tpu_custom_call.1} parent=83 // pred_check
          %p646 = pneg %p291
        $region114: #{tpu_custom_call.1} parent=83 // pred_check_branch
          %648 = sbr.rel (%p646) target = $region116
        $region115: #{tpu_custom_call.1} parent=83 // pred_region
          %650 = dma.done [#allocation20], 16
        $region116: #{tpu_custom_call.1} parent=83 // pred_fallthru
          _
        // Predicated region
        $region117: #{tpu_custom_call.1} parent=83 // pred_check
          %p651 = pneg %p312
        $region118: #{tpu_custom_call.1} parent=83 // pred_check_branch
          %653 = sbr.rel (%p651) target = $region120
        $region119: #{tpu_custom_call.1} parent=83 // pred_region
          %655 = dma.done [#allocation20], 16
        $region120: #{tpu_custom_call.1} parent=83 // pred_fallthru
          _
        // Predicated region
        $region121: #{tpu_custom_call.1} parent=83 // pred_check
          %p656 = pneg %p333
        $region122: #{tpu_custom_call.1} parent=83 // pred_check_branch
          %658 = sbr.rel (%p656) target = $region124
        $region123: #{tpu_custom_call.1} parent=83 // pred_region
          %660 = dma.done [#allocation23], 16
        $region124: #{tpu_custom_call.1} parent=83 // pred_fallthru
          _
        // Predicated region
        $region125: #{tpu_custom_call.1} parent=83 // pred_check
          %p661 = pneg %p354
        $region126: #{tpu_custom_call.1} parent=83 // pred_check_branch
          %663 = sbr.rel (%p661) target = $region128
        $region127: #{tpu_custom_call.1} parent=83 // pred_region
          %665 = dma.done [#allocation23], 16
        $region128: #{tpu_custom_call.1} parent=83 // pred_fallthru
          _
        // Predicated region
        $region129: #{tpu_custom_call.1} parent=83 // pred_check
          %p666 = pneg %p375
        $region130: #{tpu_custom_call.1} parent=83 // pred_check_branch
          %668 = sbr.rel (%p666) target = $region132
        $region131: #{tpu_custom_call.1} parent=83 // pred_region
          %670 = dma.done [#allocation26], 16
        $region132: #{tpu_custom_call.1} parent=83 // pred_fallthru
          _
        %671 = sfence
        %s672 = sand.u32 %s63, 1
        %s673 = scalar_lea.sflag [#allocation7], %s672
        %s674 = sand.u32 %s63, 1
        %s675 = smul.addr %s674, 4096
        %s676 = scalar_lea.vmem [#allocation6], %s675
        %p677 = pneg %p76
        %p678 = pneg %p73
        %p679 = pneg %p97
        %p680 = pneg %p94
        %p681 = pneg %p123
        %p682 = pneg %p120
        %p683 = pneg %p144
        %p684 = pneg %p141
        %p685 = pneg %p165
        %p686 = pneg %p162
        %p687 = pneg %p186
        %p688 = pneg %p183
        %p689 = pneg %p207
        %p690 = pneg %p204
        %p691 = pneg %p228
        %p692 = pneg %p225
        %p693 = pneg %p249
        %p694 = pneg %p246
        %p695 = pneg %p270
        %p696 = pneg %p267
        %p697 = pneg %p291
        %p698 = pneg %p288
        %p699 = pneg %p312
        %p700 = pneg %p309
        %p701 = pneg %p333
        %p702 = pneg %p330
        %p703 = pneg %p354
        %p704 = pneg %p351
        %p705 = pneg %p375
        %p706 = pneg %p372
        %p707 = pneg %p396
        %p708 = pneg %p393
        %p709 = pneg %p422
        %p710 = pneg %p419
        %s711 = sand.u32 %s409, 1
        %s712 = scalar_lea.sflag [#allocation8], %s711
        %s713 = sand.u32 %s409, 1
        %s714 = smul.addr %s713, 32
        %s715 = scalar_lea.vmem [#allocation27], %s714
        %s716 = smul.u32 64, %s46
        %s717 = smul.u32 32, %s46
        %p718 = scmp.eq.s32.totalorder %s46, 0
        // Predicated region
        $region133: #{tpu_custom_call.1} parent=83 // pred_check
          %p719 = pneg %p718
        $region134: #{tpu_custom_call.1} parent=83 // pred_check_branch
          %721 = sbr.rel (%p719) target = $region136
        $region135: #{tpu_custom_call.1} parent=83 // pred_region
          %vm722 = vcmask 261120
          %723 = vst.msk [vmem:[#allocation2] sm:$0xff] %vm722, 0.0
          %724 = vst.msk [vmem:[#allocation2 + $0x8] sm:$0xff] %vm722, 0.0
          %725 = vst.msk [vmem:[#allocation2 + $0x10] sm:$0xff] %vm722, 0.0
          %726 = vst.msk [vmem:[#allocation2 + $0x18] sm:$0xff] %vm722, 0.0
          %727 = vst.msk [vmem:[#allocation2 + $0x20] sm:$0xff] %vm722, 0.0
          %728 = vst.msk [vmem:[#allocation2 + $0x28] sm:$0xff] %vm722, 0.0
          %729 = vst.msk [vmem:[#allocation2 + $0x30] sm:$0xff] %vm722, 0.0
          %730 = vst.msk [vmem:[#allocation2 + $0x38] sm:$0xff] %vm722, 0.0
        $region136: #{tpu_custom_call.1} parent=83 // pred_fallthru
          _
        %v731 = vld [vmem:[%s610] sm:$0xff]
        %v732 = vld [vmem:[%s610 + $0x8] sm:$0xff]
        %v733 = vld [vmem:[%s610 + $0x10] sm:$0xff]
        %v734 = vld [vmem:[%s610 + $0x18] sm:$0xff]
        %v735 = vld [vmem:[%s610 + $0x20] sm:$0xff]
        %v736 = vld [vmem:[%s610 + $0x28] sm:$0xff]
        %v737 = vld [vmem:[%s610 + $0x30] sm:$0xff]
        %v738 = vld [vmem:[%s610 + $0x38] sm:$0xff]
        %v739 = vld [vmem:[%s610 + $0x40] sm:$0xff]
        %v740 = vld [vmem:[%s610 + $0x48] sm:$0xff]
        %v741 = vld [vmem:[%s610 + $0x50] sm:$0xff]
        %v742 = vld [vmem:[%s610 + $0x58] sm:$0xff]
        %v743 = vld [vmem:[%s610 + $0x60] sm:$0xff]
        %v744 = vld [vmem:[%s610 + $0x68] sm:$0xff]
        %v745 = vld [vmem:[%s610 + $0x70] sm:$0xff]
        %v746 = vld [vmem:[%s610 + $0x78] sm:$0xff]
        %v747 = vld [vmem:[%s610 + $0x80] sm:$0xff]
        %v748 = vld [vmem:[%s610 + $0x88] sm:$0xff]
        %v749 = vld [vmem:[%s610 + $0x90] sm:$0xff]
        %v750 = vld [vmem:[%s610 + $0x98] sm:$0xff]
        %v751 = vld [vmem:[%s610 + $0xa0] sm:$0xff]
        %v752 = vld [vmem:[%s610 + $0xa8] sm:$0xff]
        %v753 = vld [vmem:[%s610 + $0xb0] sm:$0xff]
        %v754 = vld [vmem:[%s610 + $0xb8] sm:$0xff]
        %v755 = vld [vmem:[%s610 + $0xc0] sm:$0xff]
        %v756 = vld [vmem:[%s610 + $0xc8] sm:$0xff]
        %v757 = vld [vmem:[%s610 + $0xd0] sm:$0xff]
        %v758 = vld [vmem:[%s610 + $0xd8] sm:$0xff]
        %v759 = vld [vmem:[%s610 + $0xe0] sm:$0xff]
        %v760 = vld [vmem:[%s610 + $0xe8] sm:$0xff]
        %v761 = vld [vmem:[%s610 + $0xf0] sm:$0xff]
        %v762 = vld [vmem:[%s610 + $0xf8] sm:$0xff]
        %v763 = vld [vmem:[%s610 + $0x100] sm:$0xff]
        %v764 = vld [vmem:[%s610 + $0x108] sm:$0xff]
        %v765 = vld [vmem:[%s610 + $0x110] sm:$0xff]
        %v766 = vld [vmem:[%s610 + $0x118] sm:$0xff]
        %v767 = vld [vmem:[%s610 + $0x120] sm:$0xff]
        %v768 = vld [vmem:[%s610 + $0x128] sm:$0xff]
        %v769 = vld [vmem:[%s610 + $0x130] sm:$0xff]
        %v770 = vld [vmem:[%s610 + $0x138] sm:$0xff]
        %v771 = vld [vmem:[%s610 + $0x140] sm:$0xff]
        %v772 = vld [vmem:[%s610 + $0x148] sm:$0xff]
        %v773 = vld [vmem:[%s610 + $0x150] sm:$0xff]
        %v774 = vld [vmem:[%s610 + $0x158] sm:$0xff]
        %v775 = vld [vmem:[%s610 + $0x160] sm:$0xff]
        %v776 = vld [vmem:[%s610 + $0x168] sm:$0xff]
        %v777 = vld [vmem:[%s610 + $0x170] sm:$0xff]
        %v778 = vld [vmem:[%s610 + $0x178] sm:$0xff]
        %v779 = vld [vmem:[%s610 + $0x180] sm:$0xff]
        %v780 = vld [vmem:[%s610 + $0x188] sm:$0xff]
        %v781 = vld [vmem:[%s610 + $0x190] sm:$0xff]
        %v782 = vld [vmem:[%s610 + $0x198] sm:$0xff]
        %v783 = vld [vmem:[%s610 + $0x1a0] sm:$0xff]
        %v784 = vld [vmem:[%s610 + $0x1a8] sm:$0xff]
        %v785 = vld [vmem:[%s610 + $0x1b0] sm:$0xff]
        %v786 = vld [vmem:[%s610 + $0x1b8] sm:$0xff]
        %v787 = vld [vmem:[%s610 + $0x1c0] sm:$0xff]
        %v788 = vld [vmem:[%s610 + $0x1c8] sm:$0xff]
        %v789 = vld [vmem:[%s610 + $0x1d0] sm:$0xff]
        %v790 = vld [vmem:[%s610 + $0x1d8] sm:$0xff]
        %v791 = vld [vmem:[%s610 + $0x1e0] sm:$0xff]
        %v792 = vld [vmem:[%s610 + $0x1e8] sm:$0xff]
        %v793 = vld [vmem:[%s610 + $0x1f0] sm:$0xff]
        %v794 = vld [vmem:[%s610 + $0x1f8] sm:$0xff]
        %v795 = vld [vmem:[%s610 + $0x200] sm:$0xff]
        %v796 = vld [vmem:[%s610 + $0x208] sm:$0xff]
        %v797 = vld [vmem:[%s610 + $0x210] sm:$0xff]
        %v798 = vld [vmem:[%s610 + $0x218] sm:$0xff]
        %v799 = vld [vmem:[%s610 + $0x220] sm:$0xff]
        %v800 = vld [vmem:[%s610 + $0x228] sm:$0xff]
        %v801 = vld [vmem:[%s610 + $0x230] sm:$0xff]
        %v802 = vld [vmem:[%s610 + $0x238] sm:$0xff]
        %v803 = vld [vmem:[%s610 + $0x240] sm:$0xff]
        %v804 = vld [vmem:[%s610 + $0x248] sm:$0xff]
        %v805 = vld [vmem:[%s610 + $0x250] sm:$0xff]
        %v806 = vld [vmem:[%s610 + $0x258] sm:$0xff]
        %v807 = vld [vmem:[%s610 + $0x260] sm:$0xff]
        %v808 = vld [vmem:[%s610 + $0x268] sm:$0xff]
        %v809 = vld [vmem:[%s610 + $0x270] sm:$0xff]
        %v810 = vld [vmem:[%s610 + $0x278] sm:$0xff]
        %v811 = vld [vmem:[%s610 + $0x280] sm:$0xff]
        %v812 = vld [vmem:[%s610 + $0x288] sm:$0xff]
        %v813 = vld [vmem:[%s610 + $0x290] sm:$0xff]
        %v814 = vld [vmem:[%s610 + $0x298] sm:$0xff]
        %v815 = vld [vmem:[%s610 + $0x2a0] sm:$0xff]
        %v816 = vld [vmem:[%s610 + $0x2a8] sm:$0xff]
        %v817 = vld [vmem:[%s610 + $0x2b0] sm:$0xff]
        %v818 = vld [vmem:[%s610 + $0x2b8] sm:$0xff]
        %v819 = vld [vmem:[%s610 + $0x2c0] sm:$0xff]
        %v820 = vld [vmem:[%s610 + $0x2c8] sm:$0xff]
        %v821 = vld [vmem:[%s610 + $0x2d0] sm:$0xff]
        %v822 = vld [vmem:[%s610 + $0x2d8] sm:$0xff]
        %v823 = vld [vmem:[%s610 + $0x2e0] sm:$0xff]
        %v824 = vld [vmem:[%s610 + $0x2e8] sm:$0xff]
        %v825 = vld [vmem:[%s610 + $0x2f0] sm:$0xff]
        %v826 = vld [vmem:[%s610 + $0x2f8] sm:$0xff]
        %v827 = vld [vmem:[%s610 + $0x300] sm:$0xff]
        %v828 = vld [vmem:[%s610 + $0x308] sm:$0xff]
        %v829 = vld [vmem:[%s610 + $0x310] sm:$0xff]
        %v830 = vld [vmem:[%s610 + $0x318] sm:$0xff]
        %v831 = vld [vmem:[%s610 + $0x320] sm:$0xff]
        %v832 = vld [vmem:[%s610 + $0x328] sm:$0xff]
        %v833 = vld [vmem:[%s610 + $0x330] sm:$0xff]
        %v834 = vld [vmem:[%s610 + $0x338] sm:$0xff]
        %v835 = vld [vmem:[%s610 + $0x340] sm:$0xff]
        %v836 = vld [vmem:[%s610 + $0x348] sm:$0xff]
        %v837 = vld [vmem:[%s610 + $0x350] sm:$0xff]
        %v838 = vld [vmem:[%s610 + $0x358] sm:$0xff]
        %v839 = vld [vmem:[%s610 + $0x360] sm:$0xff]
        %v840 = vld [vmem:[%s610 + $0x368] sm:$0xff]
        %v841 = vld [vmem:[%s610 + $0x370] sm:$0xff]
        %v842 = vld [vmem:[%s610 + $0x378] sm:$0xff]
        %v843 = vld [vmem:[%s610 + $0x380] sm:$0xff]
        %v844 = vld [vmem:[%s610 + $0x388] sm:$0xff]
        %v845 = vld [vmem:[%s610 + $0x390] sm:$0xff]
        %v846 = vld [vmem:[%s610 + $0x398] sm:$0xff]
        %v847 = vld [vmem:[%s610 + $0x3a0] sm:$0xff]
        %v848 = vld [vmem:[%s610 + $0x3a8] sm:$0xff]
        %v849 = vld [vmem:[%s610 + $0x3b0] sm:$0xff]
        %v850 = vld [vmem:[%s610 + $0x3b8] sm:$0xff]
        %v851 = vld [vmem:[%s610 + $0x3c0] sm:$0xff]
        %v852 = vld [vmem:[%s610 + $0x3c8] sm:$0xff]
        %v853 = vld [vmem:[%s610 + $0x3d0] sm:$0xff]
        %v854 = vld [vmem:[%s610 + $0x3d8] sm:$0xff]
        %v855 = vld [vmem:[%s610 + $0x3e0] sm:$0xff]
        %v856 = vld [vmem:[%s610 + $0x3e8] sm:$0xff]
        %v857 = vld [vmem:[%s610 + $0x3f0] sm:$0xff]
        %v858 = vld [vmem:[%s610 + $0x3f8] sm:$0xff]
        %v859 = vld [vmem:[%s610 + $0x400] sm:$0xff]
        %v860 = vld [vmem:[%s610 + $0x408] sm:$0xff]
        %v861 = vld [vmem:[%s610 + $0x410] sm:$0xff]
        %v862 = vld [vmem:[%s610 + $0x418] sm:$0xff]
        %v863 = vld [vmem:[%s610 + $0x420] sm:$0xff]
        %v864 = vld [vmem:[%s610 + $0x428] sm:$0xff]
        %v865 = vld [vmem:[%s610 + $0x430] sm:$0xff]
        %v866 = vld [vmem:[%s610 + $0x438] sm:$0xff]
        %v867 = vld [vmem:[%s610 + $0x440] sm:$0xff]
        %v868 = vld [vmem:[%s610 + $0x448] sm:$0xff]
        %v869 = vld [vmem:[%s610 + $0x450] sm:$0xff]
        %v870 = vld [vmem:[%s610 + $0x458] sm:$0xff]
        %v871 = vld [vmem:[%s610 + $0x460] sm:$0xff]
        %v872 = vld [vmem:[%s610 + $0x468] sm:$0xff]
        %v873 = vld [vmem:[%s610 + $0x470] sm:$0xff]
        %v874 = vld [vmem:[%s610 + $0x478] sm:$0xff]
        %v875 = vld [vmem:[%s610 + $0x480] sm:$0xff]
        %v876 = vld [vmem:[%s610 + $0x488] sm:$0xff]
        %v877 = vld [vmem:[%s610 + $0x490] sm:$0xff]
        %v878 = vld [vmem:[%s610 + $0x498] sm:$0xff]
        %v879 = vld [vmem:[%s610 + $0x4a0] sm:$0xff]
        %v880 = vld [vmem:[%s610 + $0x4a8] sm:$0xff]
        %v881 = vld [vmem:[%s610 + $0x4b0] sm:$0xff]
        %v882 = vld [vmem:[%s610 + $0x4b8] sm:$0xff]
        %v883 = vld [vmem:[%s610 + $0x4c0] sm:$0xff]
        %v884 = vld [vmem:[%s610 + $0x4c8] sm:$0xff]
        %v885 = vld [vmem:[%s610 + $0x4d0] sm:$0xff]
        %v886 = vld [vmem:[%s610 + $0x4d8] sm:$0xff]
        %v887 = vld [vmem:[%s610 + $0x4e0] sm:$0xff]
        %v888 = vld [vmem:[%s610 + $0x4e8] sm:$0xff]
        %v889 = vld [vmem:[%s610 + $0x4f0] sm:$0xff]
        %v890 = vld [vmem:[%s610 + $0x4f8] sm:$0xff]
        %v891 = vld [vmem:[%s610 + $0x500] sm:$0xff]
        %v892 = vld [vmem:[%s610 + $0x508] sm:$0xff]
        %v893 = vld [vmem:[%s610 + $0x510] sm:$0xff]
        %v894 = vld [vmem:[%s610 + $0x518] sm:$0xff]
        %v895 = vld [vmem:[%s610 + $0x520] sm:$0xff]
        %v896 = vld [vmem:[%s610 + $0x528] sm:$0xff]
        %v897 = vld [vmem:[%s610 + $0x530] sm:$0xff]
        %v898 = vld [vmem:[%s610 + $0x538] sm:$0xff]
        %v899 = vld [vmem:[%s610 + $0x540] sm:$0xff]
        %v900 = vld [vmem:[%s610 + $0x548] sm:$0xff]
        %v901 = vld [vmem:[%s610 + $0x550] sm:$0xff]
        %v902 = vld [vmem:[%s610 + $0x558] sm:$0xff]
        %v903 = vld [vmem:[%s610 + $0x560] sm:$0xff]
        %v904 = vld [vmem:[%s610 + $0x568] sm:$0xff]
        %v905 = vld [vmem:[%s610 + $0x570] sm:$0xff]
        %v906 = vld [vmem:[%s610 + $0x578] sm:$0xff]
        %v907 = vld [vmem:[%s610 + $0x580] sm:$0xff]
        %v908 = vld [vmem:[%s610 + $0x588] sm:$0xff]
        %v909 = vld [vmem:[%s610 + $0x590] sm:$0xff]
        %v910 = vld [vmem:[%s610 + $0x598] sm:$0xff]
        %v911 = vld [vmem:[%s610 + $0x5a0] sm:$0xff]
        %v912 = vld [vmem:[%s610 + $0x5a8] sm:$0xff]
        %v913 = vld [vmem:[%s610 + $0x5b0] sm:$0xff]
        %v914 = vld [vmem:[%s610 + $0x5b8] sm:$0xff]
        %v915 = vld [vmem:[%s610 + $0x5c0] sm:$0xff]
        %v916 = vld [vmem:[%s610 + $0x5c8] sm:$0xff]
        %v917 = vld [vmem:[%s610 + $0x5d0] sm:$0xff]
        %v918 = vld [vmem:[%s610 + $0x5d8] sm:$0xff]
        %v919 = vld [vmem:[%s610 + $0x5e0] sm:$0xff]
        %v920 = vld [vmem:[%s610 + $0x5e8] sm:$0xff]
        %v921 = vld [vmem:[%s610 + $0x5f0] sm:$0xff]
        %v922 = vld [vmem:[%s610 + $0x5f8] sm:$0xff]
        %v923 = vld [vmem:[%s610 + $0x600] sm:$0xff]
        %v924 = vld [vmem:[%s610 + $0x608] sm:$0xff]
        %v925 = vld [vmem:[%s610 + $0x610] sm:$0xff]
        %v926 = vld [vmem:[%s610 + $0x618] sm:$0xff]
        %v927 = vld [vmem:[%s610 + $0x620] sm:$0xff]
        %v928 = vld [vmem:[%s610 + $0x628] sm:$0xff]
        %v929 = vld [vmem:[%s610 + $0x630] sm:$0xff]
        %v930 = vld [vmem:[%s610 + $0x638] sm:$0xff]
        %v931 = vld [vmem:[%s610 + $0x640] sm:$0xff]
        %v932 = vld [vmem:[%s610 + $0x648] sm:$0xff]
        %v933 = vld [vmem:[%s610 + $0x650] sm:$0xff]
        %v934 = vld [vmem:[%s610 + $0x658] sm:$0xff]
        %v935 = vld [vmem:[%s610 + $0x660] sm:$0xff]
        %v936 = vld [vmem:[%s610 + $0x668] sm:$0xff]
        %v937 = vld [vmem:[%s610 + $0x670] sm:$0xff]
        %v938 = vld [vmem:[%s610 + $0x678] sm:$0xff]
        %v939 = vld [vmem:[%s610 + $0x680] sm:$0xff]
        %v940 = vld [vmem:[%s610 + $0x688] sm:$0xff]
        %v941 = vld [vmem:[%s610 + $0x690] sm:$0xff]
        %v942 = vld [vmem:[%s610 + $0x698] sm:$0xff]
        %v943 = vld [vmem:[%s610 + $0x6a0] sm:$0xff]
        %v944 = vld [vmem:[%s610 + $0x6a8] sm:$0xff]
        %v945 = vld [vmem:[%s610 + $0x6b0] sm:$0xff]
        %v946 = vld [vmem:[%s610 + $0x6b8] sm:$0xff]
        %v947 = vld [vmem:[%s610 + $0x6c0] sm:$0xff]
        %v948 = vld [vmem:[%s610 + $0x6c8] sm:$0xff]
        %v949 = vld [vmem:[%s610 + $0x6d0] sm:$0xff]
        %v950 = vld [vmem:[%s610 + $0x6d8] sm:$0xff]
        %v951 = vld [vmem:[%s610 + $0x6e0] sm:$0xff]
        %v952 = vld [vmem:[%s610 + $0x6e8] sm:$0xff]
        %v953 = vld [vmem:[%s610 + $0x6f0] sm:$0xff]
        %v954 = vld [vmem:[%s610 + $0x6f8] sm:$0xff]
        %v955 = vld [vmem:[%s610 + $0x700] sm:$0xff]
        %v956 = vld [vmem:[%s610 + $0x708] sm:$0xff]
        %v957 = vld [vmem:[%s610 + $0x710] sm:$0xff]
        %v958 = vld [vmem:[%s610 + $0x718] sm:$0xff]
        %v959 = vld [vmem:[%s610 + $0x720] sm:$0xff]
        %v960 = vld [vmem:[%s610 + $0x728] sm:$0xff]
        %v961 = vld [vmem:[%s610 + $0x730] sm:$0xff]
        %v962 = vld [vmem:[%s610 + $0x738] sm:$0xff]
        %v963 = vld [vmem:[%s610 + $0x740] sm:$0xff]
        %v964 = vld [vmem:[%s610 + $0x748] sm:$0xff]
        %v965 = vld [vmem:[%s610 + $0x750] sm:$0xff]
        %v966 = vld [vmem:[%s610 + $0x758] sm:$0xff]
        %v967 = vld [vmem:[%s610 + $0x760] sm:$0xff]
        %v968 = vld [vmem:[%s610 + $0x768] sm:$0xff]
        %v969 = vld [vmem:[%s610 + $0x770] sm:$0xff]
        %v970 = vld [vmem:[%s610 + $0x778] sm:$0xff]
        %v971 = vld [vmem:[%s610 + $0x780] sm:$0xff]
        %v972 = vld [vmem:[%s610 + $0x788] sm:$0xff]
        %v973 = vld [vmem:[%s610 + $0x790] sm:$0xff]
        %v974 = vld [vmem:[%s610 + $0x798] sm:$0xff]
        %v975 = vld [vmem:[%s610 + $0x7a0] sm:$0xff]
        %v976 = vld [vmem:[%s610 + $0x7a8] sm:$0xff]
        %v977 = vld [vmem:[%s610 + $0x7b0] sm:$0xff]
        %v978 = vld [vmem:[%s610 + $0x7b8] sm:$0xff]
        %v979 = vld [vmem:[%s610 + $0x7c0] sm:$0xff]
        %v980 = vld [vmem:[%s610 + $0x7c8] sm:$0xff]
        %v981 = vld [vmem:[%s610 + $0x7d0] sm:$0xff]
        %v982 = vld [vmem:[%s610 + $0x7d8] sm:$0xff]
        %v983 = vld [vmem:[%s610 + $0x7e0] sm:$0xff]
        %v984 = vld [vmem:[%s610 + $0x7e8] sm:$0xff]
        %v985 = vld [vmem:[%s610 + $0x7f0] sm:$0xff]
        %v986 = vld [vmem:[%s610 + $0x7f8] sm:$0xff]
        %v987 = vld [vmem:[%s610 + $0x800] sm:$0xff]
        %v988 = vld [vmem:[%s610 + $0x808] sm:$0xff]
        %v989 = vld [vmem:[%s610 + $0x810] sm:$0xff]
        %v990 = vld [vmem:[%s610 + $0x818] sm:$0xff]
        %v991 = vld [vmem:[%s610 + $0x820] sm:$0xff]
        %v992 = vld [vmem:[%s610 + $0x828] sm:$0xff]
        %v993 = vld [vmem:[%s610 + $0x830] sm:$0xff]
        %v994 = vld [vmem:[%s610 + $0x838] sm:$0xff]
        %v995 = vld [vmem:[%s610 + $0x840] sm:$0xff]
        %v996 = vld [vmem:[%s610 + $0x848] sm:$0xff]
        %v997 = vld [vmem:[%s610 + $0x850] sm:$0xff]
        %v998 = vld [vmem:[%s610 + $0x858] sm:$0xff]
        %v999 = vld [vmem:[%s610 + $0x860] sm:$0xff]
        %v1000 = vld [vmem:[%s610 + $0x868] sm:$0xff]
        %v1001 = vld [vmem:[%s610 + $0x870] sm:$0xff]
        %v1002 = vld [vmem:[%s610 + $0x878] sm:$0xff]
        %v1003 = vld [vmem:[%s610 + $0x880] sm:$0xff]
        %v1004 = vld [vmem:[%s610 + $0x888] sm:$0xff]
        %v1005 = vld [vmem:[%s610 + $0x890] sm:$0xff]
        %v1006 = vld [vmem:[%s610 + $0x898] sm:$0xff]
        %v1007 = vld [vmem:[%s610 + $0x8a0] sm:$0xff]
        %v1008 = vld [vmem:[%s610 + $0x8a8] sm:$0xff]
        %v1009 = vld [vmem:[%s610 + $0x8b0] sm:$0xff]
        %v1010 = vld [vmem:[%s610 + $0x8b8] sm:$0xff]
        %v1011 = vld [vmem:[%s610 + $0x8c0] sm:$0xff]
        %v1012 = vld [vmem:[%s610 + $0x8c8] sm:$0xff]
        %v1013 = vld [vmem:[%s610 + $0x8d0] sm:$0xff]
        %v1014 = vld [vmem:[%s610 + $0x8d8] sm:$0xff]
        %v1015 = vld [vmem:[%s610 + $0x8e0] sm:$0xff]
        %v1016 = vld [vmem:[%s610 + $0x8e8] sm:$0xff]
        %v1017 = vld [vmem:[%s610 + $0x8f0] sm:$0xff]
        %v1018 = vld [vmem:[%s610 + $0x8f8] sm:$0xff]
        %v1019 = vld [vmem:[%s610 + $0x900] sm:$0xff]
        %v1020 = vld [vmem:[%s610 + $0x908] sm:$0xff]
        %v1021 = vld [vmem:[%s610 + $0x910] sm:$0xff]
        %v1022 = vld [vmem:[%s610 + $0x918] sm:$0xff]
        %v1023 = vld [vmem:[%s610 + $0x920] sm:$0xff]
        %v1024 = vld [vmem:[%s610 + $0x928] sm:$0xff]
        %v1025 = vld [vmem:[%s610 + $0x930] sm:$0xff]
        %v1026 = vld [vmem:[%s610 + $0x938] sm:$0xff]
        %v1027 = vld [vmem:[%s610 + $0x940] sm:$0xff]
        %v1028 = vld [vmem:[%s610 + $0x948] sm:$0xff]
        %v1029 = vld [vmem:[%s610 + $0x950] sm:$0xff]
        %v1030 = vld [vmem:[%s610 + $0x958] sm:$0xff]
        %v1031 = vld [vmem:[%s610 + $0x960] sm:$0xff]
        %v1032 = vld [vmem:[%s610 + $0x968] sm:$0xff]
        %v1033 = vld [vmem:[%s610 + $0x970] sm:$0xff]
        %v1034 = vld [vmem:[%s610 + $0x978] sm:$0xff]
        %v1035 = vld [vmem:[%s610 + $0x980] sm:$0xff]
        %v1036 = vld [vmem:[%s610 + $0x988] sm:$0xff]
        %v1037 = vld [vmem:[%s610 + $0x990] sm:$0xff]
        %v1038 = vld [vmem:[%s610 + $0x998] sm:$0xff]
        %v1039 = vld [vmem:[%s610 + $0x9a0] sm:$0xff]
        %v1040 = vld [vmem:[%s610 + $0x9a8] sm:$0xff]
        %v1041 = vld [vmem:[%s610 + $0x9b0] sm:$0xff]
        %v1042 = vld [vmem:[%s610 + $0x9b8] sm:$0xff]
        %v1043 = vld [vmem:[%s610 + $0x9c0] sm:$0xff]
        %v1044 = vld [vmem:[%s610 + $0x9c8] sm:$0xff]
        %v1045 = vld [vmem:[%s610 + $0x9d0] sm:$0xff]
        %v1046 = vld [vmem:[%s610 + $0x9d8] sm:$0xff]
        %v1047 = vld [vmem:[%s610 + $0x9e0] sm:$0xff]
        %v1048 = vld [vmem:[%s610 + $0x9e8] sm:$0xff]
        %v1049 = vld [vmem:[%s610 + $0x9f0] sm:$0xff]
        %v1050 = vld [vmem:[%s610 + $0x9f8] sm:$0xff]
        %v1051 = vld [vmem:[%s610 + $0xa00] sm:$0xff]
        %v1052 = vld [vmem:[%s610 + $0xa08] sm:$0xff]
        %v1053 = vld [vmem:[%s610 + $0xa10] sm:$0xff]
        %v1054 = vld [vmem:[%s610 + $0xa18] sm:$0xff]
        %v1055 = vld [vmem:[%s610 + $0xa20] sm:$0xff]
        %v1056 = vld [vmem:[%s610 + $0xa28] sm:$0xff]
        %v1057 = vld [vmem:[%s610 + $0xa30] sm:$0xff]
        %v1058 = vld [vmem:[%s610 + $0xa38] sm:$0xff]
        %v1059 = vld [vmem:[%s610 + $0xa40] sm:$0xff]
        %v1060 = vld [vmem:[%s610 + $0xa48] sm:$0xff]
        %v1061 = vld [vmem:[%s610 + $0xa50] sm:$0xff]
        %v1062 = vld [vmem:[%s610 + $0xa58] sm:$0xff]
        %v1063 = vld [vmem:[%s610 + $0xa60] sm:$0xff]
        %v1064 = vld [vmem:[%s610 + $0xa68] sm:$0xff]
        %v1065 = vld [vmem:[%s610 + $0xa70] sm:$0xff]
        %v1066 = vld [vmem:[%s610 + $0xa78] sm:$0xff]
        %v1067 = vld [vmem:[%s610 + $0xa80] sm:$0xff]
        %v1068 = vld [vmem:[%s610 + $0xa88] sm:$0xff]
        %v1069 = vld [vmem:[%s610 + $0xa90] sm:$0xff]
        %v1070 = vld [vmem:[%s610 + $0xa98] sm:$0xff]
        %v1071 = vld [vmem:[%s610 + $0xaa0] sm:$0xff]
        %v1072 = vld [vmem:[%s610 + $0xaa8] sm:$0xff]
        %v1073 = vld [vmem:[%s610 + $0xab0] sm:$0xff]
        %v1074 = vld [vmem:[%s610 + $0xab8] sm:$0xff]
        %v1075 = vld [vmem:[%s610 + $0xac0] sm:$0xff]
        %v1076 = vld [vmem:[%s610 + $0xac8] sm:$0xff]
        %v1077 = vld [vmem:[%s610 + $0xad0] sm:$0xff]
        %v1078 = vld [vmem:[%s610 + $0xad8] sm:$0xff]
        %v1079 = vld [vmem:[%s610 + $0xae0] sm:$0xff]
        %v1080 = vld [vmem:[%s610 + $0xae8] sm:$0xff]
        %v1081 = vld [vmem:[%s610 + $0xaf0] sm:$0xff]
        %v1082 = vld [vmem:[%s610 + $0xaf8] sm:$0xff]
        %v1083 = vld [vmem:[%s610 + $0xb00] sm:$0xff]
        %v1084 = vld [vmem:[%s610 + $0xb08] sm:$0xff]
        %v1085 = vld [vmem:[%s610 + $0xb10] sm:$0xff]
        %v1086 = vld [vmem:[%s610 + $0xb18] sm:$0xff]
        %v1087 = vld [vmem:[%s610 + $0xb20] sm:$0xff]
        %v1088 = vld [vmem:[%s610 + $0xb28] sm:$0xff]
        %v1089 = vld [vmem:[%s610 + $0xb30] sm:$0xff]
        %v1090 = vld [vmem:[%s610 + $0xb38] sm:$0xff]
        %v1091 = vld [vmem:[%s610 + $0xb40] sm:$0xff]
        %v1092 = vld [vmem:[%s610 + $0xb48] sm:$0xff]
        %v1093 = vld [vmem:[%s610 + $0xb50] sm:$0xff]
        %v1094 = vld [vmem:[%s610 + $0xb58] sm:$0xff]
        %v1095 = vld [vmem:[%s610 + $0xb60] sm:$0xff]
        %v1096 = vld [vmem:[%s610 + $0xb68] sm:$0xff]
        %v1097 = vld [vmem:[%s610 + $0xb70] sm:$0xff]
        %v1098 = vld [vmem:[%s610 + $0xb78] sm:$0xff]
        %v1099 = vld [vmem:[%s610 + $0xb80] sm:$0xff]
        %v1100 = vld [vmem:[%s610 + $0xb88] sm:$0xff]
        %v1101 = vld [vmem:[%s610 + $0xb90] sm:$0xff]
        %v1102 = vld [vmem:[%s610 + $0xb98] sm:$0xff]
        %v1103 = vld [vmem:[%s610 + $0xba0] sm:$0xff]
        %v1104 = vld [vmem:[%s610 + $0xba8] sm:$0xff]
        %v1105 = vld [vmem:[%s610 + $0xbb0] sm:$0xff]
        %v1106 = vld [vmem:[%s610 + $0xbb8] sm:$0xff]
        %v1107 = vld [vmem:[%s610 + $0xbc0] sm:$0xff]
        %v1108 = vld [vmem:[%s610 + $0xbc8] sm:$0xff]
        %v1109 = vld [vmem:[%s610 + $0xbd0] sm:$0xff]
        %v1110 = vld [vmem:[%s610 + $0xbd8] sm:$0xff]
        %v1111 = vld [vmem:[%s610 + $0xbe0] sm:$0xff]
        %v1112 = vld [vmem:[%s610 + $0xbe8] sm:$0xff]
        %v1113 = vld [vmem:[%s610 + $0xbf0] sm:$0xff]
        %v1114 = vld [vmem:[%s610 + $0xbf8] sm:$0xff]
        %v1115 = vld [vmem:[%s610 + $0xc00] sm:$0xff]
        %v1116 = vld [vmem:[%s610 + $0xc08] sm:$0xff]
        %v1117 = vld [vmem:[%s610 + $0xc10] sm:$0xff]
        %v1118 = vld [vmem:[%s610 + $0xc18] sm:$0xff]
        %v1119 = vld [vmem:[%s610 + $0xc20] sm:$0xff]
        %v1120 = vld [vmem:[%s610 + $0xc28] sm:$0xff]
        %v1121 = vld [vmem:[%s610 + $0xc30] sm:$0xff]
        %v1122 = vld [vmem:[%s610 + $0xc38] sm:$0xff]
        %v1123 = vld [vmem:[%s610 + $0xc40] sm:$0xff]
        %v1124 = vld [vmem:[%s610 + $0xc48] sm:$0xff]
        %v1125 = vld [vmem:[%s610 + $0xc50] sm:$0xff]
        %v1126 = vld [vmem:[%s610 + $0xc58] sm:$0xff]
        %v1127 = vld [vmem:[%s610 + $0xc60] sm:$0xff]
        %v1128 = vld [vmem:[%s610 + $0xc68] sm:$0xff]
        %v1129 = vld [vmem:[%s610 + $0xc70] sm:$0xff]
        %v1130 = vld [vmem:[%s610 + $0xc78] sm:$0xff]
        %v1131 = vld [vmem:[%s610 + $0xc80] sm:$0xff]
        %v1132 = vld [vmem:[%s610 + $0xc88] sm:$0xff]
        %v1133 = vld [vmem:[%s610 + $0xc90] sm:$0xff]
        %v1134 = vld [vmem:[%s610 + $0xc98] sm:$0xff]
        %v1135 = vld [vmem:[%s610 + $0xca0] sm:$0xff]
        %v1136 = vld [vmem:[%s610 + $0xca8] sm:$0xff]
        %v1137 = vld [vmem:[%s610 + $0xcb0] sm:$0xff]
        %v1138 = vld [vmem:[%s610 + $0xcb8] sm:$0xff]
        %v1139 = vld [vmem:[%s610 + $0xcc0] sm:$0xff]
        %v1140 = vld [vmem:[%s610 + $0xcc8] sm:$0xff]
        %v1141 = vld [vmem:[%s610 + $0xcd0] sm:$0xff]
        %v1142 = vld [vmem:[%s610 + $0xcd8] sm:$0xff]
        %v1143 = vld [vmem:[%s610 + $0xce0] sm:$0xff]
        %v1144 = vld [vmem:[%s610 + $0xce8] sm:$0xff]
        %v1145 = vld [vmem:[%s610 + $0xcf0] sm:$0xff]
        %v1146 = vld [vmem:[%s610 + $0xcf8] sm:$0xff]
        %v1147 = vld [vmem:[%s610 + $0xd00] sm:$0xff]
        %v1148 = vld [vmem:[%s610 + $0xd08] sm:$0xff]
        %v1149 = vld [vmem:[%s610 + $0xd10] sm:$0xff]
        %v1150 = vld [vmem:[%s610 + $0xd18] sm:$0xff]
        %v1151 = vld [vmem:[%s610 + $0xd20] sm:$0xff]
        %v1152 = vld [vmem:[%s610 + $0xd28] sm:$0xff]
        %v1153 = vld [vmem:[%s610 + $0xd30] sm:$0xff]
        %v1154 = vld [vmem:[%s610 + $0xd38] sm:$0xff]
        %v1155 = vld [vmem:[%s610 + $0xd40] sm:$0xff]
        %v1156 = vld [vmem:[%s610 + $0xd48] sm:$0xff]
        %v1157 = vld [vmem:[%s610 + $0xd50] sm:$0xff]
        %v1158 = vld [vmem:[%s610 + $0xd58] sm:$0xff]
        %v1159 = vld [vmem:[%s610 + $0xd60] sm:$0xff]
        %v1160 = vld [vmem:[%s610 + $0xd68] sm:$0xff]
        %v1161 = vld [vmem:[%s610 + $0xd70] sm:$0xff]
        %v1162 = vld [vmem:[%s610 + $0xd78] sm:$0xff]
        %v1163 = vld [vmem:[%s610 + $0xd80] sm:$0xff]
        %v1164 = vld [vmem:[%s610 + $0xd88] sm:$0xff]
        %v1165 = vld [vmem:[%s610 + $0xd90] sm:$0xff]
        %v1166 = vld [vmem:[%s610 + $0xd98] sm:$0xff]
        %v1167 = vld [vmem:[%s610 + $0xda0] sm:$0xff]
        %v1168 = vld [vmem:[%s610 + $0xda8] sm:$0xff]
        %v1169 = vld [vmem:[%s610 + $0xdb0] sm:$0xff]
        %v1170 = vld [vmem:[%s610 + $0xdb8] sm:$0xff]
        %v1171 = vld [vmem:[%s610 + $0xdc0] sm:$0xff]
        %v1172 = vld [vmem:[%s610 + $0xdc8] sm:$0xff]
        %v1173 = vld [vmem:[%s610 + $0xdd0] sm:$0xff]
        %v1174 = vld [vmem:[%s610 + $0xdd8] sm:$0xff]
        %v1175 = vld [vmem:[%s610 + $0xde0] sm:$0xff]
        %v1176 = vld [vmem:[%s610 + $0xde8] sm:$0xff]
        %v1177 = vld [vmem:[%s610 + $0xdf0] sm:$0xff]
        %v1178 = vld [vmem:[%s610 + $0xdf8] sm:$0xff]
        %v1179 = vld [vmem:[%s610 + $0xe00] sm:$0xff]
        %v1180 = vld [vmem:[%s610 + $0xe08] sm:$0xff]
        %v1181 = vld [vmem:[%s610 + $0xe10] sm:$0xff]
        %v1182 = vld [vmem:[%s610 + $0xe18] sm:$0xff]
        %v1183 = vld [vmem:[%s610 + $0xe20] sm:$0xff]
        %v1184 = vld [vmem:[%s610 + $0xe28] sm:$0xff]
        %v1185 = vld [vmem:[%s610 + $0xe30] sm:$0xff]
        %v1186 = vld [vmem:[%s610 + $0xe38] sm:$0xff]
        %v1187 = vld [vmem:[%s610 + $0xe40] sm:$0xff]
        %v1188 = vld [vmem:[%s610 + $0xe48] sm:$0xff]
        %v1189 = vld [vmem:[%s610 + $0xe50] sm:$0xff]
        %v1190 = vld [vmem:[%s610 + $0xe58] sm:$0xff]
        %v1191 = vld [vmem:[%s610 + $0xe60] sm:$0xff]
        %v1192 = vld [vmem:[%s610 + $0xe68] sm:$0xff]
        %v1193 = vld [vmem:[%s610 + $0xe70] sm:$0xff]
        %v1194 = vld [vmem:[%s610 + $0xe78] sm:$0xff]
        %v1195 = vld [vmem:[%s610 + $0xe80] sm:$0xff]
        %v1196 = vld [vmem:[%s610 + $0xe88] sm:$0xff]
        %v1197 = vld [vmem:[%s610 + $0xe90] sm:$0xff]
        %v1198 = vld [vmem:[%s610 + $0xe98] sm:$0xff]
        %v1199 = vld [vmem:[%s610 + $0xea0] sm:$0xff]
        %v1200 = vld [vmem:[%s610 + $0xea8] sm:$0xff]
        %v1201 = vld [vmem:[%s610 + $0xeb0] sm:$0xff]
        %v1202 = vld [vmem:[%s610 + $0xeb8] sm:$0xff]
        %v1203 = vld [vmem:[%s610 + $0xec0] sm:$0xff]
        %v1204 = vld [vmem:[%s610 + $0xec8] sm:$0xff]
        %v1205 = vld [vmem:[%s610 + $0xed0] sm:$0xff]
        %v1206 = vld [vmem:[%s610 + $0xed8] sm:$0xff]
        %v1207 = vld [vmem:[%s610 + $0xee0] sm:$0xff]
        %v1208 = vld [vmem:[%s610 + $0xee8] sm:$0xff]
        %v1209 = vld [vmem:[%s610 + $0xef0] sm:$0xff]
        %v1210 = vld [vmem:[%s610 + $0xef8] sm:$0xff]
        %v1211 = vld [vmem:[%s610 + $0xf00] sm:$0xff]
        %v1212 = vld [vmem:[%s610 + $0xf08] sm:$0xff]
        %v1213 = vld [vmem:[%s610 + $0xf10] sm:$0xff]
        %v1214 = vld [vmem:[%s610 + $0xf18] sm:$0xff]
        %v1215 = vld [vmem:[%s610 + $0xf20] sm:$0xff]
        %v1216 = vld [vmem:[%s610 + $0xf28] sm:$0xff]
        %v1217 = vld [vmem:[%s610 + $0xf30] sm:$0xff]
        %v1218 = vld [vmem:[%s610 + $0xf38] sm:$0xff]
        %v1219 = vld [vmem:[%s610 + $0xf40] sm:$0xff]
        %v1220 = vld [vmem:[%s610 + $0xf48] sm:$0xff]
        %v1221 = vld [vmem:[%s610 + $0xf50] sm:$0xff]
        %v1222 = vld [vmem:[%s610 + $0xf58] sm:$0xff]
        %v1223 = vld [vmem:[%s610 + $0xf60] sm:$0xff]
        %v1224 = vld [vmem:[%s610 + $0xf68] sm:$0xff]
        %v1225 = vld [vmem:[%s610 + $0xf70] sm:$0xff]
        %v1226 = vld [vmem:[%s610 + $0xf78] sm:$0xff]
        %v1227 = vld [vmem:[%s610 + $0xf80] sm:$0xff]
        %v1228 = vld [vmem:[%s610 + $0xf88] sm:$0xff]
        %v1229 = vld [vmem:[%s610 + $0xf90] sm:$0xff]
        %v1230 = vld [vmem:[%s610 + $0xf98] sm:$0xff]
        %v1231 = vld [vmem:[%s610 + $0xfa0] sm:$0xff]
        %v1232 = vld [vmem:[%s610 + $0xfa8] sm:$0xff]
        %v1233 = vld [vmem:[%s610 + $0xfb0] sm:$0xff]
        %v1234 = vld [vmem:[%s610 + $0xfb8] sm:$0xff]
        %v1235 = vld [vmem:[%s610 + $0xfc0] sm:$0xff]
        %v1236 = vld [vmem:[%s610 + $0xfc8] sm:$0xff]
        %v1237 = vld [vmem:[%s610 + $0xfd0] sm:$0xff]
        %v1238 = vld [vmem:[%s610 + $0xfd8] sm:$0xff]
        %v1239 = vld [vmem:[%s610 + $0xfe0] sm:$0xff]
        %v1240 = vld [vmem:[%s610 + $0xfe8] sm:$0xff]
        %v1241 = vld [vmem:[%s610 + $0xff0] sm:$0xff]
        %v1242 = vld [vmem:[%s610 + $0xff8] sm:$0xff]
        %v1243 = vld [vmem:[%s1] sm:$0xff]
        %v1244 = vld [vmem:[%s1 + $0x8] sm:$0xff]
        %v1245 = vld [vmem:[%s1 + $0x10] sm:$0xff]
        %v1246 = vld [vmem:[%s1 + $0x18] sm:$0xff]
        %v1247 = vld [vmem:[%s1 + $0x20] sm:$0xff]
        %v1248 = vld [vmem:[%s1 + $0x28] sm:$0xff]
        %v1249 = vld [vmem:[%s1 + $0x30] sm:$0xff]
        %v1250 = vld [vmem:[%s1 + $0x38] sm:$0xff]
        %vm1251 = vcmask 523264
        %v1253 = vsel %vm1251, %v731, 0
        %v1256 = vsel %vm1251, %v732, 0
        %v1259 = vsel %vm1251, %v733, 0
        %v1262 = vsel %vm1251, %v734, 0
        %v1265 = vsel %vm1251, %v735, 0
        %v1268 = vsel %vm1251, %v736, 0
        %v1271 = vsel %vm1251, %v737, 0
        %v1274 = vsel %vm1251, %v738, 0
        %v1277 = vsel %vm1251, %v739, 0
        %v1280 = vsel %vm1251, %v740, 0
        %v1283 = vsel %vm1251, %v741, 0
        %v1286 = vsel %vm1251, %v742, 0
        %v1289 = vsel %vm1251, %v743, 0
        %v1292 = vsel %vm1251, %v744, 0
        %v1295 = vsel %vm1251, %v745, 0
        %v1298 = vsel %vm1251, %v746, 0
        %v1301 = vsel %vm1251, %v747, 0
        %v1304 = vsel %vm1251, %v748, 0
        %v1307 = vsel %vm1251, %v749, 0
        %v1310 = vsel %vm1251, %v750, 0
        %v1313 = vsel %vm1251, %v751, 0
        %v1316 = vsel %vm1251, %v752, 0
        %v1319 = vsel %vm1251, %v753, 0
        %v1322 = vsel %vm1251, %v754, 0
        %v1325 = vsel %vm1251, %v755, 0
        %v1328 = vsel %vm1251, %v756, 0
        %v1331 = vsel %vm1251, %v757, 0
        %v1334 = vsel %vm1251, %v758, 0
        %v1337 = vsel %vm1251, %v759, 0
        %v1340 = vsel %vm1251, %v760, 0
        %v1343 = vsel %vm1251, %v761, 0
        %v1346 = vsel %vm1251, %v762, 0
        %v1349 = vsel %vm1251, %v763, 0
        %v1352 = vsel %vm1251, %v764, 0
        %v1355 = vsel %vm1251, %v765, 0
        %v1358 = vsel %vm1251, %v766, 0
        %v1361 = vsel %vm1251, %v767, 0
        %v1364 = vsel %vm1251, %v768, 0
        %v1367 = vsel %vm1251, %v769, 0
        %v1370 = vsel %vm1251, %v770, 0
        %v1373 = vsel %vm1251, %v771, 0
        %v1376 = vsel %vm1251, %v772, 0
        %v1379 = vsel %vm1251, %v773, 0
        %v1382 = vsel %vm1251, %v774, 0
        %v1385 = vsel %vm1251, %v775, 0
        %v1388 = vsel %vm1251, %v776, 0
        %v1391 = vsel %vm1251, %v777, 0
        %v1394 = vsel %vm1251, %v778, 0
        %v1397 = vsel %vm1251, %v779, 0
        %v1400 = vsel %vm1251, %v780, 0
        %v1403 = vsel %vm1251, %v781, 0
        %v1406 = vsel %vm1251, %v782, 0
        %v1409 = vsel %vm1251, %v783, 0
        %v1412 = vsel %vm1251, %v784, 0
        %v1415 = vsel %vm1251, %v785, 0
        %v1418 = vsel %vm1251, %v786, 0
        %v1421 = vsel %vm1251, %v787, 0
        %v1424 = vsel %vm1251, %v788, 0
        %v1427 = vsel %vm1251, %v789, 0
        %v1430 = vsel %vm1251, %v790, 0
        %v1433 = vsel %vm1251, %v791, 0
        %v1436 = vsel %vm1251, %v792, 0
        %v1439 = vsel %vm1251, %v793, 0
        %v1442 = vsel %vm1251, %v794, 0
        %v1445 = vsel %vm1251, %v795, 0
        %v1448 = vsel %vm1251, %v796, 0
        %v1451 = vsel %vm1251, %v797, 0
        %v1454 = vsel %vm1251, %v798, 0
        %v1457 = vsel %vm1251, %v799, 0
        %v1460 = vsel %vm1251, %v800, 0
        %v1463 = vsel %vm1251, %v801, 0
        %v1466 = vsel %vm1251, %v802, 0
        %v1469 = vsel %vm1251, %v803, 0
        %v1472 = vsel %vm1251, %v804, 0
        %v1475 = vsel %vm1251, %v805, 0
        %v1478 = vsel %vm1251, %v806, 0
        %v1481 = vsel %vm1251, %v807, 0
        %v1484 = vsel %vm1251, %v808, 0
        %v1487 = vsel %vm1251, %v809, 0
        %v1490 = vsel %vm1251, %v810, 0
        %v1493 = vsel %vm1251, %v811, 0
        %v1496 = vsel %vm1251, %v812, 0
        %v1499 = vsel %vm1251, %v813, 0
        %v1502 = vsel %vm1251, %v814, 0
        %v1505 = vsel %vm1251, %v815, 0
        %v1508 = vsel %vm1251, %v816, 0
        %v1511 = vsel %vm1251, %v817, 0
        %v1514 = vsel %vm1251, %v818, 0
        %v1517 = vsel %vm1251, %v819, 0
        %v1520 = vsel %vm1251, %v820, 0
        %v1523 = vsel %vm1251, %v821, 0
        %v1526 = vsel %vm1251, %v822, 0
        %v1529 = vsel %vm1251, %v823, 0
        %v1532 = vsel %vm1251, %v824, 0
        %v1535 = vsel %vm1251, %v825, 0
        %v1538 = vsel %vm1251, %v826, 0
        %v1541 = vsel %vm1251, %v827, 0
        %v1544 = vsel %vm1251, %v828, 0
        %v1547 = vsel %vm1251, %v829, 0
        %v1550 = vsel %vm1251, %v830, 0
        %v1553 = vsel %vm1251, %v831, 0
        %v1556 = vsel %vm1251, %v832, 0
        %v1559 = vsel %vm1251, %v833, 0
        %v1562 = vsel %vm1251, %v834, 0
        %v1565 = vsel %vm1251, %v835, 0
        %v1568 = vsel %vm1251, %v836, 0
        %v1571 = vsel %vm1251, %v837, 0
        %v1574 = vsel %vm1251, %v838, 0
        %v1577 = vsel %vm1251, %v839, 0
        %v1580 = vsel %vm1251, %v840, 0
        %v1583 = vsel %vm1251, %v841, 0
        %v1586 = vsel %vm1251, %v842, 0
        %v1589 = vsel %vm1251, %v843, 0
        %v1592 = vsel %vm1251, %v844, 0
        %v1595 = vsel %vm1251, %v845, 0
        %v1598 = vsel %vm1251, %v846, 0
        %v1601 = vsel %vm1251, %v847, 0
        %v1604 = vsel %vm1251, %v848, 0
        %v1607 = vsel %vm1251, %v849, 0
        %v1610 = vsel %vm1251, %v850, 0
        %v1613 = vsel %vm1251, %v851, 0
        %v1616 = vsel %vm1251, %v852, 0
        %v1619 = vsel %vm1251, %v853, 0
        %v1622 = vsel %vm1251, %v854, 0
        %v1625 = vsel %vm1251, %v855, 0
        %v1628 = vsel %vm1251, %v856, 0
        %v1631 = vsel %vm1251, %v857, 0
        %v1634 = vsel %vm1251, %v858, 0
        %v1637 = vsel %vm1251, %v859, 0
        %v1640 = vsel %vm1251, %v860, 0
        %v1643 = vsel %vm1251, %v861, 0
        %v1646 = vsel %vm1251, %v862, 0
        %v1649 = vsel %vm1251, %v863, 0
        %v1652 = vsel %vm1251, %v864, 0
        %v1655 = vsel %vm1251, %v865, 0
        %v1658 = vsel %vm1251, %v866, 0
        %v1661 = vsel %vm1251, %v867, 0
        %v1664 = vsel %vm1251, %v868, 0
        %v1667 = vsel %vm1251, %v869, 0
        %v1670 = vsel %vm1251, %v870, 0
        %v1673 = vsel %vm1251, %v871, 0
        %v1676 = vsel %vm1251, %v872, 0
        %v1679 = vsel %vm1251, %v873, 0
        %v1682 = vsel %vm1251, %v874, 0
        %v1685 = vsel %vm1251, %v875, 0
        %v1688 = vsel %vm1251, %v876, 0
        %v1691 = vsel %vm1251, %v877, 0
        %v1694 = vsel %vm1251, %v878, 0
        %v1697 = vsel %vm1251, %v879, 0
        %v1700 = vsel %vm1251, %v880, 0
        %v1703 = vsel %vm1251, %v881, 0
        %v1706 = vsel %vm1251, %v882, 0
        %v1709 = vsel %vm1251, %v883, 0
        %v1712 = vsel %vm1251, %v884, 0
        %v1715 = vsel %vm1251, %v885, 0
        %v1718 = vsel %vm1251, %v886, 0
        %v1721 = vsel %vm1251, %v887, 0
        %v1724 = vsel %vm1251, %v888, 0
        %v1727 = vsel %vm1251, %v889, 0
        %v1730 = vsel %vm1251, %v890, 0
        %v1733 = vsel %vm1251, %v891, 0
        %v1736 = vsel %vm1251, %v892, 0
        %v1739 = vsel %vm1251, %v893, 0
        %v1742 = vsel %vm1251, %v894, 0
        %v1745 = vsel %vm1251, %v895, 0
        %v1748 = vsel %vm1251, %v896, 0
        %v1751 = vsel %vm1251, %v897, 0
        %v1754 = vsel %vm1251, %v898, 0
        %v1757 = vsel %vm1251, %v899, 0
        %v1760 = vsel %vm1251, %v900, 0
        %v1763 = vsel %vm1251, %v901, 0
        %v1766 = vsel %vm1251, %v902, 0
        %v1769 = vsel %vm1251, %v903, 0
        %v1772 = vsel %vm1251, %v904, 0
        %v1775 = vsel %vm1251, %v905, 0
        %v1778 = vsel %vm1251, %v906, 0
        %v1781 = vsel %vm1251, %v907, 0
        %v1784 = vsel %vm1251, %v908, 0
        %v1787 = vsel %vm1251, %v909, 0
        %v1790 = vsel %vm1251, %v910, 0
        %v1793 = vsel %vm1251, %v911, 0
        %v1796 = vsel %vm1251, %v912, 0
        %v1799 = vsel %vm1251, %v913, 0
        %v1802 = vsel %vm1251, %v914, 0
        %v1805 = vsel %vm1251, %v915, 0
        %v1808 = vsel %vm1251, %v916, 0
        %v1811 = vsel %vm1251, %v917, 0
        %v1814 = vsel %vm1251, %v918, 0
        %v1817 = vsel %vm1251, %v919, 0
        %v1820 = vsel %vm1251, %v920, 0
        %v1823 = vsel %vm1251, %v921, 0
        %v1826 = vsel %vm1251, %v922, 0
        %v1829 = vsel %vm1251, %v923, 0
        %v1832 = vsel %vm1251, %v924, 0
        %v1835 = vsel %vm1251, %v925, 0
        %v1838 = vsel %vm1251, %v926, 0
        %v1841 = vsel %vm1251, %v927, 0
        %v1844 = vsel %vm1251, %v928, 0
        %v1847 = vsel %vm1251, %v929, 0
        %v1850 = vsel %vm1251, %v930, 0
        %v1853 = vsel %vm1251, %v931, 0
        %v1856 = vsel %vm1251, %v932, 0
        %v1859 = vsel %vm1251, %v933, 0
        %v1862 = vsel %vm1251, %v934, 0
        %v1865 = vsel %vm1251, %v935, 0
        %v1868 = vsel %vm1251, %v936, 0
        %v1871 = vsel %vm1251, %v937, 0
        %v1874 = vsel %vm1251, %v938, 0
        %v1877 = vsel %vm1251, %v939, 0
        %v1880 = vsel %vm1251, %v940, 0
        %v1883 = vsel %vm1251, %v941, 0
        %v1886 = vsel %vm1251, %v942, 0
        %v1889 = vsel %vm1251, %v943, 0
        %v1892 = vsel %vm1251, %v944, 0
        %v1895 = vsel %vm1251, %v945, 0
        %v1898 = vsel %vm1251, %v946, 0
        %v1901 = vsel %vm1251, %v947, 0
        %v1904 = vsel %vm1251, %v948, 0
        %v1907 = vsel %vm1251, %v949, 0
        %v1910 = vsel %vm1251, %v950, 0
        %v1913 = vsel %vm1251, %v951, 0
        %v1916 = vsel %vm1251, %v952, 0
        %v1919 = vsel %vm1251, %v953, 0
        %v1922 = vsel %vm1251, %v954, 0
        %v1925 = vsel %vm1251, %v955, 0
        %v1928 = vsel %vm1251, %v956, 0
        %v1931 = vsel %vm1251, %v957, 0
        %v1934 = vsel %vm1251, %v958, 0
        %v1937 = vsel %vm1251, %v959, 0
        %v1940 = vsel %vm1251, %v960, 0
        %v1943 = vsel %vm1251, %v961, 0
        %v1946 = vsel %vm1251, %v962, 0
        %v1949 = vsel %vm1251, %v963, 0
        %v1952 = vsel %vm1251, %v964, 0
        %v1955 = vsel %vm1251, %v965, 0
        %v1958 = vsel %vm1251, %v966, 0
        %v1961 = vsel %vm1251, %v967, 0
        %v1964 = vsel %vm1251, %v968, 0
        %v1967 = vsel %vm1251, %v969, 0
        %v1970 = vsel %vm1251, %v970, 0
        %v1973 = vsel %vm1251, %v971, 0
        %v1976 = vsel %vm1251, %v972, 0
        %v1979 = vsel %vm1251, %v973, 0
        %v1982 = vsel %vm1251, %v974, 0
        %v1985 = vsel %vm1251, %v975, 0
        %v1988 = vsel %vm1251, %v976, 0
        %v1991 = vsel %vm1251, %v977, 0
        %v1994 = vsel %vm1251, %v978, 0
        %v1997 = vsel %vm1251, %v979, 0
        %v2000 = vsel %vm1251, %v980, 0
        %v2003 = vsel %vm1251, %v981, 0
        %v2006 = vsel %vm1251, %v982, 0
        %v2009 = vsel %vm1251, %v983, 0
        %v2012 = vsel %vm1251, %v984, 0
        %v2015 = vsel %vm1251, %v985, 0
        %v2018 = vsel %vm1251, %v986, 0
        %v2021 = vsel %vm1251, %v987, 0
        %v2024 = vsel %vm1251, %v988, 0
        %v2027 = vsel %vm1251, %v989, 0
        %v2030 = vsel %vm1251, %v990, 0
        %v2033 = vsel %vm1251, %v991, 0
        %v2036 = vsel %vm1251, %v992, 0
        %v2039 = vsel %vm1251, %v993, 0
        %v2042 = vsel %vm1251, %v994, 0
        %v2045 = vsel %vm1251, %v995, 0
        %v2048 = vsel %vm1251, %v996, 0
        %v2051 = vsel %vm1251, %v997, 0
        %v2054 = vsel %vm1251, %v998, 0
        %v2057 = vsel %vm1251, %v999, 0
        %v2060 = vsel %vm1251, %v1000, 0
        %v2063 = vsel %vm1251, %v1001, 0
        %v2066 = vsel %vm1251, %v1002, 0
        %v2069 = vsel %vm1251, %v1003, 0
        %v2072 = vsel %vm1251, %v1004, 0
        %v2075 = vsel %vm1251, %v1005, 0
        %v2078 = vsel %vm1251, %v1006, 0
        %v2081 = vsel %vm1251, %v1007, 0
        %v2084 = vsel %vm1251, %v1008, 0
        %v2087 = vsel %vm1251, %v1009, 0
        %v2090 = vsel %vm1251, %v1010, 0
        %v2093 = vsel %vm1251, %v1011, 0
        %v2096 = vsel %vm1251, %v1012, 0
        %v2099 = vsel %vm1251, %v1013, 0
        %v2102 = vsel %vm1251, %v1014, 0
        %v2105 = vsel %vm1251, %v1015, 0
        %v2108 = vsel %vm1251, %v1016, 0
        %v2111 = vsel %vm1251, %v1017, 0
        %v2114 = vsel %vm1251, %v1018, 0
        %v2117 = vsel %vm1251, %v1019, 0
        %v2120 = vsel %vm1251, %v1020, 0
        %v2123 = vsel %vm1251, %v1021, 0
        %v2126 = vsel %vm1251, %v1022, 0
        %v2129 = vsel %vm1251, %v1023, 0
        %v2132 = vsel %vm1251, %v1024, 0
        %v2135 = vsel %vm1251, %v1025, 0
        %v2138 = vsel %vm1251, %v1026, 0
        %v2141 = vsel %vm1251, %v1027, 0
        %v2144 = vsel %vm1251, %v1028, 0
        %v2147 = vsel %vm1251, %v1029, 0
        %v2150 = vsel %vm1251, %v1030, 0
        %v2153 = vsel %vm1251, %v1031, 0
        %v2156 = vsel %vm1251, %v1032, 0
        %v2159 = vsel %vm1251, %v1033, 0
        %v2162 = vsel %vm1251, %v1034, 0
        %v2165 = vsel %vm1251, %v1035, 0
        %v2168 = vsel %vm1251, %v1036, 0
        %v2171 = vsel %vm1251, %v1037, 0
        %v2174 = vsel %vm1251, %v1038, 0
        %v2177 = vsel %vm1251, %v1039, 0
        %v2180 = vsel %vm1251, %v1040, 0
        %v2183 = vsel %vm1251, %v1041, 0
        %v2186 = vsel %vm1251, %v1042, 0
        %v2189 = vsel %vm1251, %v1043, 0
        %v2192 = vsel %vm1251, %v1044, 0
        %v2195 = vsel %vm1251, %v1045, 0
        %v2198 = vsel %vm1251, %v1046, 0
        %v2201 = vsel %vm1251, %v1047, 0
        %v2204 = vsel %vm1251, %v1048, 0
        %v2207 = vsel %vm1251, %v1049, 0
        %v2210 = vsel %vm1251, %v1050, 0
        %v2213 = vsel %vm1251, %v1051, 0
        %v2216 = vsel %vm1251, %v1052, 0
        %v2219 = vsel %vm1251, %v1053, 0
        %v2222 = vsel %vm1251, %v1054, 0
        %v2225 = vsel %vm1251, %v1055, 0
        %v2228 = vsel %vm1251, %v1056, 0
        %v2231 = vsel %vm1251, %v1057, 0
        %v2234 = vsel %vm1251, %v1058, 0
        %v2237 = vsel %vm1251, %v1059, 0
        %v2240 = vsel %vm1251, %v1060, 0
        %v2243 = vsel %vm1251, %v1061, 0
        %v2246 = vsel %vm1251, %v1062, 0
        %v2249 = vsel %vm1251, %v1063, 0
        %v2252 = vsel %vm1251, %v1064, 0
        %v2255 = vsel %vm1251, %v1065, 0
        %v2258 = vsel %vm1251, %v1066, 0
        %v2261 = vsel %vm1251, %v1067, 0
        %v2264 = vsel %vm1251, %v1068, 0
        %v2267 = vsel %vm1251, %v1069, 0
        %v2270 = vsel %vm1251, %v1070, 0
        %v2273 = vsel %vm1251, %v1071, 0
        %v2276 = vsel %vm1251, %v1072, 0
        %v2279 = vsel %vm1251, %v1073, 0
        %v2282 = vsel %vm1251, %v1074, 0
        %v2285 = vsel %vm1251, %v1075, 0
        %v2288 = vsel %vm1251, %v1076, 0
        %v2291 = vsel %vm1251, %v1077, 0
        %v2294 = vsel %vm1251, %v1078, 0
        %v2297 = vsel %vm1251, %v1079, 0
        %v2300 = vsel %vm1251, %v1080, 0
        %v2303 = vsel %vm1251, %v1081, 0
        %v2306 = vsel %vm1251, %v1082, 0
        %v2309 = vsel %vm1251, %v1083, 0
        %v2312 = vsel %vm1251, %v1084, 0
        %v2315 = vsel %vm1251, %v1085, 0
        %v2318 = vsel %vm1251, %v1086, 0
        %v2321 = vsel %vm1251, %v1087, 0
        %v2324 = vsel %vm1251, %v1088, 0
        %v2327 = vsel %vm1251, %v1089, 0
        %v2330 = vsel %vm1251, %v1090, 0
        %v2333 = vsel %vm1251, %v1091, 0
        %v2336 = vsel %vm1251, %v1092, 0
        %v2339 = vsel %vm1251, %v1093, 0
        %v2342 = vsel %vm1251, %v1094, 0
        %v2345 = vsel %vm1251, %v1095, 0
        %v2348 = vsel %vm1251, %v1096, 0
        %v2351 = vsel %vm1251, %v1097, 0
        %v2354 = vsel %vm1251, %v1098, 0
        %v2357 = vsel %vm1251, %v1099, 0
        %v2360 = vsel %vm1251, %v1100, 0
        %v2363 = vsel %vm1251, %v1101, 0
        %v2366 = vsel %vm1251, %v1102, 0
        %v2369 = vsel %vm1251, %v1103, 0
        %v2372 = vsel %vm1251, %v1104, 0
        %v2375 = vsel %vm1251, %v1105, 0
        %v2378 = vsel %vm1251, %v1106, 0
        %v2381 = vsel %vm1251, %v1107, 0
        %v2384 = vsel %vm1251, %v1108, 0
        %v2387 = vsel %vm1251, %v1109, 0
        %v2390 = vsel %vm1251, %v1110, 0
        %v2393 = vsel %vm1251, %v1111, 0
        %v2396 = vsel %vm1251, %v1112, 0
        %v2399 = vsel %vm1251, %v1113, 0
        %v2402 = vsel %vm1251, %v1114, 0
        %v2405 = vsel %vm1251, %v1115, 0
        %v2408 = vsel %vm1251, %v1116, 0
        %v2411 = vsel %vm1251, %v1117, 0
        %v2414 = vsel %vm1251, %v1118, 0
        %v2417 = vsel %vm1251, %v1119, 0
        %v2420 = vsel %vm1251, %v1120, 0
        %v2423 = vsel %vm1251, %v1121, 0
        %v2426 = vsel %vm1251, %v1122, 0
        %v2429 = vsel %vm1251, %v1123, 0
        %v2432 = vsel %vm1251, %v1124, 0
        %v2435 = vsel %vm1251, %v1125, 0
        %v2438 = vsel %vm1251, %v1126, 0
        %v2441 = vsel %vm1251, %v1127, 0
        %v2444 = vsel %vm1251, %v1128, 0
        %v2447 = vsel %vm1251, %v1129, 0
        %v2450 = vsel %vm1251, %v1130, 0
        %v2453 = vsel %vm1251, %v1131, 0
        %v2456 = vsel %vm1251, %v1132, 0
        %v2459 = vsel %vm1251, %v1133, 0
        %v2462 = vsel %vm1251, %v1134, 0
        %v2465 = vsel %vm1251, %v1135, 0
        %v2468 = vsel %vm1251, %v1136, 0
        %v2471 = vsel %vm1251, %v1137, 0
        %v2474 = vsel %vm1251, %v1138, 0
        %v2477 = vsel %vm1251, %v1139, 0
        %v2480 = vsel %vm1251, %v1140, 0
        %v2483 = vsel %vm1251, %v1141, 0
        %v2486 = vsel %vm1251, %v1142, 0
        %v2489 = vsel %vm1251, %v1143, 0
        %v2492 = vsel %vm1251, %v1144, 0
        %v2495 = vsel %vm1251, %v1145, 0
        %v2498 = vsel %vm1251, %v1146, 0
        %v2501 = vsel %vm1251, %v1147, 0
        %v2504 = vsel %vm1251, %v1148, 0
        %v2507 = vsel %vm1251, %v1149, 0
        %v2510 = vsel %vm1251, %v1150, 0
        %v2513 = vsel %vm1251, %v1151, 0
        %v2516 = vsel %vm1251, %v1152, 0
        %v2519 = vsel %vm1251, %v1153, 0
        %v2522 = vsel %vm1251, %v1154, 0
        %v2525 = vsel %vm1251, %v1155, 0
        %v2528 = vsel %vm1251, %v1156, 0
        %v2531 = vsel %vm1251, %v1157, 0
        %v2534 = vsel %vm1251, %v1158, 0
        %v2537 = vsel %vm1251, %v1159, 0
        %v2540 = vsel %vm1251, %v1160, 0
        %v2543 = vsel %vm1251, %v1161, 0
        %v2546 = vsel %vm1251, %v1162, 0
        %v2549 = vsel %vm1251, %v1163, 0
        %v2552 = vsel %vm1251, %v1164, 0
        %v2555 = vsel %vm1251, %v1165, 0
        %v2558 = vsel %vm1251, %v1166, 0
        %v2561 = vsel %vm1251, %v1167, 0
        %v2564 = vsel %vm1251, %v1168, 0
        %v2567 = vsel %vm1251, %v1169, 0
        %v2570 = vsel %vm1251, %v1170, 0
        %v2573 = vsel %vm1251, %v1171, 0
        %v2576 = vsel %vm1251, %v1172, 0
        %v2579 = vsel %vm1251, %v1173, 0
        %v2582 = vsel %vm1251, %v1174, 0
        %v2585 = vsel %vm1251, %v1175, 0
        %v2588 = vsel %vm1251, %v1176, 0
        %v2591 = vsel %vm1251, %v1177, 0
        %v2594 = vsel %vm1251, %v1178, 0
        %v2597 = vsel %vm1251, %v1179, 0
        %v2600 = vsel %vm1251, %v1180, 0
        %v2603 = vsel %vm1251, %v1181, 0
        %v2606 = vsel %vm1251, %v1182, 0
        %v2609 = vsel %vm1251, %v1183, 0
        %v2612 = vsel %vm1251, %v1184, 0
        %v2615 = vsel %vm1251, %v1185, 0
        %v2618 = vsel %vm1251, %v1186, 0
        %v2621 = vsel %vm1251, %v1187, 0
        %v2624 = vsel %vm1251, %v1188, 0
        %v2627 = vsel %vm1251, %v1189, 0
        %v2630 = vsel %vm1251, %v1190, 0
        %v2633 = vsel %vm1251, %v1191, 0
        %v2636 = vsel %vm1251, %v1192, 0
        %v2639 = vsel %vm1251, %v1193, 0
        %v2642 = vsel %vm1251, %v1194, 0
        %v2645 = vsel %vm1251, %v1195, 0
        %v2648 = vsel %vm1251, %v1196, 0
        %v2651 = vsel %vm1251, %v1197, 0
        %v2654 = vsel %vm1251, %v1198, 0
        %v2657 = vsel %vm1251, %v1199, 0
        %v2660 = vsel %vm1251, %v1200, 0
        %v2663 = vsel %vm1251, %v1201, 0
        %v2666 = vsel %vm1251, %v1202, 0
        %v2669 = vsel %vm1251, %v1203, 0
        %v2672 = vsel %vm1251, %v1204, 0
        %v2675 = vsel %vm1251, %v1205, 0
        %v2678 = vsel %vm1251, %v1206, 0
        %v2681 = vsel %vm1251, %v1207, 0
        %v2684 = vsel %vm1251, %v1208, 0
        %v2687 = vsel %vm1251, %v1209, 0
        %v2690 = vsel %vm1251, %v1210, 0
        %v2693 = vsel %vm1251, %v1211, 0
        %v2696 = vsel %vm1251, %v1212, 0
        %v2699 = vsel %vm1251, %v1213, 0
        %v2702 = vsel %vm1251, %v1214, 0
        %v2705 = vsel %vm1251, %v1215, 0
        %v2708 = vsel %vm1251, %v1216, 0
        %v2711 = vsel %vm1251, %v1217, 0
        %v2714 = vsel %vm1251, %v1218, 0
        %v2717 = vsel %vm1251, %v1219, 0
        %v2720 = vsel %vm1251, %v1220, 0
        %v2723 = vsel %vm1251, %v1221, 0
        %v2726 = vsel %vm1251, %v1222, 0
        %v2729 = vsel %vm1251, %v1223, 0
        %v2732 = vsel %vm1251, %v1224, 0
        %v2735 = vsel %vm1251, %v1225, 0
        %v2738 = vsel %vm1251, %v1226, 0
        %v2741 = vsel %vm1251, %v1227, 0
        %v2744 = vsel %vm1251, %v1228, 0
        %v2747 = vsel %vm1251, %v1229, 0
        %v2750 = vsel %vm1251, %v1230, 0
        %v2753 = vsel %vm1251, %v1231, 0
        %v2756 = vsel %vm1251, %v1232, 0
        %v2759 = vsel %vm1251, %v1233, 0
        %v2762 = vsel %vm1251, %v1234, 0
        %v2765 = vsel %vm1251, %v1235, 0
        %v2768 = vsel %vm1251, %v1236, 0
        %v2771 = vsel %vm1251, %v1237, 0
        %v2774 = vsel %vm1251, %v1238, 0
        %v2777 = vsel %vm1251, %v1239, 0
        %v2780 = vsel %vm1251, %v1240, 0
        %v2783 = vsel %vm1251, %v1241, 0
        %v2786 = vsel %vm1251, %v1242, 0
        %2788 = vmatpush.msra.mxu0 0.0
        %2789 = vmatpush.msra.mxu0 0.0
        %2790 = vmatpush.msra.mxu0 0.0
        %2791 = vmatpush.msra.mxu0 0.0
        %2792 = vmatpush.msra.mxu0 0.0
        %2793 = vmatpush.msra.mxu0 0.0
        %2794 = vmatpush.msra.mxu0 0.0
        %2795 = vmatpush.msra.mxu0 0.0
        %2796 = vmatpush.msra.mxu0 %v1250
        %2797 = vmatpush.msra.mxu0 %v1249
        %2798 = vmatpush.msra.mxu0 %v1248
        %2799 = vmatpush.msra.mxu0 %v1247
        %2800 = vmatpush.msra.mxu0 %v1246
        %2801 = vmatpush.msra.mxu0 %v1245
        %2802 = vmatpush.msra.mxu0 %v1244
        %2803 = vmatpush.msra.mxu0 %v1243
        %2804 = vmatmul.f32.gmra.mxu0 %v1253
        %v2805 = vpop.f32.mrf.mxu0
        %v2806 = vadd.f32 0.0, %v2805
        %2807 = vmatmul.f32.gmra.mxu0 %v1256
        %v2808 = vpop.f32.mrf.mxu0
        %v2809 = vadd.f32 0.0, %v2808
        %2810 = vmatmul.f32.gmra.mxu0 %v1259
        %v2811 = vpop.f32.mrf.mxu0
        %v2812 = vadd.f32 0.0, %v2811
        %2813 = vmatmul.f32.gmra.mxu0 %v1262
        %v2814 = vpop.f32.mrf.mxu0
        %v2815 = vadd.f32 0.0, %v2814
        %2816 = vmatmul.f32.gmra.mxu0 %v1265
        %v2817 = vpop.f32.mrf.mxu0
        %v2818 = vadd.f32 0.0, %v2817
        %2819 = vmatmul.f32.gmra.mxu0 %v1268
        %v2820 = vpop.f32.mrf.mxu0
        %v2821 = vadd.f32 0.0, %v2820
        %2822 = vmatmul.f32.gmra.mxu0 %v1271
        %v2823 = vpop.f32.mrf.mxu0
        %v2824 = vadd.f32 0.0, %v2823
        %2825 = vmatmul.f32.gmra.mxu0 %v1274
        %v2826 = vpop.f32.mrf.mxu0
        %v2827 = vadd.f32 0.0, %v2826
        %2828 = vmatmul.f32.gmra.mxu0 %v1277
        %v2829 = vpop.f32.mrf.mxu0
        %v2830 = vadd.f32 0.0, %v2829
        %2831 = vmatmul.f32.gmra.mxu0 %v1280
        %v2832 = vpop.f32.mrf.mxu0
        %v2833 = vadd.f32 0.0, %v2832
        %2834 = vmatmul.f32.gmra.mxu0 %v1283
        %v2835 = vpop.f32.mrf.mxu0
        %v2836 = vadd.f32 0.0, %v2835
        %2837 = vmatmul.f32.gmra.mxu0 %v1286
        %v2838 = vpop.f32.mrf.mxu0
        %v2839 = vadd.f32 0.0, %v2838
        %2840 = vmatmul.f32.gmra.mxu0 %v1289
        %v2841 = vpop.f32.mrf.mxu0
        %v2842 = vadd.f32 0.0, %v2841
        %2843 = vmatmul.f32.gmra.mxu0 %v1292
        %v2844 = vpop.f32.mrf.mxu0
        %v2845 = vadd.f32 0.0, %v2844
        %2846 = vmatmul.f32.gmra.mxu0 %v1295
        %v2847 = vpop.f32.mrf.mxu0
        %v2848 = vadd.f32 0.0, %v2847
        %2849 = vmatmul.f32.gmra.mxu0 %v1298
        %v2850 = vpop.f32.mrf.mxu0
        %v2851 = vadd.f32 0.0, %v2850
        %2852 = vmatmul.f32.gmra.mxu0 %v1301
        %v2853 = vpop.f32.mrf.mxu0
        %v2854 = vadd.f32 0.0, %v2853
        %2855 = vmatmul.f32.gmra.mxu0 %v1304
        %v2856 = vpop.f32.mrf.mxu0
        %v2857 = vadd.f32 0.0, %v2856
        %2858 = vmatmul.f32.gmra.mxu0 %v1307
        %v2859 = vpop.f32.mrf.mxu0
        %v2860 = vadd.f32 0.0, %v2859
        %2861 = vmatmul.f32.gmra.mxu0 %v1310
        %v2862 = vpop.f32.mrf.mxu0
        %v2863 = vadd.f32 0.0, %v2862
        %2864 = vmatmul.f32.gmra.mxu0 %v1313
        %v2865 = vpop.f32.mrf.mxu0
        %v2866 = vadd.f32 0.0, %v2865
        %2867 = vmatmul.f32.gmra.mxu0 %v1316
        %v2868 = vpop.f32.mrf.mxu0
        %v2869 = vadd.f32 0.0, %v2868
        %2870 = vmatmul.f32.gmra.mxu0 %v1319
        %v2871 = vpop.f32.mrf.mxu0
        %v2872 = vadd.f32 0.0, %v2871
        %2873 = vmatmul.f32.gmra.mxu0 %v1322
        %v2874 = vpop.f32.mrf.mxu0
        %v2875 = vadd.f32 0.0, %v2874
        %2876 = vmatmul.f32.gmra.mxu0 %v1325
        %v2877 = vpop.f32.mrf.mxu0
        %v2878 = vadd.f32 0.0, %v2877
        %2879 = vmatmul.f32.gmra.mxu0 %v1328
        %v2880 = vpop.f32.mrf.mxu0
        %v2881 = vadd.f32 0.0, %v2880
        %2882 = vmatmul.f32.gmra.mxu0 %v1331
        %v2883 = vpop.f32.mrf.mxu0
        %v2884 = vadd.f32 0.0, %v2883
        %2885 = vmatmul.f32.gmra.mxu0 %v1334
        %v2886 = vpop.f32.mrf.mxu0
        %v2887 = vadd.f32 0.0, %v2886
        %2888 = vmatmul.f32.gmra.mxu0 %v1337
        %v2889 = vpop.f32.mrf.mxu0
        %v2890 = vadd.f32 0.0, %v2889
        %2891 = vmatmul.f32.gmra.mxu0 %v1340
        %v2892 = vpop.f32.mrf.mxu0
        %v2893 = vadd.f32 0.0, %v2892
        %2894 = vmatmul.f32.gmra.mxu0 %v1343
        %v2895 = vpop.f32.mrf.mxu0
        %v2896 = vadd.f32 0.0, %v2895
        %2897 = vmatmul.f32.gmra.mxu0 %v1346
        %v2898 = vpop.f32.mrf.mxu0
        %v2899 = vadd.f32 0.0, %v2898
        %2900 = vmatmul.f32.gmra.mxu0 %v1349
        %v2901 = vpop.f32.mrf.mxu0
        %v2902 = vadd.f32 0.0, %v2901
        %2903 = vmatmul.f32.gmra.mxu0 %v1352
        %v2904 = vpop.f32.mrf.mxu0
        %v2905 = vadd.f32 0.0, %v2904
        %2906 = vmatmul.f32.gmra.mxu0 %v1355
        %v2907 = vpop.f32.mrf.mxu0
        %v2908 = vadd.f32 0.0, %v2907
        %2909 = vmatmul.f32.gmra.mxu0 %v1358
        %v2910 = vpop.f32.mrf.mxu0
        %v2911 = vadd.f32 0.0, %v2910
        %2912 = vmatmul.f32.gmra.mxu0 %v1361
        %v2913 = vpop.f32.mrf.mxu0
        %v2914 = vadd.f32 0.0, %v2913
        %2915 = vmatmul.f32.gmra.mxu0 %v1364
        %v2916 = vpop.f32.mrf.mxu0
        %v2917 = vadd.f32 0.0, %v2916
        %2918 = vmatmul.f32.gmra.mxu0 %v1367
        %v2919 = vpop.f32.mrf.mxu0
        %v2920 = vadd.f32 0.0, %v2919
        %2921 = vmatmul.f32.gmra.mxu0 %v1370
        %v2922 = vpop.f32.mrf.mxu0
        %v2923 = vadd.f32 0.0, %v2922
        %2924 = vmatmul.f32.gmra.mxu0 %v1373
        %v2925 = vpop.f32.mrf.mxu0
        %v2926 = vadd.f32 0.0, %v2925
        %2927 = vmatmul.f32.gmra.mxu0 %v1376
        %v2928 = vpop.f32.mrf.mxu0
        %v2929 = vadd.f32 0.0, %v2928
        %2930 = vmatmul.f32.gmra.mxu0 %v1379
        %v2931 = vpop.f32.mrf.mxu0
        %v2932 = vadd.f32 0.0, %v2931
        %2933 = vmatmul.f32.gmra.mxu0 %v1382
        %v2934 = vpop.f32.mrf.mxu0
        %v2935 = vadd.f32 0.0, %v2934
        %2936 = vmatmul.f32.gmra.mxu0 %v1385
        %v2937 = vpop.f32.mrf.mxu0
        %v2938 = vadd.f32 0.0, %v2937
        %2939 = vmatmul.f32.gmra.mxu0 %v1388
        %v2940 = vpop.f32.mrf.mxu0
        %v2941 = vadd.f32 0.0, %v2940
        %2942 = vmatmul.f32.gmra.mxu0 %v1391
        %v2943 = vpop.f32.mrf.mxu0
        %v2944 = vadd.f32 0.0, %v2943
        %2945 = vmatmul.f32.gmra.mxu0 %v1394
        %v2946 = vpop.f32.mrf.mxu0
        %v2947 = vadd.f32 0.0, %v2946
        %2948 = vmatmul.f32.gmra.mxu0 %v1397
        %v2949 = vpop.f32.mrf.mxu0
        %v2950 = vadd.f32 0.0, %v2949
        %2951 = vmatmul.f32.gmra.mxu0 %v1400
        %v2952 = vpop.f32.mrf.mxu0
        %v2953 = vadd.f32 0.0, %v2952
        %2954 = vmatmul.f32.gmra.mxu0 %v1403
        %v2955 = vpop.f32.mrf.mxu0
        %v2956 = vadd.f32 0.0, %v2955
        %2957 = vmatmul.f32.gmra.mxu0 %v1406
        %v2958 = vpop.f32.mrf.mxu0
        %v2959 = vadd.f32 0.0, %v2958
        %2960 = vmatmul.f32.gmra.mxu0 %v1409
        %v2961 = vpop.f32.mrf.mxu0
        %v2962 = vadd.f32 0.0, %v2961
        %2963 = vmatmul.f32.gmra.mxu0 %v1412
        %v2964 = vpop.f32.mrf.mxu0
        %v2965 = vadd.f32 0.0, %v2964
        %2966 = vmatmul.f32.gmra.mxu0 %v1415
        %v2967 = vpop.f32.mrf.mxu0
        %v2968 = vadd.f32 0.0, %v2967
        %2969 = vmatmul.f32.gmra.mxu0 %v1418
        %v2970 = vpop.f32.mrf.mxu0
        %v2971 = vadd.f32 0.0, %v2970
        %2972 = vmatmul.f32.gmra.mxu0 %v1421
        %v2973 = vpop.f32.mrf.mxu0
        %v2974 = vadd.f32 0.0, %v2973
        %2975 = vmatmul.f32.gmra.mxu0 %v1424
        %v2976 = vpop.f32.mrf.mxu0
        %v2977 = vadd.f32 0.0, %v2976
        %2978 = vmatmul.f32.gmra.mxu0 %v1427
        %v2979 = vpop.f32.mrf.mxu0
        %v2980 = vadd.f32 0.0, %v2979
        %2981 = vmatmul.f32.gmra.mxu0 %v1430
        %v2982 = vpop.f32.mrf.mxu0
        %v2983 = vadd.f32 0.0, %v2982
        %2984 = vmatmul.f32.gmra.mxu0 %v1433
        %v2985 = vpop.f32.mrf.mxu0
        %v2986 = vadd.f32 0.0, %v2985
        %2987 = vmatmul.f32.gmra.mxu0 %v1436
        %v2988 = vpop.f32.mrf.mxu0
        %v2989 = vadd.f32 0.0, %v2988
        %2990 = vmatmul.f32.gmra.mxu0 %v1439
        %v2991 = vpop.f32.mrf.mxu0
        %v2992 = vadd.f32 0.0, %v2991
        %2993 = vmatmul.f32.gmra.mxu0 %v1442
        %v2994 = vpop.f32.mrf.mxu0
        %v2995 = vadd.f32 0.0, %v2994
        %2996 = vmatmul.f32.gmra.mxu0 %v1445
        %v2997 = vpop.f32.mrf.mxu0
        %v2998 = vadd.f32 0.0, %v2997
        %2999 = vmatmul.f32.gmra.mxu0 %v1448
        %v3000 = vpop.f32.mrf.mxu0
        %v3001 = vadd.f32 0.0, %v3000
        %3002 = vmatmul.f32.gmra.mxu0 %v1451
        %v3003 = vpop.f32.mrf.mxu0
        %v3004 = vadd.f32 0.0, %v3003
        %3005 = vmatmul.f32.gmra.mxu0 %v1454
        %v3006 = vpop.f32.mrf.mxu0
        %v3007 = vadd.f32 0.0, %v3006
        %3008 = vmatmul.f32.gmra.mxu0 %v1457
        %v3009 = vpop.f32.mrf.mxu0
        %v3010 = vadd.f32 0.0, %v3009
        %3011 = vmatmul.f32.gmra.mxu0 %v1460
        %v3012 = vpop.f32.mrf.mxu0
        %v3013 = vadd.f32 0.0, %v3012
        %3014 = vmatmul.f32.gmra.mxu0 %v1463
        %v3015 = vpop.f32.mrf.mxu0
        %v3016 = vadd.f32 0.0, %v3015
        %3017 = vmatmul.f32.gmra.mxu0 %v1466
        %v3018 = vpop.f32.mrf.mxu0
        %v3019 = vadd.f32 0.0, %v3018
        %3020 = vmatmul.f32.gmra.mxu0 %v1469
        %v3021 = vpop.f32.mrf.mxu0
        %v3022 = vadd.f32 0.0, %v3021
        %3023 = vmatmul.f32.gmra.mxu0 %v1472
        %v3024 = vpop.f32.mrf.mxu0
        %v3025 = vadd.f32 0.0, %v3024
        %3026 = vmatmul.f32.gmra.mxu0 %v1475
        %v3027 = vpop.f32.mrf.mxu0
        %v3028 = vadd.f32 0.0, %v3027
        %3029 = vmatmul.f32.gmra.mxu0 %v1478
        %v3030 = vpop.f32.mrf.mxu0
        %v3031 = vadd.f32 0.0, %v3030
        %3032 = vmatmul.f32.gmra.mxu0 %v1481
        %v3033 = vpop.f32.mrf.mxu0
        %v3034 = vadd.f32 0.0, %v3033
        %3035 = vmatmul.f32.gmra.mxu0 %v1484
        %v3036 = vpop.f32.mrf.mxu0
        %v3037 = vadd.f32 0.0, %v3036
        %3038 = vmatmul.f32.gmra.mxu0 %v1487
        %v3039 = vpop.f32.mrf.mxu0
        %v3040 = vadd.f32 0.0, %v3039
        %3041 = vmatmul.f32.gmra.mxu0 %v1490
        %v3042 = vpop.f32.mrf.mxu0
        %v3043 = vadd.f32 0.0, %v3042
        %3044 = vmatmul.f32.gmra.mxu0 %v1493
        %v3045 = vpop.f32.mrf.mxu0
        %v3046 = vadd.f32 0.0, %v3045
        %3047 = vmatmul.f32.gmra.mxu0 %v1496
        %v3048 = vpop.f32.mrf.mxu0
        %v3049 = vadd.f32 0.0, %v3048
        %3050 = vmatmul.f32.gmra.mxu0 %v1499
        %v3051 = vpop.f32.mrf.mxu0
        %v3052 = vadd.f32 0.0, %v3051
        %3053 = vmatmul.f32.gmra.mxu0 %v1502
        %v3054 = vpop.f32.mrf.mxu0
        %v3055 = vadd.f32 0.0, %v3054
        %3056 = vmatmul.f32.gmra.mxu0 %v1505
        %v3057 = vpop.f32.mrf.mxu0
        %v3058 = vadd.f32 0.0, %v3057
        %3059 = vmatmul.f32.gmra.mxu0 %v1508
        %v3060 = vpop.f32.mrf.mxu0
        %v3061 = vadd.f32 0.0, %v3060
        %3062 = vmatmul.f32.gmra.mxu0 %v1511
        %v3063 = vpop.f32.mrf.mxu0
        %v3064 = vadd.f32 0.0, %v3063
        %3065 = vmatmul.f32.gmra.mxu0 %v1514
        %v3066 = vpop.f32.mrf.mxu0
        %v3067 = vadd.f32 0.0, %v3066
        %3068 = vmatmul.f32.gmra.mxu0 %v1517
        %v3069 = vpop.f32.mrf.mxu0
        %v3070 = vadd.f32 0.0, %v3069
        %3071 = vmatmul.f32.gmra.mxu0 %v1520
        %v3072 = vpop.f32.mrf.mxu0
        %v3073 = vadd.f32 0.0, %v3072
        %3074 = vmatmul.f32.gmra.mxu0 %v1523
        %v3075 = vpop.f32.mrf.mxu0
        %v3076 = vadd.f32 0.0, %v3075
        %3077 = vmatmul.f32.gmra.mxu0 %v1526
        %v3078 = vpop.f32.mrf.mxu0
        %v3079 = vadd.f32 0.0, %v3078
        %3080 = vmatmul.f32.gmra.mxu0 %v1529
        %v3081 = vpop.f32.mrf.mxu0
        %v3082 = vadd.f32 0.0, %v3081
        %3083 = vmatmul.f32.gmra.mxu0 %v1532
        %v3084 = vpop.f32.mrf.mxu0
        %v3085 = vadd.f32 0.0, %v3084
        %3086 = vmatmul.f32.gmra.mxu0 %v1535
        %v3087 = vpop.f32.mrf.mxu0
        %v3088 = vadd.f32 0.0, %v3087
        %3089 = vmatmul.f32.gmra.mxu0 %v1538
        %v3090 = vpop.f32.mrf.mxu0
        %v3091 = vadd.f32 0.0, %v3090
        %3092 = vmatmul.f32.gmra.mxu0 %v1541
        %v3093 = vpop.f32.mrf.mxu0
        %v3094 = vadd.f32 0.0, %v3093
        %3095 = vmatmul.f32.gmra.mxu0 %v1544
        %v3096 = vpop.f32.mrf.mxu0
        %v3097 = vadd.f32 0.0, %v3096
        %3098 = vmatmul.f32.gmra.mxu0 %v1547
        %v3099 = vpop.f32.mrf.mxu0
        %v3100 = vadd.f32 0.0, %v3099
        %3101 = vmatmul.f32.gmra.mxu0 %v1550
        %v3102 = vpop.f32.mrf.mxu0
        %v3103 = vadd.f32 0.0, %v3102
        %3104 = vmatmul.f32.gmra.mxu0 %v1553
        %v3105 = vpop.f32.mrf.mxu0
        %v3106 = vadd.f32 0.0, %v3105
        %3107 = vmatmul.f32.gmra.mxu0 %v1556
        %v3108 = vpop.f32.mrf.mxu0
        %v3109 = vadd.f32 0.0, %v3108
        %3110 = vmatmul.f32.gmra.mxu0 %v1559
        %v3111 = vpop.f32.mrf.mxu0
        %v3112 = vadd.f32 0.0, %v3111
        %3113 = vmatmul.f32.gmra.mxu0 %v1562
        %v3114 = vpop.f32.mrf.mxu0
        %v3115 = vadd.f32 0.0, %v3114
        %3116 = vmatmul.f32.gmra.mxu0 %v1565
        %v3117 = vpop.f32.mrf.mxu0
        %v3118 = vadd.f32 0.0, %v3117
        %3119 = vmatmul.f32.gmra.mxu0 %v1568
        %v3120 = vpop.f32.mrf.mxu0
        %v3121 = vadd.f32 0.0, %v3120
        %3122 = vmatmul.f32.gmra.mxu0 %v1571
        %v3123 = vpop.f32.mrf.mxu0
        %v3124 = vadd.f32 0.0, %v3123
        %3125 = vmatmul.f32.gmra.mxu0 %v1574
        %v3126 = vpop.f32.mrf.mxu0
        %v3127 = vadd.f32 0.0, %v3126
        %3128 = vmatmul.f32.gmra.mxu0 %v1577
        %v3129 = vpop.f32.mrf.mxu0
        %v3130 = vadd.f32 0.0, %v3129
        %3131 = vmatmul.f32.gmra.mxu0 %v1580
        %v3132 = vpop.f32.mrf.mxu0
        %v3133 = vadd.f32 0.0, %v3132
        %3134 = vmatmul.f32.gmra.mxu0 %v1583
        %v3135 = vpop.f32.mrf.mxu0
        %v3136 = vadd.f32 0.0, %v3135
        %3137 = vmatmul.f32.gmra.mxu0 %v1586
        %v3138 = vpop.f32.mrf.mxu0
        %v3139 = vadd.f32 0.0, %v3138
        %3140 = vmatmul.f32.gmra.mxu0 %v1589
        %v3141 = vpop.f32.mrf.mxu0
        %v3142 = vadd.f32 0.0, %v3141
        %3143 = vmatmul.f32.gmra.mxu0 %v1592
        %v3144 = vpop.f32.mrf.mxu0
        %v3145 = vadd.f32 0.0, %v3144
        %3146 = vmatmul.f32.gmra.mxu0 %v1595
        %v3147 = vpop.f32.mrf.mxu0
        %v3148 = vadd.f32 0.0, %v3147
        %3149 = vmatmul.f32.gmra.mxu0 %v1598
        %v3150 = vpop.f32.mrf.mxu0
        %v3151 = vadd.f32 0.0, %v3150
        %3152 = vmatmul.f32.gmra.mxu0 %v1601
        %v3153 = vpop.f32.mrf.mxu0
        %v3154 = vadd.f32 0.0, %v3153
        %3155 = vmatmul.f32.gmra.mxu0 %v1604
        %v3156 = vpop.f32.mrf.mxu0
        %v3157 = vadd.f32 0.0, %v3156
        %3158 = vmatmul.f32.gmra.mxu0 %v1607
        %v3159 = vpop.f32.mrf.mxu0
        %v3160 = vadd.f32 0.0, %v3159
        %3161 = vmatmul.f32.gmra.mxu0 %v1610
        %v3162 = vpop.f32.mrf.mxu0
        %v3163 = vadd.f32 0.0, %v3162
        %3164 = vmatmul.f32.gmra.mxu0 %v1613
        %v3165 = vpop.f32.mrf.mxu0
        %v3166 = vadd.f32 0.0, %v3165
        %3167 = vmatmul.f32.gmra.mxu0 %v1616
        %v3168 = vpop.f32.mrf.mxu0
        %v3169 = vadd.f32 0.0, %v3168
        %3170 = vmatmul.f32.gmra.mxu0 %v1619
        %v3171 = vpop.f32.mrf.mxu0
        %v3172 = vadd.f32 0.0, %v3171
        %3173 = vmatmul.f32.gmra.mxu0 %v1622
        %v3174 = vpop.f32.mrf.mxu0
        %v3175 = vadd.f32 0.0, %v3174
        %3176 = vmatmul.f32.gmra.mxu0 %v1625
        %v3177 = vpop.f32.mrf.mxu0
        %v3178 = vadd.f32 0.0, %v3177
        %3179 = vmatmul.f32.gmra.mxu0 %v1628
        %v3180 = vpop.f32.mrf.mxu0
        %v3181 = vadd.f32 0.0, %v3180
        %3182 = vmatmul.f32.gmra.mxu0 %v1631
        %v3183 = vpop.f32.mrf.mxu0
        %v3184 = vadd.f32 0.0, %v3183
        %3185 = vmatmul.f32.gmra.mxu0 %v1634
        %v3186 = vpop.f32.mrf.mxu0
        %v3187 = vadd.f32 0.0, %v3186
        %3188 = vmatmul.f32.gmra.mxu0 %v1637
        %v3189 = vpop.f32.mrf.mxu0
        %v3190 = vadd.f32 0.0, %v3189
        %3191 = vmatmul.f32.gmra.mxu0 %v1640
        %v3192 = vpop.f32.mrf.mxu0
        %v3193 = vadd.f32 0.0, %v3192
        %3194 = vmatmul.f32.gmra.mxu0 %v1643
        %v3195 = vpop.f32.mrf.mxu0
        %v3196 = vadd.f32 0.0, %v3195
        %3197 = vmatmul.f32.gmra.mxu0 %v1646
        %v3198 = vpop.f32.mrf.mxu0
        %v3199 = vadd.f32 0.0, %v3198
        %3200 = vmatmul.f32.gmra.mxu0 %v1649
        %v3201 = vpop.f32.mrf.mxu0
        %v3202 = vadd.f32 0.0, %v3201
        %3203 = vmatmul.f32.gmra.mxu0 %v1652
        %v3204 = vpop.f32.mrf.mxu0
        %v3205 = vadd.f32 0.0, %v3204
        %3206 = vmatmul.f32.gmra.mxu0 %v1655
        %v3207 = vpop.f32.mrf.mxu0
        %v3208 = vadd.f32 0.0, %v3207
        %3209 = vmatmul.f32.gmra.mxu0 %v1658
        %v3210 = vpop.f32.mrf.mxu0
        %v3211 = vadd.f32 0.0, %v3210
        %3212 = vmatmul.f32.gmra.mxu0 %v1661
        %v3213 = vpop.f32.mrf.mxu0
        %v3214 = vadd.f32 0.0, %v3213
        %3215 = vmatmul.f32.gmra.mxu0 %v1664
        %v3216 = vpop.f32.mrf.mxu0
        %v3217 = vadd.f32 0.0, %v3216
        %3218 = vmatmul.f32.gmra.mxu0 %v1667
        %v3219 = vpop.f32.mrf.mxu0
        %v3220 = vadd.f32 0.0, %v3219
        %3221 = vmatmul.f32.gmra.mxu0 %v1670
        %v3222 = vpop.f32.mrf.mxu0
        %v3223 = vadd.f32 0.0, %v3222
        %3224 = vmatmul.f32.gmra.mxu0 %v1673
        %v3225 = vpop.f32.mrf.mxu0
        %v3226 = vadd.f32 0.0, %v3225
        %3227 = vmatmul.f32.gmra.mxu0 %v1676
        %v3228 = vpop.f32.mrf.mxu0
        %v3229 = vadd.f32 0.0, %v3228
        %3230 = vmatmul.f32.gmra.mxu0 %v1679
        %v3231 = vpop.f32.mrf.mxu0
        %v3232 = vadd.f32 0.0, %v3231
        %3233 = vmatmul.f32.gmra.mxu0 %v1682
        %v3234 = vpop.f32.mrf.mxu0
        %v3235 = vadd.f32 0.0, %v3234
        %3236 = vmatmul.f32.gmra.mxu0 %v1685
        %v3237 = vpop.f32.mrf.mxu0
        %v3238 = vadd.f32 0.0, %v3237
        %3239 = vmatmul.f32.gmra.mxu0 %v1688
        %v3240 = vpop.f32.mrf.mxu0
        %v3241 = vadd.f32 0.0, %v3240
        %3242 = vmatmul.f32.gmra.mxu0 %v1691
        %v3243 = vpop.f32.mrf.mxu0
        %v3244 = vadd.f32 0.0, %v3243
        %3245 = vmatmul.f32.gmra.mxu0 %v1694
        %v3246 = vpop.f32.mrf.mxu0
        %v3247 = vadd.f32 0.0, %v3246
        %3248 = vmatmul.f32.gmra.mxu0 %v1697
        %v3249 = vpop.f32.mrf.mxu0
        %v3250 = vadd.f32 0.0, %v3249
        %3251 = vmatmul.f32.gmra.mxu0 %v1700
        %v3252 = vpop.f32.mrf.mxu0
        %v3253 = vadd.f32 0.0, %v3252
        %3254 = vmatmul.f32.gmra.mxu0 %v1703
        %v3255 = vpop.f32.mrf.mxu0
        %v3256 = vadd.f32 0.0, %v3255
        %3257 = vmatmul.f32.gmra.mxu0 %v1706
        %v3258 = vpop.f32.mrf.mxu0
        %v3259 = vadd.f32 0.0, %v3258
        %3260 = vmatmul.f32.gmra.mxu0 %v1709
        %v3261 = vpop.f32.mrf.mxu0
        %v3262 = vadd.f32 0.0, %v3261
        %3263 = vmatmul.f32.gmra.mxu0 %v1712
        %v3264 = vpop.f32.mrf.mxu0
        %v3265 = vadd.f32 0.0, %v3264
        %3266 = vmatmul.f32.gmra.mxu0 %v1715
        %v3267 = vpop.f32.mrf.mxu0
        %v3268 = vadd.f32 0.0, %v3267
        %3269 = vmatmul.f32.gmra.mxu0 %v1718
        %v3270 = vpop.f32.mrf.mxu0
        %v3271 = vadd.f32 0.0, %v3270
        %3272 = vmatmul.f32.gmra.mxu0 %v1721
        %v3273 = vpop.f32.mrf.mxu0
        %v3274 = vadd.f32 0.0, %v3273
        %3275 = vmatmul.f32.gmra.mxu0 %v1724
        %v3276 = vpop.f32.mrf.mxu0
        %v3277 = vadd.f32 0.0, %v3276
        %3278 = vmatmul.f32.gmra.mxu0 %v1727
        %v3279 = vpop.f32.mrf.mxu0
        %v3280 = vadd.f32 0.0, %v3279
        %3281 = vmatmul.f32.gmra.mxu0 %v1730
        %v3282 = vpop.f32.mrf.mxu0
        %v3283 = vadd.f32 0.0, %v3282
        %3284 = vmatmul.f32.gmra.mxu0 %v1733
        %v3285 = vpop.f32.mrf.mxu0
        %v3286 = vadd.f32 0.0, %v3285
        %3287 = vmatmul.f32.gmra.mxu0 %v1736
        %v3288 = vpop.f32.mrf.mxu0
        %v3289 = vadd.f32 0.0, %v3288
        %3290 = vmatmul.f32.gmra.mxu0 %v1739
        %v3291 = vpop.f32.mrf.mxu0
        %v3292 = vadd.f32 0.0, %v3291
        %3293 = vmatmul.f32.gmra.mxu0 %v1742
        %v3294 = vpop.f32.mrf.mxu0
        %v3295 = vadd.f32 0.0, %v3294
        %3296 = vmatmul.f32.gmra.mxu0 %v1745
        %v3297 = vpop.f32.mrf.mxu0
        %v3298 = vadd.f32 0.0, %v3297
        %3299 = vmatmul.f32.gmra.mxu0 %v1748
        %v3300 = vpop.f32.mrf.mxu0
        %v3301 = vadd.f32 0.0, %v3300
        %3302 = vmatmul.f32.gmra.mxu0 %v1751
        %v3303 = vpop.f32.mrf.mxu0
        %v3304 = vadd.f32 0.0, %v3303
        %3305 = vmatmul.f32.gmra.mxu0 %v1754
        %v3306 = vpop.f32.mrf.mxu0
        %v3307 = vadd.f32 0.0, %v3306
        %3308 = vmatmul.f32.gmra.mxu0 %v1757
        %v3309 = vpop.f32.mrf.mxu0
        %v3310 = vadd.f32 0.0, %v3309
        %3311 = vmatmul.f32.gmra.mxu0 %v1760
        %v3312 = vpop.f32.mrf.mxu0
        %v3313 = vadd.f32 0.0, %v3312
        %3314 = vmatmul.f32.gmra.mxu0 %v1763
        %v3315 = vpop.f32.mrf.mxu0
        %v3316 = vadd.f32 0.0, %v3315
        %3317 = vmatmul.f32.gmra.mxu0 %v1766
        %v3318 = vpop.f32.mrf.mxu0
        %v3319 = vadd.f32 0.0, %v3318
        %3320 = vmatmul.f32.gmra.mxu0 %v1769
        %v3321 = vpop.f32.mrf.mxu0
        %v3322 = vadd.f32 0.0, %v3321
        %3323 = vmatmul.f32.gmra.mxu0 %v1772
        %v3324 = vpop.f32.mrf.mxu0
        %v3325 = vadd.f32 0.0, %v3324
        %3326 = vmatmul.f32.gmra.mxu0 %v1775
        %v3327 = vpop.f32.mrf.mxu0
        %v3328 = vadd.f32 0.0, %v3327
        %3329 = vmatmul.f32.gmra.mxu0 %v1778
        %v3330 = vpop.f32.mrf.mxu0
        %v3331 = vadd.f32 0.0, %v3330
        %3332 = vmatmul.f32.gmra.mxu0 %v1781
        %v3333 = vpop.f32.mrf.mxu0
        %v3334 = vadd.f32 0.0, %v3333
        %3335 = vmatmul.f32.gmra.mxu0 %v1784
        %v3336 = vpop.f32.mrf.mxu0
        %v3337 = vadd.f32 0.0, %v3336
        %3338 = vmatmul.f32.gmra.mxu0 %v1787
        %v3339 = vpop.f32.mrf.mxu0
        %v3340 = vadd.f32 0.0, %v3339
        %3341 = vmatmul.f32.gmra.mxu0 %v1790
        %v3342 = vpop.f32.mrf.mxu0
        %v3343 = vadd.f32 0.0, %v3342
        %3344 = vmatmul.f32.gmra.mxu0 %v1793
        %v3345 = vpop.f32.mrf.mxu0
        %v3346 = vadd.f32 0.0, %v3345
        %3347 = vmatmul.f32.gmra.mxu0 %v1796
        %v3348 = vpop.f32.mrf.mxu0
        %v3349 = vadd.f32 0.0, %v3348
        %3350 = vmatmul.f32.gmra.mxu0 %v1799
        %v3351 = vpop.f32.mrf.mxu0
        %v3352 = vadd.f32 0.0, %v3351
        %3353 = vmatmul.f32.gmra.mxu0 %v1802
        %v3354 = vpop.f32.mrf.mxu0
        %v3355 = vadd.f32 0.0, %v3354
        %3356 = vmatmul.f32.gmra.mxu0 %v1805
        %v3357 = vpop.f32.mrf.mxu0
        %v3358 = vadd.f32 0.0, %v3357
        %3359 = vmatmul.f32.gmra.mxu0 %v1808
        %v3360 = vpop.f32.mrf.mxu0
        %v3361 = vadd.f32 0.0, %v3360
        %3362 = vmatmul.f32.gmra.mxu0 %v1811
        %v3363 = vpop.f32.mrf.mxu0
        %v3364 = vadd.f32 0.0, %v3363
        %3365 = vmatmul.f32.gmra.mxu0 %v1814
        %v3366 = vpop.f32.mrf.mxu0
        %v3367 = vadd.f32 0.0, %v3366
        %3368 = vmatmul.f32.gmra.mxu0 %v1817
        %v3369 = vpop.f32.mrf.mxu0
        %v3370 = vadd.f32 0.0, %v3369
        %3371 = vmatmul.f32.gmra.mxu0 %v1820
        %v3372 = vpop.f32.mrf.mxu0
        %v3373 = vadd.f32 0.0, %v3372
        %3374 = vmatmul.f32.gmra.mxu0 %v1823
        %v3375 = vpop.f32.mrf.mxu0
        %v3376 = vadd.f32 0.0, %v3375
        %3377 = vmatmul.f32.gmra.mxu0 %v1826
        %v3378 = vpop.f32.mrf.mxu0
        %v3379 = vadd.f32 0.0, %v3378
        %3380 = vmatmul.f32.gmra.mxu0 %v1829
        %v3381 = vpop.f32.mrf.mxu0
        %v3382 = vadd.f32 0.0, %v3381
        %3383 = vmatmul.f32.gmra.mxu0 %v1832
        %v3384 = vpop.f32.mrf.mxu0
        %v3385 = vadd.f32 0.0, %v3384
        %3386 = vmatmul.f32.gmra.mxu0 %v1835
        %v3387 = vpop.f32.mrf.mxu0
        %v3388 = vadd.f32 0.0, %v3387
        %3389 = vmatmul.f32.gmra.mxu0 %v1838
        %v3390 = vpop.f32.mrf.mxu0
        %v3391 = vadd.f32 0.0, %v3390
        %3392 = vmatmul.f32.gmra.mxu0 %v1841
        %v3393 = vpop.f32.mrf.mxu0
        %v3394 = vadd.f32 0.0, %v3393
        %3395 = vmatmul.f32.gmra.mxu0 %v1844
        %v3396 = vpop.f32.mrf.mxu0
        %v3397 = vadd.f32 0.0, %v3396
        %3398 = vmatmul.f32.gmra.mxu0 %v1847
        %v3399 = vpop.f32.mrf.mxu0
        %v3400 = vadd.f32 0.0, %v3399
        %3401 = vmatmul.f32.gmra.mxu0 %v1850
        %v3402 = vpop.f32.mrf.mxu0
        %v3403 = vadd.f32 0.0, %v3402
        %3404 = vmatmul.f32.gmra.mxu0 %v1853
        %v3405 = vpop.f32.mrf.mxu0
        %v3406 = vadd.f32 0.0, %v3405
        %3407 = vmatmul.f32.gmra.mxu0 %v1856
        %v3408 = vpop.f32.mrf.mxu0
        %v3409 = vadd.f32 0.0, %v3408
        %3410 = vmatmul.f32.gmra.mxu0 %v1859
        %v3411 = vpop.f32.mrf.mxu0
        %v3412 = vadd.f32 0.0, %v3411
        %3413 = vmatmul.f32.gmra.mxu0 %v1862
        %v3414 = vpop.f32.mrf.mxu0
        %v3415 = vadd.f32 0.0, %v3414
        %3416 = vmatmul.f32.gmra.mxu0 %v1865
        %v3417 = vpop.f32.mrf.mxu0
        %v3418 = vadd.f32 0.0, %v3417
        %3419 = vmatmul.f32.gmra.mxu0 %v1868
        %v3420 = vpop.f32.mrf.mxu0
        %v3421 = vadd.f32 0.0, %v3420
        %3422 = vmatmul.f32.gmra.mxu0 %v1871
        %v3423 = vpop.f32.mrf.mxu0
        %v3424 = vadd.f32 0.0, %v3423
        %3425 = vmatmul.f32.gmra.mxu0 %v1874
        %v3426 = vpop.f32.mrf.mxu0
        %v3427 = vadd.f32 0.0, %v3426
        %3428 = vmatmul.f32.gmra.mxu0 %v1877
        %v3429 = vpop.f32.mrf.mxu0
        %v3430 = vadd.f32 0.0, %v3429
        %3431 = vmatmul.f32.gmra.mxu0 %v1880
        %v3432 = vpop.f32.mrf.mxu0
        %v3433 = vadd.f32 0.0, %v3432
        %3434 = vmatmul.f32.gmra.mxu0 %v1883
        %v3435 = vpop.f32.mrf.mxu0
        %v3436 = vadd.f32 0.0, %v3435
        %3437 = vmatmul.f32.gmra.mxu0 %v1886
        %v3438 = vpop.f32.mrf.mxu0
        %v3439 = vadd.f32 0.0, %v3438
        %3440 = vmatmul.f32.gmra.mxu0 %v1889
        %v3441 = vpop.f32.mrf.mxu0
        %v3442 = vadd.f32 0.0, %v3441
        %3443 = vmatmul.f32.gmra.mxu0 %v1892
        %v3444 = vpop.f32.mrf.mxu0
        %v3445 = vadd.f32 0.0, %v3444
        %3446 = vmatmul.f32.gmra.mxu0 %v1895
        %v3447 = vpop.f32.mrf.mxu0
        %v3448 = vadd.f32 0.0, %v3447
        %3449 = vmatmul.f32.gmra.mxu0 %v1898
        %v3450 = vpop.f32.mrf.mxu0
        %v3451 = vadd.f32 0.0, %v3450
        %3452 = vmatmul.f32.gmra.mxu0 %v1901
        %v3453 = vpop.f32.mrf.mxu0
        %v3454 = vadd.f32 0.0, %v3453
        %3455 = vmatmul.f32.gmra.mxu0 %v1904
        %v3456 = vpop.f32.mrf.mxu0
        %v3457 = vadd.f32 0.0, %v3456
        %3458 = vmatmul.f32.gmra.mxu0 %v1907
        %v3459 = vpop.f32.mrf.mxu0
        %v3460 = vadd.f32 0.0, %v3459
        %3461 = vmatmul.f32.gmra.mxu0 %v1910
        %v3462 = vpop.f32.mrf.mxu0
        %v3463 = vadd.f32 0.0, %v3462
        %3464 = vmatmul.f32.gmra.mxu0 %v1913
        %v3465 = vpop.f32.mrf.mxu0
        %v3466 = vadd.f32 0.0, %v3465
        %3467 = vmatmul.f32.gmra.mxu0 %v1916
        %v3468 = vpop.f32.mrf.mxu0
        %v3469 = vadd.f32 0.0, %v3468
        %3470 = vmatmul.f32.gmra.mxu0 %v1919
        %v3471 = vpop.f32.mrf.mxu0
        %v3472 = vadd.f32 0.0, %v3471
        %3473 = vmatmul.f32.gmra.mxu0 %v1922
        %v3474 = vpop.f32.mrf.mxu0
        %v3475 = vadd.f32 0.0, %v3474
        %3476 = vmatmul.f32.gmra.mxu0 %v1925
        %v3477 = vpop.f32.mrf.mxu0
        %v3478 = vadd.f32 0.0, %v3477
        %3479 = vmatmul.f32.gmra.mxu0 %v1928
        %v3480 = vpop.f32.mrf.mxu0
        %v3481 = vadd.f32 0.0, %v3480
        %3482 = vmatmul.f32.gmra.mxu0 %v1931
        %v3483 = vpop.f32.mrf.mxu0
        %v3484 = vadd.f32 0.0, %v3483
        %3485 = vmatmul.f32.gmra.mxu0 %v1934
        %v3486 = vpop.f32.mrf.mxu0
        %v3487 = vadd.f32 0.0, %v3486
        %3488 = vmatmul.f32.gmra.mxu0 %v1937
        %v3489 = vpop.f32.mrf.mxu0
        %v3490 = vadd.f32 0.0, %v3489
        %3491 = vmatmul.f32.gmra.mxu0 %v1940
        %v3492 = vpop.f32.mrf.mxu0
        %v3493 = vadd.f32 0.0, %v3492
        %3494 = vmatmul.f32.gmra.mxu0 %v1943
        %v3495 = vpop.f32.mrf.mxu0
        %v3496 = vadd.f32 0.0, %v3495
        %3497 = vmatmul.f32.gmra.mxu0 %v1946
        %v3498 = vpop.f32.mrf.mxu0
        %v3499 = vadd.f32 0.0, %v3498
        %3500 = vmatmul.f32.gmra.mxu0 %v1949
        %v3501 = vpop.f32.mrf.mxu0
        %v3502 = vadd.f32 0.0, %v3501
        %3503 = vmatmul.f32.gmra.mxu0 %v1952
        %v3504 = vpop.f32.mrf.mxu0
        %v3505 = vadd.f32 0.0, %v3504
        %3506 = vmatmul.f32.gmra.mxu0 %v1955
        %v3507 = vpop.f32.mrf.mxu0
        %v3508 = vadd.f32 0.0, %v3507
        %3509 = vmatmul.f32.gmra.mxu0 %v1958
        %v3510 = vpop.f32.mrf.mxu0
        %v3511 = vadd.f32 0.0, %v3510
        %3512 = vmatmul.f32.gmra.mxu0 %v1961
        %v3513 = vpop.f32.mrf.mxu0
        %v3514 = vadd.f32 0.0, %v3513
        %3515 = vmatmul.f32.gmra.mxu0 %v1964
        %v3516 = vpop.f32.mrf.mxu0
        %v3517 = vadd.f32 0.0, %v3516
        %3518 = vmatmul.f32.gmra.mxu0 %v1967
        %v3519 = vpop.f32.mrf.mxu0
        %v3520 = vadd.f32 0.0, %v3519
        %3521 = vmatmul.f32.gmra.mxu0 %v1970
        %v3522 = vpop.f32.mrf.mxu0
        %v3523 = vadd.f32 0.0, %v3522
        %3524 = vmatmul.f32.gmra.mxu0 %v1973
        %v3525 = vpop.f32.mrf.mxu0
        %v3526 = vadd.f32 0.0, %v3525
        %3527 = vmatmul.f32.gmra.mxu0 %v1976
        %v3528 = vpop.f32.mrf.mxu0
        %v3529 = vadd.f32 0.0, %v3528
        %3530 = vmatmul.f32.gmra.mxu0 %v1979
        %v3531 = vpop.f32.mrf.mxu0
        %v3532 = vadd.f32 0.0, %v3531
        %3533 = vmatmul.f32.gmra.mxu0 %v1982
        %v3534 = vpop.f32.mrf.mxu0
        %v3535 = vadd.f32 0.0, %v3534
        %3536 = vmatmul.f32.gmra.mxu0 %v1985
        %v3537 = vpop.f32.mrf.mxu0
        %v3538 = vadd.f32 0.0, %v3537
        %3539 = vmatmul.f32.gmra.mxu0 %v1988
        %v3540 = vpop.f32.mrf.mxu0
        %v3541 = vadd.f32 0.0, %v3540
        %3542 = vmatmul.f32.gmra.mxu0 %v1991
        %v3543 = vpop.f32.mrf.mxu0
        %v3544 = vadd.f32 0.0, %v3543
        %3545 = vmatmul.f32.gmra.mxu0 %v1994
        %v3546 = vpop.f32.mrf.mxu0
        %v3547 = vadd.f32 0.0, %v3546
        %3548 = vmatmul.f32.gmra.mxu0 %v1997
        %v3549 = vpop.f32.mrf.mxu0
        %v3550 = vadd.f32 0.0, %v3549
        %3551 = vmatmul.f32.gmra.mxu0 %v2000
        %v3552 = vpop.f32.mrf.mxu0
        %v3553 = vadd.f32 0.0, %v3552
        %3554 = vmatmul.f32.gmra.mxu0 %v2003
        %v3555 = vpop.f32.mrf.mxu0
        %v3556 = vadd.f32 0.0, %v3555
        %3557 = vmatmul.f32.gmra.mxu0 %v2006
        %v3558 = vpop.f32.mrf.mxu0
        %v3559 = vadd.f32 0.0, %v3558
        %3560 = vmatmul.f32.gmra.mxu0 %v2009
        %v3561 = vpop.f32.mrf.mxu0
        %v3562 = vadd.f32 0.0, %v3561
        %3563 = vmatmul.f32.gmra.mxu0 %v2012
        %v3564 = vpop.f32.mrf.mxu0
        %v3565 = vadd.f32 0.0, %v3564
        %3566 = vmatmul.f32.gmra.mxu0 %v2015
        %v3567 = vpop.f32.mrf.mxu0
        %v3568 = vadd.f32 0.0, %v3567
        %3569 = vmatmul.f32.gmra.mxu0 %v2018
        %v3570 = vpop.f32.mrf.mxu0
        %v3571 = vadd.f32 0.0, %v3570
        %3572 = vmatmul.f32.gmra.mxu0 %v2021
        %v3573 = vpop.f32.mrf.mxu0
        %v3574 = vadd.f32 0.0, %v3573
        %3575 = vmatmul.f32.gmra.mxu0 %v2024
        %v3576 = vpop.f32.mrf.mxu0
        %v3577 = vadd.f32 0.0, %v3576
        %3578 = vmatmul.f32.gmra.mxu0 %v2027
        %v3579 = vpop.f32.mrf.mxu0
        %v3580 = vadd.f32 0.0, %v3579
        %3581 = vmatmul.f32.gmra.mxu0 %v2030
        %v3582 = vpop.f32.mrf.mxu0
        %v3583 = vadd.f32 0.0, %v3582
        %3584 = vmatmul.f32.gmra.mxu0 %v2033
        %v3585 = vpop.f32.mrf.mxu0
        %v3586 = vadd.f32 0.0, %v3585
        %3587 = vmatmul.f32.gmra.mxu0 %v2036
        %v3588 = vpop.f32.mrf.mxu0
        %v3589 = vadd.f32 0.0, %v3588
        %3590 = vmatmul.f32.gmra.mxu0 %v2039
        %v3591 = vpop.f32.mrf.mxu0
        %v3592 = vadd.f32 0.0, %v3591
        %3593 = vmatmul.f32.gmra.mxu0 %v2042
        %v3594 = vpop.f32.mrf.mxu0
        %v3595 = vadd.f32 0.0, %v3594
        %3596 = vmatmul.f32.gmra.mxu0 %v2045
        %v3597 = vpop.f32.mrf.mxu0
        %v3598 = vadd.f32 0.0, %v3597
        %3599 = vmatmul.f32.gmra.mxu0 %v2048
        %v3600 = vpop.f32.mrf.mxu0
        %v3601 = vadd.f32 0.0, %v3600
        %3602 = vmatmul.f32.gmra.mxu0 %v2051
        %v3603 = vpop.f32.mrf.mxu0
        %v3604 = vadd.f32 0.0, %v3603
        %3605 = vmatmul.f32.gmra.mxu0 %v2054
        %v3606 = vpop.f32.mrf.mxu0
        %v3607 = vadd.f32 0.0, %v3606
        %3608 = vmatmul.f32.gmra.mxu0 %v2057
        %v3609 = vpop.f32.mrf.mxu0
        %v3610 = vadd.f32 0.0, %v3609
        %3611 = vmatmul.f32.gmra.mxu0 %v2060
        %v3612 = vpop.f32.mrf.mxu0
        %v3613 = vadd.f32 0.0, %v3612
        %3614 = vmatmul.f32.gmra.mxu0 %v2063
        %v3615 = vpop.f32.mrf.mxu0
        %v3616 = vadd.f32 0.0, %v3615
        %3617 = vmatmul.f32.gmra.mxu0 %v2066
        %v3618 = vpop.f32.mrf.mxu0
        %v3619 = vadd.f32 0.0, %v3618
        %3620 = vmatmul.f32.gmra.mxu0 %v2069
        %v3621 = vpop.f32.mrf.mxu0
        %v3622 = vadd.f32 0.0, %v3621
        %3623 = vmatmul.f32.gmra.mxu0 %v2072
        %v3624 = vpop.f32.mrf.mxu0
        %v3625 = vadd.f32 0.0, %v3624
        %3626 = vmatmul.f32.gmra.mxu0 %v2075
        %v3627 = vpop.f32.mrf.mxu0
        %v3628 = vadd.f32 0.0, %v3627
        %3629 = vmatmul.f32.gmra.mxu0 %v2078
        %v3630 = vpop.f32.mrf.mxu0
        %v3631 = vadd.f32 0.0, %v3630
        %3632 = vmatmul.f32.gmra.mxu0 %v2081
        %v3633 = vpop.f32.mrf.mxu0
        %v3634 = vadd.f32 0.0, %v3633
        %3635 = vmatmul.f32.gmra.mxu0 %v2084
        %v3636 = vpop.f32.mrf.mxu0
        %v3637 = vadd.f32 0.0, %v3636
        %3638 = vmatmul.f32.gmra.mxu0 %v2087
        %v3639 = vpop.f32.mrf.mxu0
        %v3640 = vadd.f32 0.0, %v3639
        %3641 = vmatmul.f32.gmra.mxu0 %v2090
        %v3642 = vpop.f32.mrf.mxu0
        %v3643 = vadd.f32 0.0, %v3642
        %3644 = vmatmul.f32.gmra.mxu0 %v2093
        %v3645 = vpop.f32.mrf.mxu0
        %v3646 = vadd.f32 0.0, %v3645
        %3647 = vmatmul.f32.gmra.mxu0 %v2096
        %v3648 = vpop.f32.mrf.mxu0
        %v3649 = vadd.f32 0.0, %v3648
        %3650 = vmatmul.f32.gmra.mxu0 %v2099
        %v3651 = vpop.f32.mrf.mxu0
        %v3652 = vadd.f32 0.0, %v3651
        %3653 = vmatmul.f32.gmra.mxu0 %v2102
        %v3654 = vpop.f32.mrf.mxu0
        %v3655 = vadd.f32 0.0, %v3654
        %3656 = vmatmul.f32.gmra.mxu0 %v2105
        %v3657 = vpop.f32.mrf.mxu0
        %v3658 = vadd.f32 0.0, %v3657
        %3659 = vmatmul.f32.gmra.mxu0 %v2108
        %v3660 = vpop.f32.mrf.mxu0
        %v3661 = vadd.f32 0.0, %v3660
        %3662 = vmatmul.f32.gmra.mxu0 %v2111
        %v3663 = vpop.f32.mrf.mxu0
        %v3664 = vadd.f32 0.0, %v3663
        %3665 = vmatmul.f32.gmra.mxu0 %v2114
        %v3666 = vpop.f32.mrf.mxu0
        %v3667 = vadd.f32 0.0, %v3666
        %3668 = vmatmul.f32.gmra.mxu0 %v2117
        %v3669 = vpop.f32.mrf.mxu0
        %v3670 = vadd.f32 0.0, %v3669
        %3671 = vmatmul.f32.gmra.mxu0 %v2120
        %v3672 = vpop.f32.mrf.mxu0
        %v3673 = vadd.f32 0.0, %v3672
        %3674 = vmatmul.f32.gmra.mxu0 %v2123
        %v3675 = vpop.f32.mrf.mxu0
        %v3676 = vadd.f32 0.0, %v3675
        %3677 = vmatmul.f32.gmra.mxu0 %v2126
        %v3678 = vpop.f32.mrf.mxu0
        %v3679 = vadd.f32 0.0, %v3678
        %3680 = vmatmul.f32.gmra.mxu0 %v2129
        %v3681 = vpop.f32.mrf.mxu0
        %v3682 = vadd.f32 0.0, %v3681
        %3683 = vmatmul.f32.gmra.mxu0 %v2132
        %v3684 = vpop.f32.mrf.mxu0
        %v3685 = vadd.f32 0.0, %v3684
        %3686 = vmatmul.f32.gmra.mxu0 %v2135
        %v3687 = vpop.f32.mrf.mxu0
        %v3688 = vadd.f32 0.0, %v3687
        %3689 = vmatmul.f32.gmra.mxu0 %v2138
        %v3690 = vpop.f32.mrf.mxu0
        %v3691 = vadd.f32 0.0, %v3690
        %3692 = vmatmul.f32.gmra.mxu0 %v2141
        %v3693 = vpop.f32.mrf.mxu0
        %v3694 = vadd.f32 0.0, %v3693
        %3695 = vmatmul.f32.gmra.mxu0 %v2144
        %v3696 = vpop.f32.mrf.mxu0
        %v3697 = vadd.f32 0.0, %v3696
        %3698 = vmatmul.f32.gmra.mxu0 %v2147
        %v3699 = vpop.f32.mrf.mxu0
        %v3700 = vadd.f32 0.0, %v3699
        %3701 = vmatmul.f32.gmra.mxu0 %v2150
        %v3702 = vpop.f32.mrf.mxu0
        %v3703 = vadd.f32 0.0, %v3702
        %3704 = vmatmul.f32.gmra.mxu0 %v2153
        %v3705 = vpop.f32.mrf.mxu0
        %v3706 = vadd.f32 0.0, %v3705
        %3707 = vmatmul.f32.gmra.mxu0 %v2156
        %v3708 = vpop.f32.mrf.mxu0
        %v3709 = vadd.f32 0.0, %v3708
        %3710 = vmatmul.f32.gmra.mxu0 %v2159
        %v3711 = vpop.f32.mrf.mxu0
        %v3712 = vadd.f32 0.0, %v3711
        %3713 = vmatmul.f32.gmra.mxu0 %v2162
        %v3714 = vpop.f32.mrf.mxu0
        %v3715 = vadd.f32 0.0, %v3714
        %3716 = vmatmul.f32.gmra.mxu0 %v2165
        %v3717 = vpop.f32.mrf.mxu0
        %v3718 = vadd.f32 0.0, %v3717
        %3719 = vmatmul.f32.gmra.mxu0 %v2168
        %v3720 = vpop.f32.mrf.mxu0
        %v3721 = vadd.f32 0.0, %v3720
        %3722 = vmatmul.f32.gmra.mxu0 %v2171
        %v3723 = vpop.f32.mrf.mxu0
        %v3724 = vadd.f32 0.0, %v3723
        %3725 = vmatmul.f32.gmra.mxu0 %v2174
        %v3726 = vpop.f32.mrf.mxu0
        %v3727 = vadd.f32 0.0, %v3726
        %3728 = vmatmul.f32.gmra.mxu0 %v2177
        %v3729 = vpop.f32.mrf.mxu0
        %v3730 = vadd.f32 0.0, %v3729
        %3731 = vmatmul.f32.gmra.mxu0 %v2180
        %v3732 = vpop.f32.mrf.mxu0
        %v3733 = vadd.f32 0.0, %v3732
        %3734 = vmatmul.f32.gmra.mxu0 %v2183
        %v3735 = vpop.f32.mrf.mxu0
        %v3736 = vadd.f32 0.0, %v3735
        %3737 = vmatmul.f32.gmra.mxu0 %v2186
        %v3738 = vpop.f32.mrf.mxu0
        %v3739 = vadd.f32 0.0, %v3738
        %3740 = vmatmul.f32.gmra.mxu0 %v2189
        %v3741 = vpop.f32.mrf.mxu0
        %v3742 = vadd.f32 0.0, %v3741
        %3743 = vmatmul.f32.gmra.mxu0 %v2192
        %v3744 = vpop.f32.mrf.mxu0
        %v3745 = vadd.f32 0.0, %v3744
        %3746 = vmatmul.f32.gmra.mxu0 %v2195
        %v3747 = vpop.f32.mrf.mxu0
        %v3748 = vadd.f32 0.0, %v3747
        %3749 = vmatmul.f32.gmra.mxu0 %v2198
        %v3750 = vpop.f32.mrf.mxu0
        %v3751 = vadd.f32 0.0, %v3750
        %3752 = vmatmul.f32.gmra.mxu0 %v2201
        %v3753 = vpop.f32.mrf.mxu0
        %v3754 = vadd.f32 0.0, %v3753
        %3755 = vmatmul.f32.gmra.mxu0 %v2204
        %v3756 = vpop.f32.mrf.mxu0
        %v3757 = vadd.f32 0.0, %v3756
        %3758 = vmatmul.f32.gmra.mxu0 %v2207
        %v3759 = vpop.f32.mrf.mxu0
        %v3760 = vadd.f32 0.0, %v3759
        %3761 = vmatmul.f32.gmra.mxu0 %v2210
        %v3762 = vpop.f32.mrf.mxu0
        %v3763 = vadd.f32 0.0, %v3762
        %3764 = vmatmul.f32.gmra.mxu0 %v2213
        %v3765 = vpop.f32.mrf.mxu0
        %v3766 = vadd.f32 0.0, %v3765
        %3767 = vmatmul.f32.gmra.mxu0 %v2216
        %v3768 = vpop.f32.mrf.mxu0
        %v3769 = vadd.f32 0.0, %v3768
        %3770 = vmatmul.f32.gmra.mxu0 %v2219
        %v3771 = vpop.f32.mrf.mxu0
        %v3772 = vadd.f32 0.0, %v3771
        %3773 = vmatmul.f32.gmra.mxu0 %v2222
        %v3774 = vpop.f32.mrf.mxu0
        %v3775 = vadd.f32 0.0, %v3774
        %3776 = vmatmul.f32.gmra.mxu0 %v2225
        %v3777 = vpop.f32.mrf.mxu0
        %v3778 = vadd.f32 0.0, %v3777
        %3779 = vmatmul.f32.gmra.mxu0 %v2228
        %v3780 = vpop.f32.mrf.mxu0
        %v3781 = vadd.f32 0.0, %v3780
        %3782 = vmatmul.f32.gmra.mxu0 %v2231
        %v3783 = vpop.f32.mrf.mxu0
        %v3784 = vadd.f32 0.0, %v3783
        %3785 = vmatmul.f32.gmra.mxu0 %v2234
        %v3786 = vpop.f32.mrf.mxu0
        %v3787 = vadd.f32 0.0, %v3786
        %3788 = vmatmul.f32.gmra.mxu0 %v2237
        %v3789 = vpop.f32.mrf.mxu0
        %v3790 = vadd.f32 0.0, %v3789
        %3791 = vmatmul.f32.gmra.mxu0 %v2240
        %v3792 = vpop.f32.mrf.mxu0
        %v3793 = vadd.f32 0.0, %v3792
        %3794 = vmatmul.f32.gmra.mxu0 %v2243
        %v3795 = vpop.f32.mrf.mxu0
        %v3796 = vadd.f32 0.0, %v3795
        %3797 = vmatmul.f32.gmra.mxu0 %v2246
        %v3798 = vpop.f32.mrf.mxu0
        %v3799 = vadd.f32 0.0, %v3798
        %3800 = vmatmul.f32.gmra.mxu0 %v2249
        %v3801 = vpop.f32.mrf.mxu0
        %v3802 = vadd.f32 0.0, %v3801
        %3803 = vmatmul.f32.gmra.mxu0 %v2252
        %v3804 = vpop.f32.mrf.mxu0
        %v3805 = vadd.f32 0.0, %v3804
        %3806 = vmatmul.f32.gmra.mxu0 %v2255
        %v3807 = vpop.f32.mrf.mxu0
        %v3808 = vadd.f32 0.0, %v3807
        %3809 = vmatmul.f32.gmra.mxu0 %v2258
        %v3810 = vpop.f32.mrf.mxu0
        %v3811 = vadd.f32 0.0, %v3810
        %3812 = vmatmul.f32.gmra.mxu0 %v2261
        %v3813 = vpop.f32.mrf.mxu0
        %v3814 = vadd.f32 0.0, %v3813
        %3815 = vmatmul.f32.gmra.mxu0 %v2264
        %v3816 = vpop.f32.mrf.mxu0
        %v3817 = vadd.f32 0.0, %v3816
        %3818 = vmatmul.f32.gmra.mxu0 %v2267
        %v3819 = vpop.f32.mrf.mxu0
        %v3820 = vadd.f32 0.0, %v3819
        %3821 = vmatmul.f32.gmra.mxu0 %v2270
        %v3822 = vpop.f32.mrf.mxu0
        %v3823 = vadd.f32 0.0, %v3822
        %3824 = vmatmul.f32.gmra.mxu0 %v2273
        %v3825 = vpop.f32.mrf.mxu0
        %v3826 = vadd.f32 0.0, %v3825
        %3827 = vmatmul.f32.gmra.mxu0 %v2276
        %v3828 = vpop.f32.mrf.mxu0
        %v3829 = vadd.f32 0.0, %v3828
        %3830 = vmatmul.f32.gmra.mxu0 %v2279
        %v3831 = vpop.f32.mrf.mxu0
        %v3832 = vadd.f32 0.0, %v3831
        %3833 = vmatmul.f32.gmra.mxu0 %v2282
        %v3834 = vpop.f32.mrf.mxu0
        %v3835 = vadd.f32 0.0, %v3834
        %3836 = vmatmul.f32.gmra.mxu0 %v2285
        %v3837 = vpop.f32.mrf.mxu0
        %v3838 = vadd.f32 0.0, %v3837
        %3839 = vmatmul.f32.gmra.mxu0 %v2288
        %v3840 = vpop.f32.mrf.mxu0
        %v3841 = vadd.f32 0.0, %v3840
        %3842 = vmatmul.f32.gmra.mxu0 %v2291
        %v3843 = vpop.f32.mrf.mxu0
        %v3844 = vadd.f32 0.0, %v3843
        %3845 = vmatmul.f32.gmra.mxu0 %v2294
        %v3846 = vpop.f32.mrf.mxu0
        %v3847 = vadd.f32 0.0, %v3846
        %3848 = vmatmul.f32.gmra.mxu0 %v2297
        %v3849 = vpop.f32.mrf.mxu0
        %v3850 = vadd.f32 0.0, %v3849
        %3851 = vmatmul.f32.gmra.mxu0 %v2300
        %v3852 = vpop.f32.mrf.mxu0
        %v3853 = vadd.f32 0.0, %v3852
        %3854 = vmatmul.f32.gmra.mxu0 %v2303
        %v3855 = vpop.f32.mrf.mxu0
        %v3856 = vadd.f32 0.0, %v3855
        %3857 = vmatmul.f32.gmra.mxu0 %v2306
        %v3858 = vpop.f32.mrf.mxu0
        %v3859 = vadd.f32 0.0, %v3858
        %3860 = vmatmul.f32.gmra.mxu0 %v2309
        %v3861 = vpop.f32.mrf.mxu0
        %v3862 = vadd.f32 0.0, %v3861
        %3863 = vmatmul.f32.gmra.mxu0 %v2312
        %v3864 = vpop.f32.mrf.mxu0
        %v3865 = vadd.f32 0.0, %v3864
        %3866 = vmatmul.f32.gmra.mxu0 %v2315
        %v3867 = vpop.f32.mrf.mxu0
        %v3868 = vadd.f32 0.0, %v3867
        %3869 = vmatmul.f32.gmra.mxu0 %v2318
        %v3870 = vpop.f32.mrf.mxu0
        %v3871 = vadd.f32 0.0, %v3870
        %3872 = vmatmul.f32.gmra.mxu0 %v2321
        %v3873 = vpop.f32.mrf.mxu0
        %v3874 = vadd.f32 0.0, %v3873
        %3875 = vmatmul.f32.gmra.mxu0 %v2324
        %v3876 = vpop.f32.mrf.mxu0
        %v3877 = vadd.f32 0.0, %v3876
        %3878 = vmatmul.f32.gmra.mxu0 %v2327
        %v3879 = vpop.f32.mrf.mxu0
        %v3880 = vadd.f32 0.0, %v3879
        %3881 = vmatmul.f32.gmra.mxu0 %v2330
        %v3882 = vpop.f32.mrf.mxu0
        %v3883 = vadd.f32 0.0, %v3882
        %3884 = vmatmul.f32.gmra.mxu0 %v2333
        %v3885 = vpop.f32.mrf.mxu0
        %v3886 = vadd.f32 0.0, %v3885
        %3887 = vmatmul.f32.gmra.mxu0 %v2336
        %v3888 = vpop.f32.mrf.mxu0
        %v3889 = vadd.f32 0.0, %v3888
        %3890 = vmatmul.f32.gmra.mxu0 %v2339
        %v3891 = vpop.f32.mrf.mxu0
        %v3892 = vadd.f32 0.0, %v3891
        %3893 = vmatmul.f32.gmra.mxu0 %v2342
        %v3894 = vpop.f32.mrf.mxu0
        %v3895 = vadd.f32 0.0, %v3894
        %3896 = vmatmul.f32.gmra.mxu0 %v2345
        %v3897 = vpop.f32.mrf.mxu0
        %v3898 = vadd.f32 0.0, %v3897
        %3899 = vmatmul.f32.gmra.mxu0 %v2348
        %v3900 = vpop.f32.mrf.mxu0
        %v3901 = vadd.f32 0.0, %v3900
        %3902 = vmatmul.f32.gmra.mxu0 %v2351
        %v3903 = vpop.f32.mrf.mxu0
        %v3904 = vadd.f32 0.0, %v3903
        %3905 = vmatmul.f32.gmra.mxu0 %v2354
        %v3906 = vpop.f32.mrf.mxu0
        %v3907 = vadd.f32 0.0, %v3906
        %3908 = vmatmul.f32.gmra.mxu0 %v2357
        %v3909 = vpop.f32.mrf.mxu0
        %v3910 = vadd.f32 0.0, %v3909
        %3911 = vmatmul.f32.gmra.mxu0 %v2360
        %v3912 = vpop.f32.mrf.mxu0
        %v3913 = vadd.f32 0.0, %v3912
        %3914 = vmatmul.f32.gmra.mxu0 %v2363
        %v3915 = vpop.f32.mrf.mxu0
        %v3916 = vadd.f32 0.0, %v3915
        %3917 = vmatmul.f32.gmra.mxu0 %v2366
        %v3918 = vpop.f32.mrf.mxu0
        %v3919 = vadd.f32 0.0, %v3918
        %3920 = vmatmul.f32.gmra.mxu0 %v2369
        %v3921 = vpop.f32.mrf.mxu0
        %v3922 = vadd.f32 0.0, %v3921
        %3923 = vmatmul.f32.gmra.mxu0 %v2372
        %v3924 = vpop.f32.mrf.mxu0
        %v3925 = vadd.f32 0.0, %v3924
        %3926 = vmatmul.f32.gmra.mxu0 %v2375
        %v3927 = vpop.f32.mrf.mxu0
        %v3928 = vadd.f32 0.0, %v3927
        %3929 = vmatmul.f32.gmra.mxu0 %v2378
        %v3930 = vpop.f32.mrf.mxu0
        %v3931 = vadd.f32 0.0, %v3930
        %3932 = vmatmul.f32.gmra.mxu0 %v2381
        %v3933 = vpop.f32.mrf.mxu0
        %v3934 = vadd.f32 0.0, %v3933
        %3935 = vmatmul.f32.gmra.mxu0 %v2384
        %v3936 = vpop.f32.mrf.mxu0
        %v3937 = vadd.f32 0.0, %v3936
        %3938 = vmatmul.f32.gmra.mxu0 %v2387
        %v3939 = vpop.f32.mrf.mxu0
        %v3940 = vadd.f32 0.0, %v3939
        %3941 = vmatmul.f32.gmra.mxu0 %v2390
        %v3942 = vpop.f32.mrf.mxu0
        %v3943 = vadd.f32 0.0, %v3942
        %3944 = vmatmul.f32.gmra.mxu0 %v2393
        %v3945 = vpop.f32.mrf.mxu0
        %v3946 = vadd.f32 0.0, %v3945
        %3947 = vmatmul.f32.gmra.mxu0 %v2396
        %v3948 = vpop.f32.mrf.mxu0
        %v3949 = vadd.f32 0.0, %v3948
        %3950 = vmatmul.f32.gmra.mxu0 %v2399
        %v3951 = vpop.f32.mrf.mxu0
        %v3952 = vadd.f32 0.0, %v3951
        %3953 = vmatmul.f32.gmra.mxu0 %v2402
        %v3954 = vpop.f32.mrf.mxu0
        %v3955 = vadd.f32 0.0, %v3954
        %3956 = vmatmul.f32.gmra.mxu0 %v2405
        %v3957 = vpop.f32.mrf.mxu0
        %v3958 = vadd.f32 0.0, %v3957
        %3959 = vmatmul.f32.gmra.mxu0 %v2408
        %v3960 = vpop.f32.mrf.mxu0
        %v3961 = vadd.f32 0.0, %v3960
        %3962 = vmatmul.f32.gmra.mxu0 %v2411
        %v3963 = vpop.f32.mrf.mxu0
        %v3964 = vadd.f32 0.0, %v3963
        %3965 = vmatmul.f32.gmra.mxu0 %v2414
        %v3966 = vpop.f32.mrf.mxu0
        %v3967 = vadd.f32 0.0, %v3966
        %3968 = vmatmul.f32.gmra.mxu0 %v2417
        %v3969 = vpop.f32.mrf.mxu0
        %v3970 = vadd.f32 0.0, %v3969
        %3971 = vmatmul.f32.gmra.mxu0 %v2420
        %v3972 = vpop.f32.mrf.mxu0
        %v3973 = vadd.f32 0.0, %v3972
        %3974 = vmatmul.f32.gmra.mxu0 %v2423
        %v3975 = vpop.f32.mrf.mxu0
        %v3976 = vadd.f32 0.0, %v3975
        %3977 = vmatmul.f32.gmra.mxu0 %v2426
        %v3978 = vpop.f32.mrf.mxu0
        %v3979 = vadd.f32 0.0, %v3978
        %3980 = vmatmul.f32.gmra.mxu0 %v2429
        %v3981 = vpop.f32.mrf.mxu0
        %v3982 = vadd.f32 0.0, %v3981
        %3983 = vmatmul.f32.gmra.mxu0 %v2432
        %v3984 = vpop.f32.mrf.mxu0
        %v3985 = vadd.f32 0.0, %v3984
        %3986 = vmatmul.f32.gmra.mxu0 %v2435
        %v3987 = vpop.f32.mrf.mxu0
        %v3988 = vadd.f32 0.0, %v3987
        %3989 = vmatmul.f32.gmra.mxu0 %v2438
        %v3990 = vpop.f32.mrf.mxu0
        %v3991 = vadd.f32 0.0, %v3990
        %3992 = vmatmul.f32.gmra.mxu0 %v2441
        %v3993 = vpop.f32.mrf.mxu0
        %v3994 = vadd.f32 0.0, %v3993
        %3995 = vmatmul.f32.gmra.mxu0 %v2444
        %v3996 = vpop.f32.mrf.mxu0
        %v3997 = vadd.f32 0.0, %v3996
        %3998 = vmatmul.f32.gmra.mxu0 %v2447
        %v3999 = vpop.f32.mrf.mxu0
        %v4000 = vadd.f32 0.0, %v3999
        %4001 = vmatmul.f32.gmra.mxu0 %v2450
        %v4002 = vpop.f32.mrf.mxu0
        %v4003 = vadd.f32 0.0, %v4002
        %4004 = vmatmul.f32.gmra.mxu0 %v2453
        %v4005 = vpop.f32.mrf.mxu0
        %v4006 = vadd.f32 0.0, %v4005
        %4007 = vmatmul.f32.gmra.mxu0 %v2456
        %v4008 = vpop.f32.mrf.mxu0
        %v4009 = vadd.f32 0.0, %v4008
        %4010 = vmatmul.f32.gmra.mxu0 %v2459
        %v4011 = vpop.f32.mrf.mxu0
        %v4012 = vadd.f32 0.0, %v4011
        %4013 = vmatmul.f32.gmra.mxu0 %v2462
        %v4014 = vpop.f32.mrf.mxu0
        %v4015 = vadd.f32 0.0, %v4014
        %4016 = vmatmul.f32.gmra.mxu0 %v2465
        %v4017 = vpop.f32.mrf.mxu0
        %v4018 = vadd.f32 0.0, %v4017
        %4019 = vmatmul.f32.gmra.mxu0 %v2468
        %v4020 = vpop.f32.mrf.mxu0
        %v4021 = vadd.f32 0.0, %v4020
        %4022 = vmatmul.f32.gmra.mxu0 %v2471
        %v4023 = vpop.f32.mrf.mxu0
        %v4024 = vadd.f32 0.0, %v4023
        %4025 = vmatmul.f32.gmra.mxu0 %v2474
        %v4026 = vpop.f32.mrf.mxu0
        %v4027 = vadd.f32 0.0, %v4026
        %4028 = vmatmul.f32.gmra.mxu0 %v2477
        %v4029 = vpop.f32.mrf.mxu0
        %v4030 = vadd.f32 0.0, %v4029
        %4031 = vmatmul.f32.gmra.mxu0 %v2480
        %v4032 = vpop.f32.mrf.mxu0
        %v4033 = vadd.f32 0.0, %v4032
        %4034 = vmatmul.f32.gmra.mxu0 %v2483
        %v4035 = vpop.f32.mrf.mxu0
        %v4036 = vadd.f32 0.0, %v4035
        %4037 = vmatmul.f32.gmra.mxu0 %v2486
        %v4038 = vpop.f32.mrf.mxu0
        %v4039 = vadd.f32 0.0, %v4038
        %4040 = vmatmul.f32.gmra.mxu0 %v2489
        %v4041 = vpop.f32.mrf.mxu0
        %v4042 = vadd.f32 0.0, %v4041
        %4043 = vmatmul.f32.gmra.mxu0 %v2492
        %v4044 = vpop.f32.mrf.mxu0
        %v4045 = vadd.f32 0.0, %v4044
        %4046 = vmatmul.f32.gmra.mxu0 %v2495
        %v4047 = vpop.f32.mrf.mxu0
        %v4048 = vadd.f32 0.0, %v4047
        %4049 = vmatmul.f32.gmra.mxu0 %v2498
        %v4050 = vpop.f32.mrf.mxu0
        %v4051 = vadd.f32 0.0, %v4050
        %4052 = vmatmul.f32.gmra.mxu0 %v2501
        %v4053 = vpop.f32.mrf.mxu0
        %v4054 = vadd.f32 0.0, %v4053
        %4055 = vmatmul.f32.gmra.mxu0 %v2504
        %v4056 = vpop.f32.mrf.mxu0
        %v4057 = vadd.f32 0.0, %v4056
        %4058 = vmatmul.f32.gmra.mxu0 %v2507
        %v4059 = vpop.f32.mrf.mxu0
        %v4060 = vadd.f32 0.0, %v4059
        %4061 = vmatmul.f32.gmra.mxu0 %v2510
        %v4062 = vpop.f32.mrf.mxu0
        %v4063 = vadd.f32 0.0, %v4062
        %4064 = vmatmul.f32.gmra.mxu0 %v2513
        %v4065 = vpop.f32.mrf.mxu0
        %v4066 = vadd.f32 0.0, %v4065
        %4067 = vmatmul.f32.gmra.mxu0 %v2516
        %v4068 = vpop.f32.mrf.mxu0
        %v4069 = vadd.f32 0.0, %v4068
        %4070 = vmatmul.f32.gmra.mxu0 %v2519
        %v4071 = vpop.f32.mrf.mxu0
        %v4072 = vadd.f32 0.0, %v4071
        %4073 = vmatmul.f32.gmra.mxu0 %v2522
        %v4074 = vpop.f32.mrf.mxu0
        %v4075 = vadd.f32 0.0, %v4074
        %4076 = vmatmul.f32.gmra.mxu0 %v2525
        %v4077 = vpop.f32.mrf.mxu0
        %v4078 = vadd.f32 0.0, %v4077
        %4079 = vmatmul.f32.gmra.mxu0 %v2528
        %v4080 = vpop.f32.mrf.mxu0
        %v4081 = vadd.f32 0.0, %v4080
        %4082 = vmatmul.f32.gmra.mxu0 %v2531
        %v4083 = vpop.f32.mrf.mxu0
        %v4084 = vadd.f32 0.0, %v4083
        %4085 = vmatmul.f32.gmra.mxu0 %v2534
        %v4086 = vpop.f32.mrf.mxu0
        %v4087 = vadd.f32 0.0, %v4086
        %4088 = vmatmul.f32.gmra.mxu0 %v2537
        %v4089 = vpop.f32.mrf.mxu0
        %v4090 = vadd.f32 0.0, %v4089
        %4091 = vmatmul.f32.gmra.mxu0 %v2540
        %v4092 = vpop.f32.mrf.mxu0
        %v4093 = vadd.f32 0.0, %v4092
        %4094 = vmatmul.f32.gmra.mxu0 %v2543
        %v4095 = vpop.f32.mrf.mxu0
        %v4096 = vadd.f32 0.0, %v4095
        %4097 = vmatmul.f32.gmra.mxu0 %v2546
        %v4098 = vpop.f32.mrf.mxu0
        %v4099 = vadd.f32 0.0, %v4098
        %4100 = vmatmul.f32.gmra.mxu0 %v2549
        %v4101 = vpop.f32.mrf.mxu0
        %v4102 = vadd.f32 0.0, %v4101
        %4103 = vmatmul.f32.gmra.mxu0 %v2552
        %v4104 = vpop.f32.mrf.mxu0
        %v4105 = vadd.f32 0.0, %v4104
        %4106 = vmatmul.f32.gmra.mxu0 %v2555
        %v4107 = vpop.f32.mrf.mxu0
        %v4108 = vadd.f32 0.0, %v4107
        %4109 = vmatmul.f32.gmra.mxu0 %v2558
        %v4110 = vpop.f32.mrf.mxu0
        %v4111 = vadd.f32 0.0, %v4110
        %4112 = vmatmul.f32.gmra.mxu0 %v2561
        %v4113 = vpop.f32.mrf.mxu0
        %v4114 = vadd.f32 0.0, %v4113
        %4115 = vmatmul.f32.gmra.mxu0 %v2564
        %v4116 = vpop.f32.mrf.mxu0
        %v4117 = vadd.f32 0.0, %v4116
        %4118 = vmatmul.f32.gmra.mxu0 %v2567
        %v4119 = vpop.f32.mrf.mxu0
        %v4120 = vadd.f32 0.0, %v4119
        %4121 = vmatmul.f32.gmra.mxu0 %v2570
        %v4122 = vpop.f32.mrf.mxu0
        %v4123 = vadd.f32 0.0, %v4122
        %4124 = vmatmul.f32.gmra.mxu0 %v2573
        %v4125 = vpop.f32.mrf.mxu0
        %v4126 = vadd.f32 0.0, %v4125
        %4127 = vmatmul.f32.gmra.mxu0 %v2576
        %v4128 = vpop.f32.mrf.mxu0
        %v4129 = vadd.f32 0.0, %v4128
        %4130 = vmatmul.f32.gmra.mxu0 %v2579
        %v4131 = vpop.f32.mrf.mxu0
        %v4132 = vadd.f32 0.0, %v4131
        %4133 = vmatmul.f32.gmra.mxu0 %v2582
        %v4134 = vpop.f32.mrf.mxu0
        %v4135 = vadd.f32 0.0, %v4134
        %4136 = vmatmul.f32.gmra.mxu0 %v2585
        %v4137 = vpop.f32.mrf.mxu0
        %v4138 = vadd.f32 0.0, %v4137
        %4139 = vmatmul.f32.gmra.mxu0 %v2588
        %v4140 = vpop.f32.mrf.mxu0
        %v4141 = vadd.f32 0.0, %v4140
        %4142 = vmatmul.f32.gmra.mxu0 %v2591
        %v4143 = vpop.f32.mrf.mxu0
        %v4144 = vadd.f32 0.0, %v4143
        %4145 = vmatmul.f32.gmra.mxu0 %v2594
        %v4146 = vpop.f32.mrf.mxu0
        %v4147 = vadd.f32 0.0, %v4146
        %4148 = vmatmul.f32.gmra.mxu0 %v2597
        %v4149 = vpop.f32.mrf.mxu0
        %v4150 = vadd.f32 0.0, %v4149
        %4151 = vmatmul.f32.gmra.mxu0 %v2600
        %v4152 = vpop.f32.mrf.mxu0
        %v4153 = vadd.f32 0.0, %v4152
        %4154 = vmatmul.f32.gmra.mxu0 %v2603
        %v4155 = vpop.f32.mrf.mxu0
        %v4156 = vadd.f32 0.0, %v4155
        %4157 = vmatmul.f32.gmra.mxu0 %v2606
        %v4158 = vpop.f32.mrf.mxu0
        %v4159 = vadd.f32 0.0, %v4158
        %4160 = vmatmul.f32.gmra.mxu0 %v2609
        %v4161 = vpop.f32.mrf.mxu0
        %v4162 = vadd.f32 0.0, %v4161
        %4163 = vmatmul.f32.gmra.mxu0 %v2612
        %v4164 = vpop.f32.mrf.mxu0
        %v4165 = vadd.f32 0.0, %v4164
        %4166 = vmatmul.f32.gmra.mxu0 %v2615
        %v4167 = vpop.f32.mrf.mxu0
        %v4168 = vadd.f32 0.0, %v4167
        %4169 = vmatmul.f32.gmra.mxu0 %v2618
        %v4170 = vpop.f32.mrf.mxu0
        %v4171 = vadd.f32 0.0, %v4170
        %4172 = vmatmul.f32.gmra.mxu0 %v2621
        %v4173 = vpop.f32.mrf.mxu0
        %v4174 = vadd.f32 0.0, %v4173
        %4175 = vmatmul.f32.gmra.mxu0 %v2624
        %v4176 = vpop.f32.mrf.mxu0
        %v4177 = vadd.f32 0.0, %v4176
        %4178 = vmatmul.f32.gmra.mxu0 %v2627
        %v4179 = vpop.f32.mrf.mxu0
        %v4180 = vadd.f32 0.0, %v4179
        %4181 = vmatmul.f32.gmra.mxu0 %v2630
        %v4182 = vpop.f32.mrf.mxu0
        %v4183 = vadd.f32 0.0, %v4182
        %4184 = vmatmul.f32.gmra.mxu0 %v2633
        %v4185 = vpop.f32.mrf.mxu0
        %v4186 = vadd.f32 0.0, %v4185
        %4187 = vmatmul.f32.gmra.mxu0 %v2636
        %v4188 = vpop.f32.mrf.mxu0
        %v4189 = vadd.f32 0.0, %v4188
        %4190 = vmatmul.f32.gmra.mxu0 %v2639
        %v4191 = vpop.f32.mrf.mxu0
        %v4192 = vadd.f32 0.0, %v4191
        %4193 = vmatmul.f32.gmra.mxu0 %v2642
        %v4194 = vpop.f32.mrf.mxu0
        %v4195 = vadd.f32 0.0, %v4194
        %4196 = vmatmul.f32.gmra.mxu0 %v2645
        %v4197 = vpop.f32.mrf.mxu0
        %v4198 = vadd.f32 0.0, %v4197
        %4199 = vmatmul.f32.gmra.mxu0 %v2648
        %v4200 = vpop.f32.mrf.mxu0
        %v4201 = vadd.f32 0.0, %v4200
        %4202 = vmatmul.f32.gmra.mxu0 %v2651
        %v4203 = vpop.f32.mrf.mxu0
        %v4204 = vadd.f32 0.0, %v4203
        %4205 = vmatmul.f32.gmra.mxu0 %v2654
        %v4206 = vpop.f32.mrf.mxu0
        %v4207 = vadd.f32 0.0, %v4206
        %4208 = vmatmul.f32.gmra.mxu0 %v2657
        %v4209 = vpop.f32.mrf.mxu0
        %v4210 = vadd.f32 0.0, %v4209
        %4211 = vmatmul.f32.gmra.mxu0 %v2660
        %v4212 = vpop.f32.mrf.mxu0
        %v4213 = vadd.f32 0.0, %v4212
        %4214 = vmatmul.f32.gmra.mxu0 %v2663
        %v4215 = vpop.f32.mrf.mxu0
        %v4216 = vadd.f32 0.0, %v4215
        %4217 = vmatmul.f32.gmra.mxu0 %v2666
        %v4218 = vpop.f32.mrf.mxu0
        %v4219 = vadd.f32 0.0, %v4218
        %4220 = vmatmul.f32.gmra.mxu0 %v2669
        %v4221 = vpop.f32.mrf.mxu0
        %v4222 = vadd.f32 0.0, %v4221
        %4223 = vmatmul.f32.gmra.mxu0 %v2672
        %v4224 = vpop.f32.mrf.mxu0
        %v4225 = vadd.f32 0.0, %v4224
        %4226 = vmatmul.f32.gmra.mxu0 %v2675
        %v4227 = vpop.f32.mrf.mxu0
        %v4228 = vadd.f32 0.0, %v4227
        %4229 = vmatmul.f32.gmra.mxu0 %v2678
        %v4230 = vpop.f32.mrf.mxu0
        %v4231 = vadd.f32 0.0, %v4230
        %4232 = vmatmul.f32.gmra.mxu0 %v2681
        %v4233 = vpop.f32.mrf.mxu0
        %v4234 = vadd.f32 0.0, %v4233
        %4235 = vmatmul.f32.gmra.mxu0 %v2684
        %v4236 = vpop.f32.mrf.mxu0
        %v4237 = vadd.f32 0.0, %v4236
        %4238 = vmatmul.f32.gmra.mxu0 %v2687
        %v4239 = vpop.f32.mrf.mxu0
        %v4240 = vadd.f32 0.0, %v4239
        %4241 = vmatmul.f32.gmra.mxu0 %v2690
        %v4242 = vpop.f32.mrf.mxu0
        %v4243 = vadd.f32 0.0, %v4242
        %4244 = vmatmul.f32.gmra.mxu0 %v2693
        %v4245 = vpop.f32.mrf.mxu0
        %v4246 = vadd.f32 0.0, %v4245
        %4247 = vmatmul.f32.gmra.mxu0 %v2696
        %v4248 = vpop.f32.mrf.mxu0
        %v4249 = vadd.f32 0.0, %v4248
        %4250 = vmatmul.f32.gmra.mxu0 %v2699
        %v4251 = vpop.f32.mrf.mxu0
        %v4252 = vadd.f32 0.0, %v4251
        %4253 = vmatmul.f32.gmra.mxu0 %v2702
        %v4254 = vpop.f32.mrf.mxu0
        %v4255 = vadd.f32 0.0, %v4254
        %4256 = vmatmul.f32.gmra.mxu0 %v2705
        %v4257 = vpop.f32.mrf.mxu0
        %v4258 = vadd.f32 0.0, %v4257
        %4259 = vmatmul.f32.gmra.mxu0 %v2708
        %v4260 = vpop.f32.mrf.mxu0
        %v4261 = vadd.f32 0.0, %v4260
        %4262 = vmatmul.f32.gmra.mxu0 %v2711
        %v4263 = vpop.f32.mrf.mxu0
        %v4264 = vadd.f32 0.0, %v4263
        %4265 = vmatmul.f32.gmra.mxu0 %v2714
        %v4266 = vpop.f32.mrf.mxu0
        %v4267 = vadd.f32 0.0, %v4266
        %4268 = vmatmul.f32.gmra.mxu0 %v2717
        %v4269 = vpop.f32.mrf.mxu0
        %v4270 = vadd.f32 0.0, %v4269
        %4271 = vmatmul.f32.gmra.mxu0 %v2720
        %v4272 = vpop.f32.mrf.mxu0
        %v4273 = vadd.f32 0.0, %v4272
        %4274 = vmatmul.f32.gmra.mxu0 %v2723
        %v4275 = vpop.f32.mrf.mxu0
        %v4276 = vadd.f32 0.0, %v4275
        %4277 = vmatmul.f32.gmra.mxu0 %v2726
        %v4278 = vpop.f32.mrf.mxu0
        %v4279 = vadd.f32 0.0, %v4278
        %4280 = vmatmul.f32.gmra.mxu0 %v2729
        %v4281 = vpop.f32.mrf.mxu0
        %v4282 = vadd.f32 0.0, %v4281
        %4283 = vmatmul.f32.gmra.mxu0 %v2732
        %v4284 = vpop.f32.mrf.mxu0
        %v4285 = vadd.f32 0.0, %v4284
        %4286 = vmatmul.f32.gmra.mxu0 %v2735
        %v4287 = vpop.f32.mrf.mxu0
        %v4288 = vadd.f32 0.0, %v4287
        %4289 = vmatmul.f32.gmra.mxu0 %v2738
        %v4290 = vpop.f32.mrf.mxu0
        %v4291 = vadd.f32 0.0, %v4290
        %4292 = vmatmul.f32.gmra.mxu0 %v2741
        %v4293 = vpop.f32.mrf.mxu0
        %v4294 = vadd.f32 0.0, %v4293
        %4295 = vmatmul.f32.gmra.mxu0 %v2744
        %v4296 = vpop.f32.mrf.mxu0
        %v4297 = vadd.f32 0.0, %v4296
        %4298 = vmatmul.f32.gmra.mxu0 %v2747
        %v4299 = vpop.f32.mrf.mxu0
        %v4300 = vadd.f32 0.0, %v4299
        %4301 = vmatmul.f32.gmra.mxu0 %v2750
        %v4302 = vpop.f32.mrf.mxu0
        %v4303 = vadd.f32 0.0, %v4302
        %4304 = vmatmul.f32.gmra.mxu0 %v2753
        %v4305 = vpop.f32.mrf.mxu0
        %v4306 = vadd.f32 0.0, %v4305
        %4307 = vmatmul.f32.gmra.mxu0 %v2756
        %v4308 = vpop.f32.mrf.mxu0
        %v4309 = vadd.f32 0.0, %v4308
        %4310 = vmatmul.f32.gmra.mxu0 %v2759
        %v4311 = vpop.f32.mrf.mxu0
        %v4312 = vadd.f32 0.0, %v4311
        %4313 = vmatmul.f32.gmra.mxu0 %v2762
        %v4314 = vpop.f32.mrf.mxu0
        %v4315 = vadd.f32 0.0, %v4314
        %4316 = vmatmul.f32.gmra.mxu0 %v2765
        %v4317 = vpop.f32.mrf.mxu0
        %v4318 = vadd.f32 0.0, %v4317
        %4319 = vmatmul.f32.gmra.mxu0 %v2768
        %v4320 = vpop.f32.mrf.mxu0
        %v4321 = vadd.f32 0.0, %v4320
        %4322 = vmatmul.f32.gmra.mxu0 %v2771
        %v4323 = vpop.f32.mrf.mxu0
        %v4324 = vadd.f32 0.0, %v4323
        %4325 = vmatmul.f32.gmra.mxu0 %v2774
        %v4326 = vpop.f32.mrf.mxu0
        %v4327 = vadd.f32 0.0, %v4326
        %4328 = vmatmul.f32.gmra.mxu0 %v2777
        %v4329 = vpop.f32.mrf.mxu0
        %v4330 = vadd.f32 0.0, %v4329
        %4331 = vmatmul.f32.gmra.mxu0 %v2780
        %v4332 = vpop.f32.mrf.mxu0
        %v4333 = vadd.f32 0.0, %v4332
        %4334 = vmatmul.f32.gmra.mxu0 %v2783
        %v4335 = vpop.f32.mrf.mxu0
        %v4336 = vadd.f32 0.0, %v4335
        %4337 = vmatmul.f32.gmra.mxu0 %v2786
        %v4338 = vpop.f32.mrf.mxu0
        %v4339 = vadd.f32 0.0, %v4338
        %4340 = vdwg.mxu0
        %v4341 = vld [vmem:[#allocation10] sm:$0xff]
        %v4342 = vld [vmem:[#allocation10 + $0x8] sm:$0xff]
        %v4343 = vld [vmem:[#allocation10 + $0x10] sm:$0xff]
        %v4344 = vld [vmem:[#allocation10 + $0x18] sm:$0xff]
        %v4345 = vld [vmem:[#allocation10 + $0x20] sm:$0xff]
        %v4346 = vld [vmem:[#allocation10 + $0x28] sm:$0xff]
        %v4347 = vld [vmem:[#allocation10 + $0x30] sm:$0xff]
        %v4348 = vld [vmem:[#allocation10 + $0x38] sm:$0xff]
        %v4349 = vld [vmem:[#allocation10 + $0x40] sm:$0xff]
        %v4350 = vld [vmem:[#allocation10 + $0x48] sm:$0xff]
        %v4351 = vld [vmem:[#allocation10 + $0x50] sm:$0xff]
        %v4352 = vld [vmem:[#allocation10 + $0x58] sm:$0xff]
        %v4353 = vld [vmem:[#allocation10 + $0x60] sm:$0xff]
        %v4354 = vld [vmem:[#allocation10 + $0x68] sm:$0xff]
        %v4355 = vld [vmem:[#allocation10 + $0x70] sm:$0xff]
        %v4356 = vld [vmem:[#allocation10 + $0x78] sm:$0xff]
        %v4357 = vld [vmem:[#allocation10 + $0x80] sm:$0xff]
        %v4358 = vld [vmem:[#allocation10 + $0x88] sm:$0xff]
        %v4359 = vld [vmem:[#allocation10 + $0x90] sm:$0xff]
        %v4360 = vld [vmem:[#allocation10 + $0x98] sm:$0xff]
        %v4361 = vld [vmem:[#allocation10 + $0xa0] sm:$0xff]
        %v4362 = vld [vmem:[#allocation10 + $0xa8] sm:$0xff]
        %v4363 = vld [vmem:[#allocation10 + $0xb0] sm:$0xff]
        %v4364 = vld [vmem:[#allocation10 + $0xb8] sm:$0xff]
        %v4365 = vld [vmem:[#allocation10 + $0xc0] sm:$0xff]
        %v4366 = vld [vmem:[#allocation10 + $0xc8] sm:$0xff]
        %v4367 = vld [vmem:[#allocation10 + $0xd0] sm:$0xff]
        %v4368 = vld [vmem:[#allocation10 + $0xd8] sm:$0xff]
        %v4369 = vld [vmem:[#allocation10 + $0xe0] sm:$0xff]
        %v4370 = vld [vmem:[#allocation10 + $0xe8] sm:$0xff]
        %v4371 = vld [vmem:[#allocation10 + $0xf0] sm:$0xff]
        %v4372 = vld [vmem:[#allocation10 + $0xf8] sm:$0xff]
        %v4373 = vld [vmem:[#allocation10 + $0x100] sm:$0xff]
        %v4374 = vld [vmem:[#allocation10 + $0x108] sm:$0xff]
        %v4375 = vld [vmem:[#allocation10 + $0x110] sm:$0xff]
        %v4376 = vld [vmem:[#allocation10 + $0x118] sm:$0xff]
        %v4377 = vld [vmem:[#allocation10 + $0x120] sm:$0xff]
        %v4378 = vld [vmem:[#allocation10 + $0x128] sm:$0xff]
        %v4379 = vld [vmem:[#allocation10 + $0x130] sm:$0xff]
        %v4380 = vld [vmem:[#allocation10 + $0x138] sm:$0xff]
        %v4381 = vld [vmem:[#allocation10 + $0x140] sm:$0xff]
        %v4382 = vld [vmem:[#allocation10 + $0x148] sm:$0xff]
        %v4383 = vld [vmem:[#allocation10 + $0x150] sm:$0xff]
        %v4384 = vld [vmem:[#allocation10 + $0x158] sm:$0xff]
        %v4385 = vld [vmem:[#allocation10 + $0x160] sm:$0xff]
        %v4386 = vld [vmem:[#allocation10 + $0x168] sm:$0xff]
        %v4387 = vld [vmem:[#allocation10 + $0x170] sm:$0xff]
        %v4388 = vld [vmem:[#allocation10 + $0x178] sm:$0xff]
        %v4389 = vld [vmem:[#allocation10 + $0x180] sm:$0xff]
        %v4390 = vld [vmem:[#allocation10 + $0x188] sm:$0xff]
        %v4391 = vld [vmem:[#allocation10 + $0x190] sm:$0xff]
        %v4392 = vld [vmem:[#allocation10 + $0x198] sm:$0xff]
        %v4393 = vld [vmem:[#allocation10 + $0x1a0] sm:$0xff]
        %v4394 = vld [vmem:[#allocation10 + $0x1a8] sm:$0xff]
        %v4395 = vld [vmem:[#allocation10 + $0x1b0] sm:$0xff]
        %v4396 = vld [vmem:[#allocation10 + $0x1b8] sm:$0xff]
        %v4397 = vld [vmem:[#allocation10 + $0x1c0] sm:$0xff]
        %v4398 = vld [vmem:[#allocation10 + $0x1c8] sm:$0xff]
        %v4399 = vld [vmem:[#allocation10 + $0x1d0] sm:$0xff]
        %v4400 = vld [vmem:[#allocation10 + $0x1d8] sm:$0xff]
        %v4401 = vld [vmem:[#allocation10 + $0x1e0] sm:$0xff]
        %v4402 = vld [vmem:[#allocation10 + $0x1e8] sm:$0xff]
        %v4403 = vld [vmem:[#allocation10 + $0x1f0] sm:$0xff]
        %v4404 = vld [vmem:[#allocation10 + $0x1f8] sm:$0xff]
        %v4405 = vld [vmem:[#allocation10 + $0x200] sm:$0xff]
        %v4406 = vld [vmem:[#allocation10 + $0x208] sm:$0xff]
        %v4407 = vld [vmem:[#allocation10 + $0x210] sm:$0xff]
        %v4408 = vld [vmem:[#allocation10 + $0x218] sm:$0xff]
        %v4409 = vld [vmem:[#allocation10 + $0x220] sm:$0xff]
        %v4410 = vld [vmem:[#allocation10 + $0x228] sm:$0xff]
        %v4411 = vld [vmem:[#allocation10 + $0x230] sm:$0xff]
        %v4412 = vld [vmem:[#allocation10 + $0x238] sm:$0xff]
        %v4413 = vld [vmem:[#allocation10 + $0x240] sm:$0xff]
        %v4414 = vld [vmem:[#allocation10 + $0x248] sm:$0xff]
        %v4415 = vld [vmem:[#allocation10 + $0x250] sm:$0xff]
        %v4416 = vld [vmem:[#allocation10 + $0x258] sm:$0xff]
        %v4417 = vld [vmem:[#allocation10 + $0x260] sm:$0xff]
        %v4418 = vld [vmem:[#allocation10 + $0x268] sm:$0xff]
        %v4419 = vld [vmem:[#allocation10 + $0x270] sm:$0xff]
        %v4420 = vld [vmem:[#allocation10 + $0x278] sm:$0xff]
        %v4421 = vld [vmem:[#allocation10 + $0x280] sm:$0xff]
        %v4422 = vld [vmem:[#allocation10 + $0x288] sm:$0xff]
        %v4423 = vld [vmem:[#allocation10 + $0x290] sm:$0xff]
        %v4424 = vld [vmem:[#allocation10 + $0x298] sm:$0xff]
        %v4425 = vld [vmem:[#allocation10 + $0x2a0] sm:$0xff]
        %v4426 = vld [vmem:[#allocation10 + $0x2a8] sm:$0xff]
        %v4427 = vld [vmem:[#allocation10 + $0x2b0] sm:$0xff]
        %v4428 = vld [vmem:[#allocation10 + $0x2b8] sm:$0xff]
        %v4429 = vld [vmem:[#allocation10 + $0x2c0] sm:$0xff]
        %v4430 = vld [vmem:[#allocation10 + $0x2c8] sm:$0xff]
        %v4431 = vld [vmem:[#allocation10 + $0x2d0] sm:$0xff]
        %v4432 = vld [vmem:[#allocation10 + $0x2d8] sm:$0xff]
        %v4433 = vld [vmem:[#allocation10 + $0x2e0] sm:$0xff]
        %v4434 = vld [vmem:[#allocation10 + $0x2e8] sm:$0xff]
        %v4435 = vld [vmem:[#allocation10 + $0x2f0] sm:$0xff]
        %v4436 = vld [vmem:[#allocation10 + $0x2f8] sm:$0xff]
        %v4437 = vld [vmem:[#allocation10 + $0x300] sm:$0xff]
        %v4438 = vld [vmem:[#allocation10 + $0x308] sm:$0xff]
        %v4439 = vld [vmem:[#allocation10 + $0x310] sm:$0xff]
        %v4440 = vld [vmem:[#allocation10 + $0x318] sm:$0xff]
        %v4441 = vld [vmem:[#allocation10 + $0x320] sm:$0xff]
        %v4442 = vld [vmem:[#allocation10 + $0x328] sm:$0xff]
        %v4443 = vld [vmem:[#allocation10 + $0x330] sm:$0xff]
        %v4444 = vld [vmem:[#allocation10 + $0x338] sm:$0xff]
        %v4445 = vld [vmem:[#allocation10 + $0x340] sm:$0xff]
        %v4446 = vld [vmem:[#allocation10 + $0x348] sm:$0xff]
        %v4447 = vld [vmem:[#allocation10 + $0x350] sm:$0xff]
        %v4448 = vld [vmem:[#allocation10 + $0x358] sm:$0xff]
        %v4449 = vld [vmem:[#allocation10 + $0x360] sm:$0xff]
        %v4450 = vld [vmem:[#allocation10 + $0x368] sm:$0xff]
        %v4451 = vld [vmem:[#allocation10 + $0x370] sm:$0xff]
        %v4452 = vld [vmem:[#allocation10 + $0x378] sm:$0xff]
        %v4453 = vld [vmem:[#allocation10 + $0x380] sm:$0xff]
        %v4454 = vld [vmem:[#allocation10 + $0x388] sm:$0xff]
        %v4455 = vld [vmem:[#allocation10 + $0x390] sm:$0xff]
        %v4456 = vld [vmem:[#allocation10 + $0x398] sm:$0xff]
        %v4457 = vld [vmem:[#allocation10 + $0x3a0] sm:$0xff]
        %v4458 = vld [vmem:[#allocation10 + $0x3a8] sm:$0xff]
        %v4459 = vld [vmem:[#allocation10 + $0x3b0] sm:$0xff]
        %v4460 = vld [vmem:[#allocation10 + $0x3b8] sm:$0xff]
        %v4461 = vld [vmem:[#allocation10 + $0x3c0] sm:$0xff]
        %v4462 = vld [vmem:[#allocation10 + $0x3c8] sm:$0xff]
        %v4463 = vld [vmem:[#allocation10 + $0x3d0] sm:$0xff]
        %v4464 = vld [vmem:[#allocation10 + $0x3d8] sm:$0xff]
        %v4465 = vld [vmem:[#allocation10 + $0x3e0] sm:$0xff]
        %v4466 = vld [vmem:[#allocation10 + $0x3e8] sm:$0xff]
        %v4467 = vld [vmem:[#allocation10 + $0x3f0] sm:$0xff]
        %v4468 = vld [vmem:[#allocation10 + $0x3f8] sm:$0xff]
        %v4469 = vld [vmem:[#allocation10 + $0x400] sm:$0xff]
        %v4470 = vld [vmem:[#allocation10 + $0x408] sm:$0xff]
        %v4471 = vld [vmem:[#allocation10 + $0x410] sm:$0xff]
        %v4472 = vld [vmem:[#allocation10 + $0x418] sm:$0xff]
        %v4473 = vld [vmem:[#allocation10 + $0x420] sm:$0xff]
        %v4474 = vld [vmem:[#allocation10 + $0x428] sm:$0xff]
        %v4475 = vld [vmem:[#allocation10 + $0x430] sm:$0xff]
        %v4476 = vld [vmem:[#allocation10 + $0x438] sm:$0xff]
        %v4477 = vld [vmem:[#allocation10 + $0x440] sm:$0xff]
        %v4478 = vld [vmem:[#allocation10 + $0x448] sm:$0xff]
        %v4479 = vld [vmem:[#allocation10 + $0x450] sm:$0xff]
        %v4480 = vld [vmem:[#allocation10 + $0x458] sm:$0xff]
        %v4481 = vld [vmem:[#allocation10 + $0x460] sm:$0xff]
        %v4482 = vld [vmem:[#allocation10 + $0x468] sm:$0xff]
        %v4483 = vld [vmem:[#allocation10 + $0x470] sm:$0xff]
        %v4484 = vld [vmem:[#allocation10 + $0x478] sm:$0xff]
        %v4485 = vld [vmem:[#allocation10 + $0x480] sm:$0xff]
        %v4486 = vld [vmem:[#allocation10 + $0x488] sm:$0xff]
        %v4487 = vld [vmem:[#allocation10 + $0x490] sm:$0xff]
        %v4488 = vld [vmem:[#allocation10 + $0x498] sm:$0xff]
        %v4489 = vld [vmem:[#allocation10 + $0x4a0] sm:$0xff]
        %v4490 = vld [vmem:[#allocation10 + $0x4a8] sm:$0xff]
        %v4491 = vld [vmem:[#allocation10 + $0x4b0] sm:$0xff]
        %v4492 = vld [vmem:[#allocation10 + $0x4b8] sm:$0xff]
        %v4493 = vld [vmem:[#allocation10 + $0x4c0] sm:$0xff]
        %v4494 = vld [vmem:[#allocation10 + $0x4c8] sm:$0xff]
        %v4495 = vld [vmem:[#allocation10 + $0x4d0] sm:$0xff]
        %v4496 = vld [vmem:[#allocation10 + $0x4d8] sm:$0xff]
        %v4497 = vld [vmem:[#allocation10 + $0x4e0] sm:$0xff]
        %v4498 = vld [vmem:[#allocation10 + $0x4e8] sm:$0xff]
        %v4499 = vld [vmem:[#allocation10 + $0x4f0] sm:$0xff]
        %v4500 = vld [vmem:[#allocation10 + $0x4f8] sm:$0xff]
        %v4501 = vld [vmem:[#allocation10 + $0x500] sm:$0xff]
        %v4502 = vld [vmem:[#allocation10 + $0x508] sm:$0xff]
        %v4503 = vld [vmem:[#allocation10 + $0x510] sm:$0xff]
        %v4504 = vld [vmem:[#allocation10 + $0x518] sm:$0xff]
        %v4505 = vld [vmem:[#allocation10 + $0x520] sm:$0xff]
        %v4506 = vld [vmem:[#allocation10 + $0x528] sm:$0xff]
        %v4507 = vld [vmem:[#allocation10 + $0x530] sm:$0xff]
        %v4508 = vld [vmem:[#allocation10 + $0x538] sm:$0xff]
        %v4509 = vld [vmem:[#allocation10 + $0x540] sm:$0xff]
        %v4510 = vld [vmem:[#allocation10 + $0x548] sm:$0xff]
        %v4511 = vld [vmem:[#allocation10 + $0x550] sm:$0xff]
        %v4512 = vld [vmem:[#allocation10 + $0x558] sm:$0xff]
        %v4513 = vld [vmem:[#allocation10 + $0x560] sm:$0xff]
        %v4514 = vld [vmem:[#allocation10 + $0x568] sm:$0xff]
        %v4515 = vld [vmem:[#allocation10 + $0x570] sm:$0xff]
        %v4516 = vld [vmem:[#allocation10 + $0x578] sm:$0xff]
        %v4517 = vld [vmem:[#allocation10 + $0x580] sm:$0xff]
        %v4518 = vld [vmem:[#allocation10 + $0x588] sm:$0xff]
        %v4519 = vld [vmem:[#allocation10 + $0x590] sm:$0xff]
        %v4520 = vld [vmem:[#allocation10 + $0x598] sm:$0xff]
        %v4521 = vld [vmem:[#allocation10 + $0x5a0] sm:$0xff]
        %v4522 = vld [vmem:[#allocation10 + $0x5a8] sm:$0xff]
        %v4523 = vld [vmem:[#allocation10 + $0x5b0] sm:$0xff]
        %v4524 = vld [vmem:[#allocation10 + $0x5b8] sm:$0xff]
        %v4525 = vld [vmem:[#allocation10 + $0x5c0] sm:$0xff]
        %v4526 = vld [vmem:[#allocation10 + $0x5c8] sm:$0xff]
        %v4527 = vld [vmem:[#allocation10 + $0x5d0] sm:$0xff]
        %v4528 = vld [vmem:[#allocation10 + $0x5d8] sm:$0xff]
        %v4529 = vld [vmem:[#allocation10 + $0x5e0] sm:$0xff]
        %v4530 = vld [vmem:[#allocation10 + $0x5e8] sm:$0xff]
        %v4531 = vld [vmem:[#allocation10 + $0x5f0] sm:$0xff]
        %v4532 = vld [vmem:[#allocation10 + $0x5f8] sm:$0xff]
        %v4533 = vld [vmem:[#allocation10 + $0x600] sm:$0xff]
        %v4534 = vld [vmem:[#allocation10 + $0x608] sm:$0xff]
        %v4535 = vld [vmem:[#allocation10 + $0x610] sm:$0xff]
        %v4536 = vld [vmem:[#allocation10 + $0x618] sm:$0xff]
        %v4537 = vld [vmem:[#allocation10 + $0x620] sm:$0xff]
        %v4538 = vld [vmem:[#allocation10 + $0x628] sm:$0xff]
        %v4539 = vld [vmem:[#allocation10 + $0x630] sm:$0xff]
        %v4540 = vld [vmem:[#allocation10 + $0x638] sm:$0xff]
        %v4541 = vld [vmem:[#allocation10 + $0x640] sm:$0xff]
        %v4542 = vld [vmem:[#allocation10 + $0x648] sm:$0xff]
        %v4543 = vld [vmem:[#allocation10 + $0x650] sm:$0xff]
        %v4544 = vld [vmem:[#allocation10 + $0x658] sm:$0xff]
        %v4545 = vld [vmem:[#allocation10 + $0x660] sm:$0xff]
        %v4546 = vld [vmem:[#allocation10 + $0x668] sm:$0xff]
        %v4547 = vld [vmem:[#allocation10 + $0x670] sm:$0xff]
        %v4548 = vld [vmem:[#allocation10 + $0x678] sm:$0xff]
        %v4549 = vld [vmem:[#allocation10 + $0x680] sm:$0xff]
        %v4550 = vld [vmem:[#allocation10 + $0x688] sm:$0xff]
        %v4551 = vld [vmem:[#allocation10 + $0x690] sm:$0xff]
        %v4552 = vld [vmem:[#allocation10 + $0x698] sm:$0xff]
        %v4553 = vld [vmem:[#allocation10 + $0x6a0] sm:$0xff]
        %v4554 = vld [vmem:[#allocation10 + $0x6a8] sm:$0xff]
        %v4555 = vld [vmem:[#allocation10 + $0x6b0] sm:$0xff]
        %v4556 = vld [vmem:[#allocation10 + $0x6b8] sm:$0xff]
        %v4557 = vld [vmem:[#allocation10 + $0x6c0] sm:$0xff]
        %v4558 = vld [vmem:[#allocation10 + $0x6c8] sm:$0xff]
        %v4559 = vld [vmem:[#allocation10 + $0x6d0] sm:$0xff]
        %v4560 = vld [vmem:[#allocation10 + $0x6d8] sm:$0xff]
        %v4561 = vld [vmem:[#allocation10 + $0x6e0] sm:$0xff]
        %v4562 = vld [vmem:[#allocation10 + $0x6e8] sm:$0xff]
        %v4563 = vld [vmem:[#allocation10 + $0x6f0] sm:$0xff]
        %v4564 = vld [vmem:[#allocation10 + $0x6f8] sm:$0xff]
        %v4565 = vld [vmem:[#allocation10 + $0x700] sm:$0xff]
        %v4566 = vld [vmem:[#allocation10 + $0x708] sm:$0xff]
        %v4567 = vld [vmem:[#allocation10 + $0x710] sm:$0xff]
        %v4568 = vld [vmem:[#allocation10 + $0x718] sm:$0xff]
        %v4569 = vld [vmem:[#allocation10 + $0x720] sm:$0xff]
        %v4570 = vld [vmem:[#allocation10 + $0x728] sm:$0xff]
        %v4571 = vld [vmem:[#allocation10 + $0x730] sm:$0xff]
        %v4572 = vld [vmem:[#allocation10 + $0x738] sm:$0xff]
        %v4573 = vld [vmem:[#allocation10 + $0x740] sm:$0xff]
        %v4574 = vld [vmem:[#allocation10 + $0x748] sm:$0xff]
        %v4575 = vld [vmem:[#allocation10 + $0x750] sm:$0xff]
        %v4576 = vld [vmem:[#allocation10 + $0x758] sm:$0xff]
        %v4577 = vld [vmem:[#allocation10 + $0x760] sm:$0xff]
        %v4578 = vld [vmem:[#allocation10 + $0x768] sm:$0xff]
        %v4579 = vld [vmem:[#allocation10 + $0x770] sm:$0xff]
        %v4580 = vld [vmem:[#allocation10 + $0x778] sm:$0xff]
        %v4581 = vld [vmem:[#allocation10 + $0x780] sm:$0xff]
        %v4582 = vld [vmem:[#allocation10 + $0x788] sm:$0xff]
        %v4583 = vld [vmem:[#allocation10 + $0x790] sm:$0xff]
        %v4584 = vld [vmem:[#allocation10 + $0x798] sm:$0xff]
        %v4585 = vld [vmem:[#allocation10 + $0x7a0] sm:$0xff]
        %v4586 = vld [vmem:[#allocation10 + $0x7a8] sm:$0xff]
        %v4587 = vld [vmem:[#allocation10 + $0x7b0] sm:$0xff]
        %v4588 = vld [vmem:[#allocation10 + $0x7b8] sm:$0xff]
        %v4589 = vld [vmem:[#allocation10 + $0x7c0] sm:$0xff]
        %v4590 = vld [vmem:[#allocation10 + $0x7c8] sm:$0xff]
        %v4591 = vld [vmem:[#allocation10 + $0x7d0] sm:$0xff]
        %v4592 = vld [vmem:[#allocation10 + $0x7d8] sm:$0xff]
        %v4593 = vld [vmem:[#allocation10 + $0x7e0] sm:$0xff]
        %v4594 = vld [vmem:[#allocation10 + $0x7e8] sm:$0xff]
        %v4595 = vld [vmem:[#allocation10 + $0x7f0] sm:$0xff]
        %v4596 = vld [vmem:[#allocation10 + $0x7f8] sm:$0xff]
        %4597 = vmatpush.msra.mxu0 %v2851
        %4598 = vmatpush.msra.mxu0 %v2848
        %4599 = vmatpush.msra.mxu0 %v2845
        %4600 = vmatpush.msra.mxu0 %v2842
        %4601 = vmatpush.msra.mxu0 %v2839
        %4602 = vmatpush.msra.mxu0 %v2836
        %4603 = vmatpush.msra.mxu0 %v2833
        %4604 = vmatpush.msra.mxu0 %v2830
        %4605 = vmatpush.msra.mxu0 %v2827
        %4606 = vmatpush.msra.mxu0 %v2824
        %4607 = vmatpush.msra.mxu0 %v2821
        %4608 = vmatpush.msra.mxu0 %v2818
        %4609 = vmatpush.msra.mxu0 %v2815
        %4610 = vmatpush.msra.mxu0 %v2812
        %4611 = vmatpush.msra.mxu0 %v2809
        %4612 = vmatpush.msra.mxu0 %v2806
        %4613 = vmatmul.f32.gmra.mxu0 %v4341
        %v4614 = vpop.f32.mrf.mxu0
        %v4615 = vadd.f32 0.0, %v4614
        %4616 = vmatmul.f32.gmra.mxu0 %v4373
        %v4617 = vpop.f32.mrf.mxu0
        %v4618 = vadd.f32 0.0, %v4617
        %4619 = vmatmul.f32.gmra.mxu0 %v4405
        %v4620 = vpop.f32.mrf.mxu0
        %v4621 = vadd.f32 0.0, %v4620
        %4622 = vmatmul.f32.gmra.mxu0 %v4437
        %v4623 = vpop.f32.mrf.mxu0
        %v4624 = vadd.f32 0.0, %v4623
        %4625 = vmatmul.f32.gmra.mxu0 %v4469
        %v4626 = vpop.f32.mrf.mxu0
        %v4627 = vadd.f32 0.0, %v4626
        %4628 = vmatmul.f32.gmra.mxu0 %v4501
        %v4629 = vpop.f32.mrf.mxu0
        %v4630 = vadd.f32 0.0, %v4629
        %4631 = vmatmul.f32.gmra.mxu0 %v4533
        %v4632 = vpop.f32.mrf.mxu0
        %v4633 = vadd.f32 0.0, %v4632
        %4634 = vmatmul.f32.gmra.mxu0 %v4565
        %v4635 = vpop.f32.mrf.mxu0
        %v4636 = vadd.f32 0.0, %v4635
        %4637 = vdwg.mxu0
        %4638 = vmatpush.msra.mxu0 %v2899
        %4639 = vmatpush.msra.mxu0 %v2896
        %4640 = vmatpush.msra.mxu0 %v2893
        %4641 = vmatpush.msra.mxu0 %v2890
        %4642 = vmatpush.msra.mxu0 %v2887
        %4643 = vmatpush.msra.mxu0 %v2884
        %4644 = vmatpush.msra.mxu0 %v2881
        %4645 = vmatpush.msra.mxu0 %v2878
        %4646 = vmatpush.msra.mxu0 %v2875
        %4647 = vmatpush.msra.mxu0 %v2872
        %4648 = vmatpush.msra.mxu0 %v2869
        %4649 = vmatpush.msra.mxu0 %v2866
        %4650 = vmatpush.msra.mxu0 %v2863
        %4651 = vmatpush.msra.mxu0 %v2860
        %4652 = vmatpush.msra.mxu0 %v2857
        %4653 = vmatpush.msra.mxu0 %v2854
        %4654 = vmatmul.f32.gmra.mxu0 %v4342
        %v4655 = vpop.f32.mrf.mxu0
        %v4656 = vadd.f32 %v4615, %v4655
        %4657 = vmatmul.f32.gmra.mxu0 %v4374
        %v4658 = vpop.f32.mrf.mxu0
        %v4659 = vadd.f32 %v4618, %v4658
        %4660 = vmatmul.f32.gmra.mxu0 %v4406
        %v4661 = vpop.f32.mrf.mxu0
        %v4662 = vadd.f32 %v4621, %v4661
        %4663 = vmatmul.f32.gmra.mxu0 %v4438
        %v4664 = vpop.f32.mrf.mxu0
        %v4665 = vadd.f32 %v4624, %v4664
        %4666 = vmatmul.f32.gmra.mxu0 %v4470
        %v4667 = vpop.f32.mrf.mxu0
        %v4668 = vadd.f32 %v4627, %v4667
        %4669 = vmatmul.f32.gmra.mxu0 %v4502
        %v4670 = vpop.f32.mrf.mxu0
        %v4671 = vadd.f32 %v4630, %v4670
        %4672 = vmatmul.f32.gmra.mxu0 %v4534
        %v4673 = vpop.f32.mrf.mxu0
        %v4674 = vadd.f32 %v4633, %v4673
        %4675 = vmatmul.f32.gmra.mxu0 %v4566
        %v4676 = vpop.f32.mrf.mxu0
        %v4677 = vadd.f32 %v4636, %v4676
        %4678 = vdwg.mxu0
        %4679 = vmatpush.msra.mxu0 %v2947
        %4680 = vmatpush.msra.mxu0 %v2944
        %4681 = vmatpush.msra.mxu0 %v2941
        %4682 = vmatpush.msra.mxu0 %v2938
        %4683 = vmatpush.msra.mxu0 %v2935
        %4684 = vmatpush.msra.mxu0 %v2932
        %4685 = vmatpush.msra.mxu0 %v2929
        %4686 = vmatpush.msra.mxu0 %v2926
        %4687 = vmatpush.msra.mxu0 %v2923
        %4688 = vmatpush.msra.mxu0 %v2920
        %4689 = vmatpush.msra.mxu0 %v2917
        %4690 = vmatpush.msra.mxu0 %v2914
        %4691 = vmatpush.msra.mxu0 %v2911
        %4692 = vmatpush.msra.mxu0 %v2908
        %4693 = vmatpush.msra.mxu0 %v2905
        %4694 = vmatpush.msra.mxu0 %v2902
        %4695 = vmatmul.f32.gmra.mxu0 %v4343
        %v4696 = vpop.f32.mrf.mxu0
        %v4697 = vadd.f32 %v4656, %v4696
        %4698 = vmatmul.f32.gmra.mxu0 %v4375
        %v4699 = vpop.f32.mrf.mxu0
        %v4700 = vadd.f32 %v4659, %v4699
        %4701 = vmatmul.f32.gmra.mxu0 %v4407
        %v4702 = vpop.f32.mrf.mxu0
        %v4703 = vadd.f32 %v4662, %v4702
        %4704 = vmatmul.f32.gmra.mxu0 %v4439
        %v4705 = vpop.f32.mrf.mxu0
        %v4706 = vadd.f32 %v4665, %v4705
        %4707 = vmatmul.f32.gmra.mxu0 %v4471
        %v4708 = vpop.f32.mrf.mxu0
        %v4709 = vadd.f32 %v4668, %v4708
        %4710 = vmatmul.f32.gmra.mxu0 %v4503
        %v4711 = vpop.f32.mrf.mxu0
        %v4712 = vadd.f32 %v4671, %v4711
        %4713 = vmatmul.f32.gmra.mxu0 %v4535
        %v4714 = vpop.f32.mrf.mxu0
        %v4715 = vadd.f32 %v4674, %v4714
        %4716 = vmatmul.f32.gmra.mxu0 %v4567
        %v4717 = vpop.f32.mrf.mxu0
        %v4718 = vadd.f32 %v4677, %v4717
        %4719 = vdwg.mxu0
        %4720 = vmatpush.msra.mxu0 %v2995
        %4721 = vmatpush.msra.mxu0 %v2992
        %4722 = vmatpush.msra.mxu0 %v2989
        %4723 = vmatpush.msra.mxu0 %v2986
        %4724 = vmatpush.msra.mxu0 %v2983
        %4725 = vmatpush.msra.mxu0 %v2980
        %4726 = vmatpush.msra.mxu0 %v2977
        %4727 = vmatpush.msra.mxu0 %v2974
        %4728 = vmatpush.msra.mxu0 %v2971
        %4729 = vmatpush.msra.mxu0 %v2968
        %4730 = vmatpush.msra.mxu0 %v2965
        %4731 = vmatpush.msra.mxu0 %v2962
        %4732 = vmatpush.msra.mxu0 %v2959
        %4733 = vmatpush.msra.mxu0 %v2956
        %4734 = vmatpush.msra.mxu0 %v2953
        %4735 = vmatpush.msra.mxu0 %v2950
        %4736 = vmatmul.f32.gmra.mxu0 %v4344
        %v4737 = vpop.f32.mrf.mxu0
        %v4738 = vadd.f32 %v4697, %v4737
        %4739 = vmatmul.f32.gmra.mxu0 %v4376
        %v4740 = vpop.f32.mrf.mxu0
        %v4741 = vadd.f32 %v4700, %v4740
        %4742 = vmatmul.f32.gmra.mxu0 %v4408
        %v4743 = vpop.f32.mrf.mxu0
        %v4744 = vadd.f32 %v4703, %v4743
        %4745 = vmatmul.f32.gmra.mxu0 %v4440
        %v4746 = vpop.f32.mrf.mxu0
        %v4747 = vadd.f32 %v4706, %v4746
        %4748 = vmatmul.f32.gmra.mxu0 %v4472
        %v4749 = vpop.f32.mrf.mxu0
        %v4750 = vadd.f32 %v4709, %v4749
        %4751 = vmatmul.f32.gmra.mxu0 %v4504
        %v4752 = vpop.f32.mrf.mxu0
        %v4753 = vadd.f32 %v4712, %v4752
        %4754 = vmatmul.f32.gmra.mxu0 %v4536
        %v4755 = vpop.f32.mrf.mxu0
        %v4756 = vadd.f32 %v4715, %v4755
        %4757 = vmatmul.f32.gmra.mxu0 %v4568
        %v4758 = vpop.f32.mrf.mxu0
        %v4759 = vadd.f32 %v4718, %v4758
        %4760 = vdwg.mxu0
        %4761 = vmatpush.msra.mxu0 %v3043
        %4762 = vmatpush.msra.mxu0 %v3040
        %4763 = vmatpush.msra.mxu0 %v3037
        %4764 = vmatpush.msra.mxu0 %v3034
        %4765 = vmatpush.msra.mxu0 %v3031
        %4766 = vmatpush.msra.mxu0 %v3028
        %4767 = vmatpush.msra.mxu0 %v3025
        %4768 = vmatpush.msra.mxu0 %v3022
        %4769 = vmatpush.msra.mxu0 %v3019
        %4770 = vmatpush.msra.mxu0 %v3016
        %4771 = vmatpush.msra.mxu0 %v3013
        %4772 = vmatpush.msra.mxu0 %v3010
        %4773 = vmatpush.msra.mxu0 %v3007
        %4774 = vmatpush.msra.mxu0 %v3004
        %4775 = vmatpush.msra.mxu0 %v3001
        %4776 = vmatpush.msra.mxu0 %v2998
        %4777 = vmatmul.f32.gmra.mxu0 %v4345
        %v4778 = vpop.f32.mrf.mxu0
        %v4779 = vadd.f32 %v4738, %v4778
        %4780 = vmatmul.f32.gmra.mxu0 %v4377
        %v4781 = vpop.f32.mrf.mxu0
        %v4782 = vadd.f32 %v4741, %v4781
        %4783 = vmatmul.f32.gmra.mxu0 %v4409
        %v4784 = vpop.f32.mrf.mxu0
        %v4785 = vadd.f32 %v4744, %v4784
        %4786 = vmatmul.f32.gmra.mxu0 %v4441
        %v4787 = vpop.f32.mrf.mxu0
        %v4788 = vadd.f32 %v4747, %v4787
        %4789 = vmatmul.f32.gmra.mxu0 %v4473
        %v4790 = vpop.f32.mrf.mxu0
        %v4791 = vadd.f32 %v4750, %v4790
        %4792 = vmatmul.f32.gmra.mxu0 %v4505
        %v4793 = vpop.f32.mrf.mxu0
        %v4794 = vadd.f32 %v4753, %v4793
        %4795 = vmatmul.f32.gmra.mxu0 %v4537
        %v4796 = vpop.f32.mrf.mxu0
        %v4797 = vadd.f32 %v4756, %v4796
        %4798 = vmatmul.f32.gmra.mxu0 %v4569
        %v4799 = vpop.f32.mrf.mxu0
        %v4800 = vadd.f32 %v4759, %v4799
        %4801 = vdwg.mxu0
        %4802 = vmatpush.msra.mxu0 %v3091
        %4803 = vmatpush.msra.mxu0 %v3088
        %4804 = vmatpush.msra.mxu0 %v3085
        %4805 = vmatpush.msra.mxu0 %v3082
        %4806 = vmatpush.msra.mxu0 %v3079
        %4807 = vmatpush.msra.mxu0 %v3076
        %4808 = vmatpush.msra.mxu0 %v3073
        %4809 = vmatpush.msra.mxu0 %v3070
        %4810 = vmatpush.msra.mxu0 %v3067
        %4811 = vmatpush.msra.mxu0 %v3064
        %4812 = vmatpush.msra.mxu0 %v3061
        %4813 = vmatpush.msra.mxu0 %v3058
        %4814 = vmatpush.msra.mxu0 %v3055
        %4815 = vmatpush.msra.mxu0 %v3052
        %4816 = vmatpush.msra.mxu0 %v3049
        %4817 = vmatpush.msra.mxu0 %v3046
        %4818 = vmatmul.f32.gmra.mxu0 %v4346
        %v4819 = vpop.f32.mrf.mxu0
        %v4820 = vadd.f32 %v4779, %v4819
        %4821 = vmatmul.f32.gmra.mxu0 %v4378
        %v4822 = vpop.f32.mrf.mxu0
        %v4823 = vadd.f32 %v4782, %v4822
        %4824 = vmatmul.f32.gmra.mxu0 %v4410
        %v4825 = vpop.f32.mrf.mxu0
        %v4826 = vadd.f32 %v4785, %v4825
        %4827 = vmatmul.f32.gmra.mxu0 %v4442
        %v4828 = vpop.f32.mrf.mxu0
        %v4829 = vadd.f32 %v4788, %v4828
        %4830 = vmatmul.f32.gmra.mxu0 %v4474
        %v4831 = vpop.f32.mrf.mxu0
        %v4832 = vadd.f32 %v4791, %v4831
        %4833 = vmatmul.f32.gmra.mxu0 %v4506
        %v4834 = vpop.f32.mrf.mxu0
        %v4835 = vadd.f32 %v4794, %v4834
        %4836 = vmatmul.f32.gmra.mxu0 %v4538
        %v4837 = vpop.f32.mrf.mxu0
        %v4838 = vadd.f32 %v4797, %v4837
        %4839 = vmatmul.f32.gmra.mxu0 %v4570
        %v4840 = vpop.f32.mrf.mxu0
        %v4841 = vadd.f32 %v4800, %v4840
        %4842 = vdwg.mxu0
        %4843 = vmatpush.msra.mxu0 %v3139
        %4844 = vmatpush.msra.mxu0 %v3136
        %4845 = vmatpush.msra.mxu0 %v3133
        %4846 = vmatpush.msra.mxu0 %v3130
        %4847 = vmatpush.msra.mxu0 %v3127
        %4848 = vmatpush.msra.mxu0 %v3124
        %4849 = vmatpush.msra.mxu0 %v3121
        %4850 = vmatpush.msra.mxu0 %v3118
        %4851 = vmatpush.msra.mxu0 %v3115
        %4852 = vmatpush.msra.mxu0 %v3112
        %4853 = vmatpush.msra.mxu0 %v3109
        %4854 = vmatpush.msra.mxu0 %v3106
        %4855 = vmatpush.msra.mxu0 %v3103
        %4856 = vmatpush.msra.mxu0 %v3100
        %4857 = vmatpush.msra.mxu0 %v3097
        %4858 = vmatpush.msra.mxu0 %v3094
        %4859 = vmatmul.f32.gmra.mxu0 %v4347
        %v4860 = vpop.f32.mrf.mxu0
        %v4861 = vadd.f32 %v4820, %v4860
        %4862 = vmatmul.f32.gmra.mxu0 %v4379
        %v4863 = vpop.f32.mrf.mxu0
        %v4864 = vadd.f32 %v4823, %v4863
        %4865 = vmatmul.f32.gmra.mxu0 %v4411
        %v4866 = vpop.f32.mrf.mxu0
        %v4867 = vadd.f32 %v4826, %v4866
        %4868 = vmatmul.f32.gmra.mxu0 %v4443
        %v4869 = vpop.f32.mrf.mxu0
        %v4870 = vadd.f32 %v4829, %v4869
        %4871 = vmatmul.f32.gmra.mxu0 %v4475
        %v4872 = vpop.f32.mrf.mxu0
        %v4873 = vadd.f32 %v4832, %v4872
        %4874 = vmatmul.f32.gmra.mxu0 %v4507
        %v4875 = vpop.f32.mrf.mxu0
        %v4876 = vadd.f32 %v4835, %v4875
        %4877 = vmatmul.f32.gmra.mxu0 %v4539
        %v4878 = vpop.f32.mrf.mxu0
        %v4879 = vadd.f32 %v4838, %v4878
        %4880 = vmatmul.f32.gmra.mxu0 %v4571
        %v4881 = vpop.f32.mrf.mxu0
        %v4882 = vadd.f32 %v4841, %v4881
        %4883 = vdwg.mxu0
        %4884 = vmatpush.msra.mxu0 %v3187
        %4885 = vmatpush.msra.mxu0 %v3184
        %4886 = vmatpush.msra.mxu0 %v3181
        %4887 = vmatpush.msra.mxu0 %v3178
        %4888 = vmatpush.msra.mxu0 %v3175
        %4889 = vmatpush.msra.mxu0 %v3172
        %4890 = vmatpush.msra.mxu0 %v3169
        %4891 = vmatpush.msra.mxu0 %v3166
        %4892 = vmatpush.msra.mxu0 %v3163
        %4893 = vmatpush.msra.mxu0 %v3160
        %4894 = vmatpush.msra.mxu0 %v3157
        %4895 = vmatpush.msra.mxu0 %v3154
        %4896 = vmatpush.msra.mxu0 %v3151
        %4897 = vmatpush.msra.mxu0 %v3148
        %4898 = vmatpush.msra.mxu0 %v3145
        %4899 = vmatpush.msra.mxu0 %v3142
        %4900 = vmatmul.f32.gmra.mxu0 %v4348
        %v4901 = vpop.f32.mrf.mxu0
        %v4902 = vadd.f32 %v4861, %v4901
        %4903 = vmatmul.f32.gmra.mxu0 %v4380
        %v4904 = vpop.f32.mrf.mxu0
        %v4905 = vadd.f32 %v4864, %v4904
        %4906 = vmatmul.f32.gmra.mxu0 %v4412
        %v4907 = vpop.f32.mrf.mxu0
        %v4908 = vadd.f32 %v4867, %v4907
        %4909 = vmatmul.f32.gmra.mxu0 %v4444
        %v4910 = vpop.f32.mrf.mxu0
        %v4911 = vadd.f32 %v4870, %v4910
        %4912 = vmatmul.f32.gmra.mxu0 %v4476
        %v4913 = vpop.f32.mrf.mxu0
        %v4914 = vadd.f32 %v4873, %v4913
        %4915 = vmatmul.f32.gmra.mxu0 %v4508
        %v4916 = vpop.f32.mrf.mxu0
        %v4917 = vadd.f32 %v4876, %v4916
        %4918 = vmatmul.f32.gmra.mxu0 %v4540
        %v4919 = vpop.f32.mrf.mxu0
        %v4920 = vadd.f32 %v4879, %v4919
        %4921 = vmatmul.f32.gmra.mxu0 %v4572
        %v4922 = vpop.f32.mrf.mxu0
        %v4923 = vadd.f32 %v4882, %v4922
        %4924 = vdwg.mxu0
        %4925 = vmatpush.msra.mxu0 %v3235
        %4926 = vmatpush.msra.mxu0 %v3232
        %4927 = vmatpush.msra.mxu0 %v3229
        %4928 = vmatpush.msra.mxu0 %v3226
        %4929 = vmatpush.msra.mxu0 %v3223
        %4930 = vmatpush.msra.mxu0 %v3220
        %4931 = vmatpush.msra.mxu0 %v3217
        %4932 = vmatpush.msra.mxu0 %v3214
        %4933 = vmatpush.msra.mxu0 %v3211
        %4934 = vmatpush.msra.mxu0 %v3208
        %4935 = vmatpush.msra.mxu0 %v3205
        %4936 = vmatpush.msra.mxu0 %v3202
        %4937 = vmatpush.msra.mxu0 %v3199
        %4938 = vmatpush.msra.mxu0 %v3196
        %4939 = vmatpush.msra.mxu0 %v3193
        %4940 = vmatpush.msra.mxu0 %v3190
        %4941 = vmatmul.f32.gmra.mxu0 %v4349
        %v4942 = vpop.f32.mrf.mxu0
        %v4943 = vadd.f32 %v4902, %v4942
        %4944 = vmatmul.f32.gmra.mxu0 %v4381
        %v4945 = vpop.f32.mrf.mxu0
        %v4946 = vadd.f32 %v4905, %v4945
        %4947 = vmatmul.f32.gmra.mxu0 %v4413
        %v4948 = vpop.f32.mrf.mxu0
        %v4949 = vadd.f32 %v4908, %v4948
        %4950 = vmatmul.f32.gmra.mxu0 %v4445
        %v4951 = vpop.f32.mrf.mxu0
        %v4952 = vadd.f32 %v4911, %v4951
        %4953 = vmatmul.f32.gmra.mxu0 %v4477
        %v4954 = vpop.f32.mrf.mxu0
        %v4955 = vadd.f32 %v4914, %v4954
        %4956 = vmatmul.f32.gmra.mxu0 %v4509
        %v4957 = vpop.f32.mrf.mxu0
        %v4958 = vadd.f32 %v4917, %v4957
        %4959 = vmatmul.f32.gmra.mxu0 %v4541
        %v4960 = vpop.f32.mrf.mxu0
        %v4961 = vadd.f32 %v4920, %v4960
        %4962 = vmatmul.f32.gmra.mxu0 %v4573
        %v4963 = vpop.f32.mrf.mxu0
        %v4964 = vadd.f32 %v4923, %v4963
        %4965 = vdwg.mxu0
        %4966 = vmatpush.msra.mxu0 %v3283
        %4967 = vmatpush.msra.mxu0 %v3280
        %4968 = vmatpush.msra.mxu0 %v3277
        %4969 = vmatpush.msra.mxu0 %v3274
        %4970 = vmatpush.msra.mxu0 %v3271
        %4971 = vmatpush.msra.mxu0 %v3268
        %4972 = vmatpush.msra.mxu0 %v3265
        %4973 = vmatpush.msra.mxu0 %v3262
        %4974 = vmatpush.msra.mxu0 %v3259
        %4975 = vmatpush.msra.mxu0 %v3256
        %4976 = vmatpush.msra.mxu0 %v3253
        %4977 = vmatpush.msra.mxu0 %v3250
        %4978 = vmatpush.msra.mxu0 %v3247
        %4979 = vmatpush.msra.mxu0 %v3244
        %4980 = vmatpush.msra.mxu0 %v3241
        %4981 = vmatpush.msra.mxu0 %v3238
        %4982 = vmatmul.f32.gmra.mxu0 %v4350
        %v4983 = vpop.f32.mrf.mxu0
        %v4984 = vadd.f32 %v4943, %v4983
        %4985 = vmatmul.f32.gmra.mxu0 %v4382
        %v4986 = vpop.f32.mrf.mxu0
        %v4987 = vadd.f32 %v4946, %v4986
        %4988 = vmatmul.f32.gmra.mxu0 %v4414
        %v4989 = vpop.f32.mrf.mxu0
        %v4990 = vadd.f32 %v4949, %v4989
        %4991 = vmatmul.f32.gmra.mxu0 %v4446
        %v4992 = vpop.f32.mrf.mxu0
        %v4993 = vadd.f32 %v4952, %v4992
        %4994 = vmatmul.f32.gmra.mxu0 %v4478
        %v4995 = vpop.f32.mrf.mxu0
        %v4996 = vadd.f32 %v4955, %v4995
        %4997 = vmatmul.f32.gmra.mxu0 %v4510
        %v4998 = vpop.f32.mrf.mxu0
        %v4999 = vadd.f32 %v4958, %v4998
        %5000 = vmatmul.f32.gmra.mxu0 %v4542
        %v5001 = vpop.f32.mrf.mxu0
        %v5002 = vadd.f32 %v4961, %v5001
        %5003 = vmatmul.f32.gmra.mxu0 %v4574
        %v5004 = vpop.f32.mrf.mxu0
        %v5005 = vadd.f32 %v4964, %v5004
        %5006 = vdwg.mxu0
        %5007 = vmatpush.msra.mxu0 %v3331
        %5008 = vmatpush.msra.mxu0 %v3328
        %5009 = vmatpush.msra.mxu0 %v3325
        %5010 = vmatpush.msra.mxu0 %v3322
        %5011 = vmatpush.msra.mxu0 %v3319
        %5012 = vmatpush.msra.mxu0 %v3316
        %5013 = vmatpush.msra.mxu0 %v3313
        %5014 = vmatpush.msra.mxu0 %v3310
        %5015 = vmatpush.msra.mxu0 %v3307
        %5016 = vmatpush.msra.mxu0 %v3304
        %5017 = vmatpush.msra.mxu0 %v3301
        %5018 = vmatpush.msra.mxu0 %v3298
        %5019 = vmatpush.msra.mxu0 %v3295
        %5020 = vmatpush.msra.mxu0 %v3292
        %5021 = vmatpush.msra.mxu0 %v3289
        %5022 = vmatpush.msra.mxu0 %v3286
        %5023 = vmatmul.f32.gmra.mxu0 %v4351
        %v5024 = vpop.f32.mrf.mxu0
        %v5025 = vadd.f32 %v4984, %v5024
        %5026 = vmatmul.f32.gmra.mxu0 %v4383
        %v5027 = vpop.f32.mrf.mxu0
        %v5028 = vadd.f32 %v4987, %v5027
        %5029 = vmatmul.f32.gmra.mxu0 %v4415
        %v5030 = vpop.f32.mrf.mxu0
        %v5031 = vadd.f32 %v4990, %v5030
        %5032 = vmatmul.f32.gmra.mxu0 %v4447
        %v5033 = vpop.f32.mrf.mxu0
        %v5034 = vadd.f32 %v4993, %v5033
        %5035 = vmatmul.f32.gmra.mxu0 %v4479
        %v5036 = vpop.f32.mrf.mxu0
        %v5037 = vadd.f32 %v4996, %v5036
        %5038 = vmatmul.f32.gmra.mxu0 %v4511
        %v5039 = vpop.f32.mrf.mxu0
        %v5040 = vadd.f32 %v4999, %v5039
        %5041 = vmatmul.f32.gmra.mxu0 %v4543
        %v5042 = vpop.f32.mrf.mxu0
        %v5043 = vadd.f32 %v5002, %v5042
        %5044 = vmatmul.f32.gmra.mxu0 %v4575
        %v5045 = vpop.f32.mrf.mxu0
        %v5046 = vadd.f32 %v5005, %v5045
        %5047 = vdwg.mxu0
        %5048 = vmatpush.msra.mxu0 %v3379
        %5049 = vmatpush.msra.mxu0 %v3376
        %5050 = vmatpush.msra.mxu0 %v3373
        %5051 = vmatpush.msra.mxu0 %v3370
        %5052 = vmatpush.msra.mxu0 %v3367
        %5053 = vmatpush.msra.mxu0 %v3364
        %5054 = vmatpush.msra.mxu0 %v3361
        %5055 = vmatpush.msra.mxu0 %v3358
        %5056 = vmatpush.msra.mxu0 %v3355
        %5057 = vmatpush.msra.mxu0 %v3352
        %5058 = vmatpush.msra.mxu0 %v3349
        %5059 = vmatpush.msra.mxu0 %v3346
        %5060 = vmatpush.msra.mxu0 %v3343
        %5061 = vmatpush.msra.mxu0 %v3340
        %5062 = vmatpush.msra.mxu0 %v3337
        %5063 = vmatpush.msra.mxu0 %v3334
        %5064 = vmatmul.f32.gmra.mxu0 %v4352
        %v5065 = vpop.f32.mrf.mxu0
        %v5066 = vadd.f32 %v5025, %v5065
        %5067 = vmatmul.f32.gmra.mxu0 %v4384
        %v5068 = vpop.f32.mrf.mxu0
        %v5069 = vadd.f32 %v5028, %v5068
        %5070 = vmatmul.f32.gmra.mxu0 %v4416
        %v5071 = vpop.f32.mrf.mxu0
        %v5072 = vadd.f32 %v5031, %v5071
        %5073 = vmatmul.f32.gmra.mxu0 %v4448
        %v5074 = vpop.f32.mrf.mxu0
        %v5075 = vadd.f32 %v5034, %v5074
        %5076 = vmatmul.f32.gmra.mxu0 %v4480
        %v5077 = vpop.f32.mrf.mxu0
        %v5078 = vadd.f32 %v5037, %v5077
        %5079 = vmatmul.f32.gmra.mxu0 %v4512
        %v5080 = vpop.f32.mrf.mxu0
        %v5081 = vadd.f32 %v5040, %v5080
        %5082 = vmatmul.f32.gmra.mxu0 %v4544
        %v5083 = vpop.f32.mrf.mxu0
        %v5084 = vadd.f32 %v5043, %v5083
        %5085 = vmatmul.f32.gmra.mxu0 %v4576
        %v5086 = vpop.f32.mrf.mxu0
        %v5087 = vadd.f32 %v5046, %v5086
        %5088 = vdwg.mxu0
        %5089 = vmatpush.msra.mxu0 %v3427
        %5090 = vmatpush.msra.mxu0 %v3424
        %5091 = vmatpush.msra.mxu0 %v3421
        %5092 = vmatpush.msra.mxu0 %v3418
        %5093 = vmatpush.msra.mxu0 %v3415
        %5094 = vmatpush.msra.mxu0 %v3412
        %5095 = vmatpush.msra.mxu0 %v3409
        %5096 = vmatpush.msra.mxu0 %v3406
        %5097 = vmatpush.msra.mxu0 %v3403
        %5098 = vmatpush.msra.mxu0 %v3400
        %5099 = vmatpush.msra.mxu0 %v3397
        %5100 = vmatpush.msra.mxu0 %v3394
        %5101 = vmatpush.msra.mxu0 %v3391
        %5102 = vmatpush.msra.mxu0 %v3388
        %5103 = vmatpush.msra.mxu0 %v3385
        %5104 = vmatpush.msra.mxu0 %v3382
        %5105 = vmatmul.f32.gmra.mxu0 %v4353
        %v5106 = vpop.f32.mrf.mxu0
        %v5107 = vadd.f32 %v5066, %v5106
        %5108 = vmatmul.f32.gmra.mxu0 %v4385
        %v5109 = vpop.f32.mrf.mxu0
        %v5110 = vadd.f32 %v5069, %v5109
        %5111 = vmatmul.f32.gmra.mxu0 %v4417
        %v5112 = vpop.f32.mrf.mxu0
        %v5113 = vadd.f32 %v5072, %v5112
        %5114 = vmatmul.f32.gmra.mxu0 %v4449
        %v5115 = vpop.f32.mrf.mxu0
        %v5116 = vadd.f32 %v5075, %v5115
        %5117 = vmatmul.f32.gmra.mxu0 %v4481
        %v5118 = vpop.f32.mrf.mxu0
        %v5119 = vadd.f32 %v5078, %v5118
        %5120 = vmatmul.f32.gmra.mxu0 %v4513
        %v5121 = vpop.f32.mrf.mxu0
        %v5122 = vadd.f32 %v5081, %v5121
        %5123 = vmatmul.f32.gmra.mxu0 %v4545
        %v5124 = vpop.f32.mrf.mxu0
        %v5125 = vadd.f32 %v5084, %v5124
        %5126 = vmatmul.f32.gmra.mxu0 %v4577
        %v5127 = vpop.f32.mrf.mxu0
        %v5128 = vadd.f32 %v5087, %v5127
        %5129 = vdwg.mxu0
        %5130 = vmatpush.msra.mxu0 %v3475
        %5131 = vmatpush.msra.mxu0 %v3472
        %5132 = vmatpush.msra.mxu0 %v3469
        %5133 = vmatpush.msra.mxu0 %v3466
        %5134 = vmatpush.msra.mxu0 %v3463
        %5135 = vmatpush.msra.mxu0 %v3460
        %5136 = vmatpush.msra.mxu0 %v3457
        %5137 = vmatpush.msra.mxu0 %v3454
        %5138 = vmatpush.msra.mxu0 %v3451
        %5139 = vmatpush.msra.mxu0 %v3448
        %5140 = vmatpush.msra.mxu0 %v3445
        %5141 = vmatpush.msra.mxu0 %v3442
        %5142 = vmatpush.msra.mxu0 %v3439
        %5143 = vmatpush.msra.mxu0 %v3436
        %5144 = vmatpush.msra.mxu0 %v3433
        %5145 = vmatpush.msra.mxu0 %v3430
        %5146 = vmatmul.f32.gmra.mxu0 %v4354
        %v5147 = vpop.f32.mrf.mxu0
        %v5148 = vadd.f32 %v5107, %v5147
        %5149 = vmatmul.f32.gmra.mxu0 %v4386
        %v5150 = vpop.f32.mrf.mxu0
        %v5151 = vadd.f32 %v5110, %v5150
        %5152 = vmatmul.f32.gmra.mxu0 %v4418
        %v5153 = vpop.f32.mrf.mxu0
        %v5154 = vadd.f32 %v5113, %v5153
        %5155 = vmatmul.f32.gmra.mxu0 %v4450
        %v5156 = vpop.f32.mrf.mxu0
        %v5157 = vadd.f32 %v5116, %v5156
        %5158 = vmatmul.f32.gmra.mxu0 %v4482
        %v5159 = vpop.f32.mrf.mxu0
        %v5160 = vadd.f32 %v5119, %v5159
        %5161 = vmatmul.f32.gmra.mxu0 %v4514
        %v5162 = vpop.f32.mrf.mxu0
        %v5163 = vadd.f32 %v5122, %v5162
        %5164 = vmatmul.f32.gmra.mxu0 %v4546
        %v5165 = vpop.f32.mrf.mxu0
        %v5166 = vadd.f32 %v5125, %v5165
        %5167 = vmatmul.f32.gmra.mxu0 %v4578
        %v5168 = vpop.f32.mrf.mxu0
        %v5169 = vadd.f32 %v5128, %v5168
        %5170 = vdwg.mxu0
        %5171 = vmatpush.msra.mxu0 %v3523
        %5172 = vmatpush.msra.mxu0 %v3520
        %5173 = vmatpush.msra.mxu0 %v3517
        %5174 = vmatpush.msra.mxu0 %v3514
        %5175 = vmatpush.msra.mxu0 %v3511
        %5176 = vmatpush.msra.mxu0 %v3508
        %5177 = vmatpush.msra.mxu0 %v3505
        %5178 = vmatpush.msra.mxu0 %v3502
        %5179 = vmatpush.msra.mxu0 %v3499
        %5180 = vmatpush.msra.mxu0 %v3496
        %5181 = vmatpush.msra.mxu0 %v3493
        %5182 = vmatpush.msra.mxu0 %v3490
        %5183 = vmatpush.msra.mxu0 %v3487
        %5184 = vmatpush.msra.mxu0 %v3484
        %5185 = vmatpush.msra.mxu0 %v3481
        %5186 = vmatpush.msra.mxu0 %v3478
        %5187 = vmatmul.f32.gmra.mxu0 %v4355
        %v5188 = vpop.f32.mrf.mxu0
        %v5189 = vadd.f32 %v5148, %v5188
        %5190 = vmatmul.f32.gmra.mxu0 %v4387
        %v5191 = vpop.f32.mrf.mxu0
        %v5192 = vadd.f32 %v5151, %v5191
        %5193 = vmatmul.f32.gmra.mxu0 %v4419
        %v5194 = vpop.f32.mrf.mxu0
        %v5195 = vadd.f32 %v5154, %v5194
        %5196 = vmatmul.f32.gmra.mxu0 %v4451
        %v5197 = vpop.f32.mrf.mxu0
        %v5198 = vadd.f32 %v5157, %v5197
        %5199 = vmatmul.f32.gmra.mxu0 %v4483
        %v5200 = vpop.f32.mrf.mxu0
        %v5201 = vadd.f32 %v5160, %v5200
        %5202 = vmatmul.f32.gmra.mxu0 %v4515
        %v5203 = vpop.f32.mrf.mxu0
        %v5204 = vadd.f32 %v5163, %v5203
        %5205 = vmatmul.f32.gmra.mxu0 %v4547
        %v5206 = vpop.f32.mrf.mxu0
        %v5207 = vadd.f32 %v5166, %v5206
        %5208 = vmatmul.f32.gmra.mxu0 %v4579
        %v5209 = vpop.f32.mrf.mxu0
        %v5210 = vadd.f32 %v5169, %v5209
        %5211 = vdwg.mxu0
        %5212 = vmatpush.msra.mxu0 %v3571
        %5213 = vmatpush.msra.mxu0 %v3568
        %5214 = vmatpush.msra.mxu0 %v3565
        %5215 = vmatpush.msra.mxu0 %v3562
        %5216 = vmatpush.msra.mxu0 %v3559
        %5217 = vmatpush.msra.mxu0 %v3556
        %5218 = vmatpush.msra.mxu0 %v3553
        %5219 = vmatpush.msra.mxu0 %v3550
        %5220 = vmatpush.msra.mxu0 %v3547
        %5221 = vmatpush.msra.mxu0 %v3544
        %5222 = vmatpush.msra.mxu0 %v3541
        %5223 = vmatpush.msra.mxu0 %v3538
        %5224 = vmatpush.msra.mxu0 %v3535
        %5225 = vmatpush.msra.mxu0 %v3532
        %5226 = vmatpush.msra.mxu0 %v3529
        %5227 = vmatpush.msra.mxu0 %v3526
        %5228 = vmatmul.f32.gmra.mxu0 %v4356
        %v5229 = vpop.f32.mrf.mxu0
        %v5230 = vadd.f32 %v5189, %v5229
        %5231 = vmatmul.f32.gmra.mxu0 %v4388
        %v5232 = vpop.f32.mrf.mxu0
        %v5233 = vadd.f32 %v5192, %v5232
        %5234 = vmatmul.f32.gmra.mxu0 %v4420
        %v5235 = vpop.f32.mrf.mxu0
        %v5236 = vadd.f32 %v5195, %v5235
        %5237 = vmatmul.f32.gmra.mxu0 %v4452
        %v5238 = vpop.f32.mrf.mxu0
        %v5239 = vadd.f32 %v5198, %v5238
        %5240 = vmatmul.f32.gmra.mxu0 %v4484
        %v5241 = vpop.f32.mrf.mxu0
        %v5242 = vadd.f32 %v5201, %v5241
        %5243 = vmatmul.f32.gmra.mxu0 %v4516
        %v5244 = vpop.f32.mrf.mxu0
        %v5245 = vadd.f32 %v5204, %v5244
        %5246 = vmatmul.f32.gmra.mxu0 %v4548
        %v5247 = vpop.f32.mrf.mxu0
        %v5248 = vadd.f32 %v5207, %v5247
        %5249 = vmatmul.f32.gmra.mxu0 %v4580
        %v5250 = vpop.f32.mrf.mxu0
        %v5251 = vadd.f32 %v5210, %v5250
        %5252 = vdwg.mxu0
        %5253 = vmatpush.msra.mxu0 %v3619
        %5254 = vmatpush.msra.mxu0 %v3616
        %5255 = vmatpush.msra.mxu0 %v3613
        %5256 = vmatpush.msra.mxu0 %v3610
        %5257 = vmatpush.msra.mxu0 %v3607
        %5258 = vmatpush.msra.mxu0 %v3604
        %5259 = vmatpush.msra.mxu0 %v3601
        %5260 = vmatpush.msra.mxu0 %v3598
        %5261 = vmatpush.msra.mxu0 %v3595
        %5262 = vmatpush.msra.mxu0 %v3592
        %5263 = vmatpush.msra.mxu0 %v3589
        %5264 = vmatpush.msra.mxu0 %v3586
        %5265 = vmatpush.msra.mxu0 %v3583
        %5266 = vmatpush.msra.mxu0 %v3580
        %5267 = vmatpush.msra.mxu0 %v3577
        %5268 = vmatpush.msra.mxu0 %v3574
        %5269 = vmatmul.f32.gmra.mxu0 %v4357
        %v5270 = vpop.f32.mrf.mxu0
        %v5271 = vadd.f32 %v5230, %v5270
        %5272 = vmatmul.f32.gmra.mxu0 %v4389
        %v5273 = vpop.f32.mrf.mxu0
        %v5274 = vadd.f32 %v5233, %v5273
        %5275 = vmatmul.f32.gmra.mxu0 %v4421
        %v5276 = vpop.f32.mrf.mxu0
        %v5277 = vadd.f32 %v5236, %v5276
        %5278 = vmatmul.f32.gmra.mxu0 %v4453
        %v5279 = vpop.f32.mrf.mxu0
        %v5280 = vadd.f32 %v5239, %v5279
        %5281 = vmatmul.f32.gmra.mxu0 %v4485
        %v5282 = vpop.f32.mrf.mxu0
        %v5283 = vadd.f32 %v5242, %v5282
        %5284 = vmatmul.f32.gmra.mxu0 %v4517
        %v5285 = vpop.f32.mrf.mxu0
        %v5286 = vadd.f32 %v5245, %v5285
        %5287 = vmatmul.f32.gmra.mxu0 %v4549
        %v5288 = vpop.f32.mrf.mxu0
        %v5289 = vadd.f32 %v5248, %v5288
        %5290 = vmatmul.f32.gmra.mxu0 %v4581
        %v5291 = vpop.f32.mrf.mxu0
        %v5292 = vadd.f32 %v5251, %v5291
        %5293 = vdwg.mxu0
        %5294 = vmatpush.msra.mxu0 %v3667
        %5295 = vmatpush.msra.mxu0 %v3664
        %5296 = vmatpush.msra.mxu0 %v3661
        %5297 = vmatpush.msra.mxu0 %v3658
        %5298 = vmatpush.msra.mxu0 %v3655
        %5299 = vmatpush.msra.mxu0 %v3652
        %5300 = vmatpush.msra.mxu0 %v3649
        %5301 = vmatpush.msra.mxu0 %v3646
        %5302 = vmatpush.msra.mxu0 %v3643
        %5303 = vmatpush.msra.mxu0 %v3640
        %5304 = vmatpush.msra.mxu0 %v3637
        %5305 = vmatpush.msra.mxu0 %v3634
        %5306 = vmatpush.msra.mxu0 %v3631
        %5307 = vmatpush.msra.mxu0 %v3628
        %5308 = vmatpush.msra.mxu0 %v3625
        %5309 = vmatpush.msra.mxu0 %v3622
        %5310 = vmatmul.f32.gmra.mxu0 %v4358
        %v5311 = vpop.f32.mrf.mxu0
        %v5312 = vadd.f32 %v5271, %v5311
        %5313 = vmatmul.f32.gmra.mxu0 %v4390
        %v5314 = vpop.f32.mrf.mxu0
        %v5315 = vadd.f32 %v5274, %v5314
        %5316 = vmatmul.f32.gmra.mxu0 %v4422
        %v5317 = vpop.f32.mrf.mxu0
        %v5318 = vadd.f32 %v5277, %v5317
        %5319 = vmatmul.f32.gmra.mxu0 %v4454
        %v5320 = vpop.f32.mrf.mxu0
        %v5321 = vadd.f32 %v5280, %v5320
        %5322 = vmatmul.f32.gmra.mxu0 %v4486
        %v5323 = vpop.f32.mrf.mxu0
        %v5324 = vadd.f32 %v5283, %v5323
        %5325 = vmatmul.f32.gmra.mxu0 %v4518
        %v5326 = vpop.f32.mrf.mxu0
        %v5327 = vadd.f32 %v5286, %v5326
        %5328 = vmatmul.f32.gmra.mxu0 %v4550
        %v5329 = vpop.f32.mrf.mxu0
        %v5330 = vadd.f32 %v5289, %v5329
        %5331 = vmatmul.f32.gmra.mxu0 %v4582
        %v5332 = vpop.f32.mrf.mxu0
        %v5333 = vadd.f32 %v5292, %v5332
        %5334 = vdwg.mxu0
        %5335 = vmatpush.msra.mxu0 %v3715
        %5336 = vmatpush.msra.mxu0 %v3712
        %5337 = vmatpush.msra.mxu0 %v3709
        %5338 = vmatpush.msra.mxu0 %v3706
        %5339 = vmatpush.msra.mxu0 %v3703
        %5340 = vmatpush.msra.mxu0 %v3700
        %5341 = vmatpush.msra.mxu0 %v3697
        %5342 = vmatpush.msra.mxu0 %v3694
        %5343 = vmatpush.msra.mxu0 %v3691
        %5344 = vmatpush.msra.mxu0 %v3688
        %5345 = vmatpush.msra.mxu0 %v3685
        %5346 = vmatpush.msra.mxu0 %v3682
        %5347 = vmatpush.msra.mxu0 %v3679
        %5348 = vmatpush.msra.mxu0 %v3676
        %5349 = vmatpush.msra.mxu0 %v3673
        %5350 = vmatpush.msra.mxu0 %v3670
        %5351 = vmatmul.f32.gmra.mxu0 %v4359
        %v5352 = vpop.f32.mrf.mxu0
        %v5353 = vadd.f32 %v5312, %v5352
        %5354 = vmatmul.f32.gmra.mxu0 %v4391
        %v5355 = vpop.f32.mrf.mxu0
        %v5356 = vadd.f32 %v5315, %v5355
        %5357 = vmatmul.f32.gmra.mxu0 %v4423
        %v5358 = vpop.f32.mrf.mxu0
        %v5359 = vadd.f32 %v5318, %v5358
        %5360 = vmatmul.f32.gmra.mxu0 %v4455
        %v5361 = vpop.f32.mrf.mxu0
        %v5362 = vadd.f32 %v5321, %v5361
        %5363 = vmatmul.f32.gmra.mxu0 %v4487
        %v5364 = vpop.f32.mrf.mxu0
        %v5365 = vadd.f32 %v5324, %v5364
        %5366 = vmatmul.f32.gmra.mxu0 %v4519
        %v5367 = vpop.f32.mrf.mxu0
        %v5368 = vadd.f32 %v5327, %v5367
        %5369 = vmatmul.f32.gmra.mxu0 %v4551
        %v5370 = vpop.f32.mrf.mxu0
        %v5371 = vadd.f32 %v5330, %v5370
        %5372 = vmatmul.f32.gmra.mxu0 %v4583
        %v5373 = vpop.f32.mrf.mxu0
        %v5374 = vadd.f32 %v5333, %v5373
        %5375 = vdwg.mxu0
        %5376 = vmatpush.msra.mxu0 %v3763
        %5377 = vmatpush.msra.mxu0 %v3760
        %5378 = vmatpush.msra.mxu0 %v3757
        %5379 = vmatpush.msra.mxu0 %v3754
        %5380 = vmatpush.msra.mxu0 %v3751
        %5381 = vmatpush.msra.mxu0 %v3748
        %5382 = vmatpush.msra.mxu0 %v3745
        %5383 = vmatpush.msra.mxu0 %v3742
        %5384 = vmatpush.msra.mxu0 %v3739
        %5385 = vmatpush.msra.mxu0 %v3736
        %5386 = vmatpush.msra.mxu0 %v3733
        %5387 = vmatpush.msra.mxu0 %v3730
        %5388 = vmatpush.msra.mxu0 %v3727
        %5389 = vmatpush.msra.mxu0 %v3724
        %5390 = vmatpush.msra.mxu0 %v3721
        %5391 = vmatpush.msra.mxu0 %v3718
        %5392 = vmatmul.f32.gmra.mxu0 %v4360
        %v5393 = vpop.f32.mrf.mxu0
        %v5394 = vadd.f32 %v5353, %v5393
        %5395 = vmatmul.f32.gmra.mxu0 %v4392
        %v5396 = vpop.f32.mrf.mxu0
        %v5397 = vadd.f32 %v5356, %v5396
        %5398 = vmatmul.f32.gmra.mxu0 %v4424
        %v5399 = vpop.f32.mrf.mxu0
        %v5400 = vadd.f32 %v5359, %v5399
        %5401 = vmatmul.f32.gmra.mxu0 %v4456
        %v5402 = vpop.f32.mrf.mxu0
        %v5403 = vadd.f32 %v5362, %v5402
        %5404 = vmatmul.f32.gmra.mxu0 %v4488
        %v5405 = vpop.f32.mrf.mxu0
        %v5406 = vadd.f32 %v5365, %v5405
        %5407 = vmatmul.f32.gmra.mxu0 %v4520
        %v5408 = vpop.f32.mrf.mxu0
        %v5409 = vadd.f32 %v5368, %v5408
        %5410 = vmatmul.f32.gmra.mxu0 %v4552
        %v5411 = vpop.f32.mrf.mxu0
        %v5412 = vadd.f32 %v5371, %v5411
        %5413 = vmatmul.f32.gmra.mxu0 %v4584
        %v5414 = vpop.f32.mrf.mxu0
        %v5415 = vadd.f32 %v5374, %v5414
        %5416 = vdwg.mxu0
        %5417 = vmatpush.msra.mxu0 %v3811
        %5418 = vmatpush.msra.mxu0 %v3808
        %5419 = vmatpush.msra.mxu0 %v3805
        %5420 = vmatpush.msra.mxu0 %v3802
        %5421 = vmatpush.msra.mxu0 %v3799
        %5422 = vmatpush.msra.mxu0 %v3796
        %5423 = vmatpush.msra.mxu0 %v3793
        %5424 = vmatpush.msra.mxu0 %v3790
        %5425 = vmatpush.msra.mxu0 %v3787
        %5426 = vmatpush.msra.mxu0 %v3784
        %5427 = vmatpush.msra.mxu0 %v3781
        %5428 = vmatpush.msra.mxu0 %v3778
        %5429 = vmatpush.msra.mxu0 %v3775
        %5430 = vmatpush.msra.mxu0 %v3772
        %5431 = vmatpush.msra.mxu0 %v3769
        %5432 = vmatpush.msra.mxu0 %v3766
        %5433 = vmatmul.f32.gmra.mxu0 %v4361
        %v5434 = vpop.f32.mrf.mxu0
        %v5435 = vadd.f32 %v5394, %v5434
        %5436 = vmatmul.f32.gmra.mxu0 %v4393
        %v5437 = vpop.f32.mrf.mxu0
        %v5438 = vadd.f32 %v5397, %v5437
        %5439 = vmatmul.f32.gmra.mxu0 %v4425
        %v5440 = vpop.f32.mrf.mxu0
        %v5441 = vadd.f32 %v5400, %v5440
        %5442 = vmatmul.f32.gmra.mxu0 %v4457
        %v5443 = vpop.f32.mrf.mxu0
        %v5444 = vadd.f32 %v5403, %v5443
        %5445 = vmatmul.f32.gmra.mxu0 %v4489
        %v5446 = vpop.f32.mrf.mxu0
        %v5447 = vadd.f32 %v5406, %v5446
        %5448 = vmatmul.f32.gmra.mxu0 %v4521
        %v5449 = vpop.f32.mrf.mxu0
        %v5450 = vadd.f32 %v5409, %v5449
        %5451 = vmatmul.f32.gmra.mxu0 %v4553
        %v5452 = vpop.f32.mrf.mxu0
        %v5453 = vadd.f32 %v5412, %v5452
        %5454 = vmatmul.f32.gmra.mxu0 %v4585
        %v5455 = vpop.f32.mrf.mxu0
        %v5456 = vadd.f32 %v5415, %v5455
        %5457 = vdwg.mxu0
        %5458 = vmatpush.msra.mxu0 %v3859
        %5459 = vmatpush.msra.mxu0 %v3856
        %5460 = vmatpush.msra.mxu0 %v3853
        %5461 = vmatpush.msra.mxu0 %v3850
        %5462 = vmatpush.msra.mxu0 %v3847
        %5463 = vmatpush.msra.mxu0 %v3844
        %5464 = vmatpush.msra.mxu0 %v3841
        %5465 = vmatpush.msra.mxu0 %v3838
        %5466 = vmatpush.msra.mxu0 %v3835
        %5467 = vmatpush.msra.mxu0 %v3832
        %5468 = vmatpush.msra.mxu0 %v3829
        %5469 = vmatpush.msra.mxu0 %v3826
        %5470 = vmatpush.msra.mxu0 %v3823
        %5471 = vmatpush.msra.mxu0 %v3820
        %5472 = vmatpush.msra.mxu0 %v3817
        %5473 = vmatpush.msra.mxu0 %v3814
        %5474 = vmatmul.f32.gmra.mxu0 %v4362
        %v5475 = vpop.f32.mrf.mxu0
        %v5476 = vadd.f32 %v5435, %v5475
        %5477 = vmatmul.f32.gmra.mxu0 %v4394
        %v5478 = vpop.f32.mrf.mxu0
        %v5479 = vadd.f32 %v5438, %v5478
        %5480 = vmatmul.f32.gmra.mxu0 %v4426
        %v5481 = vpop.f32.mrf.mxu0
        %v5482 = vadd.f32 %v5441, %v5481
        %5483 = vmatmul.f32.gmra.mxu0 %v4458
        %v5484 = vpop.f32.mrf.mxu0
        %v5485 = vadd.f32 %v5444, %v5484
        %5486 = vmatmul.f32.gmra.mxu0 %v4490
        %v5487 = vpop.f32.mrf.mxu0
        %v5488 = vadd.f32 %v5447, %v5487
        %5489 = vmatmul.f32.gmra.mxu0 %v4522
        %v5490 = vpop.f32.mrf.mxu0
        %v5491 = vadd.f32 %v5450, %v5490
        %5492 = vmatmul.f32.gmra.mxu0 %v4554
        %v5493 = vpop.f32.mrf.mxu0
        %v5494 = vadd.f32 %v5453, %v5493
        %5495 = vmatmul.f32.gmra.mxu0 %v4586
        %v5496 = vpop.f32.mrf.mxu0
        %v5497 = vadd.f32 %v5456, %v5496
        %5498 = vdwg.mxu0
        %5499 = vmatpush.msra.mxu0 %v3907
        %5500 = vmatpush.msra.mxu0 %v3904
        %5501 = vmatpush.msra.mxu0 %v3901
        %5502 = vmatpush.msra.mxu0 %v3898
        %5503 = vmatpush.msra.mxu0 %v3895
        %5504 = vmatpush.msra.mxu0 %v3892
        %5505 = vmatpush.msra.mxu0 %v3889
        %5506 = vmatpush.msra.mxu0 %v3886
        %5507 = vmatpush.msra.mxu0 %v3883
        %5508 = vmatpush.msra.mxu0 %v3880
        %5509 = vmatpush.msra.mxu0 %v3877
        %5510 = vmatpush.msra.mxu0 %v3874
        %5511 = vmatpush.msra.mxu0 %v3871
        %5512 = vmatpush.msra.mxu0 %v3868
        %5513 = vmatpush.msra.mxu0 %v3865
        %5514 = vmatpush.msra.mxu0 %v3862
        %5515 = vmatmul.f32.gmra.mxu0 %v4363
        %v5516 = vpop.f32.mrf.mxu0
        %v5517 = vadd.f32 %v5476, %v5516
        %5518 = vmatmul.f32.gmra.mxu0 %v4395
        %v5519 = vpop.f32.mrf.mxu0
        %v5520 = vadd.f32 %v5479, %v5519
        %5521 = vmatmul.f32.gmra.mxu0 %v4427
        %v5522 = vpop.f32.mrf.mxu0
        %v5523 = vadd.f32 %v5482, %v5522
        %5524 = vmatmul.f32.gmra.mxu0 %v4459
        %v5525 = vpop.f32.mrf.mxu0
        %v5526 = vadd.f32 %v5485, %v5525
        %5527 = vmatmul.f32.gmra.mxu0 %v4491
        %v5528 = vpop.f32.mrf.mxu0
        %v5529 = vadd.f32 %v5488, %v5528
        %5530 = vmatmul.f32.gmra.mxu0 %v4523
        %v5531 = vpop.f32.mrf.mxu0
        %v5532 = vadd.f32 %v5491, %v5531
        %5533 = vmatmul.f32.gmra.mxu0 %v4555
        %v5534 = vpop.f32.mrf.mxu0
        %v5535 = vadd.f32 %v5494, %v5534
        %5536 = vmatmul.f32.gmra.mxu0 %v4587
        %v5537 = vpop.f32.mrf.mxu0
        %v5538 = vadd.f32 %v5497, %v5537
        %5539 = vdwg.mxu0
        %5540 = vmatpush.msra.mxu0 %v3955
        %5541 = vmatpush.msra.mxu0 %v3952
        %5542 = vmatpush.msra.mxu0 %v3949
        %5543 = vmatpush.msra.mxu0 %v3946
        %5544 = vmatpush.msra.mxu0 %v3943
        %5545 = vmatpush.msra.mxu0 %v3940
        %5546 = vmatpush.msra.mxu0 %v3937
        %5547 = vmatpush.msra.mxu0 %v3934
        %5548 = vmatpush.msra.mxu0 %v3931
        %5549 = vmatpush.msra.mxu0 %v3928
        %5550 = vmatpush.msra.mxu0 %v3925
        %5551 = vmatpush.msra.mxu0 %v3922
        %5552 = vmatpush.msra.mxu0 %v3919
        %5553 = vmatpush.msra.mxu0 %v3916
        %5554 = vmatpush.msra.mxu0 %v3913
        %5555 = vmatpush.msra.mxu0 %v3910
        %5556 = vmatmul.f32.gmra.mxu0 %v4364
        %v5557 = vpop.f32.mrf.mxu0
        %v5558 = vadd.f32 %v5517, %v5557
        %5559 = vmatmul.f32.gmra.mxu0 %v4396
        %v5560 = vpop.f32.mrf.mxu0
        %v5561 = vadd.f32 %v5520, %v5560
        %5562 = vmatmul.f32.gmra.mxu0 %v4428
        %v5563 = vpop.f32.mrf.mxu0
        %v5564 = vadd.f32 %v5523, %v5563
        %5565 = vmatmul.f32.gmra.mxu0 %v4460
        %v5566 = vpop.f32.mrf.mxu0
        %v5567 = vadd.f32 %v5526, %v5566
        %5568 = vmatmul.f32.gmra.mxu0 %v4492
        %v5569 = vpop.f32.mrf.mxu0
        %v5570 = vadd.f32 %v5529, %v5569
        %5571 = vmatmul.f32.gmra.mxu0 %v4524
        %v5572 = vpop.f32.mrf.mxu0
        %v5573 = vadd.f32 %v5532, %v5572
        %5574 = vmatmul.f32.gmra.mxu0 %v4556
        %v5575 = vpop.f32.mrf.mxu0
        %v5576 = vadd.f32 %v5535, %v5575
        %5577 = vmatmul.f32.gmra.mxu0 %v4588
        %v5578 = vpop.f32.mrf.mxu0
        %v5579 = vadd.f32 %v5538, %v5578
        %5580 = vdwg.mxu0
        %5581 = vmatpush.msra.mxu0 %v4003
        %5582 = vmatpush.msra.mxu0 %v4000
        %5583 = vmatpush.msra.mxu0 %v3997
        %5584 = vmatpush.msra.mxu0 %v3994
        %5585 = vmatpush.msra.mxu0 %v3991
        %5586 = vmatpush.msra.mxu0 %v3988
        %5587 = vmatpush.msra.mxu0 %v3985
        %5588 = vmatpush.msra.mxu0 %v3982
        %5589 = vmatpush.msra.mxu0 %v3979
        %5590 = vmatpush.msra.mxu0 %v3976
        %5591 = vmatpush.msra.mxu0 %v3973
        %5592 = vmatpush.msra.mxu0 %v3970
        %5593 = vmatpush.msra.mxu0 %v3967
        %5594 = vmatpush.msra.mxu0 %v3964
        %5595 = vmatpush.msra.mxu0 %v3961
        %5596 = vmatpush.msra.mxu0 %v3958
        %5597 = vmatmul.f32.gmra.mxu0 %v4365
        %v5598 = vpop.f32.mrf.mxu0
        %v5599 = vadd.f32 %v5558, %v5598
        %5600 = vmatmul.f32.gmra.mxu0 %v4397
        %v5601 = vpop.f32.mrf.mxu0
        %v5602 = vadd.f32 %v5561, %v5601
        %5603 = vmatmul.f32.gmra.mxu0 %v4429
        %v5604 = vpop.f32.mrf.mxu0
        %v5605 = vadd.f32 %v5564, %v5604
        %5606 = vmatmul.f32.gmra.mxu0 %v4461
        %v5607 = vpop.f32.mrf.mxu0
        %v5608 = vadd.f32 %v5567, %v5607
        %5609 = vmatmul.f32.gmra.mxu0 %v4493
        %v5610 = vpop.f32.mrf.mxu0
        %v5611 = vadd.f32 %v5570, %v5610
        %5612 = vmatmul.f32.gmra.mxu0 %v4525
        %v5613 = vpop.f32.mrf.mxu0
        %v5614 = vadd.f32 %v5573, %v5613
        %5615 = vmatmul.f32.gmra.mxu0 %v4557
        %v5616 = vpop.f32.mrf.mxu0
        %v5617 = vadd.f32 %v5576, %v5616
        %5618 = vmatmul.f32.gmra.mxu0 %v4589
        %v5619 = vpop.f32.mrf.mxu0
        %v5620 = vadd.f32 %v5579, %v5619
        %5621 = vdwg.mxu0
        %5622 = vmatpush.msra.mxu0 %v4051
        %5623 = vmatpush.msra.mxu0 %v4048
        %5624 = vmatpush.msra.mxu0 %v4045
        %5625 = vmatpush.msra.mxu0 %v4042
        %5626 = vmatpush.msra.mxu0 %v4039
        %5627 = vmatpush.msra.mxu0 %v4036
        %5628 = vmatpush.msra.mxu0 %v4033
        %5629 = vmatpush.msra.mxu0 %v4030
        %5630 = vmatpush.msra.mxu0 %v4027
        %5631 = vmatpush.msra.mxu0 %v4024
        %5632 = vmatpush.msra.mxu0 %v4021
        %5633 = vmatpush.msra.mxu0 %v4018
        %5634 = vmatpush.msra.mxu0 %v4015
        %5635 = vmatpush.msra.mxu0 %v4012
        %5636 = vmatpush.msra.mxu0 %v4009
        %5637 = vmatpush.msra.mxu0 %v4006
        %5638 = vmatmul.f32.gmra.mxu0 %v4366
        %v5639 = vpop.f32.mrf.mxu0
        %v5640 = vadd.f32 %v5599, %v5639
        %5641 = vmatmul.f32.gmra.mxu0 %v4398
        %v5642 = vpop.f32.mrf.mxu0
        %v5643 = vadd.f32 %v5602, %v5642
        %5644 = vmatmul.f32.gmra.mxu0 %v4430
        %v5645 = vpop.f32.mrf.mxu0
        %v5646 = vadd.f32 %v5605, %v5645
        %5647 = vmatmul.f32.gmra.mxu0 %v4462
        %v5648 = vpop.f32.mrf.mxu0
        %v5649 = vadd.f32 %v5608, %v5648
        %5650 = vmatmul.f32.gmra.mxu0 %v4494
        %v5651 = vpop.f32.mrf.mxu0
        %v5652 = vadd.f32 %v5611, %v5651
        %5653 = vmatmul.f32.gmra.mxu0 %v4526
        %v5654 = vpop.f32.mrf.mxu0
        %v5655 = vadd.f32 %v5614, %v5654
        %5656 = vmatmul.f32.gmra.mxu0 %v4558
        %v5657 = vpop.f32.mrf.mxu0
        %v5658 = vadd.f32 %v5617, %v5657
        %5659 = vmatmul.f32.gmra.mxu0 %v4590
        %v5660 = vpop.f32.mrf.mxu0
        %v5661 = vadd.f32 %v5620, %v5660
        %5662 = vdwg.mxu0
        %5663 = vmatpush.msra.mxu0 %v4099
        %5664 = vmatpush.msra.mxu0 %v4096
        %5665 = vmatpush.msra.mxu0 %v4093
        %5666 = vmatpush.msra.mxu0 %v4090
        %5667 = vmatpush.msra.mxu0 %v4087
        %5668 = vmatpush.msra.mxu0 %v4084
        %5669 = vmatpush.msra.mxu0 %v4081
        %5670 = vmatpush.msra.mxu0 %v4078
        %5671 = vmatpush.msra.mxu0 %v4075
        %5672 = vmatpush.msra.mxu0 %v4072
        %5673 = vmatpush.msra.mxu0 %v4069
        %5674 = vmatpush.msra.mxu0 %v4066
        %5675 = vmatpush.msra.mxu0 %v4063
        %5676 = vmatpush.msra.mxu0 %v4060
        %5677 = vmatpush.msra.mxu0 %v4057
        %5678 = vmatpush.msra.mxu0 %v4054
        %5679 = vmatmul.f32.gmra.mxu0 %v4367
        %v5680 = vpop.f32.mrf.mxu0
        %v5681 = vadd.f32 %v5640, %v5680
        %5682 = vmatmul.f32.gmra.mxu0 %v4399
        %v5683 = vpop.f32.mrf.mxu0
        %v5684 = vadd.f32 %v5643, %v5683
        %5685 = vmatmul.f32.gmra.mxu0 %v4431
        %v5686 = vpop.f32.mrf.mxu0
        %v5687 = vadd.f32 %v5646, %v5686
        %5688 = vmatmul.f32.gmra.mxu0 %v4463
        %v5689 = vpop.f32.mrf.mxu0
        %v5690 = vadd.f32 %v5649, %v5689
        %5691 = vmatmul.f32.gmra.mxu0 %v4495
        %v5692 = vpop.f32.mrf.mxu0
        %v5693 = vadd.f32 %v5652, %v5692
        %5694 = vmatmul.f32.gmra.mxu0 %v4527
        %v5695 = vpop.f32.mrf.mxu0
        %v5696 = vadd.f32 %v5655, %v5695
        %5697 = vmatmul.f32.gmra.mxu0 %v4559
        %v5698 = vpop.f32.mrf.mxu0
        %v5699 = vadd.f32 %v5658, %v5698
        %5700 = vmatmul.f32.gmra.mxu0 %v4591
        %v5701 = vpop.f32.mrf.mxu0
        %v5702 = vadd.f32 %v5661, %v5701
        %5703 = vdwg.mxu0
        %5704 = vmatpush.msra.mxu0 %v4147
        %5705 = vmatpush.msra.mxu0 %v4144
        %5706 = vmatpush.msra.mxu0 %v4141
        %5707 = vmatpush.msra.mxu0 %v4138
        %5708 = vmatpush.msra.mxu0 %v4135
        %5709 = vmatpush.msra.mxu0 %v4132
        %5710 = vmatpush.msra.mxu0 %v4129
        %5711 = vmatpush.msra.mxu0 %v4126
        %5712 = vmatpush.msra.mxu0 %v4123
        %5713 = vmatpush.msra.mxu0 %v4120
        %5714 = vmatpush.msra.mxu0 %v4117
        %5715 = vmatpush.msra.mxu0 %v4114
        %5716 = vmatpush.msra.mxu0 %v4111
        %5717 = vmatpush.msra.mxu0 %v4108
        %5718 = vmatpush.msra.mxu0 %v4105
        %5719 = vmatpush.msra.mxu0 %v4102
        %5720 = vmatmul.f32.gmra.mxu0 %v4368
        %v5721 = vpop.f32.mrf.mxu0
        %v5722 = vadd.f32 %v5681, %v5721
        %5723 = vmatmul.f32.gmra.mxu0 %v4400
        %v5724 = vpop.f32.mrf.mxu0
        %v5725 = vadd.f32 %v5684, %v5724
        %5726 = vmatmul.f32.gmra.mxu0 %v4432
        %v5727 = vpop.f32.mrf.mxu0
        %v5728 = vadd.f32 %v5687, %v5727
        %5729 = vmatmul.f32.gmra.mxu0 %v4464
        %v5730 = vpop.f32.mrf.mxu0
        %v5731 = vadd.f32 %v5690, %v5730
        %5732 = vmatmul.f32.gmra.mxu0 %v4496
        %v5733 = vpop.f32.mrf.mxu0
        %v5734 = vadd.f32 %v5693, %v5733
        %5735 = vmatmul.f32.gmra.mxu0 %v4528
        %v5736 = vpop.f32.mrf.mxu0
        %v5737 = vadd.f32 %v5696, %v5736
        %5738 = vmatmul.f32.gmra.mxu0 %v4560
        %v5739 = vpop.f32.mrf.mxu0
        %v5740 = vadd.f32 %v5699, %v5739
        %5741 = vmatmul.f32.gmra.mxu0 %v4592
        %v5742 = vpop.f32.mrf.mxu0
        %v5743 = vadd.f32 %v5702, %v5742
        %5744 = vdwg.mxu0
        %5745 = vmatpush.msra.mxu0 %v4195
        %5746 = vmatpush.msra.mxu0 %v4192
        %5747 = vmatpush.msra.mxu0 %v4189
        %5748 = vmatpush.msra.mxu0 %v4186
        %5749 = vmatpush.msra.mxu0 %v4183
        %5750 = vmatpush.msra.mxu0 %v4180
        %5751 = vmatpush.msra.mxu0 %v4177
        %5752 = vmatpush.msra.mxu0 %v4174
        %5753 = vmatpush.msra.mxu0 %v4171
        %5754 = vmatpush.msra.mxu0 %v4168
        %5755 = vmatpush.msra.mxu0 %v4165
        %5756 = vmatpush.msra.mxu0 %v4162
        %5757 = vmatpush.msra.mxu0 %v4159
        %5758 = vmatpush.msra.mxu0 %v4156
        %5759 = vmatpush.msra.mxu0 %v4153
        %5760 = vmatpush.msra.mxu0 %v4150
        %5761 = vmatmul.f32.gmra.mxu0 %v4369
        %v5762 = vpop.f32.mrf.mxu0
        %v5763 = vadd.f32 %v5722, %v5762
        %5764 = vmatmul.f32.gmra.mxu0 %v4401
        %v5765 = vpop.f32.mrf.mxu0
        %v5766 = vadd.f32 %v5725, %v5765
        %5767 = vmatmul.f32.gmra.mxu0 %v4433
        %v5768 = vpop.f32.mrf.mxu0
        %v5769 = vadd.f32 %v5728, %v5768
        %5770 = vmatmul.f32.gmra.mxu0 %v4465
        %v5771 = vpop.f32.mrf.mxu0
        %v5772 = vadd.f32 %v5731, %v5771
        %5773 = vmatmul.f32.gmra.mxu0 %v4497
        %v5774 = vpop.f32.mrf.mxu0
        %v5775 = vadd.f32 %v5734, %v5774
        %5776 = vmatmul.f32.gmra.mxu0 %v4529
        %v5777 = vpop.f32.mrf.mxu0
        %v5778 = vadd.f32 %v5737, %v5777
        %5779 = vmatmul.f32.gmra.mxu0 %v4561
        %v5780 = vpop.f32.mrf.mxu0
        %v5781 = vadd.f32 %v5740, %v5780
        %5782 = vmatmul.f32.gmra.mxu0 %v4593
        %v5783 = vpop.f32.mrf.mxu0
        %v5784 = vadd.f32 %v5743, %v5783
        %5785 = vdwg.mxu0
        %5786 = vmatpush.msra.mxu0 %v4243
        %5787 = vmatpush.msra.mxu0 %v4240
        %5788 = vmatpush.msra.mxu0 %v4237
        %5789 = vmatpush.msra.mxu0 %v4234
        %5790 = vmatpush.msra.mxu0 %v4231
        %5791 = vmatpush.msra.mxu0 %v4228
        %5792 = vmatpush.msra.mxu0 %v4225
        %5793 = vmatpush.msra.mxu0 %v4222
        %5794 = vmatpush.msra.mxu0 %v4219
        %5795 = vmatpush.msra.mxu0 %v4216
        %5796 = vmatpush.msra.mxu0 %v4213
        %5797 = vmatpush.msra.mxu0 %v4210
        %5798 = vmatpush.msra.mxu0 %v4207
        %5799 = vmatpush.msra.mxu0 %v4204
        %5800 = vmatpush.msra.mxu0 %v4201
        %5801 = vmatpush.msra.mxu0 %v4198
        %5802 = vmatmul.f32.gmra.mxu0 %v4370
        %v5803 = vpop.f32.mrf.mxu0
        %v5804 = vadd.f32 %v5763, %v5803
        %5805 = vmatmul.f32.gmra.mxu0 %v4402
        %v5806 = vpop.f32.mrf.mxu0
        %v5807 = vadd.f32 %v5766, %v5806
        %5808 = vmatmul.f32.gmra.mxu0 %v4434
        %v5809 = vpop.f32.mrf.mxu0
        %v5810 = vadd.f32 %v5769, %v5809
        %5811 = vmatmul.f32.gmra.mxu0 %v4466
        %v5812 = vpop.f32.mrf.mxu0
        %v5813 = vadd.f32 %v5772, %v5812
        %5814 = vmatmul.f32.gmra.mxu0 %v4498
        %v5815 = vpop.f32.mrf.mxu0
        %v5816 = vadd.f32 %v5775, %v5815
        %5817 = vmatmul.f32.gmra.mxu0 %v4530
        %v5818 = vpop.f32.mrf.mxu0
        %v5819 = vadd.f32 %v5778, %v5818
        %5820 = vmatmul.f32.gmra.mxu0 %v4562
        %v5821 = vpop.f32.mrf.mxu0
        %v5822 = vadd.f32 %v5781, %v5821
        %5823 = vmatmul.f32.gmra.mxu0 %v4594
        %v5824 = vpop.f32.mrf.mxu0
        %v5825 = vadd.f32 %v5784, %v5824
        %5826 = vdwg.mxu0
        %5827 = vmatpush.msra.mxu0 %v4291
        %5828 = vmatpush.msra.mxu0 %v4288
        %5829 = vmatpush.msra.mxu0 %v4285
        %5830 = vmatpush.msra.mxu0 %v4282
        %5831 = vmatpush.msra.mxu0 %v4279
        %5832 = vmatpush.msra.mxu0 %v4276
        %5833 = vmatpush.msra.mxu0 %v4273
        %5834 = vmatpush.msra.mxu0 %v4270
        %5835 = vmatpush.msra.mxu0 %v4267
        %5836 = vmatpush.msra.mxu0 %v4264
        %5837 = vmatpush.msra.mxu0 %v4261
        %5838 = vmatpush.msra.mxu0 %v4258
        %5839 = vmatpush.msra.mxu0 %v4255
        %5840 = vmatpush.msra.mxu0 %v4252
        %5841 = vmatpush.msra.mxu0 %v4249
        %5842 = vmatpush.msra.mxu0 %v4246
        %5843 = vmatmul.f32.gmra.mxu0 %v4371
        %v5844 = vpop.f32.mrf.mxu0
        %v5845 = vadd.f32 %v5804, %v5844
        %5846 = vmatmul.f32.gmra.mxu0 %v4403
        %v5847 = vpop.f32.mrf.mxu0
        %v5848 = vadd.f32 %v5807, %v5847
        %5849 = vmatmul.f32.gmra.mxu0 %v4435
        %v5850 = vpop.f32.mrf.mxu0
        %v5851 = vadd.f32 %v5810, %v5850
        %5852 = vmatmul.f32.gmra.mxu0 %v4467
        %v5853 = vpop.f32.mrf.mxu0
        %v5854 = vadd.f32 %v5813, %v5853
        %5855 = vmatmul.f32.gmra.mxu0 %v4499
        %v5856 = vpop.f32.mrf.mxu0
        %v5857 = vadd.f32 %v5816, %v5856
        %5858 = vmatmul.f32.gmra.mxu0 %v4531
        %v5859 = vpop.f32.mrf.mxu0
        %v5860 = vadd.f32 %v5819, %v5859
        %5861 = vmatmul.f32.gmra.mxu0 %v4563
        %v5862 = vpop.f32.mrf.mxu0
        %v5863 = vadd.f32 %v5822, %v5862
        %5864 = vmatmul.f32.gmra.mxu0 %v4595
        %v5865 = vpop.f32.mrf.mxu0
        %v5866 = vadd.f32 %v5825, %v5865
        %5867 = vdwg.mxu0
        %5868 = vmatpush.msra.mxu0 %v4339
        %5869 = vmatpush.msra.mxu0 %v4336
        %5870 = vmatpush.msra.mxu0 %v4333
        %5871 = vmatpush.msra.mxu0 %v4330
        %5872 = vmatpush.msra.mxu0 %v4327
        %5873 = vmatpush.msra.mxu0 %v4324
        %5874 = vmatpush.msra.mxu0 %v4321
        %5875 = vmatpush.msra.mxu0 %v4318
        %5876 = vmatpush.msra.mxu0 %v4315
        %5877 = vmatpush.msra.mxu0 %v4312
        %5878 = vmatpush.msra.mxu0 %v4309
        %5879 = vmatpush.msra.mxu0 %v4306
        %5880 = vmatpush.msra.mxu0 %v4303
        %5881 = vmatpush.msra.mxu0 %v4300
        %5882 = vmatpush.msra.mxu0 %v4297
        %5883 = vmatpush.msra.mxu0 %v4294
        %5884 = vmatmul.f32.gmra.mxu0 %v4372
        %v5885 = vpop.f32.mrf.mxu0
        %v5886 = vadd.f32 %v5845, %v5885
        %5887 = vmatmul.f32.gmra.mxu0 %v4404
        %v5888 = vpop.f32.mrf.mxu0
        %v5889 = vadd.f32 %v5848, %v5888
        %5890 = vmatmul.f32.gmra.mxu0 %v4436
        %v5891 = vpop.f32.mrf.mxu0
        %v5892 = vadd.f32 %v5851, %v5891
        %5893 = vmatmul.f32.gmra.mxu0 %v4468
        %v5894 = vpop.f32.mrf.mxu0
        %v5895 = vadd.f32 %v5854, %v5894
        %5896 = vmatmul.f32.gmra.mxu0 %v4500
        %v5897 = vpop.f32.mrf.mxu0
        %v5898 = vadd.f32 %v5857, %v5897
        %5899 = vmatmul.f32.gmra.mxu0 %v4532
        %v5900 = vpop.f32.mrf.mxu0
        %v5901 = vadd.f32 %v5860, %v5900
        %5902 = vmatmul.f32.gmra.mxu0 %v4564
        %v5903 = vpop.f32.mrf.mxu0
        %v5904 = vadd.f32 %v5863, %v5903
        %5905 = vmatmul.f32.gmra.mxu0 %v4596
        %v5906 = vpop.f32.mrf.mxu0
        %v5907 = vadd.f32 %v5866, %v5906
        %5908 = vdwg.mxu0
        %v5909 = vld [vmem:[#allocation2] sm:$0xff]
        %v5910 = vld [vmem:[#allocation2 + $0x8] sm:$0xff]
        %v5911 = vld [vmem:[#allocation2 + $0x10] sm:$0xff]
        %v5912 = vld [vmem:[#allocation2 + $0x18] sm:$0xff]
        %v5913 = vld [vmem:[#allocation2 + $0x20] sm:$0xff]
        %v5914 = vld [vmem:[#allocation2 + $0x28] sm:$0xff]
        %v5915 = vld [vmem:[#allocation2 + $0x30] sm:$0xff]
        %v5916 = vld [vmem:[#allocation2 + $0x38] sm:$0xff]
        %v5917 = vadd.f32 %v5909, %v5886
        %v5918 = vadd.f32 %v5910, %v5889
        %v5919 = vadd.f32 %v5911, %v5892
        %v5920 = vadd.f32 %v5912, %v5895
        %v5921 = vadd.f32 %v5913, %v5898
        %v5922 = vadd.f32 %v5914, %v5901
        %v5923 = vadd.f32 %v5915, %v5904
        %v5924 = vadd.f32 %v5916, %v5907
        %vm5925 = vcmask 261120
        %5926 = vst.msk [vmem:[#allocation2] sm:$0xff] %vm5925, %v5917
        %5927 = vst.msk [vmem:[#allocation2 + $0x8] sm:$0xff] %vm5925, %v5918
        %5928 = vst.msk [vmem:[#allocation2 + $0x10] sm:$0xff] %vm5925, %v5919
        %5929 = vst.msk [vmem:[#allocation2 + $0x18] sm:$0xff] %vm5925, %v5920
        %5930 = vst.msk [vmem:[#allocation2 + $0x20] sm:$0xff] %vm5925, %v5921
        %5931 = vst.msk [vmem:[#allocation2 + $0x28] sm:$0xff] %vm5925, %v5922
        %5932 = vst.msk [vmem:[#allocation2 + $0x30] sm:$0xff] %vm5925, %v5923
        %5933 = vst.msk [vmem:[#allocation2 + $0x38] sm:$0xff] %vm5925, %v5924
        // Predicated region
        $region137: #{tpu_custom_call.1} parent=83 // pred_check
          %p5934 = pneg %p718
        $region138: #{tpu_custom_call.1} parent=83 // pred_check_branch
          %5936 = sbr.rel (%p5934) target = $region140
        $region139: #{tpu_custom_call.1} parent=83 // pred_region
          %vm5937 = vcmask 80896
          %5938 = vst.msk [vmem:[#allocation3] sm:$0xff] %vm5937, 0.0
          %vm5939 = vcmask 74752
          %5940 = vst.msk [vmem:[#allocation3 + $0x8] sm:$0x3] %vm5939, 0.0
          %5941 = vst.msk [vmem:[#allocation3 + $0x10] sm:$0xff] %vm5937, 0.0
          %5942 = vst.msk [vmem:[#allocation3 + $0x18] sm:$0x3] %vm5939, 0.0
          %vm5943 = vcmask 277504
          %5944 = vst.msk [vmem:[#allocation4] sm:$0xff] %vm5943, 0.0
          %5945 = vst.msk [vmem:[#allocation4 + $0x8] sm:$0xff] %vm5943, 0.0
          %5946 = vst.msk [vmem:[#allocation4 + $0x10] sm:$0xff] %vm5943, 0.0
          %5947 = vst.msk [vmem:[#allocation4 + $0x18] sm:$0xff] %vm5943, 0.0
          %vm5948 = vcmask 271360
          %5949 = vst.msk [vmem:[#allocation4 + $0x20] sm:$0x3] %vm5948, 0.0
          %5950 = vst.msk [vmem:[#allocation4 + $0x28] sm:$0xff] %vm5943, 0.0
          %5951 = vst.msk [vmem:[#allocation4 + $0x30] sm:$0xff] %vm5943, 0.0
          %5952 = vst.msk [vmem:[#allocation4 + $0x38] sm:$0xff] %vm5943, 0.0
          %5953 = vst.msk [vmem:[#allocation4 + $0x40] sm:$0xff] %vm5943, 0.0
          %5954 = vst.msk [vmem:[#allocation4 + $0x48] sm:$0x3] %vm5948, 0.0
          %v5955 = vld [vmem:[#allocation2] sm:$0xff]
          %v5956 = vld [vmem:[#allocation2 + $0x8] sm:$0xff]
          %v5957 = vld [vmem:[#allocation2 + $0x10] sm:$0xff]
          %v5958 = vld [vmem:[#allocation2 + $0x18] sm:$0xff]
          %s5959 = sld [smem:[#allocation12]]
          %v5960 = vstv %s5959
          %v5961 = vadd.f32 %v5955, %v5960
          %v5962 = vadd.f32 %v5956, %v5960
          %v5963 = vadd.f32 %v5957, %v5960
          %v5964 = vadd.f32 %v5958, %v5960
          %s5965 = scalar_lea.vmem [#allocation2], 32
          %v5966 = vld [vmem:[%s5965] sm:$0xff]
          %v5967 = vld [vmem:[%s5965 + $0x8] sm:$0xff]
          %v5968 = vld [vmem:[%s5965 + $0x10] sm:$0xff]
          %v5969 = vld [vmem:[%s5965 + $0x18] sm:$0xff]
          %s5970 = sld [smem:[#allocation12 + $0x1]]
          %v5971 = vstv %s5970
          %v5972 = vadd.f32 %v5966, %v5971
          %v5973 = vadd.f32 %v5967, %v5971
          %v5974 = vadd.f32 %v5968, %v5971
          %v5975 = vadd.f32 %v5969, %v5971
          %v5976 = vld [vmem:[#allocation13] sm:$0xff]
          %v5978 = vsel %vm5925, %v5976, 0
          %5980 = vmatpush.msra.mxu0 0.0
          %5981 = vmatpush.msra.mxu0 0.0
          %5982 = vmatpush.msra.mxu0 0.0
          %5983 = vmatpush.msra.mxu0 0.0
          %5984 = vmatpush.msra.mxu0 0.0
          %5985 = vmatpush.msra.mxu0 0.0
          %5986 = vmatpush.msra.mxu0 0.0
          %5987 = vmatpush.msra.mxu0 0.0
          %5988 = vmatpush.msra.mxu0 0.0
          %5989 = vmatpush.msra.mxu0 0.0
          %5990 = vmatpush.msra.mxu0 0.0
          %5991 = vmatpush.msra.mxu0 0.0
          %5992 = vmatpush.msra.mxu0 %v5964
          %5993 = vmatpush.msra.mxu0 %v5963
          %5994 = vmatpush.msra.mxu0 %v5962
          %5995 = vmatpush.msra.mxu0 %v5961
          %5996 = vmatmul.f32.gmra.mxu0 %v5978
          %v5997 = vpop.f32.mrf.mxu0
          %v5998 = vadd.f32 0.0, %v5997
          %5999 = vdwg.mxu0
          %v6000 = vld [vmem:[%s5] sm:$0xff]
          %v6001 = vld [vmem:[%s5 + $0x8] sm:$0xff]
          %v6002 = vld [vmem:[%s5 + $0x10] sm:$0xff]
          %v6003 = vld [vmem:[%s5 + $0x18] sm:$0xff]
          %v6005 = vsel %vm5925, %v5998, 0
          %6007 = vmatpush.msra.mxu0 0.0
          %6008 = vmatpush.msra.mxu0 0.0
          %6009 = vmatpush.msra.mxu0 0.0
          %6010 = vmatpush.msra.mxu0 0.0
          %6011 = vmatpush.msra.mxu0 0.0
          %6012 = vmatpush.msra.mxu0 0.0
          %6013 = vmatpush.msra.mxu0 0.0
          %6014 = vmatpush.msra.mxu0 0.0
          %6015 = vmatpush.msra.mxu0 0.0
          %6016 = vmatpush.msra.mxu0 0.0
          %6017 = vmatpush.msra.mxu0 0.0
          %6018 = vmatpush.msra.mxu0 0.0
          %6019 = vmatpush.msra.mxu0 %v6003
          %6020 = vmatpush.msra.mxu0 %v6002
          %6021 = vmatpush.msra.mxu0 %v6001
          %6022 = vmatpush.msra.mxu0 %v6000
          %6023 = vmatmul.f32.gmra.mxu0 %v6005
          %v6024 = vpop.f32.mrf.mxu0
          %v6025 = vadd.f32 0.0, %v6024
          %6026 = vdwg.mxu0
          %6027 = vmatpush.msra.mxu0 0.0
          %6028 = vmatpush.msra.mxu0 0.0
          %6029 = vmatpush.msra.mxu0 0.0
          %6030 = vmatpush.msra.mxu0 0.0
          %6031 = vmatpush.msra.mxu0 0.0
          %6032 = vmatpush.msra.mxu0 0.0
          %6033 = vmatpush.msra.mxu0 0.0
          %6034 = vmatpush.msra.mxu0 0.0
          %6035 = vmatpush.msra.mxu0 0.0
          %6036 = vmatpush.msra.mxu0 0.0
          %6037 = vmatpush.msra.mxu0 0.0
          %6038 = vmatpush.msra.mxu0 0.0
          %6039 = vmatpush.msra.mxu0 %v5975
          %6040 = vmatpush.msra.mxu0 %v5974
          %6041 = vmatpush.msra.mxu0 %v5973
          %6042 = vmatpush.msra.mxu0 %v5972
          %6043 = vmatmul.f32.gmra.mxu0 %v5978
          %v6044 = vpop.f32.mrf.mxu0
          %v6045 = vadd.f32 0.0, %v6044
          %6046 = vdwg.mxu0
          %v6048 = vsel %vm5925, %v6045, 0
          %6050 = vmatpush.msra.mxu0 0.0
          %6051 = vmatpush.msra.mxu0 0.0
          %6052 = vmatpush.msra.mxu0 0.0
          %6053 = vmatpush.msra.mxu0 0.0
          %6054 = vmatpush.msra.mxu0 0.0
          %6055 = vmatpush.msra.mxu0 0.0
          %6056 = vmatpush.msra.mxu0 0.0
          %6057 = vmatpush.msra.mxu0 0.0
          %6058 = vmatpush.msra.mxu0 0.0
          %6059 = vmatpush.msra.mxu0 0.0
          %6060 = vmatpush.msra.mxu0 0.0
          %6061 = vmatpush.msra.mxu0 0.0
          %6062 = vmatpush.msra.mxu0 %v6003
          %6063 = vmatpush.msra.mxu0 %v6002
          %6064 = vmatpush.msra.mxu0 %v6001
          %6065 = vmatpush.msra.mxu0 %v6000
          %6066 = vmatmul.f32.gmra.mxu0 %v6048
          %v6067 = vpop.f32.mrf.mxu0
          %v6068 = vadd.f32 0.0, %v6067
          %6069 = vdwg.mxu0
          %6071 = vrot.lane.b32.xlu0 %v6025, 1
          %v6072 = vpop.permute.xlu0 %6071
          %vm6074 = vcmask 72712
          %6075 = vst.msk [vmem:[#allocation3 + $0x1] sm:$0xff] %vm6074, %v6072
          %6077 = vrot.lane.b32.xlu0 %v6068, 1
          %v6078 = vpop.permute.xlu0 %6077
          %s6080 = scalar_lea.vmem [#allocation3], 16
          %6081 = vst.msk [vmem:[%s6080 + $0x1] sm:$0xff] %vm6074, %v6078
          %s6082 = sld [smem:[#allocation16]]
          %v6083 = vld [vmem:[#allocation3] sm:$0xff]
          %v6084 = vstv %s6082
          %v6085 = vmul.f32 %v6084, %v6083
          %v6086 = vadd.f32 %v6085, 0.0
          %s6087 = sld [smem:[#allocation16 + $0x1]]
          %v6088 = vstv %s6087
          %v6089 = vmul.f32 %v6088, %v6083
          %6091 = vrot.lane.b32.xlu0 %v6089, 127
          %v6092 = vpop.permute.xlu0 %6091
          %v6094 = vadd.f32 %v6086, %v6092
          %s6095 = sld [smem:[#allocation16 + $0x2]]
          %v6096 = vstv %s6095
          %v6097 = vmul.f32 %v6096, %v6083
          %6099 = vrot.lane.b32.xlu0 %v6097, 126
          %v6100 = vpop.permute.xlu0 %6099
          %v6102 = vadd.f32 %v6094, %v6100
          %s6103 = sld [smem:[#allocation16 + $0x3]]
          %v6104 = vld [vmem:[#allocation3 + $0x1] sm:$0xff]
          %v6105 = vstv %s6103
          %v6106 = vmul.f32 %v6105, %v6104
          %v6107 = vadd.f32 %v6102, %v6106
          %s6108 = sld [smem:[#allocation16 + $0x4]]
          %v6109 = vstv %s6108
          %v6110 = vmul.f32 %v6109, %v6104
          %6112 = vrot.lane.b32.xlu0 %v6110, 127
          %v6113 = vpop.permute.xlu0 %6112
          %v6115 = vadd.f32 %v6107, %v6113
          %s6116 = sld [smem:[#allocation16 + $0x5]]
          %v6117 = vstv %s6116
          %v6118 = vmul.f32 %v6117, %v6104
          %6120 = vrot.lane.b32.xlu0 %v6118, 126
          %v6121 = vpop.permute.xlu0 %6120
          %v6123 = vadd.f32 %v6115, %v6121
          %s6124 = sld [smem:[#allocation16 + $0x6]]
          %v6125 = vld [vmem:[#allocation3 + $0x2] sm:$0xff]
          %v6126 = vstv %s6124
          %v6127 = vmul.f32 %v6126, %v6125
          %v6128 = vadd.f32 %v6123, %v6127
          %s6129 = sld [smem:[#allocation16 + $0x7]]
          %v6130 = vstv %s6129
          %v6131 = vmul.f32 %v6130, %v6125
          %6133 = vrot.lane.b32.xlu0 %v6131, 127
          %v6134 = vpop.permute.xlu0 %6133
          %v6136 = vadd.f32 %v6128, %v6134
          %s6137 = sld [smem:[#allocation16 + $0x8]]
          %v6138 = vstv %s6137
          %v6139 = vmul.f32 %v6138, %v6125
          %6141 = vrot.lane.b32.xlu0 %v6139, 126
          %v6142 = vpop.permute.xlu0 %6141
          %v6144 = vadd.f32 %v6136, %v6142
          %s6145 = sld [smem:[#allocation16 + $0x9]]
          %v6146 = vld [vmem:[%s6080] sm:$0xff]
          %v6147 = vstv %s6145
          %v6148 = vmul.f32 %v6147, %v6146
          %v6149 = vadd.f32 %v6144, %v6148
          %s6150 = sld [smem:[#allocation16 + $0xa]]
          %v6151 = vstv %s6150
          %v6152 = vmul.f32 %v6151, %v6146
          %6154 = vrot.lane.b32.xlu0 %v6152, 127
          %v6155 = vpop.permute.xlu0 %6154
          %v6157 = vadd.f32 %v6149, %v6155
          %s6158 = sld [smem:[#allocation16 + $0xb]]
          %v6159 = vstv %s6158
          %v6160 = vmul.f32 %v6159, %v6146
          %6162 = vrot.lane.b32.xlu0 %v6160, 126
          %v6163 = vpop.permute.xlu0 %6162
          %v6165 = vadd.f32 %v6157, %v6163
          %s6166 = sld [smem:[#allocation16 + $0xc]]
          %v6167 = vld [vmem:[%s6080 + $0x1] sm:$0xff]
          %v6168 = vstv %s6166
          %v6169 = vmul.f32 %v6168, %v6167
          %v6170 = vadd.f32 %v6165, %v6169
          %s6171 = sld [smem:[#allocation16 + $0xd]]
          %v6172 = vstv %s6171
          %v6173 = vmul.f32 %v6172, %v6167
          %6175 = vrot.lane.b32.xlu0 %v6173, 127
          %v6176 = vpop.permute.xlu0 %6175
          %v6178 = vadd.f32 %v6170, %v6176
          %s6179 = sld [smem:[#allocation16 + $0xe]]
          %v6180 = vstv %s6179
          %v6181 = vmul.f32 %v6180, %v6167
          %6183 = vrot.lane.b32.xlu0 %v6181, 126
          %v6184 = vpop.permute.xlu0 %6183
          %v6186 = vadd.f32 %v6178, %v6184
          %s6187 = sld [smem:[#allocation16 + $0xf]]
          %v6188 = vld [vmem:[%s6080 + $0x2] sm:$0xff]
          %v6189 = vstv %s6187
          %v6190 = vmul.f32 %v6189, %v6188
          %v6191 = vadd.f32 %v6186, %v6190
          %s6192 = sld [smem:[#allocation16 + $0x10]]
          %v6193 = vstv %s6192
          %v6194 = vmul.f32 %v6193, %v6188
          %6196 = vrot.lane.b32.xlu0 %v6194, 127
          %v6197 = vpop.permute.xlu0 %6196
          %v6199 = vadd.f32 %v6191, %v6197
          %s6200 = sld [smem:[#allocation16 + $0x11]]
          %v6201 = vstv %s6200
          %v6202 = vmul.f32 %v6201, %v6188
          %6204 = vrot.lane.b32.xlu0 %v6202, 126
          %v6205 = vpop.permute.xlu0 %6204
          %v6207 = vadd.f32 %v6199, %v6205
          %s6208 = sld [smem:[#allocation18]]
          %v6209 = vstv %s6208
          %v6210 = vadd.f32 %v6207, %v6209
          %s6211 = sld [smem:[#allocation16 + $0x12]]
          %v6212 = vstv %s6211
          %v6213 = vmul.f32 %v6212, %v6083
          %v6214 = vadd.f32 %v6213, 0.0
          %s6215 = sld [smem:[#allocation16 + $0x13]]
          %v6216 = vstv %s6215
          %v6217 = vmul.f32 %v6216, %v6083
          %6219 = vrot.lane.b32.xlu0 %v6217, 127
          %v6220 = vpop.permute.xlu0 %6219
          %v6222 = vadd.f32 %v6214, %v6220
          %s6223 = sld [smem:[#allocation16 + $0x14]]
          %v6224 = vstv %s6223
          %v6225 = vmul.f32 %v6224, %v6083
          %6227 = vrot.lane.b32.xlu0 %v6225, 126
          %v6228 = vpop.permute.xlu0 %6227
          %v6230 = vadd.f32 %v6222, %v6228
          %s6231 = sld [smem:[#allocation16 + $0x15]]
          %v6232 = vstv %s6231
          %v6233 = vmul.f32 %v6232, %v6104
          %v6234 = vadd.f32 %v6230, %v6233
          %s6235 = sld [smem:[#allocation16 + $0x16]]
          %v6236 = vstv %s6235
          %v6237 = vmul.f32 %v6236, %v6104
          %6239 = vrot.lane.b32.xlu0 %v6237, 127
          %v6240 = vpop.permute.xlu0 %6239
          %v6242 = vadd.f32 %v6234, %v6240
          %s6243 = sld [smem:[#allocation16 + $0x17]]
          %v6244 = vstv %s6243
          %v6245 = vmul.f32 %v6244, %v6104
          %6247 = vrot.lane.b32.xlu0 %v6245, 126
          %v6248 = vpop.permute.xlu0 %6247
          %v6250 = vadd.f32 %v6242, %v6248
          %s6251 = sld [smem:[#allocation16 + $0x18]]
          %v6252 = vstv %s6251
          %v6253 = vmul.f32 %v6252, %v6125
          %v6254 = vadd.f32 %v6250, %v6253
          %s6255 = sld [smem:[#allocation16 + $0x19]]
          %v6256 = vstv %s6255
          %v6257 = vmul.f32 %v6256, %v6125
          %6259 = vrot.lane.b32.xlu0 %v6257, 127
          %v6260 = vpop.permute.xlu0 %6259
          %v6262 = vadd.f32 %v6254, %v6260
          %s6263 = sld [smem:[#allocation16 + $0x1a]]
          %v6264 = vstv %s6263
          %v6265 = vmul.f32 %v6264, %v6125
          %6267 = vrot.lane.b32.xlu0 %v6265, 126
          %v6268 = vpop.permute.xlu0 %6267
          %v6270 = vadd.f32 %v6262, %v6268
          %s6271 = sld [smem:[#allocation16 + $0x1b]]
          %v6272 = vstv %s6271
          %v6273 = vmul.f32 %v6272, %v6146
          %v6274 = vadd.f32 %v6270, %v6273
          %s6275 = sld [smem:[#allocation16 + $0x1c]]
          %v6276 = vstv %s6275
          %v6277 = vmul.f32 %v6276, %v6146
          %6279 = vrot.lane.b32.xlu0 %v6277, 127
          %v6280 = vpop.permute.xlu0 %6279
          %v6282 = vadd.f32 %v6274, %v6280
          %s6283 = sld [smem:[#allocation16 + $0x1d]]
          %v6284 = vstv %s6283
          %v6285 = vmul.f32 %v6284, %v6146
          %6287 = vrot.lane.b32.xlu0 %v6285, 126
          %v6288 = vpop.permute.xlu0 %6287
          %v6290 = vadd.f32 %v6282, %v6288
          %s6291 = sld [smem:[#allocation16 + $0x1e]]
          %v6292 = vstv %s6291
          %v6293 = vmul.f32 %v6292, %v6167
          %v6294 = vadd.f32 %v6290, %v6293
          %s6295 = sld [smem:[#allocation16 + $0x1f]]
          %v6296 = vstv %s6295
          %v6297 = vmul.f32 %v6296, %v6167
          %6299 = vrot.lane.b32.xlu0 %v6297, 127
          %v6300 = vpop.permute.xlu0 %6299
          %v6302 = vadd.f32 %v6294, %v6300
          %s6303 = sld [smem:[#allocation16 + $0x20]]
          %v6304 = vstv %s6303
          %v6305 = vmul.f32 %v6304, %v6167
          %6307 = vrot.lane.b32.xlu0 %v6305, 126
          %v6308 = vpop.permute.xlu0 %6307
          %v6310 = vadd.f32 %v6302, %v6308
          %s6311 = sld [smem:[#allocation16 + $0x21]]
          %v6312 = vstv %s6311
          %v6313 = vmul.f32 %v6312, %v6188
          %v6314 = vadd.f32 %v6310, %v6313
          %s6315 = sld [smem:[#allocation16 + $0x22]]
          %v6316 = vstv %s6315
          %v6317 = vmul.f32 %v6316, %v6188
          %6319 = vrot.lane.b32.xlu0 %v6317, 127
          %v6320 = vpop.permute.xlu0 %6319
          %v6322 = vadd.f32 %v6314, %v6320
          %s6323 = sld [smem:[#allocation16 + $0x23]]
          %v6324 = vstv %s6323
          %v6325 = vmul.f32 %v6324, %v6188
          %6327 = vrot.lane.b32.xlu0 %v6325, 126
          %v6328 = vpop.permute.xlu0 %6327
          %v6330 = vadd.f32 %v6322, %v6328
          %s6331 = sld [smem:[#allocation18 + $0x1]]
          %v6332 = vstv %s6331
          %v6333 = vadd.f32 %v6330, %v6332
          %v6334 = vsub.f32 0.0, %v6210
          %v6335 = vmul.f32 %v6334, 1.442695
          %v6336 = vpow.pop %v6335
          %v6337 = vadd.f32 %v6336, 1.0
          %v6338 = vrcp.pop %v6337
          %v6339 = vmul.f32 %v6337, %v6338
          %v6340 = vsub.f32 1.0, %v6339
          %v6341 = vmul.f32 %v6338, %v6340
          %v6342 = vadd.f32 %v6338, %v6341
          %vm6343 = vweird.f32 %v6337
          %vm6344 = vweird.f32 %v6338
          %vm6345 = vmor %vm6343, %vm6344
          %v6346 = vsel %vm6345, %v6338, %v6342
          %v6347 = vand.u32 2147483647, %v6337
          %vm6348 = vcmp.eq.f32.partialorder %v6347, 8.507059e+37
          %v6349 = vand.u32 %v6337, 2147483648
          %v6350 = vor.u32 1.1754944e-38, %v6349
          %v6351 = vsel %vm6348, %v6350, %v6346
          %v6352 = vmul.f32 1.0, %v6351
          %v6353 = vsub.f32 0.0, %v6333
          %v6354 = vmul.f32 %v6353, 1.442695
          %v6355 = vpow.pop %v6354
          %v6356 = vadd.f32 %v6355, 1.0
          %v6357 = vrcp.pop %v6356
          %v6358 = vmul.f32 %v6356, %v6357
          %v6359 = vsub.f32 1.0, %v6358
          %v6360 = vmul.f32 %v6357, %v6359
          %v6361 = vadd.f32 %v6357, %v6360
          %vm6362 = vweird.f32 %v6356
          %vm6363 = vweird.f32 %v6357
          %vm6364 = vmor %vm6362, %vm6363
          %v6365 = vsel %vm6364, %v6357, %v6361
          %v6366 = vand.u32 2147483647, %v6356
          %vm6367 = vcmp.eq.f32.partialorder %v6366, 8.507059e+37
          %v6368 = vand.u32 %v6356, 2147483648
          %v6369 = vor.u32 1.1754944e-38, %v6368
          %v6370 = vsel %vm6367, %v6369, %v6365
          %v6371 = vmul.f32 1.0, %v6370
          %6373 = vrot.lane.b32.xlu0 %v6352, 1
          %v6374 = vpop.permute.xlu0 %6373
          %6376 = vst.msk [vmem:[#allocation3 + $0x1] sm:$0xff] %vm6074, %v6374
          %6378 = vrot.lane.b32.xlu0 %v6371, 1
          %v6379 = vpop.permute.xlu0 %6378
          %6381 = vst.msk [vmem:[%s6080 + $0x1] sm:$0xff] %vm6074, %v6379
          %s6382 = sld [smem:[#allocation19]]
          %v6383 = vld [vmem:[#allocation3] sm:$0xff]
          %v6384 = vstv %s6382
          %v6385 = vmul.f32 %v6384, %v6383
          %v6386 = vadd.f32 %v6385, 0.0
          %s6387 = sld [smem:[#allocation19 + $0x1]]
          %v6388 = vstv %s6387
          %v6389 = vmul.f32 %v6388, %v6383
          %6391 = vrot.lane.b32.xlu0 %v6389, 127
          %v6392 = vpop.permute.xlu0 %6391
          %v6394 = vadd.f32 %v6386, %v6392
          %s6395 = sld [smem:[#allocation19 + $0x2]]
          %v6396 = vstv %s6395
          %v6397 = vmul.f32 %v6396, %v6383
          %6399 = vrot.lane.b32.xlu0 %v6397, 126
          %v6400 = vpop.permute.xlu0 %6399
          %v6402 = vadd.f32 %v6394, %v6400
          %s6403 = sld [smem:[#allocation19 + $0x3]]
          %v6404 = vld [vmem:[#allocation3 + $0x1] sm:$0xff]
          %v6405 = vstv %s6403
          %v6406 = vmul.f32 %v6405, %v6404
          %v6407 = vadd.f32 %v6402, %v6406
          %s6408 = sld [smem:[#allocation19 + $0x4]]
          %v6409 = vstv %s6408
          %v6410 = vmul.f32 %v6409, %v6404
          %6412 = vrot.lane.b32.xlu0 %v6410, 127
          %v6413 = vpop.permute.xlu0 %6412
          %v6415 = vadd.f32 %v6407, %v6413
          %s6416 = sld [smem:[#allocation19 + $0x5]]
          %v6417 = vstv %s6416
          %v6418 = vmul.f32 %v6417, %v6404
          %6420 = vrot.lane.b32.xlu0 %v6418, 126
          %v6421 = vpop.permute.xlu0 %6420
          %v6423 = vadd.f32 %v6415, %v6421
          %s6424 = sld [smem:[#allocation19 + $0x6]]
          %v6425 = vld [vmem:[#allocation3 + $0x2] sm:$0xff]
          %v6426 = vstv %s6424
          %v6427 = vmul.f32 %v6426, %v6425
          %v6428 = vadd.f32 %v6423, %v6427
          %s6429 = sld [smem:[#allocation19 + $0x7]]
          %v6430 = vstv %s6429
          %v6431 = vmul.f32 %v6430, %v6425
          %6433 = vrot.lane.b32.xlu0 %v6431, 127
          %v6434 = vpop.permute.xlu0 %6433
          %v6436 = vadd.f32 %v6428, %v6434
          %s6437 = sld [smem:[#allocation19 + $0x8]]
          %v6438 = vstv %s6437
          %v6439 = vmul.f32 %v6438, %v6425
          %6441 = vrot.lane.b32.xlu0 %v6439, 126
          %v6442 = vpop.permute.xlu0 %6441
          %v6444 = vadd.f32 %v6436, %v6442
          %s6445 = sld [smem:[#allocation19 + $0x9]]
          %v6446 = vld [vmem:[%s6080] sm:$0xff]
          %v6447 = vstv %s6445
          %v6448 = vmul.f32 %v6447, %v6446
          %v6449 = vadd.f32 %v6444, %v6448
          %s6450 = sld [smem:[#allocation19 + $0xa]]
          %v6451 = vstv %s6450
          %v6452 = vmul.f32 %v6451, %v6446
          %6454 = vrot.lane.b32.xlu0 %v6452, 127
          %v6455 = vpop.permute.xlu0 %6454
          %v6457 = vadd.f32 %v6449, %v6455
          %s6458 = sld [smem:[#allocation19 + $0xb]]
          %v6459 = vstv %s6458
          %v6460 = vmul.f32 %v6459, %v6446
          %6462 = vrot.lane.b32.xlu0 %v6460, 126
          %v6463 = vpop.permute.xlu0 %6462
          %v6465 = vadd.f32 %v6457, %v6463
          %s6466 = sld [smem:[#allocation19 + $0xc]]
          %v6467 = vld [vmem:[%s6080 + $0x1] sm:$0xff]
          %v6468 = vstv %s6466
          %v6469 = vmul.f32 %v6468, %v6467
          %v6470 = vadd.f32 %v6465, %v6469
          %s6471 = sld [smem:[#allocation19 + $0xd]]
          %v6472 = vstv %s6471
          %v6473 = vmul.f32 %v6472, %v6467
          %6475 = vrot.lane.b32.xlu0 %v6473, 127
          %v6476 = vpop.permute.xlu0 %6475
          %v6478 = vadd.f32 %v6470, %v6476
          %s6479 = sld [smem:[#allocation19 + $0xe]]
          %v6480 = vstv %s6479
          %v6481 = vmul.f32 %v6480, %v6467
          %6483 = vrot.lane.b32.xlu0 %v6481, 126
          %v6484 = vpop.permute.xlu0 %6483
          %v6486 = vadd.f32 %v6478, %v6484
          %s6487 = sld [smem:[#allocation19 + $0xf]]
          %v6488 = vld [vmem:[%s6080 + $0x2] sm:$0xff]
          %v6489 = vstv %s6487
          %v6490 = vmul.f32 %v6489, %v6488
          %v6491 = vadd.f32 %v6486, %v6490
          %s6492 = sld [smem:[#allocation19 + $0x10]]
          %v6493 = vstv %s6492
          %v6494 = vmul.f32 %v6493, %v6488
          %6496 = vrot.lane.b32.xlu0 %v6494, 127
          %v6497 = vpop.permute.xlu0 %6496
          %v6499 = vadd.f32 %v6491, %v6497
          %s6500 = sld [smem:[#allocation19 + $0x11]]
          %v6501 = vstv %s6500
          %v6502 = vmul.f32 %v6501, %v6488
          %6504 = vrot.lane.b32.xlu0 %v6502, 126
          %v6505 = vpop.permute.xlu0 %6504
          %v6507 = vadd.f32 %v6499, %v6505
          %s6508 = sld [smem:[#allocation21]]
          %v6509 = vstv %s6508
          %v6510 = vadd.f32 %v6507, %v6509
          %s6511 = sld [smem:[#allocation19 + $0x12]]
          %v6512 = vstv %s6511
          %v6513 = vmul.f32 %v6512, %v6383
          %v6514 = vadd.f32 %v6513, 0.0
          %s6515 = sld [smem:[#allocation19 + $0x13]]
          %v6516 = vstv %s6515
          %v6517 = vmul.f32 %v6516, %v6383
          %6519 = vrot.lane.b32.xlu0 %v6517, 127
          %v6520 = vpop.permute.xlu0 %6519
          %v6522 = vadd.f32 %v6514, %v6520
          %s6523 = sld [smem:[#allocation19 + $0x14]]
          %v6524 = vstv %s6523
          %v6525 = vmul.f32 %v6524, %v6383
          %6527 = vrot.lane.b32.xlu0 %v6525, 126
          %v6528 = vpop.permute.xlu0 %6527
          %v6530 = vadd.f32 %v6522, %v6528
          %s6531 = sld [smem:[#allocation19 + $0x15]]
          %v6532 = vstv %s6531
          %v6533 = vmul.f32 %v6532, %v6404
          %v6534 = vadd.f32 %v6530, %v6533
          %s6535 = sld [smem:[#allocation19 + $0x16]]
          %v6536 = vstv %s6535
          %v6537 = vmul.f32 %v6536, %v6404
          %6539 = vrot.lane.b32.xlu0 %v6537, 127
          %v6540 = vpop.permute.xlu0 %6539
          %v6542 = vadd.f32 %v6534, %v6540
          %s6543 = sld [smem:[#allocation19 + $0x17]]
          %v6544 = vstv %s6543
          %v6545 = vmul.f32 %v6544, %v6404
          %6547 = vrot.lane.b32.xlu0 %v6545, 126
          %v6548 = vpop.permute.xlu0 %6547
          %v6550 = vadd.f32 %v6542, %v6548
          %s6551 = sld [smem:[#allocation19 + $0x18]]
          %v6552 = vstv %s6551
          %v6553 = vmul.f32 %v6552, %v6425
          %v6554 = vadd.f32 %v6550, %v6553
          %s6555 = sld [smem:[#allocation19 + $0x19]]
          %v6556 = vstv %s6555
          %v6557 = vmul.f32 %v6556, %v6425
          %6559 = vrot.lane.b32.xlu0 %v6557, 127
          %v6560 = vpop.permute.xlu0 %6559
          %v6562 = vadd.f32 %v6554, %v6560
          %s6563 = sld [smem:[#allocation19 + $0x1a]]
          %v6564 = vstv %s6563
          %v6565 = vmul.f32 %v6564, %v6425
          %6567 = vrot.lane.b32.xlu0 %v6565, 126
          %v6568 = vpop.permute.xlu0 %6567
          %v6570 = vadd.f32 %v6562, %v6568
          %s6571 = sld [smem:[#allocation19 + $0x1b]]
          %v6572 = vstv %s6571
          %v6573 = vmul.f32 %v6572, %v6446
          %v6574 = vadd.f32 %v6570, %v6573
          %s6575 = sld [smem:[#allocation19 + $0x1c]]
          %v6576 = vstv %s6575
          %v6577 = vmul.f32 %v6576, %v6446
          %6579 = vrot.lane.b32.xlu0 %v6577, 127
          %v6580 = vpop.permute.xlu0 %6579
          %v6582 = vadd.f32 %v6574, %v6580
          %s6583 = sld [smem:[#allocation19 + $0x1d]]
          %v6584 = vstv %s6583
          %v6585 = vmul.f32 %v6584, %v6446
          %6587 = vrot.lane.b32.xlu0 %v6585, 126
          %v6588 = vpop.permute.xlu0 %6587
          %v6590 = vadd.f32 %v6582, %v6588
          %s6591 = sld [smem:[#allocation19 + $0x1e]]
          %v6592 = vstv %s6591
          %v6593 = vmul.f32 %v6592, %v6467
          %v6594 = vadd.f32 %v6590, %v6593
          %s6595 = sld [smem:[#allocation19 + $0x1f]]
          %v6596 = vstv %s6595
          %v6597 = vmul.f32 %v6596, %v6467
          %6599 = vrot.lane.b32.xlu0 %v6597, 127
          %v6600 = vpop.permute.xlu0 %6599
          %v6602 = vadd.f32 %v6594, %v6600
          %s6603 = sld [smem:[#allocation19 + $0x20]]
          %v6604 = vstv %s6603
          %v6605 = vmul.f32 %v6604, %v6467
          %6607 = vrot.lane.b32.xlu0 %v6605, 126
          %v6608 = vpop.permute.xlu0 %6607
          %v6610 = vadd.f32 %v6602, %v6608
          %s6611 = sld [smem:[#allocation19 + $0x21]]
          %v6612 = vstv %s6611
          %v6613 = vmul.f32 %v6612, %v6488
          %v6614 = vadd.f32 %v6610, %v6613
          %s6615 = sld [smem:[#allocation19 + $0x22]]
          %v6616 = vstv %s6615
          %v6617 = vmul.f32 %v6616, %v6488
          %6619 = vrot.lane.b32.xlu0 %v6617, 127
          %v6620 = vpop.permute.xlu0 %6619
          %v6622 = vadd.f32 %v6614, %v6620
          %s6623 = sld [smem:[#allocation19 + $0x23]]
          %v6624 = vstv %s6623
          %v6625 = vmul.f32 %v6624, %v6488
          %6627 = vrot.lane.b32.xlu0 %v6625, 126
          %v6628 = vpop.permute.xlu0 %6627
          %v6630 = vadd.f32 %v6622, %v6628
          %s6631 = sld [smem:[#allocation21 + $0x1]]
          %v6632 = vstv %s6631
          %v6633 = vadd.f32 %v6630, %v6632
          %v6634 = vsub.f32 0.0, %v6510
          %v6635 = vmul.f32 %v6634, 1.442695
          %v6636 = vpow.pop %v6635
          %v6637 = vadd.f32 %v6636, 1.0
          %v6638 = vrcp.pop %v6637
          %v6639 = vmul.f32 %v6637, %v6638
          %v6640 = vsub.f32 1.0, %v6639
          %v6641 = vmul.f32 %v6638, %v6640
          %v6642 = vadd.f32 %v6638, %v6641
          %vm6643 = vweird.f32 %v6637
          %vm6644 = vweird.f32 %v6638
          %vm6645 = vmor %vm6643, %vm6644
          %v6646 = vsel %vm6645, %v6638, %v6642
          %v6647 = vand.u32 2147483647, %v6637
          %vm6648 = vcmp.eq.f32.partialorder %v6647, 8.507059e+37
          %v6649 = vand.u32 %v6637, 2147483648
          %v6650 = vor.u32 1.1754944e-38, %v6649
          %v6651 = vsel %vm6648, %v6650, %v6646
          %v6652 = vmul.f32 1.0, %v6651
          %v6653 = vsub.f32 0.0, %v6633
          %v6654 = vmul.f32 %v6653, 1.442695
          %v6655 = vpow.pop %v6654
          %v6656 = vadd.f32 %v6655, 1.0
          %v6657 = vrcp.pop %v6656
          %v6658 = vmul.f32 %v6656, %v6657
          %v6659 = vsub.f32 1.0, %v6658
          %v6660 = vmul.f32 %v6657, %v6659
          %v6661 = vadd.f32 %v6657, %v6660
          %vm6662 = vweird.f32 %v6656
          %vm6663 = vweird.f32 %v6657
          %vm6664 = vmor %vm6662, %vm6663
          %v6665 = vsel %vm6664, %v6657, %v6661
          %v6666 = vand.u32 2147483647, %v6656
          %vm6667 = vcmp.eq.f32.partialorder %v6666, 8.507059e+37
          %v6668 = vand.u32 %v6656, 2147483648
          %v6669 = vor.u32 1.1754944e-38, %v6668
          %v6670 = vsel %vm6667, %v6669, %v6665
          %v6671 = vmul.f32 1.0, %v6670
          %v6672 = vld [vmem:[%s6] sm:$0xff]
          %v6673 = vld [vmem:[%s6 + $0x8] sm:$0xff]
          %v6674 = vld [vmem:[%s6 + $0x10] sm:$0xff]
          %v6675 = vld [vmem:[%s6 + $0x18] sm:$0xff]
          %vm6676 = vcmask 64512
          %v6678 = vsel %vm6676, %v6672, 0
          %v6681 = vsel %vm6676, %v6673, 0
          %v6684 = vsel %vm6676, %v6674, 0
          %v6687 = vsel %vm6676, %v6675, 0
          %6689 = vmatpush.msra.mxu0 0.0
          %6690 = vmatpush.msra.mxu0 0.0
          %6691 = vmatpush.msra.mxu0 0.0
          %6692 = vmatpush.msra.mxu0 0.0
          %6693 = vmatpush.msra.mxu0 0.0
          %6694 = vmatpush.msra.mxu0 0.0
          %6695 = vmatpush.msra.mxu0 0.0
          %6696 = vmatpush.msra.mxu0 0.0
          %6697 = vmatpush.msra.mxu0 0.0
          %6698 = vmatpush.msra.mxu0 0.0
          %6699 = vmatpush.msra.mxu0 0.0
          %6700 = vmatpush.msra.mxu0 0.0
          %6701 = vmatpush.msra.mxu0 0.0
          %6702 = vmatpush.msra.mxu0 0.0
          %6703 = vmatpush.msra.mxu0 0.0
          %6704 = vmatpush.msra.mxu0 %v6652
          %6705 = vmatmul.f32.gmra.mxu0 %v6678
          %v6706 = vpop.f32.mrf.mxu0
          %v6707 = vadd.f32 0.0, %v6706
          %6708 = vmatmul.f32.gmra.mxu0 %v6681
          %v6709 = vpop.f32.mrf.mxu0
          %v6710 = vadd.f32 0.0, %v6709
          %6711 = vmatmul.f32.gmra.mxu0 %v6684
          %v6712 = vpop.f32.mrf.mxu0
          %v6713 = vadd.f32 0.0, %v6712
          %6714 = vmatmul.f32.gmra.mxu0 %v6687
          %v6715 = vpop.f32.mrf.mxu0
          %v6716 = vadd.f32 0.0, %v6715
          %6717 = vdwg.mxu0
          %v6718 = vld [vmem:[#allocation14] sm:$0xff]
          %v6720 = vsel %vm6676, %v6707, 0
          %v6723 = vsel %vm6676, %v6710, 0
          %v6726 = vsel %vm6676, %v6713, 0
          %v6729 = vsel %vm6676, %v6716, 0
          %6731 = vmatpush.msra.mxu0 0.0
          %6732 = vmatpush.msra.mxu0 0.0
          %6733 = vmatpush.msra.mxu0 0.0
          %6734 = vmatpush.msra.mxu0 0.0
          %6735 = vmatpush.msra.mxu0 0.0
          %6736 = vmatpush.msra.mxu0 0.0
          %6737 = vmatpush.msra.mxu0 0.0
          %6738 = vmatpush.msra.mxu0 0.0
          %6739 = vmatpush.msra.mxu0 0.0
          %6740 = vmatpush.msra.mxu0 0.0
          %6741 = vmatpush.msra.mxu0 0.0
          %6742 = vmatpush.msra.mxu0 0.0
          %6743 = vmatpush.msra.mxu0 0.0
          %6744 = vmatpush.msra.mxu0 0.0
          %6745 = vmatpush.msra.mxu0 0.0
          %6746 = vmatpush.msra.mxu0 %v6718
          %6747 = vmatmul.f32.gmra.mxu0 %v6720
          %v6748 = vpop.f32.mrf.mxu0
          %v6749 = vadd.f32 %v5961, %v6748
          %6750 = vmatmul.f32.gmra.mxu0 %v6723
          %v6751 = vpop.f32.mrf.mxu0
          %v6752 = vadd.f32 %v5962, %v6751
          %6753 = vmatmul.f32.gmra.mxu0 %v6726
          %v6754 = vpop.f32.mrf.mxu0
          %v6755 = vadd.f32 %v5963, %v6754
          %6756 = vmatmul.f32.gmra.mxu0 %v6729
          %v6757 = vpop.f32.mrf.mxu0
          %v6758 = vadd.f32 %v5964, %v6757
          %6759 = vdwg.mxu0
          %6760 = vmatpush.msra.mxu0 0.0
          %6761 = vmatpush.msra.mxu0 0.0
          %6762 = vmatpush.msra.mxu0 0.0
          %6763 = vmatpush.msra.mxu0 0.0
          %6764 = vmatpush.msra.mxu0 0.0
          %6765 = vmatpush.msra.mxu0 0.0
          %6766 = vmatpush.msra.mxu0 0.0
          %6767 = vmatpush.msra.mxu0 0.0
          %6768 = vmatpush.msra.mxu0 0.0
          %6769 = vmatpush.msra.mxu0 0.0
          %6770 = vmatpush.msra.mxu0 0.0
          %6771 = vmatpush.msra.mxu0 0.0
          %6772 = vmatpush.msra.mxu0 0.0
          %6773 = vmatpush.msra.mxu0 0.0
          %6774 = vmatpush.msra.mxu0 0.0
          %6775 = vmatpush.msra.mxu0 %v6671
          %6776 = vmatmul.f32.gmra.mxu0 %v6678
          %v6777 = vpop.f32.mrf.mxu0
          %v6778 = vadd.f32 0.0, %v6777
          %6779 = vmatmul.f32.gmra.mxu0 %v6681
          %v6780 = vpop.f32.mrf.mxu0
          %v6781 = vadd.f32 0.0, %v6780
          %6782 = vmatmul.f32.gmra.mxu0 %v6684
          %v6783 = vpop.f32.mrf.mxu0
          %v6784 = vadd.f32 0.0, %v6783
          %6785 = vmatmul.f32.gmra.mxu0 %v6687
          %v6786 = vpop.f32.mrf.mxu0
          %v6787 = vadd.f32 0.0, %v6786
          %6788 = vdwg.mxu0
          %v6790 = vsel %vm6676, %v6778, 0
          %v6793 = vsel %vm6676, %v6781, 0
          %v6796 = vsel %vm6676, %v6784, 0
          %v6799 = vsel %vm6676, %v6787, 0
          %6801 = vmatpush.msra.mxu0 0.0
          %6802 = vmatpush.msra.mxu0 0.0
          %6803 = vmatpush.msra.mxu0 0.0
          %6804 = vmatpush.msra.mxu0 0.0
          %6805 = vmatpush.msra.mxu0 0.0
          %6806 = vmatpush.msra.mxu0 0.0
          %6807 = vmatpush.msra.mxu0 0.0
          %6808 = vmatpush.msra.mxu0 0.0
          %6809 = vmatpush.msra.mxu0 0.0
          %6810 = vmatpush.msra.mxu0 0.0
          %6811 = vmatpush.msra.mxu0 0.0
          %6812 = vmatpush.msra.mxu0 0.0
          %6813 = vmatpush.msra.mxu0 0.0
          %6814 = vmatpush.msra.mxu0 0.0
          %6815 = vmatpush.msra.mxu0 0.0
          %6816 = vmatpush.msra.mxu0 %v6718
          %6817 = vmatmul.f32.gmra.mxu0 %v6790
          %v6818 = vpop.f32.mrf.mxu0
          %v6819 = vadd.f32 %v5972, %v6818
          %6820 = vmatmul.f32.gmra.mxu0 %v6793
          %v6821 = vpop.f32.mrf.mxu0
          %v6822 = vadd.f32 %v5973, %v6821
          %6823 = vmatmul.f32.gmra.mxu0 %v6796
          %v6824 = vpop.f32.mrf.mxu0
          %v6825 = vadd.f32 %v5974, %v6824
          %6826 = vmatmul.f32.gmra.mxu0 %v6799
          %v6827 = vpop.f32.mrf.mxu0
          %v6828 = vadd.f32 %v5975, %v6827
          %6829 = vdwg.mxu0
          %6834 = vrot.lane.b32.xlu0 %v6749, 1
          %v6835 = vpop.permute.xlu0 %6834
          %6836 = vrot.lane.b32.xlu0 %v6752, 1
          %v6837 = vpop.permute.xlu0 %6836
          %6838 = vrot.lane.b32.xlu0 %v6755, 1
          %v6839 = vpop.permute.xlu0 %6838
          %6840 = vrot.lane.b32.xlu0 %v6758, 1
          %v6841 = vpop.permute.xlu0 %6840
          %vm6846 = vcmask 269320
          %6847 = vst.msk [vmem:[#allocation4 + $0x1] sm:$0xff] %vm6846, %v6835
          %6848 = vst.msk [vmem:[#allocation4 + $0x9] sm:$0xff] %vm6846, %v6837
          %6849 = vst.msk [vmem:[#allocation4 + $0x11] sm:$0xff] %vm6846, %v6839
          %6850 = vst.msk [vmem:[#allocation4 + $0x19] sm:$0xff] %vm6846, %v6841
          %6855 = vrot.lane.b32.xlu0 %v6819, 1
          %v6856 = vpop.permute.xlu0 %6855
          %6857 = vrot.lane.b32.xlu0 %v6822, 1
          %v6858 = vpop.permute.xlu0 %6857
          %6859 = vrot.lane.b32.xlu0 %v6825, 1
          %v6860 = vpop.permute.xlu0 %6859
          %6861 = vrot.lane.b32.xlu0 %v6828, 1
          %v6862 = vpop.permute.xlu0 %6861
          %s6867 = scalar_lea.vmem [#allocation4], 40
          %6868 = vst.msk [vmem:[%s6867 + $0x1] sm:$0xff] %vm6846, %v6856
          %6869 = vst.msk [vmem:[%s6867 + $0x9] sm:$0xff] %vm6846, %v6858
          %6870 = vst.msk [vmem:[%s6867 + $0x11] sm:$0xff] %vm6846, %v6860
          %6871 = vst.msk [vmem:[%s6867 + $0x19] sm:$0xff] %vm6846, %v6862
          %s6872 = sld [smem:[#allocation22]]
          %v6873 = vld [vmem:[#allocation4] sm:$0xff]
          %v6874 = vld [vmem:[#allocation4 + $0x8] sm:$0xff]
          %v6875 = vld [vmem:[#allocation4 + $0x10] sm:$0xff]
          %v6876 = vld [vmem:[#allocation4 + $0x18] sm:$0xff]
          %v6877 = vstv %s6872
          %v6878 = vmul.f32 %v6877, %v6873
          %v6879 = vmul.f32 %v6877, %v6874
          %v6880 = vmul.f32 %v6877, %v6875
          %v6881 = vmul.f32 %v6877, %v6876
          %v6882 = vadd.f32 %v6878, 0.0
          %v6883 = vadd.f32 %v6879, 0.0
          %v6884 = vadd.f32 %v6880, 0.0
          %v6885 = vadd.f32 %v6881, 0.0
          %s6886 = sld [smem:[#allocation22 + $0x1]]
          %v6887 = vstv %s6886
          %v6888 = vmul.f32 %v6887, %v6873
          %v6889 = vmul.f32 %v6887, %v6874
          %v6890 = vmul.f32 %v6887, %v6875
          %v6891 = vmul.f32 %v6887, %v6876
          %6896 = vrot.lane.b32.xlu0 %v6888, 127
          %v6897 = vpop.permute.xlu0 %6896
          %6898 = vrot.lane.b32.xlu0 %v6889, 127
          %v6899 = vpop.permute.xlu0 %6898
          %6900 = vrot.lane.b32.xlu0 %v6890, 127
          %v6901 = vpop.permute.xlu0 %6900
          %6902 = vrot.lane.b32.xlu0 %v6891, 127
          %v6903 = vpop.permute.xlu0 %6902
          %v6908 = vadd.f32 %v6882, %v6897
          %v6909 = vadd.f32 %v6883, %v6899
          %v6910 = vadd.f32 %v6884, %v6901
          %v6911 = vadd.f32 %v6885, %v6903
          %s6912 = sld [smem:[#allocation22 + $0x2]]
          %v6913 = vstv %s6912
          %v6914 = vmul.f32 %v6913, %v6873
          %v6915 = vmul.f32 %v6913, %v6874
          %v6916 = vmul.f32 %v6913, %v6875
          %v6917 = vmul.f32 %v6913, %v6876
          %6922 = vrot.lane.b32.xlu0 %v6914, 126
          %v6923 = vpop.permute.xlu0 %6922
          %6924 = vrot.lane.b32.xlu0 %v6915, 126
          %v6925 = vpop.permute.xlu0 %6924
          %6926 = vrot.lane.b32.xlu0 %v6916, 126
          %v6927 = vpop.permute.xlu0 %6926
          %6928 = vrot.lane.b32.xlu0 %v6917, 126
          %v6929 = vpop.permute.xlu0 %6928
          %v6934 = vadd.f32 %v6908, %v6923
          %v6935 = vadd.f32 %v6909, %v6925
          %v6936 = vadd.f32 %v6910, %v6927
          %v6937 = vadd.f32 %v6911, %v6929
          %s6938 = sld [smem:[#allocation22 + $0x3]]
          %v6939 = vld [vmem:[#allocation4 + $0x1] sm:$0xff]
          %v6940 = vld [vmem:[#allocation4 + $0x9] sm:$0xff]
          %v6941 = vld [vmem:[#allocation4 + $0x11] sm:$0xff]
          %v6942 = vld [vmem:[#allocation4 + $0x19] sm:$0xff]
          %v6943 = vstv %s6938
          %v6944 = vmul.f32 %v6943, %v6939
          %v6945 = vmul.f32 %v6943, %v6940
          %v6946 = vmul.f32 %v6943, %v6941
          %v6947 = vmul.f32 %v6943, %v6942
          %v6948 = vadd.f32 %v6934, %v6944
          %v6949 = vadd.f32 %v6935, %v6945
          %v6950 = vadd.f32 %v6936, %v6946
          %v6951 = vadd.f32 %v6937, %v6947
          %s6952 = sld [smem:[#allocation22 + $0x4]]
          %v6953 = vstv %s6952
          %v6954 = vmul.f32 %v6953, %v6939
          %v6955 = vmul.f32 %v6953, %v6940
          %v6956 = vmul.f32 %v6953, %v6941
          %v6957 = vmul.f32 %v6953, %v6942
          %6962 = vrot.lane.b32.xlu0 %v6954, 127
          %v6963 = vpop.permute.xlu0 %6962
          %6964 = vrot.lane.b32.xlu0 %v6955, 127
          %v6965 = vpop.permute.xlu0 %6964
          %6966 = vrot.lane.b32.xlu0 %v6956, 127
          %v6967 = vpop.permute.xlu0 %6966
          %6968 = vrot.lane.b32.xlu0 %v6957, 127
          %v6969 = vpop.permute.xlu0 %6968
          %v6974 = vadd.f32 %v6948, %v6963
          %v6975 = vadd.f32 %v6949, %v6965
          %v6976 = vadd.f32 %v6950, %v6967
          %v6977 = vadd.f32 %v6951, %v6969
          %s6978 = sld [smem:[#allocation22 + $0x5]]
          %v6979 = vstv %s6978
          %v6980 = vmul.f32 %v6979, %v6939
          %v6981 = vmul.f32 %v6979, %v6940
          %v6982 = vmul.f32 %v6979, %v6941
          %v6983 = vmul.f32 %v6979, %v6942
          %6988 = vrot.lane.b32.xlu0 %v6980, 126
          %v6989 = vpop.permute.xlu0 %6988
          %6990 = vrot.lane.b32.xlu0 %v6981, 126
          %v6991 = vpop.permute.xlu0 %6990
          %6992 = vrot.lane.b32.xlu0 %v6982, 126
          %v6993 = vpop.permute.xlu0 %6992
          %6994 = vrot.lane.b32.xlu0 %v6983, 126
          %v6995 = vpop.permute.xlu0 %6994
          %v7000 = vadd.f32 %v6974, %v6989
          %v7001 = vadd.f32 %v6975, %v6991
          %v7002 = vadd.f32 %v6976, %v6993
          %v7003 = vadd.f32 %v6977, %v6995
          %s7004 = sld [smem:[#allocation22 + $0x6]]
          %v7005 = vld [vmem:[#allocation4 + $0x2] sm:$0xff]
          %v7006 = vld [vmem:[#allocation4 + $0xa] sm:$0xff]
          %v7007 = vld [vmem:[#allocation4 + $0x12] sm:$0xff]
          %v7008 = vld [vmem:[#allocation4 + $0x1a] sm:$0xff]
          %v7009 = vstv %s7004
          %v7010 = vmul.f32 %v7009, %v7005
          %v7011 = vmul.f32 %v7009, %v7006
          %v7012 = vmul.f32 %v7009, %v7007
          %v7013 = vmul.f32 %v7009, %v7008
          %v7014 = vadd.f32 %v7000, %v7010
          %v7015 = vadd.f32 %v7001, %v7011
          %v7016 = vadd.f32 %v7002, %v7012
          %v7017 = vadd.f32 %v7003, %v7013
          %s7018 = sld [smem:[#allocation22 + $0x7]]
          %v7019 = vstv %s7018
          %v7020 = vmul.f32 %v7019, %v7005
          %v7021 = vmul.f32 %v7019, %v7006
          %v7022 = vmul.f32 %v7019, %v7007
          %v7023 = vmul.f32 %v7019, %v7008
          %7028 = vrot.lane.b32.xlu0 %v7020, 127
          %v7029 = vpop.permute.xlu0 %7028
          %7030 = vrot.lane.b32.xlu0 %v7021, 127
          %v7031 = vpop.permute.xlu0 %7030
          %7032 = vrot.lane.b32.xlu0 %v7022, 127
          %v7033 = vpop.permute.xlu0 %7032
          %7034 = vrot.lane.b32.xlu0 %v7023, 127
          %v7035 = vpop.permute.xlu0 %7034
          %v7040 = vadd.f32 %v7014, %v7029
          %v7041 = vadd.f32 %v7015, %v7031
          %v7042 = vadd.f32 %v7016, %v7033
          %v7043 = vadd.f32 %v7017, %v7035
          %s7044 = sld [smem:[#allocation22 + $0x8]]
          %v7045 = vstv %s7044
          %v7046 = vmul.f32 %v7045, %v7005
          %v7047 = vmul.f32 %v7045, %v7006
          %v7048 = vmul.f32 %v7045, %v7007
          %v7049 = vmul.f32 %v7045, %v7008
          %7054 = vrot.lane.b32.xlu0 %v7046, 126
          %v7055 = vpop.permute.xlu0 %7054
          %7056 = vrot.lane.b32.xlu0 %v7047, 126
          %v7057 = vpop.permute.xlu0 %7056
          %7058 = vrot.lane.b32.xlu0 %v7048, 126
          %v7059 = vpop.permute.xlu0 %7058
          %7060 = vrot.lane.b32.xlu0 %v7049, 126
          %v7061 = vpop.permute.xlu0 %7060
          %v7066 = vadd.f32 %v7040, %v7055
          %v7067 = vadd.f32 %v7041, %v7057
          %v7068 = vadd.f32 %v7042, %v7059
          %v7069 = vadd.f32 %v7043, %v7061
          %s7070 = sld [smem:[#allocation22 + $0x9]]
          %v7071 = vld [vmem:[%s6867] sm:$0xff]
          %v7072 = vld [vmem:[%s6867 + $0x8] sm:$0xff]
          %v7073 = vld [vmem:[%s6867 + $0x10] sm:$0xff]
          %v7074 = vld [vmem:[%s6867 + $0x18] sm:$0xff]
          %v7075 = vstv %s7070
          %v7076 = vmul.f32 %v7075, %v7071
          %v7077 = vmul.f32 %v7075, %v7072
          %v7078 = vmul.f32 %v7075, %v7073
          %v7079 = vmul.f32 %v7075, %v7074
          %v7080 = vadd.f32 %v7066, %v7076
          %v7081 = vadd.f32 %v7067, %v7077
          %v7082 = vadd.f32 %v7068, %v7078
          %v7083 = vadd.f32 %v7069, %v7079
          %s7084 = sld [smem:[#allocation22 + $0xa]]
          %v7085 = vstv %s7084
          %v7086 = vmul.f32 %v7085, %v7071
          %v7087 = vmul.f32 %v7085, %v7072
          %v7088 = vmul.f32 %v7085, %v7073
          %v7089 = vmul.f32 %v7085, %v7074
          %7094 = vrot.lane.b32.xlu0 %v7086, 127
          %v7095 = vpop.permute.xlu0 %7094
          %7096 = vrot.lane.b32.xlu0 %v7087, 127
          %v7097 = vpop.permute.xlu0 %7096
          %7098 = vrot.lane.b32.xlu0 %v7088, 127
          %v7099 = vpop.permute.xlu0 %7098
          %7100 = vrot.lane.b32.xlu0 %v7089, 127
          %v7101 = vpop.permute.xlu0 %7100
          %v7106 = vadd.f32 %v7080, %v7095
          %v7107 = vadd.f32 %v7081, %v7097
          %v7108 = vadd.f32 %v7082, %v7099
          %v7109 = vadd.f32 %v7083, %v7101
          %s7110 = sld [smem:[#allocation22 + $0xb]]
          %v7111 = vstv %s7110
          %v7112 = vmul.f32 %v7111, %v7071
          %v7113 = vmul.f32 %v7111, %v7072
          %v7114 = vmul.f32 %v7111, %v7073
          %v7115 = vmul.f32 %v7111, %v7074
          %7120 = vrot.lane.b32.xlu0 %v7112, 126
          %v7121 = vpop.permute.xlu0 %7120
          %7122 = vrot.lane.b32.xlu0 %v7113, 126
          %v7123 = vpop.permute.xlu0 %7122
          %7124 = vrot.lane.b32.xlu0 %v7114, 126
          %v7125 = vpop.permute.xlu0 %7124
          %7126 = vrot.lane.b32.xlu0 %v7115, 126
          %v7127 = vpop.permute.xlu0 %7126
          %v7132 = vadd.f32 %v7106, %v7121
          %v7133 = vadd.f32 %v7107, %v7123
          %v7134 = vadd.f32 %v7108, %v7125
          %v7135 = vadd.f32 %v7109, %v7127
          %s7136 = sld [smem:[#allocation22 + $0xc]]
          %v7137 = vld [vmem:[%s6867 + $0x1] sm:$0xff]
          %v7138 = vld [vmem:[%s6867 + $0x9] sm:$0xff]
          %v7139 = vld [vmem:[%s6867 + $0x11] sm:$0xff]
          %v7140 = vld [vmem:[%s6867 + $0x19] sm:$0xff]
          %v7141 = vstv %s7136
          %v7142 = vmul.f32 %v7141, %v7137
          %v7143 = vmul.f32 %v7141, %v7138
          %v7144 = vmul.f32 %v7141, %v7139
          %v7145 = vmul.f32 %v7141, %v7140
          %v7146 = vadd.f32 %v7132, %v7142
          %v7147 = vadd.f32 %v7133, %v7143
          %v7148 = vadd.f32 %v7134, %v7144
          %v7149 = vadd.f32 %v7135, %v7145
          %s7150 = sld [smem:[#allocation22 + $0xd]]
          %v7151 = vstv %s7150
          %v7152 = vmul.f32 %v7151, %v7137
          %v7153 = vmul.f32 %v7151, %v7138
          %v7154 = vmul.f32 %v7151, %v7139
          %v7155 = vmul.f32 %v7151, %v7140
          %7160 = vrot.lane.b32.xlu0 %v7152, 127
          %v7161 = vpop.permute.xlu0 %7160
          %7162 = vrot.lane.b32.xlu0 %v7153, 127
          %v7163 = vpop.permute.xlu0 %7162
          %7164 = vrot.lane.b32.xlu0 %v7154, 127
          %v7165 = vpop.permute.xlu0 %7164
          %7166 = vrot.lane.b32.xlu0 %v7155, 127
          %v7167 = vpop.permute.xlu0 %7166
          %v7172 = vadd.f32 %v7146, %v7161
          %v7173 = vadd.f32 %v7147, %v7163
          %v7174 = vadd.f32 %v7148, %v7165
          %v7175 = vadd.f32 %v7149, %v7167
          %s7176 = sld [smem:[#allocation22 + $0xe]]
          %v7177 = vstv %s7176
          %v7178 = vmul.f32 %v7177, %v7137
          %v7179 = vmul.f32 %v7177, %v7138
          %v7180 = vmul.f32 %v7177, %v7139
          %v7181 = vmul.f32 %v7177, %v7140
          %7186 = vrot.lane.b32.xlu0 %v7178, 126
          %v7187 = vpop.permute.xlu0 %7186
          %7188 = vrot.lane.b32.xlu0 %v7179, 126
          %v7189 = vpop.permute.xlu0 %7188
          %7190 = vrot.lane.b32.xlu0 %v7180, 126
          %v7191 = vpop.permute.xlu0 %7190
          %7192 = vrot.lane.b32.xlu0 %v7181, 126
          %v7193 = vpop.permute.xlu0 %7192
          %v7198 = vadd.f32 %v7172, %v7187
          %v7199 = vadd.f32 %v7173, %v7189
          %v7200 = vadd.f32 %v7174, %v7191
          %v7201 = vadd.f32 %v7175, %v7193
          %s7202 = sld [smem:[#allocation22 + $0xf]]
          %v7203 = vld [vmem:[%s6867 + $0x2] sm:$0xff]
          %v7204 = vld [vmem:[%s6867 + $0xa] sm:$0xff]
          %v7205 = vld [vmem:[%s6867 + $0x12] sm:$0xff]
          %v7206 = vld [vmem:[%s6867 + $0x1a] sm:$0xff]
          %v7207 = vstv %s7202
          %v7208 = vmul.f32 %v7207, %v7203
          %v7209 = vmul.f32 %v7207, %v7204
          %v7210 = vmul.f32 %v7207, %v7205
          %v7211 = vmul.f32 %v7207, %v7206
          %v7212 = vadd.f32 %v7198, %v7208
          %v7213 = vadd.f32 %v7199, %v7209
          %v7214 = vadd.f32 %v7200, %v7210
          %v7215 = vadd.f32 %v7201, %v7211
          %s7216 = sld [smem:[#allocation22 + $0x10]]
          %v7217 = vstv %s7216
          %v7218 = vmul.f32 %v7217, %v7203
          %v7219 = vmul.f32 %v7217, %v7204
          %v7220 = vmul.f32 %v7217, %v7205
          %v7221 = vmul.f32 %v7217, %v7206
          %7226 = vrot.lane.b32.xlu0 %v7218, 127
          %v7227 = vpop.permute.xlu0 %7226
          %7228 = vrot.lane.b32.xlu0 %v7219, 127
          %v7229 = vpop.permute.xlu0 %7228
          %7230 = vrot.lane.b32.xlu0 %v7220, 127
          %v7231 = vpop.permute.xlu0 %7230
          %7232 = vrot.lane.b32.xlu0 %v7221, 127
          %v7233 = vpop.permute.xlu0 %7232
          %v7238 = vadd.f32 %v7212, %v7227
          %v7239 = vadd.f32 %v7213, %v7229
          %v7240 = vadd.f32 %v7214, %v7231
          %v7241 = vadd.f32 %v7215, %v7233
          %s7242 = sld [smem:[#allocation22 + $0x11]]
          %v7243 = vstv %s7242
          %v7244 = vmul.f32 %v7243, %v7203
          %v7245 = vmul.f32 %v7243, %v7204
          %v7246 = vmul.f32 %v7243, %v7205
          %v7247 = vmul.f32 %v7243, %v7206
          %7252 = vrot.lane.b32.xlu0 %v7244, 126
          %v7253 = vpop.permute.xlu0 %7252
          %7254 = vrot.lane.b32.xlu0 %v7245, 126
          %v7255 = vpop.permute.xlu0 %7254
          %7256 = vrot.lane.b32.xlu0 %v7246, 126
          %v7257 = vpop.permute.xlu0 %7256
          %7258 = vrot.lane.b32.xlu0 %v7247, 126
          %v7259 = vpop.permute.xlu0 %7258
          %v7264 = vadd.f32 %v7238, %v7253
          %v7265 = vadd.f32 %v7239, %v7255
          %v7266 = vadd.f32 %v7240, %v7257
          %v7267 = vadd.f32 %v7241, %v7259
          %s7268 = sld [smem:[#allocation24]]
          %v7269 = vstv %s7268
          %v7270 = vadd.f32 %v7264, %v7269
          %v7271 = vadd.f32 %v7265, %v7269
          %v7272 = vadd.f32 %v7266, %v7269
          %v7273 = vadd.f32 %v7267, %v7269
          %s7274 = sld [smem:[#allocation22 + $0x12]]
          %v7275 = vstv %s7274
          %v7276 = vmul.f32 %v7275, %v6873
          %v7277 = vmul.f32 %v7275, %v6874
          %v7278 = vmul.f32 %v7275, %v6875
          %v7279 = vmul.f32 %v7275, %v6876
          %v7280 = vadd.f32 %v7276, 0.0
          %v7281 = vadd.f32 %v7277, 0.0
          %v7282 = vadd.f32 %v7278, 0.0
          %v7283 = vadd.f32 %v7279, 0.0
          %s7284 = sld [smem:[#allocation22 + $0x13]]
          %v7285 = vstv %s7284
          %v7286 = vmul.f32 %v7285, %v6873
          %v7287 = vmul.f32 %v7285, %v6874
          %v7288 = vmul.f32 %v7285, %v6875
          %v7289 = vmul.f32 %v7285, %v6876
          %7294 = vrot.lane.b32.xlu0 %v7286, 127
          %v7295 = vpop.permute.xlu0 %7294
          %7296 = vrot.lane.b32.xlu0 %v7287, 127
          %v7297 = vpop.permute.xlu0 %7296
          %7298 = vrot.lane.b32.xlu0 %v7288, 127
          %v7299 = vpop.permute.xlu0 %7298
          %7300 = vrot.lane.b32.xlu0 %v7289, 127
          %v7301 = vpop.permute.xlu0 %7300
          %v7306 = vadd.f32 %v7280, %v7295
          %v7307 = vadd.f32 %v7281, %v7297
          %v7308 = vadd.f32 %v7282, %v7299
          %v7309 = vadd.f32 %v7283, %v7301
          %s7310 = sld [smem:[#allocation22 + $0x14]]
          %v7311 = vstv %s7310
          %v7312 = vmul.f32 %v7311, %v6873
          %v7313 = vmul.f32 %v7311, %v6874
          %v7314 = vmul.f32 %v7311, %v6875
          %v7315 = vmul.f32 %v7311, %v6876
          %7320 = vrot.lane.b32.xlu0 %v7312, 126
          %v7321 = vpop.permute.xlu0 %7320
          %7322 = vrot.lane.b32.xlu0 %v7313, 126
          %v7323 = vpop.permute.xlu0 %7322
          %7324 = vrot.lane.b32.xlu0 %v7314, 126
          %v7325 = vpop.permute.xlu0 %7324
          %7326 = vrot.lane.b32.xlu0 %v7315, 126
          %v7327 = vpop.permute.xlu0 %7326
          %v7332 = vadd.f32 %v7306, %v7321
          %v7333 = vadd.f32 %v7307, %v7323
          %v7334 = vadd.f32 %v7308, %v7325
          %v7335 = vadd.f32 %v7309, %v7327
          %s7336 = sld [smem:[#allocation22 + $0x15]]
          %v7337 = vstv %s7336
          %v7338 = vmul.f32 %v7337, %v6939
          %v7339 = vmul.f32 %v7337, %v6940
          %v7340 = vmul.f32 %v7337, %v6941
          %v7341 = vmul.f32 %v7337, %v6942
          %v7342 = vadd.f32 %v7332, %v7338
          %v7343 = vadd.f32 %v7333, %v7339
          %v7344 = vadd.f32 %v7334, %v7340
          %v7345 = vadd.f32 %v7335, %v7341
          %s7346 = sld [smem:[#allocation22 + $0x16]]
          %v7347 = vstv %s7346
          %v7348 = vmul.f32 %v7347, %v6939
          %v7349 = vmul.f32 %v7347, %v6940
          %v7350 = vmul.f32 %v7347, %v6941
          %v7351 = vmul.f32 %v7347, %v6942
          %7356 = vrot.lane.b32.xlu0 %v7348, 127
          %v7357 = vpop.permute.xlu0 %7356
          %7358 = vrot.lane.b32.xlu0 %v7349, 127
          %v7359 = vpop.permute.xlu0 %7358
          %7360 = vrot.lane.b32.xlu0 %v7350, 127
          %v7361 = vpop.permute.xlu0 %7360
          %7362 = vrot.lane.b32.xlu0 %v7351, 127
          %v7363 = vpop.permute.xlu0 %7362
          %v7368 = vadd.f32 %v7342, %v7357
          %v7369 = vadd.f32 %v7343, %v7359
          %v7370 = vadd.f32 %v7344, %v7361
          %v7371 = vadd.f32 %v7345, %v7363
          %s7372 = sld [smem:[#allocation22 + $0x17]]
          %v7373 = vstv %s7372
          %v7374 = vmul.f32 %v7373, %v6939
          %v7375 = vmul.f32 %v7373, %v6940
          %v7376 = vmul.f32 %v7373, %v6941
          %v7377 = vmul.f32 %v7373, %v6942
          %7382 = vrot.lane.b32.xlu0 %v7374, 126
          %v7383 = vpop.permute.xlu0 %7382
          %7384 = vrot.lane.b32.xlu0 %v7375, 126
          %v7385 = vpop.permute.xlu0 %7384
          %7386 = vrot.lane.b32.xlu0 %v7376, 126
          %v7387 = vpop.permute.xlu0 %7386
          %7388 = vrot.lane.b32.xlu0 %v7377, 126
          %v7389 = vpop.permute.xlu0 %7388
          %v7394 = vadd.f32 %v7368, %v7383
          %v7395 = vadd.f32 %v7369, %v7385
          %v7396 = vadd.f32 %v7370, %v7387
          %v7397 = vadd.f32 %v7371, %v7389
          %s7398 = sld [smem:[#allocation22 + $0x18]]
          %v7399 = vstv %s7398
          %v7400 = vmul.f32 %v7399, %v7005
          %v7401 = vmul.f32 %v7399, %v7006
          %v7402 = vmul.f32 %v7399, %v7007
          %v7403 = vmul.f32 %v7399, %v7008
          %v7404 = vadd.f32 %v7394, %v7400
          %v7405 = vadd.f32 %v7395, %v7401
          %v7406 = vadd.f32 %v7396, %v7402
          %v7407 = vadd.f32 %v7397, %v7403
          %s7408 = sld [smem:[#allocation22 + $0x19]]
          %v7409 = vstv %s7408
          %v7410 = vmul.f32 %v7409, %v7005
          %v7411 = vmul.f32 %v7409, %v7006
          %v7412 = vmul.f32 %v7409, %v7007
          %v7413 = vmul.f32 %v7409, %v7008
          %7418 = vrot.lane.b32.xlu0 %v7410, 127
          %v7419 = vpop.permute.xlu0 %7418
          %7420 = vrot.lane.b32.xlu0 %v7411, 127
          %v7421 = vpop.permute.xlu0 %7420
          %7422 = vrot.lane.b32.xlu0 %v7412, 127
          %v7423 = vpop.permute.xlu0 %7422
          %7424 = vrot.lane.b32.xlu0 %v7413, 127
          %v7425 = vpop.permute.xlu0 %7424
          %v7430 = vadd.f32 %v7404, %v7419
          %v7431 = vadd.f32 %v7405, %v7421
          %v7432 = vadd.f32 %v7406, %v7423
          %v7433 = vadd.f32 %v7407, %v7425
          %s7434 = sld [smem:[#allocation22 + $0x1a]]
          %v7435 = vstv %s7434
          %v7436 = vmul.f32 %v7435, %v7005
          %v7437 = vmul.f32 %v7435, %v7006
          %v7438 = vmul.f32 %v7435, %v7007
          %v7439 = vmul.f32 %v7435, %v7008
          %7444 = vrot.lane.b32.xlu0 %v7436, 126
          %v7445 = vpop.permute.xlu0 %7444
          %7446 = vrot.lane.b32.xlu0 %v7437, 126
          %v7447 = vpop.permute.xlu0 %7446
          %7448 = vrot.lane.b32.xlu0 %v7438, 126
          %v7449 = vpop.permute.xlu0 %7448
          %7450 = vrot.lane.b32.xlu0 %v7439, 126
          %v7451 = vpop.permute.xlu0 %7450
          %v7456 = vadd.f32 %v7430, %v7445
          %v7457 = vadd.f32 %v7431, %v7447
          %v7458 = vadd.f32 %v7432, %v7449
          %v7459 = vadd.f32 %v7433, %v7451
          %s7460 = sld [smem:[#allocation22 + $0x1b]]
          %v7461 = vstv %s7460
          %v7462 = vmul.f32 %v7461, %v7071
          %v7463 = vmul.f32 %v7461, %v7072
          %v7464 = vmul.f32 %v7461, %v7073
          %v7465 = vmul.f32 %v7461, %v7074
          %v7466 = vadd.f32 %v7456, %v7462
          %v7467 = vadd.f32 %v7457, %v7463
          %v7468 = vadd.f32 %v7458, %v7464
          %v7469 = vadd.f32 %v7459, %v7465
          %s7470 = sld [smem:[#allocation22 + $0x1c]]
          %v7471 = vstv %s7470
          %v7472 = vmul.f32 %v7471, %v7071
          %v7473 = vmul.f32 %v7471, %v7072
          %v7474 = vmul.f32 %v7471, %v7073
          %v7475 = vmul.f32 %v7471, %v7074
          %7480 = vrot.lane.b32.xlu0 %v7472, 127
          %v7481 = vpop.permute.xlu0 %7480
          %7482 = vrot.lane.b32.xlu0 %v7473, 127
          %v7483 = vpop.permute.xlu0 %7482
          %7484 = vrot.lane.b32.xlu0 %v7474, 127
          %v7485 = vpop.permute.xlu0 %7484
          %7486 = vrot.lane.b32.xlu0 %v7475, 127
          %v7487 = vpop.permute.xlu0 %7486
          %v7492 = vadd.f32 %v7466, %v7481
          %v7493 = vadd.f32 %v7467, %v7483
          %v7494 = vadd.f32 %v7468, %v7485
          %v7495 = vadd.f32 %v7469, %v7487
          %s7496 = sld [smem:[#allocation22 + $0x1d]]
          %v7497 = vstv %s7496
          %v7498 = vmul.f32 %v7497, %v7071
          %v7499 = vmul.f32 %v7497, %v7072
          %v7500 = vmul.f32 %v7497, %v7073
          %v7501 = vmul.f32 %v7497, %v7074
          %7506 = vrot.lane.b32.xlu0 %v7498, 126
          %v7507 = vpop.permute.xlu0 %7506
          %7508 = vrot.lane.b32.xlu0 %v7499, 126
          %v7509 = vpop.permute.xlu0 %7508
          %7510 = vrot.lane.b32.xlu0 %v7500, 126
          %v7511 = vpop.permute.xlu0 %7510
          %7512 = vrot.lane.b32.xlu0 %v7501, 126
          %v7513 = vpop.permute.xlu0 %7512
          %v7518 = vadd.f32 %v7492, %v7507
          %v7519 = vadd.f32 %v7493, %v7509
          %v7520 = vadd.f32 %v7494, %v7511
          %v7521 = vadd.f32 %v7495, %v7513
          %s7522 = sld [smem:[#allocation22 + $0x1e]]
          %v7523 = vstv %s7522
          %v7524 = vmul.f32 %v7523, %v7137
          %v7525 = vmul.f32 %v7523, %v7138
          %v7526 = vmul.f32 %v7523, %v7139
          %v7527 = vmul.f32 %v7523, %v7140
          %v7528 = vadd.f32 %v7518, %v7524
          %v7529 = vadd.f32 %v7519, %v7525
          %v7530 = vadd.f32 %v7520, %v7526
          %v7531 = vadd.f32 %v7521, %v7527
          %s7532 = sld [smem:[#allocation22 + $0x1f]]
          %v7533 = vstv %s7532
          %v7534 = vmul.f32 %v7533, %v7137
          %v7535 = vmul.f32 %v7533, %v7138
          %v7536 = vmul.f32 %v7533, %v7139
          %v7537 = vmul.f32 %v7533, %v7140
          %7542 = vrot.lane.b32.xlu0 %v7534, 127
          %v7543 = vpop.permute.xlu0 %7542
          %7544 = vrot.lane.b32.xlu0 %v7535, 127
          %v7545 = vpop.permute.xlu0 %7544
          %7546 = vrot.lane.b32.xlu0 %v7536, 127
          %v7547 = vpop.permute.xlu0 %7546
          %7548 = vrot.lane.b32.xlu0 %v7537, 127
          %v7549 = vpop.permute.xlu0 %7548
          %v7554 = vadd.f32 %v7528, %v7543
          %v7555 = vadd.f32 %v7529, %v7545
          %v7556 = vadd.f32 %v7530, %v7547
          %v7557 = vadd.f32 %v7531, %v7549
          %s7558 = sld [smem:[#allocation22 + $0x20]]
          %v7559 = vstv %s7558
          %v7560 = vmul.f32 %v7559, %v7137
          %v7561 = vmul.f32 %v7559, %v7138
          %v7562 = vmul.f32 %v7559, %v7139
          %v7563 = vmul.f32 %v7559, %v7140
          %7568 = vrot.lane.b32.xlu0 %v7560, 126
          %v7569 = vpop.permute.xlu0 %7568
          %7570 = vrot.lane.b32.xlu0 %v7561, 126
          %v7571 = vpop.permute.xlu0 %7570
          %7572 = vrot.lane.b32.xlu0 %v7562, 126
          %v7573 = vpop.permute.xlu0 %7572
          %7574 = vrot.lane.b32.xlu0 %v7563, 126
          %v7575 = vpop.permute.xlu0 %7574
          %v7580 = vadd.f32 %v7554, %v7569
          %v7581 = vadd.f32 %v7555, %v7571
          %v7582 = vadd.f32 %v7556, %v7573
          %v7583 = vadd.f32 %v7557, %v7575
          %s7584 = sld [smem:[#allocation22 + $0x21]]
          %v7585 = vstv %s7584
          %v7586 = vmul.f32 %v7585, %v7203
          %v7587 = vmul.f32 %v7585, %v7204
          %v7588 = vmul.f32 %v7585, %v7205
          %v7589 = vmul.f32 %v7585, %v7206
          %v7590 = vadd.f32 %v7580, %v7586
          %v7591 = vadd.f32 %v7581, %v7587
          %v7592 = vadd.f32 %v7582, %v7588
          %v7593 = vadd.f32 %v7583, %v7589
          %s7594 = sld [smem:[#allocation22 + $0x22]]
          %v7595 = vstv %s7594
          %v7596 = vmul.f32 %v7595, %v7203
          %v7597 = vmul.f32 %v7595, %v7204
          %v7598 = vmul.f32 %v7595, %v7205
          %v7599 = vmul.f32 %v7595, %v7206
          %7604 = vrot.lane.b32.xlu0 %v7596, 127
          %v7605 = vpop.permute.xlu0 %7604
          %7606 = vrot.lane.b32.xlu0 %v7597, 127
          %v7607 = vpop.permute.xlu0 %7606
          %7608 = vrot.lane.b32.xlu0 %v7598, 127
          %v7609 = vpop.permute.xlu0 %7608
          %7610 = vrot.lane.b32.xlu0 %v7599, 127
          %v7611 = vpop.permute.xlu0 %7610
          %v7616 = vadd.f32 %v7590, %v7605
          %v7617 = vadd.f32 %v7591, %v7607
          %v7618 = vadd.f32 %v7592, %v7609
          %v7619 = vadd.f32 %v7593, %v7611
          %s7620 = sld [smem:[#allocation22 + $0x23]]
          %v7621 = vstv %s7620
          %v7622 = vmul.f32 %v7621, %v7203
          %v7623 = vmul.f32 %v7621, %v7204
          %v7624 = vmul.f32 %v7621, %v7205
          %v7625 = vmul.f32 %v7621, %v7206
          %7630 = vrot.lane.b32.xlu0 %v7622, 126
          %v7631 = vpop.permute.xlu0 %7630
          %7632 = vrot.lane.b32.xlu0 %v7623, 126
          %v7633 = vpop.permute.xlu0 %7632
          %7634 = vrot.lane.b32.xlu0 %v7624, 126
          %v7635 = vpop.permute.xlu0 %7634
          %7636 = vrot.lane.b32.xlu0 %v7625, 126
          %v7637 = vpop.permute.xlu0 %7636
          %v7642 = vadd.f32 %v7616, %v7631
          %v7643 = vadd.f32 %v7617, %v7633
          %v7644 = vadd.f32 %v7618, %v7635
          %v7645 = vadd.f32 %v7619, %v7637
          %s7646 = sld [smem:[#allocation24 + $0x1]]
          %v7647 = vstv %s7646
          %v7648 = vadd.f32 %v7642, %v7647
          %v7649 = vadd.f32 %v7643, %v7647
          %v7650 = vadd.f32 %v7644, %v7647
          %v7651 = vadd.f32 %v7645, %v7647
          %v7652 = vsub.f32 0.0, %v7270
          %v7653 = vsub.f32 0.0, %v7271
          %v7654 = vsub.f32 0.0, %v7272
          %v7655 = vsub.f32 0.0, %v7273
          %v7656 = vmul.f32 %v7652, 1.442695
          %v7657 = vpow.pop %v7656
          %v7658 = vmul.f32 %v7653, 1.442695
          %v7659 = vpow.pop %v7658
          %v7660 = vmul.f32 %v7654, 1.442695
          %v7661 = vpow.pop %v7660
          %v7662 = vmul.f32 %v7655, 1.442695
          %v7663 = vpow.pop %v7662
          %v7664 = vadd.f32 %v7657, 1.0
          %v7665 = vadd.f32 %v7659, 1.0
          %v7666 = vadd.f32 %v7661, 1.0
          %v7667 = vadd.f32 %v7663, 1.0
          %v7668 = vrcp.pop %v7664
          %v7669 = vmul.f32 %v7664, %v7668
          %v7670 = vsub.f32 1.0, %v7669
          %v7671 = vmul.f32 %v7668, %v7670
          %v7672 = vadd.f32 %v7668, %v7671
          %vm7673 = vweird.f32 %v7664
          %vm7674 = vweird.f32 %v7668
          %vm7675 = vmor %vm7673, %vm7674
          %v7676 = vsel %vm7675, %v7668, %v7672
          %v7677 = vand.u32 2147483647, %v7664
          %vm7678 = vcmp.eq.f32.partialorder %v7677, 8.507059e+37
          %v7679 = vand.u32 %v7664, 2147483648
          %v7680 = vor.u32 1.1754944e-38, %v7679
          %v7681 = vsel %vm7678, %v7680, %v7676
          %v7682 = vmul.f32 1.0, %v7681
          %v7683 = vrcp.pop %v7665
          %v7684 = vmul.f32 %v7665, %v7683
          %v7685 = vsub.f32 1.0, %v7684
          %v7686 = vmul.f32 %v7683, %v7685
          %v7687 = vadd.f32 %v7683, %v7686
          %vm7688 = vweird.f32 %v7665
          %vm7689 = vweird.f32 %v7683
          %vm7690 = vmor %vm7688, %vm7689
          %v7691 = vsel %vm7690, %v7683, %v7687
          %v7692 = vand.u32 2147483647, %v7665
          %vm7693 = vcmp.eq.f32.partialorder %v7692, 8.507059e+37
          %v7694 = vand.u32 %v7665, 2147483648
          %v7695 = vor.u32 1.1754944e-38, %v7694
          %v7696 = vsel %vm7693, %v7695, %v7691
          %v7697 = vmul.f32 1.0, %v7696
          %v7698 = vrcp.pop %v7666
          %v7699 = vmul.f32 %v7666, %v7698
          %v7700 = vsub.f32 1.0, %v7699
          %v7701 = vmul.f32 %v7698, %v7700
          %v7702 = vadd.f32 %v7698, %v7701
          %vm7703 = vweird.f32 %v7666
          %vm7704 = vweird.f32 %v7698
          %vm7705 = vmor %vm7703, %vm7704
          %v7706 = vsel %vm7705, %v7698, %v7702
          %v7707 = vand.u32 2147483647, %v7666
          %vm7708 = vcmp.eq.f32.partialorder %v7707, 8.507059e+37
          %v7709 = vand.u32 %v7666, 2147483648
          %v7710 = vor.u32 1.1754944e-38, %v7709
          %v7711 = vsel %vm7708, %v7710, %v7706
          %v7712 = vmul.f32 1.0, %v7711
          %v7713 = vrcp.pop %v7667
          %v7714 = vmul.f32 %v7667, %v7713
          %v7715 = vsub.f32 1.0, %v7714
          %v7716 = vmul.f32 %v7713, %v7715
          %v7717 = vadd.f32 %v7713, %v7716
          %vm7718 = vweird.f32 %v7667
          %vm7719 = vweird.f32 %v7713
          %vm7720 = vmor %vm7718, %vm7719
          %v7721 = vsel %vm7720, %v7713, %v7717
          %v7722 = vand.u32 2147483647, %v7667
          %vm7723 = vcmp.eq.f32.partialorder %v7722, 8.507059e+37
          %v7724 = vand.u32 %v7667, 2147483648
          %v7725 = vor.u32 1.1754944e-38, %v7724
          %v7726 = vsel %vm7723, %v7725, %v7721
          %v7727 = vmul.f32 1.0, %v7726
          %v7728 = vsub.f32 0.0, %v7648
          %v7729 = vsub.f32 0.0, %v7649
          %v7730 = vsub.f32 0.0, %v7650
          %v7731 = vsub.f32 0.0, %v7651
          %v7732 = vmul.f32 %v7728, 1.442695
          %v7733 = vpow.pop %v7732
          %v7734 = vmul.f32 %v7729, 1.442695
          %v7735 = vpow.pop %v7734
          %v7736 = vmul.f32 %v7730, 1.442695
          %v7737 = vpow.pop %v7736
          %v7738 = vmul.f32 %v7731, 1.442695
          %v7739 = vpow.pop %v7738
          %v7740 = vadd.f32 %v7733, 1.0
          %v7741 = vadd.f32 %v7735, 1.0
          %v7742 = vadd.f32 %v7737, 1.0
          %v7743 = vadd.f32 %v7739, 1.0
          %v7744 = vrcp.pop %v7740
          %v7745 = vmul.f32 %v7740, %v7744
          %v7746 = vsub.f32 1.0, %v7745
          %v7747 = vmul.f32 %v7744, %v7746
          %v7748 = vadd.f32 %v7744, %v7747
          %vm7749 = vweird.f32 %v7740
          %vm7750 = vweird.f32 %v7744
          %vm7751 = vmor %vm7749, %vm7750
          %v7752 = vsel %vm7751, %v7744, %v7748
          %v7753 = vand.u32 2147483647, %v7740
          %vm7754 = vcmp.eq.f32.partialorder %v7753, 8.507059e+37
          %v7755 = vand.u32 %v7740, 2147483648
          %v7756 = vor.u32 1.1754944e-38, %v7755
          %v7757 = vsel %vm7754, %v7756, %v7752
          %v7758 = vmul.f32 1.0, %v7757
          %v7759 = vrcp.pop %v7741
          %v7760 = vmul.f32 %v7741, %v7759
          %v7761 = vsub.f32 1.0, %v7760
          %v7762 = vmul.f32 %v7759, %v7761
          %v7763 = vadd.f32 %v7759, %v7762
          %vm7764 = vweird.f32 %v7741
          %vm7765 = vweird.f32 %v7759
          %vm7766 = vmor %vm7764, %vm7765
          %v7767 = vsel %vm7766, %v7759, %v7763
          %v7768 = vand.u32 2147483647, %v7741
          %vm7769 = vcmp.eq.f32.partialorder %v7768, 8.507059e+37
          %v7770 = vand.u32 %v7741, 2147483648
          %v7771 = vor.u32 1.1754944e-38, %v7770
          %v7772 = vsel %vm7769, %v7771, %v7767
          %v7773 = vmul.f32 1.0, %v7772
          %v7774 = vrcp.pop %v7742
          %v7775 = vmul.f32 %v7742, %v7774
          %v7776 = vsub.f32 1.0, %v7775
          %v7777 = vmul.f32 %v7774, %v7776
          %v7778 = vadd.f32 %v7774, %v7777
          %vm7779 = vweird.f32 %v7742
          %vm7780 = vweird.f32 %v7774
          %vm7781 = vmor %vm7779, %vm7780
          %v7782 = vsel %vm7781, %v7774, %v7778
          %v7783 = vand.u32 2147483647, %v7742
          %vm7784 = vcmp.eq.f32.partialorder %v7783, 8.507059e+37
          %v7785 = vand.u32 %v7742, 2147483648
          %v7786 = vor.u32 1.1754944e-38, %v7785
          %v7787 = vsel %vm7784, %v7786, %v7782
          %v7788 = vmul.f32 1.0, %v7787
          %v7789 = vrcp.pop %v7743
          %v7790 = vmul.f32 %v7743, %v7789
          %v7791 = vsub.f32 1.0, %v7790
          %v7792 = vmul.f32 %v7789, %v7791
          %v7793 = vadd.f32 %v7789, %v7792
          %vm7794 = vweird.f32 %v7743
          %vm7795 = vweird.f32 %v7789
          %vm7796 = vmor %vm7794, %vm7795
          %v7797 = vsel %vm7796, %v7789, %v7793
          %v7798 = vand.u32 2147483647, %v7743
          %vm7799 = vcmp.eq.f32.partialorder %v7798, 8.507059e+37
          %v7800 = vand.u32 %v7743, 2147483648
          %v7801 = vor.u32 1.1754944e-38, %v7800
          %v7802 = vsel %vm7799, %v7801, %v7797
          %v7803 = vmul.f32 1.0, %v7802
          %7808 = vrot.lane.b32.xlu0 %v7682, 1
          %v7809 = vpop.permute.xlu0 %7808
          %7810 = vrot.lane.b32.xlu0 %v7697, 1
          %v7811 = vpop.permute.xlu0 %7810
          %7812 = vrot.lane.b32.xlu0 %v7712, 1
          %v7813 = vpop.permute.xlu0 %7812
          %7814 = vrot.lane.b32.xlu0 %v7727, 1
          %v7815 = vpop.permute.xlu0 %7814
          %7820 = vst.msk [vmem:[#allocation4 + $0x1] sm:$0xff] %vm6846, %v7809
          %7821 = vst.msk [vmem:[#allocation4 + $0x9] sm:$0xff] %vm6846, %v7811
          %7822 = vst.msk [vmem:[#allocation4 + $0x11] sm:$0xff] %vm6846, %v7813
          %7823 = vst.msk [vmem:[#allocation4 + $0x19] sm:$0xff] %vm6846, %v7815
          %7828 = vrot.lane.b32.xlu0 %v7758, 1
          %v7829 = vpop.permute.xlu0 %7828
          %7830 = vrot.lane.b32.xlu0 %v7773, 1
          %v7831 = vpop.permute.xlu0 %7830
          %7832 = vrot.lane.b32.xlu0 %v7788, 1
          %v7833 = vpop.permute.xlu0 %7832
          %7834 = vrot.lane.b32.xlu0 %v7803, 1
          %v7835 = vpop.permute.xlu0 %7834
          %7840 = vst.msk [vmem:[%s6867 + $0x1] sm:$0xff] %vm6846, %v7829
          %7841 = vst.msk [vmem:[%s6867 + $0x9] sm:$0xff] %vm6846, %v7831
          %7842 = vst.msk [vmem:[%s6867 + $0x11] sm:$0xff] %vm6846, %v7833
          %7843 = vst.msk [vmem:[%s6867 + $0x19] sm:$0xff] %vm6846, %v7835
          %s7844 = sld [smem:[#allocation25]]
          %v7845 = vld [vmem:[#allocation4] sm:$0xff]
          %v7846 = vld [vmem:[#allocation4 + $0x8] sm:$0xff]
          %v7847 = vld [vmem:[#allocation4 + $0x10] sm:$0xff]
          %v7848 = vld [vmem:[#allocation4 + $0x18] sm:$0xff]
          %v7849 = vstv %s7844
          %v7850 = vmul.f32 %v7849, %v7845
          %v7851 = vmul.f32 %v7849, %v7846
          %v7852 = vmul.f32 %v7849, %v7847
          %v7853 = vmul.f32 %v7849, %v7848
          %v7854 = vadd.f32 %v7850, 0.0
          %v7855 = vadd.f32 %v7851, 0.0
          %v7856 = vadd.f32 %v7852, 0.0
          %v7857 = vadd.f32 %v7853, 0.0
          %s7858 = sld [smem:[#allocation25 + $0x1]]
          %v7859 = vstv %s7858
          %v7860 = vmul.f32 %v7859, %v7845
          %v7861 = vmul.f32 %v7859, %v7846
          %v7862 = vmul.f32 %v7859, %v7847
          %v7863 = vmul.f32 %v7859, %v7848
          %7868 = vrot.lane.b32.xlu0 %v7860, 127
          %v7869 = vpop.permute.xlu0 %7868
          %7870 = vrot.lane.b32.xlu0 %v7861, 127
          %v7871 = vpop.permute.xlu0 %7870
          %7872 = vrot.lane.b32.xlu0 %v7862, 127
          %v7873 = vpop.permute.xlu0 %7872
          %7874 = vrot.lane.b32.xlu0 %v7863, 127
          %v7875 = vpop.permute.xlu0 %7874
          %v7880 = vadd.f32 %v7854, %v7869
          %v7881 = vadd.f32 %v7855, %v7871
          %v7882 = vadd.f32 %v7856, %v7873
          %v7883 = vadd.f32 %v7857, %v7875
          %s7884 = sld [smem:[#allocation25 + $0x2]]
          %v7885 = vstv %s7884
          %v7886 = vmul.f32 %v7885, %v7845
          %v7887 = vmul.f32 %v7885, %v7846
          %v7888 = vmul.f32 %v7885, %v7847
          %v7889 = vmul.f32 %v7885, %v7848
          %7894 = vrot.lane.b32.xlu0 %v7886, 126
          %v7895 = vpop.permute.xlu0 %7894
          %7896 = vrot.lane.b32.xlu0 %v7887, 126
          %v7897 = vpop.permute.xlu0 %7896
          %7898 = vrot.lane.b32.xlu0 %v7888, 126
          %v7899 = vpop.permute.xlu0 %7898
          %7900 = vrot.lane.b32.xlu0 %v7889, 126
          %v7901 = vpop.permute.xlu0 %7900
          %v7906 = vadd.f32 %v7880, %v7895
          %v7907 = vadd.f32 %v7881, %v7897
          %v7908 = vadd.f32 %v7882, %v7899
          %v7909 = vadd.f32 %v7883, %v7901
          %s7910 = sld [smem:[#allocation25 + $0x3]]
          %v7911 = vld [vmem:[#allocation4 + $0x1] sm:$0xff]
          %v7912 = vld [vmem:[#allocation4 + $0x9] sm:$0xff]
          %v7913 = vld [vmem:[#allocation4 + $0x11] sm:$0xff]
          %v7914 = vld [vmem:[#allocation4 + $0x19] sm:$0xff]
          %v7915 = vstv %s7910
          %v7916 = vmul.f32 %v7915, %v7911
          %v7917 = vmul.f32 %v7915, %v7912
          %v7918 = vmul.f32 %v7915, %v7913
          %v7919 = vmul.f32 %v7915, %v7914
          %v7920 = vadd.f32 %v7906, %v7916
          %v7921 = vadd.f32 %v7907, %v7917
          %v7922 = vadd.f32 %v7908, %v7918
          %v7923 = vadd.f32 %v7909, %v7919
          %s7924 = sld [smem:[#allocation25 + $0x4]]
          %v7925 = vstv %s7924
          %v7926 = vmul.f32 %v7925, %v7911
          %v7927 = vmul.f32 %v7925, %v7912
          %v7928 = vmul.f32 %v7925, %v7913
          %v7929 = vmul.f32 %v7925, %v7914
          %7934 = vrot.lane.b32.xlu0 %v7926, 127
          %v7935 = vpop.permute.xlu0 %7934
          %7936 = vrot.lane.b32.xlu0 %v7927, 127
          %v7937 = vpop.permute.xlu0 %7936
          %7938 = vrot.lane.b32.xlu0 %v7928, 127
          %v7939 = vpop.permute.xlu0 %7938
          %7940 = vrot.lane.b32.xlu0 %v7929, 127
          %v7941 = vpop.permute.xlu0 %7940
          %v7946 = vadd.f32 %v7920, %v7935
          %v7947 = vadd.f32 %v7921, %v7937
          %v7948 = vadd.f32 %v7922, %v7939
          %v7949 = vadd.f32 %v7923, %v7941
          %s7950 = sld [smem:[#allocation25 + $0x5]]
          %v7951 = vstv %s7950
          %v7952 = vmul.f32 %v7951, %v7911
          %v7953 = vmul.f32 %v7951, %v7912
          %v7954 = vmul.f32 %v7951, %v7913
          %v7955 = vmul.f32 %v7951, %v7914
          %7960 = vrot.lane.b32.xlu0 %v7952, 126
          %v7961 = vpop.permute.xlu0 %7960
          %7962 = vrot.lane.b32.xlu0 %v7953, 126
          %v7963 = vpop.permute.xlu0 %7962
          %7964 = vrot.lane.b32.xlu0 %v7954, 126
          %v7965 = vpop.permute.xlu0 %7964
          %7966 = vrot.lane.b32.xlu0 %v7955, 126
          %v7967 = vpop.permute.xlu0 %7966
          %v7972 = vadd.f32 %v7946, %v7961
          %v7973 = vadd.f32 %v7947, %v7963
          %v7974 = vadd.f32 %v7948, %v7965
          %v7975 = vadd.f32 %v7949, %v7967
          %s7976 = sld [smem:[#allocation25 + $0x6]]
          %v7977 = vld [vmem:[#allocation4 + $0x2] sm:$0xff]
          %v7978 = vld [vmem:[#allocation4 + $0xa] sm:$0xff]
          %v7979 = vld [vmem:[#allocation4 + $0x12] sm:$0xff]
          %v7980 = vld [vmem:[#allocation4 + $0x1a] sm:$0xff]
          %v7981 = vstv %s7976
          %v7982 = vmul.f32 %v7981, %v7977
          %v7983 = vmul.f32 %v7981, %v7978
          %v7984 = vmul.f32 %v7981, %v7979
          %v7985 = vmul.f32 %v7981, %v7980
          %v7986 = vadd.f32 %v7972, %v7982
          %v7987 = vadd.f32 %v7973, %v7983
          %v7988 = vadd.f32 %v7974, %v7984
          %v7989 = vadd.f32 %v7975, %v7985
          %s7990 = sld [smem:[#allocation25 + $0x7]]
          %v7991 = vstv %s7990
          %v7992 = vmul.f32 %v7991, %v7977
          %v7993 = vmul.f32 %v7991, %v7978
          %v7994 = vmul.f32 %v7991, %v7979
          %v7995 = vmul.f32 %v7991, %v7980
          %8000 = vrot.lane.b32.xlu0 %v7992, 127
          %v8001 = vpop.permute.xlu0 %8000
          %8002 = vrot.lane.b32.xlu0 %v7993, 127
          %v8003 = vpop.permute.xlu0 %8002
          %8004 = vrot.lane.b32.xlu0 %v7994, 127
          %v8005 = vpop.permute.xlu0 %8004
          %8006 = vrot.lane.b32.xlu0 %v7995, 127
          %v8007 = vpop.permute.xlu0 %8006
          %v8012 = vadd.f32 %v7986, %v8001
          %v8013 = vadd.f32 %v7987, %v8003
          %v8014 = vadd.f32 %v7988, %v8005
          %v8015 = vadd.f32 %v7989, %v8007
          %s8016 = sld [smem:[#allocation25 + $0x8]]
          %v8017 = vstv %s8016
          %v8018 = vmul.f32 %v8017, %v7977
          %v8019 = vmul.f32 %v8017, %v7978
          %v8020 = vmul.f32 %v8017, %v7979
          %v8021 = vmul.f32 %v8017, %v7980
          %8026 = vrot.lane.b32.xlu0 %v8018, 126
          %v8027 = vpop.permute.xlu0 %8026
          %8028 = vrot.lane.b32.xlu0 %v8019, 126
          %v8029 = vpop.permute.xlu0 %8028
          %8030 = vrot.lane.b32.xlu0 %v8020, 126
          %v8031 = vpop.permute.xlu0 %8030
          %8032 = vrot.lane.b32.xlu0 %v8021, 126
          %v8033 = vpop.permute.xlu0 %8032
          %v8038 = vadd.f32 %v8012, %v8027
          %v8039 = vadd.f32 %v8013, %v8029
          %v8040 = vadd.f32 %v8014, %v8031
          %v8041 = vadd.f32 %v8015, %v8033
          %s8042 = sld [smem:[#allocation25 + $0x9]]
          %v8043 = vld [vmem:[%s6867] sm:$0xff]
          %v8044 = vld [vmem:[%s6867 + $0x8] sm:$0xff]
          %v8045 = vld [vmem:[%s6867 + $0x10] sm:$0xff]
          %v8046 = vld [vmem:[%s6867 + $0x18] sm:$0xff]
          %v8047 = vstv %s8042
          %v8048 = vmul.f32 %v8047, %v8043
          %v8049 = vmul.f32 %v8047, %v8044
          %v8050 = vmul.f32 %v8047, %v8045
          %v8051 = vmul.f32 %v8047, %v8046
          %v8052 = vadd.f32 %v8038, %v8048
          %v8053 = vadd.f32 %v8039, %v8049
          %v8054 = vadd.f32 %v8040, %v8050
          %v8055 = vadd.f32 %v8041, %v8051
          %s8056 = sld [smem:[#allocation25 + $0xa]]
          %v8057 = vstv %s8056
          %v8058 = vmul.f32 %v8057, %v8043
          %v8059 = vmul.f32 %v8057, %v8044
          %v8060 = vmul.f32 %v8057, %v8045
          %v8061 = vmul.f32 %v8057, %v8046
          %8066 = vrot.lane.b32.xlu0 %v8058, 127
          %v8067 = vpop.permute.xlu0 %8066
          %8068 = vrot.lane.b32.xlu0 %v8059, 127
          %v8069 = vpop.permute.xlu0 %8068
          %8070 = vrot.lane.b32.xlu0 %v8060, 127
          %v8071 = vpop.permute.xlu0 %8070
          %8072 = vrot.lane.b32.xlu0 %v8061, 127
          %v8073 = vpop.permute.xlu0 %8072
          %v8078 = vadd.f32 %v8052, %v8067
          %v8079 = vadd.f32 %v8053, %v8069
          %v8080 = vadd.f32 %v8054, %v8071
          %v8081 = vadd.f32 %v8055, %v8073
          %s8082 = sld [smem:[#allocation25 + $0xb]]
          %v8083 = vstv %s8082
          %v8084 = vmul.f32 %v8083, %v8043
          %v8085 = vmul.f32 %v8083, %v8044
          %v8086 = vmul.f32 %v8083, %v8045
          %v8087 = vmul.f32 %v8083, %v8046
          %8092 = vrot.lane.b32.xlu0 %v8084, 126
          %v8093 = vpop.permute.xlu0 %8092
          %8094 = vrot.lane.b32.xlu0 %v8085, 126
          %v8095 = vpop.permute.xlu0 %8094
          %8096 = vrot.lane.b32.xlu0 %v8086, 126
          %v8097 = vpop.permute.xlu0 %8096
          %8098 = vrot.lane.b32.xlu0 %v8087, 126
          %v8099 = vpop.permute.xlu0 %8098
          %v8104 = vadd.f32 %v8078, %v8093
          %v8105 = vadd.f32 %v8079, %v8095
          %v8106 = vadd.f32 %v8080, %v8097
          %v8107 = vadd.f32 %v8081, %v8099
          %s8108 = sld [smem:[#allocation25 + $0xc]]
          %v8109 = vld [vmem:[%s6867 + $0x1] sm:$0xff]
          %v8110 = vld [vmem:[%s6867 + $0x9] sm:$0xff]
          %v8111 = vld [vmem:[%s6867 + $0x11] sm:$0xff]
          %v8112 = vld [vmem:[%s6867 + $0x19] sm:$0xff]
          %v8113 = vstv %s8108
          %v8114 = vmul.f32 %v8113, %v8109
          %v8115 = vmul.f32 %v8113, %v8110
          %v8116 = vmul.f32 %v8113, %v8111
          %v8117 = vmul.f32 %v8113, %v8112
          %v8118 = vadd.f32 %v8104, %v8114
          %v8119 = vadd.f32 %v8105, %v8115
          %v8120 = vadd.f32 %v8106, %v8116
          %v8121 = vadd.f32 %v8107, %v8117
          %s8122 = sld [smem:[#allocation25 + $0xd]]
          %v8123 = vstv %s8122
          %v8124 = vmul.f32 %v8123, %v8109
          %v8125 = vmul.f32 %v8123, %v8110
          %v8126 = vmul.f32 %v8123, %v8111
          %v8127 = vmul.f32 %v8123, %v8112
          %8132 = vrot.lane.b32.xlu0 %v8124, 127
          %v8133 = vpop.permute.xlu0 %8132
          %8134 = vrot.lane.b32.xlu0 %v8125, 127
          %v8135 = vpop.permute.xlu0 %8134
          %8136 = vrot.lane.b32.xlu0 %v8126, 127
          %v8137 = vpop.permute.xlu0 %8136
          %8138 = vrot.lane.b32.xlu0 %v8127, 127
          %v8139 = vpop.permute.xlu0 %8138
          %v8144 = vadd.f32 %v8118, %v8133
          %v8145 = vadd.f32 %v8119, %v8135
          %v8146 = vadd.f32 %v8120, %v8137
          %v8147 = vadd.f32 %v8121, %v8139
          %s8148 = sld [smem:[#allocation25 + $0xe]]
          %v8149 = vstv %s8148
          %v8150 = vmul.f32 %v8149, %v8109
          %v8151 = vmul.f32 %v8149, %v8110
          %v8152 = vmul.f32 %v8149, %v8111
          %v8153 = vmul.f32 %v8149, %v8112
          %8158 = vrot.lane.b32.xlu0 %v8150, 126
          %v8159 = vpop.permute.xlu0 %8158
          %8160 = vrot.lane.b32.xlu0 %v8151, 126
          %v8161 = vpop.permute.xlu0 %8160
          %8162 = vrot.lane.b32.xlu0 %v8152, 126
          %v8163 = vpop.permute.xlu0 %8162
          %8164 = vrot.lane.b32.xlu0 %v8153, 126
          %v8165 = vpop.permute.xlu0 %8164
          %v8170 = vadd.f32 %v8144, %v8159
          %v8171 = vadd.f32 %v8145, %v8161
          %v8172 = vadd.f32 %v8146, %v8163
          %v8173 = vadd.f32 %v8147, %v8165
          %s8174 = sld [smem:[#allocation25 + $0xf]]
          %v8175 = vld [vmem:[%s6867 + $0x2] sm:$0xff]
          %v8176 = vld [vmem:[%s6867 + $0xa] sm:$0xff]
          %v8177 = vld [vmem:[%s6867 + $0x12] sm:$0xff]
          %v8178 = vld [vmem:[%s6867 + $0x1a] sm:$0xff]
          %v8179 = vstv %s8174
          %v8180 = vmul.f32 %v8179, %v8175
          %v8181 = vmul.f32 %v8179, %v8176
          %v8182 = vmul.f32 %v8179, %v8177
          %v8183 = vmul.f32 %v8179, %v8178
          %v8184 = vadd.f32 %v8170, %v8180
          %v8185 = vadd.f32 %v8171, %v8181
          %v8186 = vadd.f32 %v8172, %v8182
          %v8187 = vadd.f32 %v8173, %v8183
          %s8188 = sld [smem:[#allocation25 + $0x10]]
          %v8189 = vstv %s8188
          %v8190 = vmul.f32 %v8189, %v8175
          %v8191 = vmul.f32 %v8189, %v8176
          %v8192 = vmul.f32 %v8189, %v8177
          %v8193 = vmul.f32 %v8189, %v8178
          %8198 = vrot.lane.b32.xlu0 %v8190, 127
          %v8199 = vpop.permute.xlu0 %8198
          %8200 = vrot.lane.b32.xlu0 %v8191, 127
          %v8201 = vpop.permute.xlu0 %8200
          %8202 = vrot.lane.b32.xlu0 %v8192, 127
          %v8203 = vpop.permute.xlu0 %8202
          %8204 = vrot.lane.b32.xlu0 %v8193, 127
          %v8205 = vpop.permute.xlu0 %8204
          %v8210 = vadd.f32 %v8184, %v8199
          %v8211 = vadd.f32 %v8185, %v8201
          %v8212 = vadd.f32 %v8186, %v8203
          %v8213 = vadd.f32 %v8187, %v8205
          %s8214 = sld [smem:[#allocation25 + $0x11]]
          %v8215 = vstv %s8214
          %v8216 = vmul.f32 %v8215, %v8175
          %v8217 = vmul.f32 %v8215, %v8176
          %v8218 = vmul.f32 %v8215, %v8177
          %v8219 = vmul.f32 %v8215, %v8178
          %8224 = vrot.lane.b32.xlu0 %v8216, 126
          %v8225 = vpop.permute.xlu0 %8224
          %8226 = vrot.lane.b32.xlu0 %v8217, 126
          %v8227 = vpop.permute.xlu0 %8226
          %8228 = vrot.lane.b32.xlu0 %v8218, 126
          %v8229 = vpop.permute.xlu0 %8228
          %8230 = vrot.lane.b32.xlu0 %v8219, 126
          %v8231 = vpop.permute.xlu0 %8230
          %v8236 = vadd.f32 %v8210, %v8225
          %v8237 = vadd.f32 %v8211, %v8227
          %v8238 = vadd.f32 %v8212, %v8229
          %v8239 = vadd.f32 %v8213, %v8231
          %s8240 = sld [smem:[#allocation5]]
          %v8241 = vstv %s8240
          %v8242 = vadd.f32 %v8236, %v8241
          %v8243 = vadd.f32 %v8237, %v8241
          %v8244 = vadd.f32 %v8238, %v8241
          %v8245 = vadd.f32 %v8239, %v8241
          %v8246 = vsub.f32 0.0, %v8242
          %v8247 = vsub.f32 0.0, %v8243
          %v8248 = vsub.f32 0.0, %v8244
          %v8249 = vsub.f32 0.0, %v8245
          %v8250 = vmul.f32 %v8246, 1.442695
          %v8251 = vpow.pop %v8250
          %v8252 = vmul.f32 %v8247, 1.442695
          %v8253 = vpow.pop %v8252
          %v8254 = vmul.f32 %v8248, 1.442695
          %v8255 = vpow.pop %v8254
          %v8256 = vmul.f32 %v8249, 1.442695
          %v8257 = vpow.pop %v8256
          %v8258 = vadd.f32 %v8251, 1.0
          %v8259 = vadd.f32 %v8253, 1.0
          %v8260 = vadd.f32 %v8255, 1.0
          %v8261 = vadd.f32 %v8257, 1.0
          %v8262 = vrcp.pop %v8258
          %v8263 = vmul.f32 %v8258, %v8262
          %v8264 = vsub.f32 1.0, %v8263
          %v8265 = vmul.f32 %v8262, %v8264
          %v8266 = vadd.f32 %v8262, %v8265
          %vm8267 = vweird.f32 %v8258
          %vm8268 = vweird.f32 %v8262
          %vm8269 = vmor %vm8267, %vm8268
          %v8270 = vsel %vm8269, %v8262, %v8266
          %v8271 = vand.u32 2147483647, %v8258
          %vm8272 = vcmp.eq.f32.partialorder %v8271, 8.507059e+37
          %v8273 = vand.u32 %v8258, 2147483648
          %v8274 = vor.u32 1.1754944e-38, %v8273
          %v8275 = vsel %vm8272, %v8274, %v8270
          %v8276 = vmul.f32 1.0, %v8275
          %v8277 = vrcp.pop %v8259
          %v8278 = vmul.f32 %v8259, %v8277
          %v8279 = vsub.f32 1.0, %v8278
          %v8280 = vmul.f32 %v8277, %v8279
          %v8281 = vadd.f32 %v8277, %v8280
          %vm8282 = vweird.f32 %v8259
          %vm8283 = vweird.f32 %v8277
          %vm8284 = vmor %vm8282, %vm8283
          %v8285 = vsel %vm8284, %v8277, %v8281
          %v8286 = vand.u32 2147483647, %v8259
          %vm8287 = vcmp.eq.f32.partialorder %v8286, 8.507059e+37
          %v8288 = vand.u32 %v8259, 2147483648
          %v8289 = vor.u32 1.1754944e-38, %v8288
          %v8290 = vsel %vm8287, %v8289, %v8285
          %v8291 = vmul.f32 1.0, %v8290
          %v8292 = vrcp.pop %v8260
          %v8293 = vmul.f32 %v8260, %v8292
          %v8294 = vsub.f32 1.0, %v8293
          %v8295 = vmul.f32 %v8292, %v8294
          %v8296 = vadd.f32 %v8292, %v8295
          %vm8297 = vweird.f32 %v8260
          %vm8298 = vweird.f32 %v8292
          %vm8299 = vmor %vm8297, %vm8298
          %v8300 = vsel %vm8299, %v8292, %v8296
          %v8301 = vand.u32 2147483647, %v8260
          %vm8302 = vcmp.eq.f32.partialorder %v8301, 8.507059e+37
          %v8303 = vand.u32 %v8260, 2147483648
          %v8304 = vor.u32 1.1754944e-38, %v8303
          %v8305 = vsel %vm8302, %v8304, %v8300
          %v8306 = vmul.f32 1.0, %v8305
          %v8307 = vrcp.pop %v8261
          %v8308 = vmul.f32 %v8261, %v8307
          %v8309 = vsub.f32 1.0, %v8308
          %v8310 = vmul.f32 %v8307, %v8309
          %v8311 = vadd.f32 %v8307, %v8310
          %vm8312 = vweird.f32 %v8261
          %vm8313 = vweird.f32 %v8307
          %vm8314 = vmor %vm8312, %vm8313
          %v8315 = vsel %vm8314, %v8307, %v8311
          %v8316 = vand.u32 2147483647, %v8261
          %vm8317 = vcmp.eq.f32.partialorder %v8316, 8.507059e+37
          %v8318 = vand.u32 %v8261, 2147483648
          %v8319 = vor.u32 1.1754944e-38, %v8318
          %v8320 = vsel %vm8317, %v8319, %v8315
          %v8321 = vmul.f32 1.0, %v8320
          %8322 = vst.msk [vmem:[%s715] sm:$0xff] %vm5925, %v8276
          %8323 = vst.msk [vmem:[%s715 + $0x8] sm:$0xff] %vm5925, %v8291
          %8324 = vst.msk [vmem:[%s715 + $0x10] sm:$0xff] %vm5925, %v8306
          %8325 = vst.msk [vmem:[%s715 + $0x18] sm:$0xff] %vm5925, %v8321
        $region140: #{tpu_custom_call.1} parent=83 // pred_fallthru
          _
        %s8326 = sand.u32 %s409, 1
        %s8327 = scalar_lea.sflag [#allocation8], %s8326
        %s8328 = sand.u32 %s409, 1
        %s8329 = smul.addr %s8328, 32
        %s8330 = scalar_lea.vmem [#allocation27], %s8329
        // Predicated region
        $region141: #{tpu_custom_call.1} parent=83 // pred_check
          %p8331 = pneg %p419
        $region142: #{tpu_custom_call.1} parent=83 // pred_check_branch
          %8333 = sbr.rel (%p8331) target = $region144
        $region143: #{tpu_custom_call.1} parent=83 // pred_region
          %8335 = vsyncadd %s8327, 0
          %s8336 = smul.addr %s45, 4
          %s8337 = smul.addr %s8336, 8
          %s8338 = scalar_lea.hbm %s16, %s8337
          %s8339 = sshll.u32 %s8330, 4
          %s8340 = int_to_ptr.vmem [resolvable:$true] %s8339
          %s8341 = sshll.u32 %s8338, 4
          %s8342 = int_to_ptr.hbm [resolvable:$true] %s8341
          %8347 = dma.vmem_to_hbm [thread:$0]  %s8340, 512, %s8342, %s8327, 128, 128, 8
        $region144: #{tpu_custom_call.1} parent=83 // pred_fallthru
          _
      $region84: #{tpu_custom_call.1} parent=5 // pred_fallthru
        _
      %p8348 = scmp.le.s32.totalorder 2, %s36
      // Predicated region
      $region145: #{tpu_custom_call.1} parent=5 // pred_check
        %p8349 = pneg %p8348
      $region146: #{tpu_custom_call.1} parent=5 // pred_check_branch
        %8351 = sbr.rel (%p8349) target = $region148
      $region147: #{tpu_custom_call.1} parent=5 // pred_region
        %s8352 = ssub.s32 %s36, 2
        // Predicated region
        $region149: #{tpu_custom_call.1} parent=147 // pred_check
          %p8353 = pneg %p425
        $region150: #{tpu_custom_call.1} parent=147 // pred_check_branch
          %8355 = sbr.rel (%p8353) target = $region152
        $region151: #{tpu_custom_call.1} parent=147 // pred_region
          %s8356 = sand.u32 %s410, 1
          %s8357 = scalar_lea.sflag [#allocation8], %s8356
          %s8358 = sand.u32 %s410, 1
          %s8359 = smul.addr %s8358, 32
          %s8360 = scalar_lea.vmem [#allocation27], %s8359
          %8362 = dma.done %s8357, 512
        $region152: #{tpu_custom_call.1} parent=147 // pred_fallthru
          _
      $region148: #{tpu_custom_call.1} parent=5 // pred_fallthru
        _
    $region6: #{tpu_custom_call.1} parent=1 // loop_footer
      %s40 = sadd.s32 1, %s36
    $region7: #{tpu_custom_call.1} parent=1 // loop_footer_branch
      %35 = sbr.rel target = $region3
    $region8: #{tpu_custom_call.1} parent=1 // loop_exit
      _
    %8363 = vsyncpa [#allocation7], 1
    %s8364 = scalar_lea.sflag [#allocation7], 1
    %8365 = vsyncpa %s8364, 1
    %8366 = vsyncpa [#allocation11], 1
    %8367 = vsyncpa [#allocation15], 1
    %8368 = vsyncpa [#allocation8], 1
    %s8369 = scalar_lea.sflag [#allocation8], 1
    %8370 = vsyncpa %s8369, 1
    %8371 = vsyncpa [#allocation9], 1
    %s8372 = scalar_lea.sflag [#allocation9], 1
    %8373 = vsyncpa %s8372, 1
    %8374 = vsyncpa [#allocation17], 1
    %8375 = vsyncpa [#allocation20], 1
    %8376 = vsyncpa [#allocation23], 1
    %8377 = vsyncpa [#allocation26], 1

</llo_original>
